<compile_context>
chip_gen: v6e
topology: v6e:2x2x1
jax: 0.10.0
libtpu: 0.0.40
codegen_flags: <defaults>
</compile_context>

<pallas_src>
import functools

import jax
import jax.numpy as jnp
from jax import lax
from jax.experimental import pallas as pl
from jax.experimental.pallas import tpu as pltpu

H = W = 16          # spatial size of the image produced by the MLP
C = 32              # conv channel count
P = 256             # pixels per plane (16*16), flat pixel index p = 16*h + w
RE = 272            # 17*16 pixels for the "even output row" sub-pixel phases
PL = 32             # zero lead columns in the channel-major activation buffer
PTOT = PL + P + 32  # lead zeros + data + tail zeros = 320 columns
CG = 8              # image channels produced per MLP matmul group
NG = C // CG        # 4 groups
N_MLP = C * P       # 8192


# ----------------------------------------------------------------------------
# The fused kernel: MLP -> (pad + ConvT2x2 + ReLU) x2 -> ConvT3x3 s2 + ReLU ->
#                   Conv2d 2x2 + Sigmoid, one batch element per grid step.
# ----------------------------------------------------------------------------
def _decoder_kernel(z_ref, w1_ref, b1_ref, w2_ref, b2_ref,
                    wt1_ref, bt1_ref, wt2_ref, bt2_ref,
                    w3_ref, bt3_ref, wc_ref, bc_ref,
                    o_ref, xbuf):
    f32 = jnp.float32
    bf16 = jnp.bfloat16

    def mm(a, b):
        return jnp.dot(a, b, preferred_element_type=f32)

    # Lane masks over the flat pixel index p (image column n = p & 15).
    col = lax.broadcasted_iota(jnp.int32, (1, RE), 1) & 15
    keep_n0 = (col != 0).astype(bf16)     # zero where n == 0  (kills reads of col -1)
    keep_n15 = (col != 15).astype(bf16)   # zero where n == 15 (kills reads of col 16)

    def tap(d, n, keep=None):
        # Channel-major tap: all pixels shifted by d image-flat positions.
        t = xbuf[:, PL + d: PL + d + n].astype(bf16)
        if keep is not None:
            t = t * keep[:, :n]
        return t

    # ---- zero only the lead/tail pad bands (data band is fully overwritten) -
    xbuf[:, 0:PL] = jnp.zeros((C, PL), f32)
    xbuf[:, PL + P:PTOT] = jnp.zeros((C, PTOT - PL - P), f32)

    # ---- stage 0: fused MLP, written directly in channel-major (C, P) -------
    h1 = mm(z_ref[0].astype(bf16), w1_ref[...]) + b1_ref[...]
    h1 = jnp.maximum(h1, 0.0).astype(bf16)                         # (1, 128)

    # Block-diagonal LHS: one (8,1024)@(1024,256) matmul emits 8 image
    # channels at once (output rows = channels), so no lane->sublane reshape.
    h1_rep = jnp.broadcast_to(jnp.concatenate([h1] * CG, axis=1), (CG, CG * 128))
    lane = lax.broadcasted_iota(jnp.int32, (CG, CG * 128), 1)
    sub = lax.broadcasted_iota(jnp.int32, (CG, CG * 128), 0)
    lhs_bd = h1_rep * ((lane >> 7) == sub).astype(bf16)

    for g in range(NG):
        a = mm(lhs_bd, w2_ref[g]) + b2_ref[g * CG:(g + 1) * CG, :]
        xbuf[g * CG:(g + 1) * CG, PL:PL + P] = jnp.maximum(a, 0.0)

    # ---- stages 1-2: ConstantPad2d((0,1,0,1)) + ConvTranspose2d(32,32,2,1,p=1)
    # One (32,128)@(128,256) MXU matmul per stage: the 4 taps are concatenated
    # along K (in-kernel im2col).  The right pad is the n==15 lane mask, the
    # bottom pad is the zero tail columns.
    def pad_convT2x2(w_ref, b_ref):
        rhs = jnp.concatenate(
            [tap(0, P), tap(1, P, keep_n15), tap(16, P), tap(17, P, keep_n15)],
            axis=0)                                               # (128, 256)
        y = jnp.maximum(mm(w_ref[...], rhs) + b_ref[...], 0.0)
        xbuf[:, PL:PL + P] = y

    pad_convT2x2(wt1_ref, bt1_ref)
    pad_convT2x2(wt2_ref, bt2_ref)

    # ---- stages 3-4: ConvTranspose2d(32,32,3,s=2)+ReLU then Conv2d(32,3,2) --
    # The stride-2 transposed conv is split into sub-pixel parity phases (the
    # 75%-zero upsampled tensor never exists).  Each phase's contribution to
    # the final Conv2d is accumulated immediately into four small (3,256)
    # accumulators, so no big phase tensor stays live.
    b3 = bt3_ref[...]
    bias_c = jnp.broadcast_to(bc_ref[...], (3, P))
    acc = [bias_c, bias_c, bias_c, bias_c]       # z00, z01, z10, z11 logits

    def wc(t):                                   # Conv2d tap t = 2*dr + dc
        return wc_ref[:, 32 * t:32 * (t + 1)]

    ALL = slice(0, P)        # phase pixels with m = 0..15
    UP = slice(16, 16 + P)   # phase pixels shifted one image row (m = 1..16)

    def phase(w_sl, taps, contrib):
        if len(taps) > 1:
            rhs = jnp.concatenate([tap(*t) for t in taps], axis=0)
        else:
            rhs = tap(*taps[0])
        y = jnp.maximum(mm(w3_ref[:, w_sl], rhs) + b3, 0.0).astype(bf16)
        for k, t, sl in contrib:
            acc[k] = acc[k] + mm(wc(t), y[:, sl])

    # y[2m, 2n]            (17x16 pixels)
    phase(slice(0, 128),
          [(0, RE), (-1, RE, keep_n0), (-16, RE), (-17, RE, keep_n0)],
          [(0, 0, ALL), (2, 2, UP)])
    # y[2m, 2n+2]
    phase(slice(0, 128),
          [(1, RE, keep_n15), (0, RE), (-15, RE, keep_n15), (-16, RE)],
          [(1, 1, ALL), (3, 3, UP)])
    # y[2m, 2n+1]
    phase(slice(128, 192), [(0, RE), (-16, RE)],
          [(0, 1, ALL), (1, 0, ALL), (2, 3, UP), (3, 2, UP)])
    # y[2m+1, 2n]
    phase(slice(192, 256), [(0, P), (-1, P, keep_n0)],
          [(0, 2, ALL), (2, 0, ALL)])
    # y[2m+1, 2n+2]
    phase(slice(192, 256), [(1, P, keep_n15), (0, P)],
          [(1, 3, ALL), (3, 1, ALL)])
    # y[2m+1, 2n+1]
    phase(slice(256, 288), [(0, P)],
          [(0, 3, ALL), (1, 2, ALL), (2, 1, ALL), (3, 0, ALL)])

    # ---- sigmoid on the EUP, lane-dense (last dim 256) output stores --------
    for k in range(4):
        s = pl.reciprocal(1.0 + jnp.exp(-acc[k]), approx=True)
        o_ref[0, 3 * k:3 * k + 3, :] = jnp.clip(s, 0.0, 1.0)


# ----------------------------------------------------------------------------
# Wrapper: one pallas_call over the batch; the tiny parity un-shuffle of the
# 12 KB/sample output is left to XLA (free reshape + small transpose).
# ----------------------------------------------------------------------------
def decoder_forward(z, params):
    assert z.ndim == 2
    B, L = z.shape
    z3 = z.reshape(B, 1, L)

    ph = pl.pallas_call(
        _decoder_kernel,
        grid=(B,),
        in_specs=[
            pl.BlockSpec((1, 1, L), lambda b: (b, 0, 0)),          # z
            pl.BlockSpec((L, 128), lambda b: (0, 0)),              # w1
            pl.BlockSpec((1, 128), lambda b: (0, 0)),              # b1
            pl.BlockSpec((NG, CG * 128, P), lambda b: (0, 0, 0)),  # w2 (grouped)
            pl.BlockSpec((C, P), lambda b: (0, 0)),                # b2 (c, p)
            pl.BlockSpec((C, 4 * C), lambda b: (0, 0)),            # convT1 (K-concat)
            pl.BlockSpec((C, 1), lambda b: (0, 0)),
            pl.BlockSpec((C, 4 * C), lambda b: (0, 0)),            # convT2 (K-concat)
            pl.BlockSpec((C, 1), lambda b: (0, 0)),
            pl.BlockSpec((C, 9 * C), lambda b: (0, 0)),            # convT3 per-phase packs
            pl.BlockSpec((C, 1), lambda b: (0, 0)),
            pl.BlockSpec((3, 4 * C), lambda b: (0, 0)),            # conv4 (K-concat)
            pl.BlockSpec((3, 1), lambda b: (0, 0)),
        ],
        out_specs=pl.BlockSpec((1, 12, P), lambda b: (b, 0, 0)),
        out_shape=jax.ShapeDtypeStruct((B, 12, P), jnp.float32),
        scratch_shapes=[pltpu.VMEM((C, PTOT), jnp.float32)],
        compiler_params=pltpu.CompilerParams(dimension_semantics=("parallel",)),
    )(z3, params["w1"], params["b1"], params["w2g"], params["b2"],
      params["wt1"], params["bt1"], params["wt2"], params["bt2"],
      params["w3p"], params["bt3"], params["wcp"], params["bc"])

    # ph[b, 3*(2*sp+sq) + c, 16*m + n] = out[b, c, 2m+sp, 2n+sq]
    out = (ph.reshape(B, 2, 2, 3, H, W)
             .transpose(0, 3, 4, 1, 5, 2)
             .reshape(B, 3, 32, 32))
    assert out.shape[1] == 3 and out.shape[2] == 32 and out.shape[3] == 32
    return out


# ----------------------------------------------------------------------------
# Parameters: PyTorch-layout init + one-time packing (permutation/flip/cast).
# ----------------------------------------------------------------------------
def init_params_pt(key, latent):
    ks = jax.random.split(key, 12)

    def u(k, shape, fan_in):
        bound = 1.0 / float(fan_in) ** 0.5
        return jax.random.uniform(k, shape, jnp.float32, -bound, bound)

    return {
        "w1": u(ks[0], (128, latent), latent),        # Linear: (out, in)
        "b1": u(ks[1], (128,), latent),
        "w2": u(ks[2], (N_MLP, 128), 128),
        "b2": u(ks[3], (N_MLP,), 128),
        "wt1": u(ks[4], (32, 32, 2, 2), 32 * 4),      # ConvTranspose2d: (Cin,Cout,kh,kw)
        "bt1": u(ks[5], (32,), 32 * 4),
        "wt2": u(ks[6], (32, 32, 2, 2), 32 * 4),
        "bt2": u(ks[7], (32,), 32 * 4),
        "wt3": u(ks[8], (32, 32, 3, 3), 32 * 9),
        "bt3": u(ks[9], (32,), 32 * 9),
        "wc": u(ks[10], (3, 32, 2, 2), 32 * 4),       # Conv2d: (Cout,Cin,kh,kw)
        "bc": u(ks[11], (3,), 32 * 4),
    }


def pack_params(pt):
    bf16 = jnp.bfloat16
    f32 = jnp.float32

    # MLP: second Linear grouped for the block-diagonal channel-major matmuls.
    w1 = pt["w1"].T.astype(bf16)                              # (L, 128)
    b1 = pt["b1"].reshape(1, 128).astype(f32)
    w2r = pt["w2"].reshape(C, P, 128).transpose(0, 2, 1)      # (c, k, p)
    w2g = w2r.reshape(NG, CG * 128, P).astype(bf16)           # [g, 128*s+k, p]
    b2 = pt["b2"].reshape(C, P).astype(f32)

    def pack_convT2(w):   # (Cin,Cout,2,2) -> (Cout, 4*Cin): flipped, taps along K
        wf = w[:, :, ::-1, ::-1]                              # wf[ci,co,a,b]=w[ci,co,1-a,1-b]
        return wf.transpose(1, 2, 3, 0).reshape(C, 4 * C).astype(bf16)

    wt1 = pack_convT2(pt["wt1"])
    bt1 = pt["bt1"].reshape(C, 1).astype(f32)
    wt2 = pack_convT2(pt["wt2"])
    bt2 = pt["bt2"].reshape(C, 1).astype(f32)

    # ConvT3: per-(kr,kc) blocks (co, ci), concatenated per sub-pixel phase.
    w3 = pt["wt3"].transpose(1, 2, 3, 0)                      # (co, kr, kc, ci)

    def blk(kr, kc):
        return w3[:, kr, kc, :]                               # (32, 32)

    w3_ee = jnp.concatenate([blk(0, 0), blk(0, 2), blk(2, 0), blk(2, 2)], axis=1)
    w3_eo = jnp.concatenate([blk(0, 1), blk(2, 1)], axis=1)
    w3_oe = jnp.concatenate([blk(1, 0), blk(1, 2)], axis=1)
    w3_oo = blk(1, 1)
    w3p = jnp.concatenate([w3_ee, w3_eo, w3_oe, w3_oo], axis=1).astype(bf16)  # (32, 288)
    bt3 = pt["bt3"].reshape(C, 1).astype(f32)

    # Final Conv2d: blocks [W00|W01|W10|W11] along K, rows = output channels.
    wcp = pt["wc"].transpose(0, 2, 3, 1).reshape(3, 4 * C).astype(bf16)       # (3, 128)
    bc = pt["bc"].reshape(3, 1).astype(f32)

    return dict(w1=w1, b1=b1, w2g=w2g, b2=b2, wt1=wt1, bt1=bt1, wt2=wt2,
                bt2=bt2, w3p=w3p, bt3=bt3, wcp=wcp, bc=bc)


# ----------------------------------------------------------------------------
# Pure-JAX reference (straight transcription of the PyTorch module).
# ----------------------------------------------------------------------------
def _convT_ref(x, w, b, stride, padding):
    kh, kw = w.shape[2], w.shape[3]
    w_eff = jnp.transpose(w[:, :, ::-1, ::-1], (1, 0, 2, 3))
    y = jax.lax.conv_general_dilated(
        x, w_eff, window_strides=(1, 1),
        padding=[(kh - 1 - padding, kh - 1 - padding),
                 (kw - 1 - padding, kw - 1 - padding)],
        lhs_dilation=(stride, stride), rhs_dilation=(1, 1),
        dimension_numbers=("NCHW", "OIHW", "NCHW"))
    return y + b.reshape(1, -1, 1, 1)


def decoder_reference(z, params):
    B = z.shape[0]
    h = jnp.maximum(z @ params["w1"].T + params["b1"], 0.0)
    h = jnp.maximum(h @ params["w2"].T + params["b2"], 0.0)
    x = h.reshape(B, 32, 16, 16)
    x = jnp.pad(x, ((0, 0), (0, 0), (0, 1), (0, 1)))
    x = jnp.maximum(_convT_ref(x, params["wt1"], params["bt1"], 1, 1), 0.0)
    x = jnp.pad(x, ((0, 0), (0, 0), (0, 1), (0, 1)))
    x = jnp.maximum(_convT_ref(x, params["wt2"], params["bt2"], 1, 1), 0.0)
    x = jnp.maximum(_convT_ref(x, params["wt3"], params["bt3"], 2, 0), 0.0)
    x = jax.lax.conv_general_dilated(
        x, params["wc"], window_strides=(1, 1), padding="VALID",
        dimension_numbers=("NCHW", "OIHW", "NCHW")) + params["bc"].reshape(1, -1, 1, 1)
    return jax.nn.sigmoid(x)


if __name__ == "__main__":
    key = jax.random.PRNGKey(0)
    latent_size = 32
    batch = 2

    k_param, k_z = jax.random.split(key)
    params_pt = init_params_pt(k_param, latent_size)
    packed = pack_params(params_pt)
    z = jax.random.normal(k_z, (batch, latent_size), jnp.float32)

    fwd = jax.jit(functools.partial(decoder_forward, params=packed))
    out = jax.block_until_ready(fwd(z))

    assert out.shape == (batch, 3, 32, 32), out.shape
    assert out.dtype == jnp.float32

    ref = jax.block_until_ready(
        jax.jit(functools.partial(decoder_reference, params=params_pt))(z))
    max_err = float(jnp.max(jnp.abs(out - ref)))
    assert max_err < 1e-2, f"mismatch vs reference: max abs err = {max_err}"
    assert bool(jnp.all(out >= 0.0)) and bool(jnp.all(out <= 1.0))
    print("KERNEL_OK")
</pallas_src>

<mosaic_0001>
module attributes {stable_mosaic.version = 11 : i64} {
  func.func @_decoder_kernel(%arg0: i32, %arg1: memref<1x1x32xf32, #tpu.memory_space<vmem>>, %arg2: memref<32x128xbf16, #tpu.memory_space<vmem>>, %arg3: memref<1x128xf32, #tpu.memory_space<vmem>>, %arg4: memref<4x1024x256xbf16, #tpu.memory_space<vmem>>, %arg5: memref<32x256xf32, #tpu.memory_space<vmem>>, %arg6: memref<32x128xbf16, #tpu.memory_space<vmem>>, %arg7: memref<32x1xf32, #tpu.memory_space<vmem>>, %arg8: memref<32x128xbf16, #tpu.memory_space<vmem>>, %arg9: memref<32x1xf32, #tpu.memory_space<vmem>>, %arg10: memref<32x288xbf16, #tpu.memory_space<vmem>>, %arg11: memref<32x1xf32, #tpu.memory_space<vmem>>, %arg12: memref<3x128xbf16, #tpu.memory_space<vmem>>, %arg13: memref<3x1xf32, #tpu.memory_space<vmem>>, %arg14: memref<1x12x256xf32, #tpu.memory_space<vmem>>, %arg15: memref<32x320xf32, #tpu.memory_space<vmem>>) attributes {dimension_semantics = [#tpu.dimension_semantics<parallel>], iteration_bounds = array<i64: 2>, scalar_prefetch = 0 : i64, scratch_operands = 1 : i64, tpu.core_type = #tpu.core_type<tc>, window_params = [{transform_indices = @transform_0, window_bounds = array<i64: 1, 1, 32>}, {pipeline_mode = #tpu.pipeline_mode<synchronous>, transform_indices = @transform_1, window_bounds = array<i64: 32, 128>}, {pipeline_mode = #tpu.pipeline_mode<synchronous>, transform_indices = @transform_2, window_bounds = array<i64: 1, 128>}, {pipeline_mode = #tpu.pipeline_mode<synchronous>, transform_indices = @transform_3, window_bounds = array<i64: 4, 1024, 256>}, {pipeline_mode = #tpu.pipeline_mode<synchronous>, transform_indices = @transform_4, window_bounds = array<i64: 32, 256>}, {pipeline_mode = #tpu.pipeline_mode<synchronous>, transform_indices = @transform_5, window_bounds = array<i64: 32, 128>}, {pipeline_mode = #tpu.pipeline_mode<synchronous>, transform_indices = @transform_6, window_bounds = array<i64: 32, 1>}, {pipeline_mode = #tpu.pipeline_mode<synchronous>, transform_indices = @transform_7, window_bounds = array<i64: 32, 128>}, {pipeline_mode = #tpu.pipeline_mode<synchronous>, transform_indices = @transform_8, window_bounds = array<i64: 32, 1>}, {pipeline_mode = #tpu.pipeline_mode<synchronous>, transform_indices = @transform_9, window_bounds = array<i64: 32, 288>}, {pipeline_mode = #tpu.pipeline_mode<synchronous>, transform_indices = @transform_10, window_bounds = array<i64: 32, 1>}, {pipeline_mode = #tpu.pipeline_mode<synchronous>, transform_indices = @transform_11, window_bounds = array<i64: 3, 128>}, {pipeline_mode = #tpu.pipeline_mode<synchronous>, transform_indices = @transform_12, window_bounds = array<i64: 3, 1>}, {transform_indices = @transform_13, window_bounds = array<i64: 1, 12, 256>}]} {
    %0 = tpu.iota {dimensions = array<i32: 1>} : vector<1x272xi32>
    %c15_i32 = arith.constant 15 : i32
    %1 = vector.broadcast %c15_i32 : i32 to vector<1x272xi32>
    %2 = arith.andi %0, %1 : vector<1x272xi32>
    %c0_i32 = arith.constant 0 : i32
    %3 = vector.broadcast %c0_i32 : i32 to vector<1x272xi32>
    %4 = arith.cmpi ne, %2, %3 : vector<1x272xi32>
    %5 = arith.extui %4 : vector<1x272xi1> to vector<1x272xi32>
    %6 = arith.sitofp %5 : vector<1x272xi32> to vector<1x272xf32>
    %7 = arith.truncf %6 : vector<1x272xf32> to vector<1x272xbf16>
    %c15_i32_0 = arith.constant 15 : i32
    %8 = vector.broadcast %c15_i32_0 : i32 to vector<1x272xi32>
    %9 = arith.cmpi ne, %2, %8 : vector<1x272xi32>
    %10 = arith.extui %9 : vector<1x272xi1> to vector<1x272xi32>
    %11 = arith.sitofp %10 : vector<1x272xi32> to vector<1x272xf32>
    %12 = arith.truncf %11 : vector<1x272xf32> to vector<1x272xbf16>
    %cst = arith.constant 0.000000e+00 : f32
    %13 = vector.broadcast %cst : f32 to vector<32x32xf32>
    %c0 = arith.constant 0 : index
    %c0_1 = arith.constant 0 : index
    %14 = vector.load %arg15[%c0, %c0_1] : memref<32x320xf32, #tpu.memory_space<vmem>>, vector<32x32xf32>
    tpu.vector_store %arg15[%c0, %c0_1], %13 {strides = array<i32>} : memref<32x320xf32, #tpu.memory_space<vmem>>, vector<32x32xf32>,
    %cst_2 = arith.constant 0.000000e+00 : f32
    %15 = vector.broadcast %cst_2 : f32 to vector<32x32xf32>
    %c0_3 = arith.constant 0 : index
    %c288 = arith.constant 288 : index
    %16 = vector.load %arg15[%c0_3, %c288] : memref<32x320xf32, #tpu.memory_space<vmem>>, vector<32x32xf32>
    tpu.vector_store %arg15[%c0_3, %c288], %15 {strides = array<i32>} : memref<32x320xf32, #tpu.memory_space<vmem>>, vector<32x32xf32>,
    %c0_4 = arith.constant 0 : index
    %c0_5 = arith.constant 0 : index
    %c0_6 = arith.constant 0 : index
    %17 = vector.load %arg1[%c0_4, %c0_5, %c0_6] : memref<1x1x32xf32, #tpu.memory_space<vmem>>, vector<1x1x32xf32>
    %18 = vector.shape_cast %17 : vector<1x1x32xf32> to vector<1x32xf32>
    %19 = arith.truncf %18 : vector<1x32xf32> to vector<1x32xbf16>
    %c0_7 = arith.constant 0 : index
    %c0_8 = arith.constant 0 : index
    %20 = vector.load %arg2[%c0_7, %c0_8] : memref<32x128xbf16, #tpu.memory_space<vmem>>, vector<32x128xbf16>
    %cst_9 = arith.constant dense<0.000000e+00> : vector<1x128xf32>
    %21 = tpu.matmul %19, %20, %cst_9 {dimension_numbers = #tpu.dot_dimension_numbers<[1], [0], [0], [1], [0, 0, 1, 1], [], []>} : vector<1x32xbf16>, vector<32x128xbf16>, vector<1x128xf32> -> vector<1x128xf32>
    %c0_10 = arith.constant 0 : index
    %c0_11 = arith.constant 0 : index
    %22 = vector.load %arg3[%c0_10, %c0_11] : memref<1x128xf32, #tpu.memory_space<vmem>>, vector<1x128xf32>
    %23 = arith.addf %21, %22 : vector<1x128xf32>
    %cst_12 = arith.constant 0.000000e+00 : f32
    %24 = vector.broadcast %cst_12 : f32 to vector<1x128xf32>
    %25 = arith.maximumf %23, %24 : vector<1x128xf32>
    %26 = arith.truncf %25 : vector<1x128xf32> to vector<1x128xbf16>
    %27 = tpu.concatenate %26, %26, %26, %26, %26, %26, %26, %26 in 1 : vector<1x128xbf16>, vector<1x128xbf16>, vector<1x128xbf16>, vector<1x128xbf16>, vector<1x128xbf16>, vector<1x128xbf16>, vector<1x128xbf16>, vector<1x128xbf16> -> vector<1x1024xbf16>
    %28 = vector.shape_cast %27 : vector<1x1024xbf16> to vector<1x1024xbf16>
    %29 = vector.broadcast %28 : vector<1x1024xbf16> to vector<8x1024xbf16>
    %30 = tpu.iota {dimensions = array<i32: 1>} : vector<8x1024xi32>
    %31 = tpu.iota {dimensions = array<i32: 0>} : vector<8x1024xi32>
    %c7_i32 = arith.constant 7 : i32
    %32 = vector.broadcast %c7_i32 : i32 to vector<8x1024xi32>
    %33 = arith.shrsi %30, %32 : vector<8x1024xi32>
    %34 = arith.cmpi eq, %33, %31 : vector<8x1024xi32>
    %35 = arith.extui %34 : vector<8x1024xi1> to vector<8x1024xi32>
    %36 = arith.sitofp %35 : vector<8x1024xi32> to vector<8x1024xf32>
    %37 = arith.truncf %36 : vector<8x1024xf32> to vector<8x1024xbf16>
    %38 = arith.mulf %29, %37 : vector<8x1024xbf16>
    %c0_13 = arith.constant 0 : index
    %c0_14 = arith.constant 0 : index
    %c0_15 = arith.constant 0 : index
    %39 = vector.load %arg4[%c0_13, %c0_14, %c0_15] : memref<4x1024x256xbf16, #tpu.memory_space<vmem>>, vector<1x1024x256xbf16>
    %40 = vector.shape_cast %39 : vector<1x1024x256xbf16> to vector<1024x256xbf16>
    %cst_16 = arith.constant dense<0.000000e+00> : vector<8x256xf32>
    %41 = tpu.matmul %38, %40, %cst_16 {dimension_numbers = #tpu.dot_dimension_numbers<[1], [0], [0], [1], [0, 0, 1, 1], [], []>} : vector<8x1024xbf16>, vector<1024x256xbf16>, vector<8x256xf32> -> vector<8x256xf32>
    %c0_17 = arith.constant 0 : index
    %c0_18 = arith.constant 0 : index
    %42 = vector.load %arg5[%c0_17, %c0_18] : memref<32x256xf32, #tpu.memory_space<vmem>>, vector<8x256xf32>
    %43 = arith.addf %41, %42 : vector<8x256xf32>
    %cst_19 = arith.constant 0.000000e+00 : f32
    %44 = vector.broadcast %cst_19 : f32 to vector<8x256xf32>
    %45 = arith.maximumf %43, %44 : vector<8x256xf32>
    %c0_20 = arith.constant 0 : index
    %c32 = arith.constant 32 : index
    %46 = vector.load %arg15[%c0_20, %c32] : memref<32x320xf32, #tpu.memory_space<vmem>>, vector<8x256xf32>
    tpu.vector_store %arg15[%c0_20, %c32], %45 {strides = array<i32>} : memref<32x320xf32, #tpu.memory_space<vmem>>, vector<8x256xf32>,
    %c1 = arith.constant 1 : index
    %c0_21 = arith.constant 0 : index
    %c0_22 = arith.constant 0 : index
    %47 = vector.load %arg4[%c1, %c0_21, %c0_22] : memref<4x1024x256xbf16, #tpu.memory_space<vmem>>, vector<1x1024x256xbf16>
    %48 = vector.shape_cast %47 : vector<1x1024x256xbf16> to vector<1024x256xbf16>
    %cst_23 = arith.constant dense<0.000000e+00> : vector<8x256xf32>
    %49 = tpu.matmul %38, %48, %cst_23 {dimension_numbers = #tpu.dot_dimension_numbers<[1], [0], [0], [1], [0, 0, 1, 1], [], []>} : vector<8x1024xbf16>, vector<1024x256xbf16>, vector<8x256xf32> -> vector<8x256xf32>
    %c8 = arith.constant 8 : index
    %c0_24 = arith.constant 0 : index
    %50 = vector.load %arg5[%c8, %c0_24] : memref<32x256xf32, #tpu.memory_space<vmem>>, vector<8x256xf32>
    %51 = arith.addf %49, %50 : vector<8x256xf32>
    %cst_25 = arith.constant 0.000000e+00 : f32
    %52 = vector.broadcast %cst_25 : f32 to vector<8x256xf32>
    %53 = arith.maximumf %51, %52 : vector<8x256xf32>
    %c8_26 = arith.constant 8 : index
    %c32_27 = arith.constant 32 : index
    %54 = vector.load %arg15[%c8_26, %c32_27] : memref<32x320xf32, #tpu.memory_space<vmem>>, vector<8x256xf32>
    tpu.vector_store %arg15[%c8_26, %c32_27], %53 {strides = array<i32>} : memref<32x320xf32, #tpu.memory_space<vmem>>, vector<8x256xf32>,
    %c2 = arith.constant 2 : index
    %c0_28 = arith.constant 0 : index
    %c0_29 = arith.constant 0 : index
    %55 = vector.load %arg4[%c2, %c0_28, %c0_29] : memref<4x1024x256xbf16, #tpu.memory_space<vmem>>, vector<1x1024x256xbf16>
    %56 = vector.shape_cast %55 : vector<1x1024x256xbf16> to vector<1024x256xbf16>
    %cst_30 = arith.constant dense<0.000000e+00> : vector<8x256xf32>
    %57 = tpu.matmul %38, %56, %cst_30 {dimension_numbers = #tpu.dot_dimension_numbers<[1], [0], [0], [1], [0, 0, 1, 1], [], []>} : vector<8x1024xbf16>, vector<1024x256xbf16>, vector<8x256xf32> -> vector<8x256xf32>
    %c16 = arith.constant 16 : index
    %c0_31 = arith.constant 0 : index
    %58 = vector.load %arg5[%c16, %c0_31] : memref<32x256xf32, #tpu.memory_space<vmem>>, vector<8x256xf32>
    %59 = arith.addf %57, %58 : vector<8x256xf32>
    %cst_32 = arith.constant 0.000000e+00 : f32
    %60 = vector.broadcast %cst_32 : f32 to vector<8x256xf32>
    %61 = arith.maximumf %59, %60 : vector<8x256xf32>
    %c16_33 = arith.constant 16 : index
    %c32_34 = arith.constant 32 : index
    %62 = vector.load %arg15[%c16_33, %c32_34] : memref<32x320xf32, #tpu.memory_space<vmem>>, vector<8x256xf32>
    tpu.vector_store %arg15[%c16_33, %c32_34], %61 {strides = array<i32>} : memref<32x320xf32, #tpu.memory_space<vmem>>, vector<8x256xf32>,
    %c3 = arith.constant 3 : index
    %c0_35 = arith.constant 0 : index
    %c0_36 = arith.constant 0 : index
    %63 = vector.load %arg4[%c3, %c0_35, %c0_36] : memref<4x1024x256xbf16, #tpu.memory_space<vmem>>, vector<1x1024x256xbf16>
    %64 = vector.shape_cast %63 : vector<1x1024x256xbf16> to vector<1024x256xbf16>
    %cst_37 = arith.constant dense<0.000000e+00> : vector<8x256xf32>
    %65 = tpu.matmul %38, %64, %cst_37 {dimension_numbers = #tpu.dot_dimension_numbers<[1], [0], [0], [1], [0, 0, 1, 1], [], []>} : vector<8x1024xbf16>, vector<1024x256xbf16>, vector<8x256xf32> -> vector<8x256xf32>
    %c24 = arith.constant 24 : index
    %c0_38 = arith.constant 0 : index
    %66 = vector.load %arg5[%c24, %c0_38] : memref<32x256xf32, #tpu.memory_space<vmem>>, vector<8x256xf32>
    %67 = arith.addf %65, %66 : vector<8x256xf32>
    %cst_39 = arith.constant 0.000000e+00 : f32
    %68 = vector.broadcast %cst_39 : f32 to vector<8x256xf32>
    %69 = arith.maximumf %67, %68 : vector<8x256xf32>
    %c24_40 = arith.constant 24 : index
    %c32_41 = arith.constant 32 : index
    %70 = vector.load %arg15[%c24_40, %c32_41] : memref<32x320xf32, #tpu.memory_space<vmem>>, vector<8x256xf32>
    tpu.vector_store %arg15[%c24_40, %c32_41], %69 {strides = array<i32>} : memref<32x320xf32, #tpu.memory_space<vmem>>, vector<8x256xf32>,
    %c0_42 = arith.constant 0 : index
    %c32_43 = arith.constant 32 : index
    %71 = vector.load %arg15[%c0_42, %c32_43] : memref<32x320xf32, #tpu.memory_space<vmem>>, vector<32x256xf32>
    %72 = arith.truncf %71 : vector<32x256xf32> to vector<32x256xbf16>
    %c0_44 = arith.constant 0 : index
    %c33 = arith.constant 33 : index
    %73 = vector.load %arg15[%c0_44, %c33] : memref<32x320xf32, #tpu.memory_space<vmem>>, vector<32x256xf32>
    %74 = arith.truncf %73 : vector<32x256xf32> to vector<32x256xbf16>
    %75 = vector.extract_strided_slice %12 {offsets = [0, 0], sizes = [1, 256], strides = [1, 1]} : vector<1x272xbf16> to vector<1x256xbf16>
    %76 = vector.broadcast %75 : vector<1x256xbf16> to vector<32x256xbf16>
    %77 = arith.mulf %74, %76 : vector<32x256xbf16>
    %c0_45 = arith.constant 0 : index
    %c48 = arith.constant 48 : index
    %78 = vector.load %arg15[%c0_45, %c48] : memref<32x320xf32, #tpu.memory_space<vmem>>, vector<32x256xf32>
    %79 = arith.truncf %78 : vector<32x256xf32> to vector<32x256xbf16>
    %c0_46 = arith.constant 0 : index
    %c49 = arith.constant 49 : index
    %80 = vector.load %arg15[%c0_46, %c49] : memref<32x320xf32, #tpu.memory_space<vmem>>, vector<32x256xf32>
    %81 = arith.truncf %80 : vector<32x256xf32> to vector<32x256xbf16>
    %82 = vector.extract_strided_slice %12 {offsets = [0, 0], sizes = [1, 256], strides = [1, 1]} : vector<1x272xbf16> to vector<1x256xbf16>
    %83 = vector.broadcast %82 : vector<1x256xbf16> to vector<32x256xbf16>
    %84 = arith.mulf %81, %83 : vector<32x256xbf16>
    %85 = tpu.concatenate %72, %77, %79, %84 in 0 : vector<32x256xbf16>, vector<32x256xbf16>, vector<32x256xbf16>, vector<32x256xbf16> -> vector<128x256xbf16>
    %c0_47 = arith.constant 0 : index
    %c0_48 = arith.constant 0 : index
    %86 = vector.load %arg6[%c0_47, %c0_48] : memref<32x128xbf16, #tpu.memory_space<vmem>>, vector<32x128xbf16>
    %cst_49 = arith.constant dense<0.000000e+00> : vector<32x256xf32>
    %87 = tpu.matmul %86, %85, %cst_49 {dimension_numbers = #tpu.dot_dimension_numbers<[1], [0], [0], [1], [0, 0, 1, 1], [], []>} : vector<32x128xbf16>, vector<128x256xbf16>, vector<32x256xf32> -> vector<32x256xf32>
    %c0_50 = arith.constant 0 : index
    %c0_51 = arith.constant 0 : index
    %88 = vector.load %arg7[%c0_50, %c0_51] : memref<32x1xf32, #tpu.memory_space<vmem>>, vector<32x1xf32>
    %89 = vector.broadcast %88 : vector<32x1xf32> to vector<32x256xf32>
    %90 = arith.addf %87, %89 : vector<32x256xf32>
    %cst_52 = arith.constant 0.000000e+00 : f32
    %91 = vector.broadcast %cst_52 : f32 to vector<32x256xf32>
    %92 = arith.maximumf %90, %91 : vector<32x256xf32>
    %c0_53 = arith.constant 0 : index
    %c32_54 = arith.constant 32 : index
    %93 = vector.load %arg15[%c0_53, %c32_54] : memref<32x320xf32, #tpu.memory_space<vmem>>, vector<32x256xf32>
    tpu.vector_store %arg15[%c0_53, %c32_54], %92 {strides = array<i32>} : memref<32x320xf32, #tpu.memory_space<vmem>>, vector<32x256xf32>,
    %c0_55 = arith.constant 0 : index
    %c32_56 = arith.constant 32 : index
    %94 = vector.load %arg15[%c0_55, %c32_56] : memref<32x320xf32, #tpu.memory_space<vmem>>, vector<32x256xf32>
    %95 = arith.truncf %94 : vector<32x256xf32> to vector<32x256xbf16>
    %c0_57 = arith.constant 0 : index
    %c33_58 = arith.constant 33 : index
    %96 = vector.load %arg15[%c0_57, %c33_58] : memref<32x320xf32, #tpu.memory_space<vmem>>, vector<32x256xf32>
    %97 = arith.truncf %96 : vector<32x256xf32> to vector<32x256xbf16>
    %98 = vector.extract_strided_slice %12 {offsets = [0, 0], sizes = [1, 256], strides = [1, 1]} : vector<1x272xbf16> to vector<1x256xbf16>
    %99 = vector.broadcast %98 : vector<1x256xbf16> to vector<32x256xbf16>
    %100 = arith.mulf %97, %99 : vector<32x256xbf16>
    %c0_59 = arith.constant 0 : index
    %c48_60 = arith.constant 48 : index
    %101 = vector.load %arg15[%c0_59, %c48_60] : memref<32x320xf32, #tpu.memory_space<vmem>>, vector<32x256xf32>
    %102 = arith.truncf %101 : vector<32x256xf32> to vector<32x256xbf16>
    %c0_61 = arith.constant 0 : index
    %c49_62 = arith.constant 49 : index
    %103 = vector.load %arg15[%c0_61, %c49_62] : memref<32x320xf32, #tpu.memory_space<vmem>>, vector<32x256xf32>
    %104 = arith.truncf %103 : vector<32x256xf32> to vector<32x256xbf16>
    %105 = vector.extract_strided_slice %12 {offsets = [0, 0], sizes = [1, 256], strides = [1, 1]} : vector<1x272xbf16> to vector<1x256xbf16>
    %106 = vector.broadcast %105 : vector<1x256xbf16> to vector<32x256xbf16>
    %107 = arith.mulf %104, %106 : vector<32x256xbf16>
    %108 = tpu.concatenate %95, %100, %102, %107 in 0 : vector<32x256xbf16>, vector<32x256xbf16>, vector<32x256xbf16>, vector<32x256xbf16> -> vector<128x256xbf16>
    %c0_63 = arith.constant 0 : index
    %c0_64 = arith.constant 0 : index
    %109 = vector.load %arg8[%c0_63, %c0_64] : memref<32x128xbf16, #tpu.memory_space<vmem>>, vector<32x128xbf16>
    %cst_65 = arith.constant dense<0.000000e+00> : vector<32x256xf32>
    %110 = tpu.matmul %109, %108, %cst_65 {dimension_numbers = #tpu.dot_dimension_numbers<[1], [0], [0], [1], [0, 0, 1, 1], [], []>} : vector<32x128xbf16>, vector<128x256xbf16>, vector<32x256xf32> -> vector<32x256xf32>
    %c0_66 = arith.constant 0 : index
    %c0_67 = arith.constant 0 : index
    %111 = vector.load %arg9[%c0_66, %c0_67] : memref<32x1xf32, #tpu.memory_space<vmem>>, vector<32x1xf32>
    %112 = vector.broadcast %111 : vector<32x1xf32> to vector<32x256xf32>
    %113 = arith.addf %110, %112 : vector<32x256xf32>
    %cst_68 = arith.constant 0.000000e+00 : f32
    %114 = vector.broadcast %cst_68 : f32 to vector<32x256xf32>
    %115 = arith.maximumf %113, %114 : vector<32x256xf32>
    %c0_69 = arith.constant 0 : index
    %c32_70 = arith.constant 32 : index
    %116 = vector.load %arg15[%c0_69, %c32_70] : memref<32x320xf32, #tpu.memory_space<vmem>>, vector<32x256xf32>
    tpu.vector_store %arg15[%c0_69, %c32_70], %115 {strides = array<i32>} : memref<32x320xf32, #tpu.memory_space<vmem>>, vector<32x256xf32>,
    %c0_71 = arith.constant 0 : index
    %c0_72 = arith.constant 0 : index
    %117 = vector.load %arg11[%c0_71, %c0_72] : memref<32x1xf32, #tpu.memory_space<vmem>>, vector<32x1xf32>
    %c0_73 = arith.constant 0 : index
    %c0_74 = arith.constant 0 : index
    %118 = vector.load %arg13[%c0_73, %c0_74] : memref<3x1xf32, #tpu.memory_space<vmem>>, vector<3x1xf32>
    %119 = vector.shape_cast %118 : vector<3x1xf32> to vector<3x1xf32>
    %120 = vector.broadcast %119 : vector<3x1xf32> to vector<3x256xf32>
    %c0_75 = arith.constant 0 : index
    %c32_76 = arith.constant 32 : index
    %121 = vector.load %arg15[%c0_75, %c32_76] : memref<32x320xf32, #tpu.memory_space<vmem>>, vector<32x272xf32>
    %122 = arith.truncf %121 : vector<32x272xf32> to vector<32x272xbf16>
    %c0_77 = arith.constant 0 : index
    %c31 = arith.constant 31 : index
    %123 = vector.load %arg15[%c0_77, %c31] : memref<32x320xf32, #tpu.memory_space<vmem>>, vector<32x272xf32>
    %124 = arith.truncf %123 : vector<32x272xf32> to vector<32x272xbf16>
    %125 = vector.broadcast %7 : vector<1x272xbf16> to vector<32x272xbf16>
    %126 = arith.mulf %124, %125 : vector<32x272xbf16>
    %c0_78 = arith.constant 0 : index
    %c16_79 = arith.constant 16 : index
    %127 = vector.load %arg15[%c0_78, %c16_79] : memref<32x320xf32, #tpu.memory_space<vmem>>, vector<32x272xf32>
    %128 = arith.truncf %127 : vector<32x272xf32> to vector<32x272xbf16>
    %c0_80 = arith.constant 0 : index
    %c15 = arith.constant 15 : index
    %129 = vector.load %arg15[%c0_80, %c15] : memref<32x320xf32, #tpu.memory_space<vmem>>, vector<32x272xf32>
    %130 = arith.truncf %129 : vector<32x272xf32> to vector<32x272xbf16>
    %131 = vector.broadcast %7 : vector<1x272xbf16> to vector<32x272xbf16>
    %132 = arith.mulf %130, %131 : vector<32x272xbf16>
    %133 = tpu.concatenate %122, %126, %128, %132 in 0 : vector<32x272xbf16>, vector<32x272xbf16>, vector<32x272xbf16>, vector<32x272xbf16> -> vector<128x272xbf16>
    %c0_81 = arith.constant 0 : index
    %c0_82 = arith.constant 0 : index
    %134 = vector.load %arg10[%c0_81, %c0_82] : memref<32x288xbf16, #tpu.memory_space<vmem>>, vector<32x128xbf16>
    %cst_83 = arith.constant dense<0.000000e+00> : vector<32x272xf32>
    %135 = tpu.matmul %134, %133, %cst_83 {dimension_numbers = #tpu.dot_dimension_numbers<[1], [0], [0], [1], [0, 0, 1, 1], [], []>} : vector<32x128xbf16>, vector<128x272xbf16>, vector<32x272xf32> -> vector<32x272xf32>
    %136 = vector.broadcast %117 : vector<32x1xf32> to vector<32x272xf32>
    %137 = arith.addf %135, %136 : vector<32x272xf32>
    %cst_84 = arith.constant 0.000000e+00 : f32
    %138 = vector.broadcast %cst_84 : f32 to vector<32x272xf32>
    %139 = arith.maximumf %137, %138 : vector<32x272xf32>
    %140 = arith.truncf %139 : vector<32x272xf32> to vector<32x272xbf16>
    %c0_85 = arith.constant 0 : index
    %c0_86 = arith.constant 0 : index
    %141 = vector.load %arg12[%c0_85, %c0_86] : memref<3x128xbf16, #tpu.memory_space<vmem>>, vector<3x32xbf16>
    %142 = vector.extract_strided_slice %140 {offsets = [0, 0], sizes = [32, 256], strides = [1, 1]} : vector<32x272xbf16> to vector<32x256xbf16>
    %cst_87 = arith.constant dense<0.000000e+00> : vector<3x256xf32>
    %143 = tpu.matmul %141, %142, %cst_87 {dimension_numbers = #tpu.dot_dimension_numbers<[1], [0], [0], [1], [0, 0, 1, 1], [], []>} : vector<3x32xbf16>, vector<32x256xbf16>, vector<3x256xf32> -> vector<3x256xf32>
    %144 = arith.addf %120, %143 : vector<3x256xf32>
    %c0_88 = arith.constant 0 : index
    %c64 = arith.constant 64 : index
    %145 = vector.load %arg12[%c0_88, %c64] : memref<3x128xbf16, #tpu.memory_space<vmem>>, vector<3x32xbf16>
    %146 = vector.extract_strided_slice %140 {offsets = [0, 16], sizes = [32, 256], strides = [1, 1]} : vector<32x272xbf16> to vector<32x256xbf16>
    %cst_89 = arith.constant dense<0.000000e+00> : vector<3x256xf32>
    %147 = tpu.matmul %145, %146, %cst_89 {dimension_numbers = #tpu.dot_dimension_numbers<[1], [0], [0], [1], [0, 0, 1, 1], [], []>} : vector<3x32xbf16>, vector<32x256xbf16>, vector<3x256xf32> -> vector<3x256xf32>
    %148 = arith.addf %120, %147 : vector<3x256xf32>
    %c0_90 = arith.constant 0 : index
    %c33_91 = arith.constant 33 : index
    %149 = vector.load %arg15[%c0_90, %c33_91] : memref<32x320xf32, #tpu.memory_space<vmem>>, vector<32x272xf32>
    %150 = arith.truncf %149 : vector<32x272xf32> to vector<32x272xbf16>
    %151 = vector.broadcast %12 : vector<1x272xbf16> to vector<32x272xbf16>
    %152 = arith.mulf %150, %151 : vector<32x272xbf16>
    %c0_92 = arith.constant 0 : index
    %c32_93 = arith.constant 32 : index
    %153 = vector.load %arg15[%c0_92, %c32_93] : memref<32x320xf32, #tpu.memory_space<vmem>>, vector<32x272xf32>
    %154 = arith.truncf %153 : vector<32x272xf32> to vector<32x272xbf16>
    %c0_94 = arith.constant 0 : index
    %c17 = arith.constant 17 : index
    %155 = vector.load %arg15[%c0_94, %c17] : memref<32x320xf32, #tpu.memory_space<vmem>>, vector<32x272xf32>
    %156 = arith.truncf %155 : vector<32x272xf32> to vector<32x272xbf16>
    %157 = vector.broadcast %12 : vector<1x272xbf16> to vector<32x272xbf16>
    %158 = arith.mulf %156, %157 : vector<32x272xbf16>
    %c0_95 = arith.constant 0 : index
    %c16_96 = arith.constant 16 : index
    %159 = vector.load %arg15[%c0_95, %c16_96] : memref<32x320xf32, #tpu.memory_space<vmem>>, vector<32x272xf32>
    %160 = arith.truncf %159 : vector<32x272xf32> to vector<32x272xbf16>
    %161 = tpu.concatenate %152, %154, %158, %160 in 0 : vector<32x272xbf16>, vector<32x272xbf16>, vector<32x272xbf16>, vector<32x272xbf16> -> vector<128x272xbf16>
    %c0_97 = arith.constant 0 : index
    %c0_98 = arith.constant 0 : index
    %162 = vector.load %arg10[%c0_97, %c0_98] : memref<32x288xbf16, #tpu.memory_space<vmem>>, vector<32x128xbf16>
    %cst_99 = arith.constant dense<0.000000e+00> : vector<32x272xf32>
    %163 = tpu.matmul %162, %161, %cst_99 {dimension_numbers = #tpu.dot_dimension_numbers<[1], [0], [0], [1], [0, 0, 1, 1], [], []>} : vector<32x128xbf16>, vector<128x272xbf16>, vector<32x272xf32> -> vector<32x272xf32>
    %164 = vector.broadcast %117 : vector<32x1xf32> to vector<32x272xf32>
    %165 = arith.addf %163, %164 : vector<32x272xf32>
    %cst_100 = arith.constant 0.000000e+00 : f32
    %166 = vector.broadcast %cst_100 : f32 to vector<32x272xf32>
    %167 = arith.maximumf %165, %166 : vector<32x272xf32>
    %168 = arith.truncf %167 : vector<32x272xf32> to vector<32x272xbf16>
    %c0_101 = arith.constant 0 : index
    %c32_102 = arith.constant 32 : index
    %169 = vector.load %arg12[%c0_101, %c32_102] : memref<3x128xbf16, #tpu.memory_space<vmem>>, vector<3x32xbf16>
    %170 = vector.extract_strided_slice %168 {offsets = [0, 0], sizes = [32, 256], strides = [1, 1]} : vector<32x272xbf16> to vector<32x256xbf16>
    %cst_103 = arith.constant dense<0.000000e+00> : vector<3x256xf32>
    %171 = tpu.matmul %169, %170, %cst_103 {dimension_numbers = #tpu.dot_dimension_numbers<[1], [0], [0], [1], [0, 0, 1, 1], [], []>} : vector<3x32xbf16>, vector<32x256xbf16>, vector<3x256xf32> -> vector<3x256xf32>
    %172 = arith.addf %120, %171 : vector<3x256xf32>
    %c0_104 = arith.constant 0 : index
    %c96 = arith.constant 96 : index
    %173 = vector.load %arg12[%c0_104, %c96] : memref<3x128xbf16, #tpu.memory_space<vmem>>, vector<3x32xbf16>
    %174 = vector.extract_strided_slice %168 {offsets = [0, 16], sizes = [32, 256], strides = [1, 1]} : vector<32x272xbf16> to vector<32x256xbf16>
    %cst_105 = arith.constant dense<0.000000e+00> : vector<3x256xf32>
    %175 = tpu.matmul %173, %174, %cst_105 {dimension_numbers = #tpu.dot_dimension_numbers<[1], [0], [0], [1], [0, 0, 1, 1], [], []>} : vector<3x32xbf16>, vector<32x256xbf16>, vector<3x256xf32> -> vector<3x256xf32>
    %176 = arith.addf %120, %175 : vector<3x256xf32>
    %c0_106 = arith.constant 0 : index
    %c32_107 = arith.constant 32 : index
    %177 = vector.load %arg15[%c0_106, %c32_107] : memref<32x320xf32, #tpu.memory_space<vmem>>, vector<32x272xf32>
    %178 = arith.truncf %177 : vector<32x272xf32> to vector<32x272xbf16>
    %c0_108 = arith.constant 0 : index
    %c16_109 = arith.constant 16 : index
    %179 = vector.load %arg15[%c0_108, %c16_109] : memref<32x320xf32, #tpu.memory_space<vmem>>, vector<32x272xf32>
    %180 = arith.truncf %179 : vector<32x272xf32> to vector<32x272xbf16>
    %181 = tpu.concatenate %178, %180 in 0 : vector<32x272xbf16>, vector<32x272xbf16> -> vector<64x272xbf16>
    %c0_110 = arith.constant 0 : index
    %c128 = arith.constant 128 : index
    %182 = vector.load %arg10[%c0_110, %c128] : memref<32x288xbf16, #tpu.memory_space<vmem>>, vector<32x64xbf16>
    %cst_111 = arith.constant dense<0.000000e+00> : vector<32x272xf32>
    %183 = tpu.matmul %182, %181, %cst_111 {dimension_numbers = #tpu.dot_dimension_numbers<[1], [0], [0], [1], [0, 0, 1, 1], [], []>} : vector<32x64xbf16>, vector<64x272xbf16>, vector<32x272xf32> -> vector<32x272xf32>
    %184 = vector.broadcast %117 : vector<32x1xf32> to vector<32x272xf32>
    %185 = arith.addf %183, %184 : vector<32x272xf32>
    %cst_112 = arith.constant 0.000000e+00 : f32
    %186 = vector.broadcast %cst_112 : f32 to vector<32x272xf32>
    %187 = arith.maximumf %185, %186 : vector<32x272xf32>
    %188 = arith.truncf %187 : vector<32x272xf32> to vector<32x272xbf16>
    %c0_113 = arith.constant 0 : index
    %c32_114 = arith.constant 32 : index
    %189 = vector.load %arg12[%c0_113, %c32_114] : memref<3x128xbf16, #tpu.memory_space<vmem>>, vector<3x32xbf16>
    %190 = vector.extract_strided_slice %188 {offsets = [0, 0], sizes = [32, 256], strides = [1, 1]} : vector<32x272xbf16> to vector<32x256xbf16>
    %cst_115 = arith.constant dense<0.000000e+00> : vector<3x256xf32>
    %191 = tpu.matmul %189, %190, %cst_115 {dimension_numbers = #tpu.dot_dimension_numbers<[1], [0], [0], [1], [0, 0, 1, 1], [], []>} : vector<3x32xbf16>, vector<32x256xbf16>, vector<3x256xf32> -> vector<3x256xf32>
    %192 = arith.addf %144, %191 : vector<3x256xf32>
    %c0_116 = arith.constant 0 : index
    %c0_117 = arith.constant 0 : index
    %193 = vector.load %arg12[%c0_116, %c0_117] : memref<3x128xbf16, #tpu.memory_space<vmem>>, vector<3x32xbf16>
    %194 = vector.extract_strided_slice %188 {offsets = [0, 0], sizes = [32, 256], strides = [1, 1]} : vector<32x272xbf16> to vector<32x256xbf16>
    %cst_118 = arith.constant dense<0.000000e+00> : vector<3x256xf32>
    %195 = tpu.matmul %193, %194, %cst_118 {dimension_numbers = #tpu.dot_dimension_numbers<[1], [0], [0], [1], [0, 0, 1, 1], [], []>} : vector<3x32xbf16>, vector<32x256xbf16>, vector<3x256xf32> -> vector<3x256xf32>
    %196 = arith.addf %172, %195 : vector<3x256xf32>
    %c0_119 = arith.constant 0 : index
    %c96_120 = arith.constant 96 : index
    %197 = vector.load %arg12[%c0_119, %c96_120] : memref<3x128xbf16, #tpu.memory_space<vmem>>, vector<3x32xbf16>
    %198 = vector.extract_strided_slice %188 {offsets = [0, 16], sizes = [32, 256], strides = [1, 1]} : vector<32x272xbf16> to vector<32x256xbf16>
    %cst_121 = arith.constant dense<0.000000e+00> : vector<3x256xf32>
    %199 = tpu.matmul %197, %198, %cst_121 {dimension_numbers = #tpu.dot_dimension_numbers<[1], [0], [0], [1], [0, 0, 1, 1], [], []>} : vector<3x32xbf16>, vector<32x256xbf16>, vector<3x256xf32> -> vector<3x256xf32>
    %200 = arith.addf %148, %199 : vector<3x256xf32>
    %c0_122 = arith.constant 0 : index
    %c64_123 = arith.constant 64 : index
    %201 = vector.load %arg12[%c0_122, %c64_123] : memref<3x128xbf16, #tpu.memory_space<vmem>>, vector<3x32xbf16>
    %202 = vector.extract_strided_slice %188 {offsets = [0, 16], sizes = [32, 256], strides = [1, 1]} : vector<32x272xbf16> to vector<32x256xbf16>
    %cst_124 = arith.constant dense<0.000000e+00> : vector<3x256xf32>
    %203 = tpu.matmul %201, %202, %cst_124 {dimension_numbers = #tpu.dot_dimension_numbers<[1], [0], [0], [1], [0, 0, 1, 1], [], []>} : vector<3x32xbf16>, vector<32x256xbf16>, vector<3x256xf32> -> vector<3x256xf32>
    %204 = arith.addf %176, %203 : vector<3x256xf32>
    %c0_125 = arith.constant 0 : index
    %c32_126 = arith.constant 32 : index
    %205 = vector.load %arg15[%c0_125, %c32_126] : memref<32x320xf32, #tpu.memory_space<vmem>>, vector<32x256xf32>
    %206 = arith.truncf %205 : vector<32x256xf32> to vector<32x256xbf16>
    %c0_127 = arith.constant 0 : index
    %c31_128 = arith.constant 31 : index
    %207 = vector.load %arg15[%c0_127, %c31_128] : memref<32x320xf32, #tpu.memory_space<vmem>>, vector<32x256xf32>
    %208 = arith.truncf %207 : vector<32x256xf32> to vector<32x256xbf16>
    %209 = vector.extract_strided_slice %7 {offsets = [0, 0], sizes = [1, 256], strides = [1, 1]} : vector<1x272xbf16> to vector<1x256xbf16>
    %210 = vector.broadcast %209 : vector<1x256xbf16> to vector<32x256xbf16>
    %211 = arith.mulf %208, %210 : vector<32x256xbf16>
    %212 = tpu.concatenate %206, %211 in 0 : vector<32x256xbf16>, vector<32x256xbf16> -> vector<64x256xbf16>
    %c0_129 = arith.constant 0 : index
    %c192 = arith.constant 192 : index
    %213 = vector.load %arg10[%c0_129, %c192] : memref<32x288xbf16, #tpu.memory_space<vmem>>, vector<32x64xbf16>
    %cst_130 = arith.constant dense<0.000000e+00> : vector<32x256xf32>
    %214 = tpu.matmul %213, %212, %cst_130 {dimension_numbers = #tpu.dot_dimension_numbers<[1], [0], [0], [1], [0, 0, 1, 1], [], []>} : vector<32x64xbf16>, vector<64x256xbf16>, vector<32x256xf32> -> vector<32x256xf32>
    %215 = vector.broadcast %117 : vector<32x1xf32> to vector<32x256xf32>
    %216 = arith.addf %214, %215 : vector<32x256xf32>
    %cst_131 = arith.constant 0.000000e+00 : f32
    %217 = vector.broadcast %cst_131 : f32 to vector<32x256xf32>
    %218 = arith.maximumf %216, %217 : vector<32x256xf32>
    %219 = arith.truncf %218 : vector<32x256xf32> to vector<32x256xbf16>
    %c0_132 = arith.constant 0 : index
    %c64_133 = arith.constant 64 : index
    %220 = vector.load %arg12[%c0_132, %c64_133] : memref<3x128xbf16, #tpu.memory_space<vmem>>, vector<3x32xbf16>
    %cst_134 = arith.constant dense<0.000000e+00> : vector<3x256xf32>
    %221 = tpu.matmul %220, %219, %cst_134 {dimension_numbers = #tpu.dot_dimension_numbers<[1], [0], [0], [1], [0, 0, 1, 1], [], []>} : vector<3x32xbf16>, vector<32x256xbf16>, vector<3x256xf32> -> vector<3x256xf32>
    %222 = arith.addf %192, %221 : vector<3x256xf32>
    %c0_135 = arith.constant 0 : index
    %c0_136 = arith.constant 0 : index
    %223 = vector.load %arg12[%c0_135, %c0_136] : memref<3x128xbf16, #tpu.memory_space<vmem>>, vector<3x32xbf16>
    %cst_137 = arith.constant dense<0.000000e+00> : vector<3x256xf32>
    %224 = tpu.matmul %223, %219, %cst_137 {dimension_numbers = #tpu.dot_dimension_numbers<[1], [0], [0], [1], [0, 0, 1, 1], [], []>} : vector<3x32xbf16>, vector<32x256xbf16>, vector<3x256xf32> -> vector<3x256xf32>
    %225 = arith.addf %200, %224 : vector<3x256xf32>
    %c0_138 = arith.constant 0 : index
    %c33_139 = arith.constant 33 : index
    %226 = vector.load %arg15[%c0_138, %c33_139] : memref<32x320xf32, #tpu.memory_space<vmem>>, vector<32x256xf32>
    %227 = arith.truncf %226 : vector<32x256xf32> to vector<32x256xbf16>
    %228 = vector.extract_strided_slice %12 {offsets = [0, 0], sizes = [1, 256], strides = [1, 1]} : vector<1x272xbf16> to vector<1x256xbf16>
    %229 = vector.broadcast %228 : vector<1x256xbf16> to vector<32x256xbf16>
    %230 = arith.mulf %227, %229 : vector<32x256xbf16>
    %c0_140 = arith.constant 0 : index
    %c32_141 = arith.constant 32 : index
    %231 = vector.load %arg15[%c0_140, %c32_141] : memref<32x320xf32, #tpu.memory_space<vmem>>, vector<32x256xf32>
    %232 = arith.truncf %231 : vector<32x256xf32> to vector<32x256xbf16>
    %233 = tpu.concatenate %230, %232 in 0 : vector<32x256xbf16>, vector<32x256xbf16> -> vector<64x256xbf16>
    %c0_142 = arith.constant 0 : index
    %c192_143 = arith.constant 192 : index
    %234 = vector.load %arg10[%c0_142, %c192_143] : memref<32x288xbf16, #tpu.memory_space<vmem>>, vector<32x64xbf16>
    %cst_144 = arith.constant dense<0.000000e+00> : vector<32x256xf32>
    %235 = tpu.matmul %234, %233, %cst_144 {dimension_numbers = #tpu.dot_dimension_numbers<[1], [0], [0], [1], [0, 0, 1, 1], [], []>} : vector<32x64xbf16>, vector<64x256xbf16>, vector<32x256xf32> -> vector<32x256xf32>
    %236 = vector.broadcast %117 : vector<32x1xf32> to vector<32x256xf32>
    %237 = arith.addf %235, %236 : vector<32x256xf32>
    %cst_145 = arith.constant 0.000000e+00 : f32
    %238 = vector.broadcast %cst_145 : f32 to vector<32x256xf32>
    %239 = arith.maximumf %237, %238 : vector<32x256xf32>
    %240 = arith.truncf %239 : vector<32x256xf32> to vector<32x256xbf16>
    %c0_146 = arith.constant 0 : index
    %c96_147 = arith.constant 96 : index
    %241 = vector.load %arg12[%c0_146, %c96_147] : memref<3x128xbf16, #tpu.memory_space<vmem>>, vector<3x32xbf16>
    %cst_148 = arith.constant dense<0.000000e+00> : vector<3x256xf32>
    %242 = tpu.matmul %241, %240, %cst_148 {dimension_numbers = #tpu.dot_dimension_numbers<[1], [0], [0], [1], [0, 0, 1, 1], [], []>} : vector<3x32xbf16>, vector<32x256xbf16>, vector<3x256xf32> -> vector<3x256xf32>
    %243 = arith.addf %196, %242 : vector<3x256xf32>
    %c0_149 = arith.constant 0 : index
    %c32_150 = arith.constant 32 : index
    %244 = vector.load %arg12[%c0_149, %c32_150] : memref<3x128xbf16, #tpu.memory_space<vmem>>, vector<3x32xbf16>
    %cst_151 = arith.constant dense<0.000000e+00> : vector<3x256xf32>
    %245 = tpu.matmul %244, %240, %cst_151 {dimension_numbers = #tpu.dot_dimension_numbers<[1], [0], [0], [1], [0, 0, 1, 1], [], []>} : vector<3x32xbf16>, vector<32x256xbf16>, vector<3x256xf32> -> vector<3x256xf32>
    %246 = arith.addf %204, %245 : vector<3x256xf32>
    %c0_152 = arith.constant 0 : index
    %c32_153 = arith.constant 32 : index
    %247 = vector.load %arg15[%c0_152, %c32_153] : memref<32x320xf32, #tpu.memory_space<vmem>>, vector<32x256xf32>
    %248 = arith.truncf %247 : vector<32x256xf32> to vector<32x256xbf16>
    %c0_154 = arith.constant 0 : index
    %c256 = arith.constant 256 : index
    %249 = vector.load %arg10[%c0_154, %c256] : memref<32x288xbf16, #tpu.memory_space<vmem>>, vector<32x32xbf16>
    %cst_155 = arith.constant dense<0.000000e+00> : vector<32x256xf32>
    %250 = tpu.matmul %249, %248, %cst_155 {dimension_numbers = #tpu.dot_dimension_numbers<[1], [0], [0], [1], [0, 0, 1, 1], [], []>} : vector<32x32xbf16>, vector<32x256xbf16>, vector<32x256xf32> -> vector<32x256xf32>
    %251 = vector.broadcast %117 : vector<32x1xf32> to vector<32x256xf32>
    %252 = arith.addf %250, %251 : vector<32x256xf32>
    %cst_156 = arith.constant 0.000000e+00 : f32
    %253 = vector.broadcast %cst_156 : f32 to vector<32x256xf32>
    %254 = arith.maximumf %252, %253 : vector<32x256xf32>
    %255 = arith.truncf %254 : vector<32x256xf32> to vector<32x256xbf16>
    %c0_157 = arith.constant 0 : index
    %c96_158 = arith.constant 96 : index
    %256 = vector.load %arg12[%c0_157, %c96_158] : memref<3x128xbf16, #tpu.memory_space<vmem>>, vector<3x32xbf16>
    %cst_159 = arith.constant dense<0.000000e+00> : vector<3x256xf32>
    %257 = tpu.matmul %256, %255, %cst_159 {dimension_numbers = #tpu.dot_dimension_numbers<[1], [0], [0], [1], [0, 0, 1, 1], [], []>} : vector<3x32xbf16>, vector<32x256xbf16>, vector<3x256xf32> -> vector<3x256xf32>
    %258 = arith.addf %222, %257 : vector<3x256xf32>
    %c0_160 = arith.constant 0 : index
    %c64_161 = arith.constant 64 : index
    %259 = vector.load %arg12[%c0_160, %c64_161] : memref<3x128xbf16, #tpu.memory_space<vmem>>, vector<3x32xbf16>
    %cst_162 = arith.constant dense<0.000000e+00> : vector<3x256xf32>
    %260 = tpu.matmul %259, %255, %cst_162 {dimension_numbers = #tpu.dot_dimension_numbers<[1], [0], [0], [1], [0, 0, 1, 1], [], []>} : vector<3x32xbf16>, vector<32x256xbf16>, vector<3x256xf32> -> vector<3x256xf32>
    %261 = arith.addf %243, %260 : vector<3x256xf32>
    %c0_163 = arith.constant 0 : index
    %c32_164 = arith.constant 32 : index
    %262 = vector.load %arg12[%c0_163, %c32_164] : memref<3x128xbf16, #tpu.memory_space<vmem>>, vector<3x32xbf16>
    %cst_165 = arith.constant dense<0.000000e+00> : vector<3x256xf32>
    %263 = tpu.matmul %262, %255, %cst_165 {dimension_numbers = #tpu.dot_dimension_numbers<[1], [0], [0], [1], [0, 0, 1, 1], [], []>} : vector<3x32xbf16>, vector<32x256xbf16>, vector<3x256xf32> -> vector<3x256xf32>
    %264 = arith.addf %225, %263 : vector<3x256xf32>
    %c0_166 = arith.constant 0 : index
    %c0_167 = arith.constant 0 : index
    %265 = vector.load %arg12[%c0_166, %c0_167] : memref<3x128xbf16, #tpu.memory_space<vmem>>, vector<3x32xbf16>
    %cst_168 = arith.constant dense<0.000000e+00> : vector<3x256xf32>
    %266 = tpu.matmul %265, %255, %cst_168 {dimension_numbers = #tpu.dot_dimension_numbers<[1], [0], [0], [1], [0, 0, 1, 1], [], []>} : vector<3x32xbf16>, vector<32x256xbf16>, vector<3x256xf32> -> vector<3x256xf32>
    %267 = arith.addf %246, %266 : vector<3x256xf32>
    %cst_169 = arith.constant 0.000000e+00 : f32
    %268 = vector.broadcast %cst_169 : f32 to vector<3x256xf32>
    %269 = arith.subf %268, %258 : vector<3x256xf32>
    %270 = math.exp %269 : vector<3x256xf32>
    %cst_170 = arith.constant 1.000000e+00 : f32
    %271 = vector.broadcast %cst_170 : f32 to vector<3x256xf32>
    %272 = arith.addf %271, %270 : vector<3x256xf32>
    %273 = tpu.reciprocal %272 {approx = true} : vector<3x256xf32> -> vector<3x256xf32>
    %cst_171 = arith.constant 0.000000e+00 : f32
    %cst_172 = arith.constant 1.000000e+00 : f32
    %274 = vector.broadcast %cst_171 : f32 to vector<3x256xf32>
    %275 = arith.maximumf %274, %273 : vector<3x256xf32>
    %276 = vector.broadcast %cst_172 : f32 to vector<3x256xf32>
    %277 = arith.minimumf %276, %275 : vector<3x256xf32>
    %c0_173 = arith.constant 0 : index
    %c0_174 = arith.constant 0 : index
    %c0_175 = arith.constant 0 : index
    %278 = vector.load %arg14[%c0_173, %c0_174, %c0_175] : memref<1x12x256xf32, #tpu.memory_space<vmem>>, vector<1x3x256xf32>
    %279 = vector.shape_cast %278 : vector<1x3x256xf32> to vector<3x256xf32>
    %280 = vector.shape_cast %277 : vector<3x256xf32> to vector<1x3x256xf32>
    tpu.vector_store %arg14[%c0_173, %c0_174, %c0_175], %280 {strides = array<i32>} : memref<1x12x256xf32, #tpu.memory_space<vmem>>, vector<1x3x256xf32>,
    %cst_176 = arith.constant 0.000000e+00 : f32
    %281 = vector.broadcast %cst_176 : f32 to vector<3x256xf32>
    %282 = arith.subf %281, %261 : vector<3x256xf32>
    %283 = math.exp %282 : vector<3x256xf32>
    %cst_177 = arith.constant 1.000000e+00 : f32
    %284 = vector.broadcast %cst_177 : f32 to vector<3x256xf32>
    %285 = arith.addf %284, %283 : vector<3x256xf32>
    %286 = tpu.reciprocal %285 {approx = true} : vector<3x256xf32> -> vector<3x256xf32>
    %cst_178 = arith.constant 0.000000e+00 : f32
    %cst_179 = arith.constant 1.000000e+00 : f32
    %287 = vector.broadcast %cst_178 : f32 to vector<3x256xf32>
    %288 = arith.maximumf %287, %286 : vector<3x256xf32>
    %289 = vector.broadcast %cst_179 : f32 to vector<3x256xf32>
    %290 = arith.minimumf %289, %288 : vector<3x256xf32>
    %c0_180 = arith.constant 0 : index
    %c3_181 = arith.constant 3 : index
    %c0_182 = arith.constant 0 : index
    %291 = vector.load %arg14[%c0_180, %c3_181, %c0_182] : memref<1x12x256xf32, #tpu.memory_space<vmem>>, vector<1x3x256xf32>
    %292 = vector.shape_cast %291 : vector<1x3x256xf32> to vector<3x256xf32>
    %293 = vector.shape_cast %290 : vector<3x256xf32> to vector<1x3x256xf32>
    tpu.vector_store %arg14[%c0_180, %c3_181, %c0_182], %293 {strides = array<i32>} : memref<1x12x256xf32, #tpu.memory_space<vmem>>, vector<1x3x256xf32>,
    %cst_183 = arith.constant 0.000000e+00 : f32
    %294 = vector.broadcast %cst_183 : f32 to vector<3x256xf32>
    %295 = arith.subf %294, %264 : vector<3x256xf32>
    %296 = math.exp %295 : vector<3x256xf32>
    %cst_184 = arith.constant 1.000000e+00 : f32
    %297 = vector.broadcast %cst_184 : f32 to vector<3x256xf32>
    %298 = arith.addf %297, %296 : vector<3x256xf32>
    %299 = tpu.reciprocal %298 {approx = true} : vector<3x256xf32> -> vector<3x256xf32>
    %cst_185 = arith.constant 0.000000e+00 : f32
    %cst_186 = arith.constant 1.000000e+00 : f32
    %300 = vector.broadcast %cst_185 : f32 to vector<3x256xf32>
    %301 = arith.maximumf %300, %299 : vector<3x256xf32>
    %302 = vector.broadcast %cst_186 : f32 to vector<3x256xf32>
    %303 = arith.minimumf %302, %301 : vector<3x256xf32>
    %c0_187 = arith.constant 0 : index
    %c6 = arith.constant 6 : index
    %c0_188 = arith.constant 0 : index
    %304 = vector.load %arg14[%c0_187, %c6, %c0_188] : memref<1x12x256xf32, #tpu.memory_space<vmem>>, vector<1x3x256xf32>
    %305 = vector.shape_cast %304 : vector<1x3x256xf32> to vector<3x256xf32>
    %306 = vector.shape_cast %303 : vector<3x256xf32> to vector<1x3x256xf32>
    tpu.vector_store %arg14[%c0_187, %c6, %c0_188], %306 {strides = array<i32>} : memref<1x12x256xf32, #tpu.memory_space<vmem>>, vector<1x3x256xf32>,
    %cst_189 = arith.constant 0.000000e+00 : f32
    %307 = vector.broadcast %cst_189 : f32 to vector<3x256xf32>
    %308 = arith.subf %307, %267 : vector<3x256xf32>
    %309 = math.exp %308 : vector<3x256xf32>
    %cst_190 = arith.constant 1.000000e+00 : f32
    %310 = vector.broadcast %cst_190 : f32 to vector<3x256xf32>
    %311 = arith.addf %310, %309 : vector<3x256xf32>
    %312 = tpu.reciprocal %311 {approx = true} : vector<3x256xf32> -> vector<3x256xf32>
    %cst_191 = arith.constant 0.000000e+00 : f32
    %cst_192 = arith.constant 1.000000e+00 : f32
    %313 = vector.broadcast %cst_191 : f32 to vector<3x256xf32>
    %314 = arith.maximumf %313, %312 : vector<3x256xf32>
    %315 = vector.broadcast %cst_192 : f32 to vector<3x256xf32>
    %316 = arith.minimumf %315, %314 : vector<3x256xf32>
    %c0_193 = arith.constant 0 : index
    %c9 = arith.constant 9 : index
    %c0_194 = arith.constant 0 : index
    %317 = vector.load %arg14[%c0_193, %c9, %c0_194] : memref<1x12x256xf32, #tpu.memory_space<vmem>>, vector<1x3x256xf32>
    %318 = vector.shape_cast %317 : vector<1x3x256xf32> to vector<3x256xf32>
    %319 = vector.shape_cast %316 : vector<3x256xf32> to vector<1x3x256xf32>
    tpu.vector_store %arg14[%c0_193, %c9, %c0_194], %319 {strides = array<i32>} : memref<1x12x256xf32, #tpu.memory_space<vmem>>, vector<1x3x256xf32>,
    return
  }
  func.func @transform_0(%arg0: i32) -> (i32, i32, i32) {
    %c0_i32 = arith.constant 0 : i32
    %c0_i32_0 = arith.constant 0 : i32
    %c0_i32_1 = arith.constant 0 : i32
    return %arg0, %c0_i32, %c0_i32_0 : i32, i32, i32
  }
  func.func @transform_1(%arg0: i32) -> (i32, i32) {
    %c0_i32 = arith.constant 0 : i32
    %c0_i32_0 = arith.constant 0 : i32
    %c0_i32_1 = arith.constant 0 : i32
    return %c0_i32, %c0_i32_0 : i32, i32
  }
  func.func @transform_2(%arg0: i32) -> (i32, i32) {
    %c0_i32 = arith.constant 0 : i32
    %c0_i32_0 = arith.constant 0 : i32
    %c0_i32_1 = arith.constant 0 : i32
    return %c0_i32, %c0_i32_0 : i32, i32
  }
  func.func @transform_3(%arg0: i32) -> (i32, i32, i32) {
    %c0_i32 = arith.constant 0 : i32
    %c0_i32_0 = arith.constant 0 : i32
    %c0_i32_1 = arith.constant 0 : i32
    %c0_i32_2 = arith.constant 0 : i32
    return %c0_i32, %c0_i32_0, %c0_i32_1 : i32, i32, i32
  }
  func.func @transform_4(%arg0: i32) -> (i32, i32) {
    %c0_i32 = arith.constant 0 : i32
    %c0_i32_0 = arith.constant 0 : i32
    %c0_i32_1 = arith.constant 0 : i32
    return %c0_i32, %c0_i32_0 : i32, i32
  }
  func.func @transform_5(%arg0: i32) -> (i32, i32) {
    %c0_i32 = arith.constant 0 : i32
    %c0_i32_0 = arith.constant 0 : i32
    %c0_i32_1 = arith.constant 0 : i32
    return %c0_i32, %c0_i32_0 : i32, i32
  }
  func.func @transform_6(%arg0: i32) -> (i32, i32) {
    %c0_i32 = arith.constant 0 : i32
    %c0_i32_0 = arith.constant 0 : i32
    %c0_i32_1 = arith.constant 0 : i32
    return %c0_i32, %c0_i32_0 : i32, i32
  }
  func.func @transform_7(%arg0: i32) -> (i32, i32) {
    %c0_i32 = arith.constant 0 : i32
    %c0_i32_0 = arith.constant 0 : i32
    %c0_i32_1 = arith.constant 0 : i32
    return %c0_i32, %c0_i32_0 : i32, i32
  }
  func.func @transform_8(%arg0: i32) -> (i32, i32) {
    %c0_i32 = arith.constant 0 : i32
    %c0_i32_0 = arith.constant 0 : i32
    %c0_i32_1 = arith.constant 0 : i32
    return %c0_i32, %c0_i32_0 : i32, i32
  }
  func.func @transform_9(%arg0: i32) -> (i32, i32) {
    %c0_i32 = arith.constant 0 : i32
    %c0_i32_0 = arith.constant 0 : i32
    %c0_i32_1 = arith.constant 0 : i32
    return %c0_i32, %c0_i32_0 : i32, i32
  }
  func.func @transform_10(%arg0: i32) -> (i32, i32) {
    %c0_i32 = arith.constant 0 : i32
    %c0_i32_0 = arith.constant 0 : i32
    %c0_i32_1 = arith.constant 0 : i32
    return %c0_i32, %c0_i32_0 : i32, i32
  }
  func.func @transform_11(%arg0: i32) -> (i32, i32) {
    %c0_i32 = arith.constant 0 : i32
    %c0_i32_0 = arith.constant 0 : i32
    %c0_i32_1 = arith.constant 0 : i32
    return %c0_i32, %c0_i32_0 : i32, i32
  }
  func.func @transform_12(%arg0: i32) -> (i32, i32) {
    %c0_i32 = arith.constant 0 : i32
    %c0_i32_0 = arith.constant 0 : i32
    %c0_i32_1 = arith.constant 0 : i32
    return %c0_i32, %c0_i32_0 : i32, i32
  }
  func.func @transform_13(%arg0: i32) -> (i32, i32, i32) {
    %c0_i32 = arith.constant 0 : i32
    %c0_i32_0 = arith.constant 0 : i32
    %c0_i32_1 = arith.constant 0 : i32
    return %arg0, %c0_i32, %c0_i32_0 : i32, i32, i32
  }
}

</mosaic_0001>

<llo_original>
// kernel: decoder_forward.1
$region0: #{decoder_forward.1}
  #allocation0 [shape = 'u32[]', space=smem, size = 0x4, offset = 0x4, fixed_abs, tag = 'smem constant byte address 0x4 - core index']
  #allocation1 [shape = 'u32[144,128]{1,0:T(1,128)}', space=vmem, size = 0x12000, scoped, tag = 'internal scratch']
  #allocation2 [shape = 'f32[32,320]{1,0:T(8,128)}', space=vmem, size = 0xc000, scoped, tag = 'scratch operand']
  %s0 = inlined_call_operand.hbm [shape: f32[2,1,32], index: 0, kind: input, shape index: {}]
  %s1 = inlined_call_operand.hbm [shape: bf16[32,128], index: 1, kind: input, shape index: {}]
  %s2 = inlined_call_operand.hbm [shape: f32[1,128], index: 2, kind: input, shape index: {}]
  %s3 = inlined_call_operand.hbm [shape: bf16[4,1024,256], index: 3, kind: input, shape index: {}]
  %s4 = inlined_call_operand.hbm [shape: f32[32,256], index: 4, kind: input, shape index: {}]
  %s5 = inlined_call_operand.hbm [shape: bf16[32,128], index: 5, kind: input, shape index: {}]
  %s6 = inlined_call_operand.hbm [shape: f32[32,1], index: 6, kind: input, shape index: {}]
  %s7 = inlined_call_operand.hbm [shape: bf16[32,128], index: 7, kind: input, shape index: {}]
  %s8 = inlined_call_operand.hbm [shape: f32[32,1], index: 8, kind: input, shape index: {}]
  %s9 = inlined_call_operand.hbm [shape: bf16[32,288], index: 9, kind: input, shape index: {}]
  %s10 = inlined_call_operand.hbm [shape: f32[32,1], index: 10, kind: input, shape index: {}]
  %s11 = inlined_call_operand.hbm [shape: bf16[3,128], index: 11, kind: input, shape index: {}]
  %s12 = inlined_call_operand.hbm [shape: f32[3,1], index: 12, kind: input, shape index: {}]
  %s13 = inlined_call_operand.vmem [shape: f32[2,12,256], index: 13, kind: output, shape index: {}]
  %s14 = sld [smem:[#allocation0]]
  $region137: #{decoder_forward.1} parent=0
    _
  %s16 = ssub.s32 1, %s14
  %s17 = scalar_select 0, %s16, %s14
  $region1: #{decoder_forward.1} parent=0
    #allocation3 [shape = 'u8[1024]{0}', space=vmem, size = 0x400, scoped, tag = 'input window, operand 0']
    #allocation4 [shape = 's32[2]{0}', space=sflag, size = 0x8, scoped, tag = 'scoped memory for decoder_forward.1']
    #allocation5 [shape = 'u8[8192]{0}', space=vmem, size = 0x2000, scoped, tag = 'input window, operand 1, single buffered']
    #allocation6 [shape = 's32[1]{0}', space=sflag, size = 0x4, scoped, tag = 'scoped memory for decoder_forward.1']
    #allocation7 [shape = 'u8[512]{0}', space=vmem, size = 0x400, scoped, tag = 'input window, operand 2, single buffered']
    #allocation8 [shape = 'u8[2097152]{0}', space=vmem, size = 0x200000, scoped, tag = 'input window, operand 3, single buffered']
    #allocation9 [shape = 's32[1]{0}', space=sflag, size = 0x4, scoped, tag = 'scoped memory for decoder_forward.1']
    #allocation10 [shape = 'u8[32768]{0}', space=vmem, size = 0x8000, scoped, tag = 'input window, operand 4, single buffered']
    #allocation11 [shape = 'u8[8192]{0}', space=vmem, size = 0x2000, scoped, tag = 'input window, operand 5, single buffered']
    #allocation12 [shape = 's32[1]{0}', space=sflag, size = 0x4, scoped, tag = 'scoped memory for decoder_forward.1']
    #allocation13 [shape = 'u8[16384]{0}', space=vmem, size = 0x4000, scoped, tag = 'input window, operand 6, single buffered']
    #allocation14 [shape = 'u8[8192]{0}', space=vmem, size = 0x2000, scoped, tag = 'input window, operand 7, single buffered']
    #allocation15 [shape = 's32[1]{0}', space=sflag, size = 0x4, scoped, tag = 'scoped memory for decoder_forward.1']
    #allocation16 [shape = 'u8[16384]{0}', space=vmem, size = 0x4000, scoped, tag = 'input window, operand 8, single buffered']
    #allocation17 [shape = 'u8[24576]{0}', space=vmem, size = 0x6000, scoped, tag = 'input window, operand 9, single buffered']
    #allocation18 [shape = 's32[1]{0}', space=sflag, size = 0x4, scoped, tag = 'scoped memory for decoder_forward.1']
    #allocation19 [shape = 'u8[16384]{0}', space=vmem, size = 0x4000, scoped, tag = 'input window, operand 10, single buffered']
    #allocation20 [shape = 'u8[1024]{0}', space=vmem, size = 0x400, scoped, tag = 'input window, operand 11, single buffered']
    #allocation21 [shape = 's32[1]{0}', space=sflag, size = 0x4, scoped, tag = 'scoped memory for decoder_forward.1']
    #allocation22 [shape = 'u8[2048]{0}', space=vmem, size = 0x800, scoped, tag = 'input window, operand 12, single buffered']
    %18 = vsyncpa [#allocation4], 0
    %s19 = scalar_lea.sflag [#allocation4], 1
    %20 = vsyncpa %s19, 0
    %21 = vsyncpa [#allocation6], 0
    %22 = vsyncpa [#allocation9], 0
    %23 = vsyncpa [#allocation12], 0
    %24 = vsyncpa [#allocation15], 0
    %25 = vsyncpa [#allocation18], 0
    %26 = vsyncpa [#allocation21], 0
    loop: start=0, step=1, limit=4
    $region2: #{decoder_forward.1} parent=1 // loop_pre_header
      _
    $region3: #{decoder_forward.1} parent=1 // loop_header
      %s28 = sphi 0, %s32
      %p29 = scmp.ge.s32.totalorder %s28, 4
      %s38 = sphi 0, %s40
      %s41 = sphi 0, %s38
      %s42 = sphi 0, %s41
      %s58 = sphi 0, %s42
      %s62 = sphi 0, %s62
      %s64 = sphi 0, %s62
      %s65 = sphi 0, %s64
      %s79 = sphi 0, %s65
      %s83 = sphi 0, %s83
      %s85 = sphi 0, %s83
      %s86 = sphi 0, %s85
      %s100 = sphi 0, %s86
      %s104 = sphi 0, %s104
      %s106 = sphi 0, %s104
      %s107 = sphi 0, %s106
      %s121 = sphi 0, %s107
      %s125 = sphi 0, %s125
      %s127 = sphi 0, %s125
      %s128 = sphi 0, %s127
      %s142 = sphi 0, %s128
      %s146 = sphi 0, %s146
      %s148 = sphi 0, %s146
      %s149 = sphi 0, %s148
      %s163 = sphi 0, %s149
      %s167 = sphi 0, %s167
      %s169 = sphi 0, %s167
      %s170 = sphi 0, %s169
      %s184 = sphi 0, %s170
      %s188 = sphi 0, %s188
      %s190 = sphi 0, %s188
      %s191 = sphi 0, %s190
      %s205 = sphi 0, %s191
      %s209 = sphi 0, %s209
      %s211 = sphi 0, %s209
      %s212 = sphi 0, %s211
      %s226 = sphi 0, %s212
      %s230 = sphi 0, %s230
      %s232 = sphi 0, %s230
      %s233 = sphi 0, %s232
      %s247 = sphi 0, %s233
      %s251 = sphi 0, %s251
      %s253 = sphi 0, %s251
      %s254 = sphi 0, %s253
      %s268 = sphi 0, %s254
      %s272 = sphi 0, %s272
      %s274 = sphi 0, %s272
      %s275 = sphi 0, %s274
      %s289 = sphi 0, %s275
      %s293 = sphi 0, %s293
      %s295 = sphi 0, %s293
      %s296 = sphi 0, %s295
      %s310 = sphi 0, %s296
      %s316 = sphi 0, %s318
      %s319 = sphi 0, %s316
      %s320 = sphi 0, %s319
      %s336 = sphi 0, %s320
    $region4: #{decoder_forward.1} parent=1 // loop_header_branch
      %31 = sbr.rel (%p29) target = $region8
    $region5: #{decoder_forward.1} parent=1 // loop_body
      %s33 = ssub.s32 %s28, 1
      %s34 = ssub.s32 %s28, 2
      %s35 = sadd.s32 %s28, 1
      %s36 = ssub.s32 %s28, %s35
      %p37 = scmp.eq.s32.totalorder %s36, 0
      %s39 = sadd.s32 %s38, 1
      %s40 = scalar_select %p37, %s38, %s39
      %p43 = pneg %p37
      %p44 = scmp.eq.s32.totalorder %s28, 1
      %p45 = por %p43, %p44
      %p46 = scmp.ne.s32.totalorder %s38, %s41
      %p47 = scmp.eq.s32.totalorder %s28, 0
      %p48 = por %p46, %p47
      %p49 = scmp.ne.s32.totalorder %s38, %s41
      %p50 = scmp.eq.s32.totalorder %s33, 1
      %p51 = por %p49, %p50
      %p52 = scmp.ne.s32.totalorder %s41, %s42
      %p53 = scmp.eq.s32.totalorder %s33, 0
      %p54 = por %p52, %p53
      %p55 = scmp.ne.s32.totalorder %s41, %s42
      %p56 = scmp.eq.s32.totalorder %s34, 1
      %p57 = por %p55, %p56
      %p59 = scmp.ne.s32.totalorder %s42, %s58
      %p60 = scmp.eq.s32.totalorder %s34, 0
      %p61 = por %p59, %p60
      %s63 = sadd.s32 %s62, 1
      %p66 = scmp.eq.s32.totalorder %s28, 1
      %p67 = scmp.ne.s32.totalorder %s62, %s64
      %p68 = scmp.eq.s32.totalorder %s28, 0
      %p69 = por %p67, %p68
      %p70 = scmp.ne.s32.totalorder %s62, %s64
      %p71 = scmp.eq.s32.totalorder %s33, 1
      %p72 = por %p70, %p71
      %p73 = scmp.ne.s32.totalorder %s64, %s65
      %p74 = scmp.eq.s32.totalorder %s33, 0
      %p75 = por %p73, %p74
      %p76 = scmp.ne.s32.totalorder %s64, %s65
      %p77 = scmp.eq.s32.totalorder %s34, 1
      %p78 = por %p76, %p77
      %p80 = scmp.ne.s32.totalorder %s65, %s79
      %p81 = scmp.eq.s32.totalorder %s34, 0
      %p82 = por %p80, %p81
      %s84 = sadd.s32 %s83, 1
      %p87 = scmp.eq.s32.totalorder %s28, 1
      %p88 = scmp.ne.s32.totalorder %s83, %s85
      %p89 = scmp.eq.s32.totalorder %s28, 0
      %p90 = por %p88, %p89
      %p91 = scmp.ne.s32.totalorder %s83, %s85
      %p92 = scmp.eq.s32.totalorder %s33, 1
      %p93 = por %p91, %p92
      %p94 = scmp.ne.s32.totalorder %s85, %s86
      %p95 = scmp.eq.s32.totalorder %s33, 0
      %p96 = por %p94, %p95
      %p97 = scmp.ne.s32.totalorder %s85, %s86
      %p98 = scmp.eq.s32.totalorder %s34, 1
      %p99 = por %p97, %p98
      %p101 = scmp.ne.s32.totalorder %s86, %s100
      %p102 = scmp.eq.s32.totalorder %s34, 0
      %p103 = por %p101, %p102
      %s105 = sadd.s32 %s104, 1
      %p108 = scmp.eq.s32.totalorder %s28, 1
      %p109 = scmp.ne.s32.totalorder %s104, %s106
      %p110 = scmp.eq.s32.totalorder %s28, 0
      %p111 = por %p109, %p110
      %p112 = scmp.ne.s32.totalorder %s104, %s106
      %p113 = scmp.eq.s32.totalorder %s33, 1
      %p114 = por %p112, %p113
      %p115 = scmp.ne.s32.totalorder %s106, %s107
      %p116 = scmp.eq.s32.totalorder %s33, 0
      %p117 = por %p115, %p116
      %p118 = scmp.ne.s32.totalorder %s106, %s107
      %p119 = scmp.eq.s32.totalorder %s34, 1
      %p120 = por %p118, %p119
      %p122 = scmp.ne.s32.totalorder %s107, %s121
      %p123 = scmp.eq.s32.totalorder %s34, 0
      %p124 = por %p122, %p123
      %s126 = sadd.s32 %s125, 1
      %p129 = scmp.eq.s32.totalorder %s28, 1
      %p130 = scmp.ne.s32.totalorder %s125, %s127
      %p131 = scmp.eq.s32.totalorder %s28, 0
      %p132 = por %p130, %p131
      %p133 = scmp.ne.s32.totalorder %s125, %s127
      %p134 = scmp.eq.s32.totalorder %s33, 1
      %p135 = por %p133, %p134
      %p136 = scmp.ne.s32.totalorder %s127, %s128
      %p137 = scmp.eq.s32.totalorder %s33, 0
      %p138 = por %p136, %p137
      %p139 = scmp.ne.s32.totalorder %s127, %s128
      %p140 = scmp.eq.s32.totalorder %s34, 1
      %p141 = por %p139, %p140
      %p143 = scmp.ne.s32.totalorder %s128, %s142
      %p144 = scmp.eq.s32.totalorder %s34, 0
      %p145 = por %p143, %p144
      %s147 = sadd.s32 %s146, 1
      %p150 = scmp.eq.s32.totalorder %s28, 1
      %p151 = scmp.ne.s32.totalorder %s146, %s148
      %p152 = scmp.eq.s32.totalorder %s28, 0
      %p153 = por %p151, %p152
      %p154 = scmp.ne.s32.totalorder %s146, %s148
      %p155 = scmp.eq.s32.totalorder %s33, 1
      %p156 = por %p154, %p155
      %p157 = scmp.ne.s32.totalorder %s148, %s149
      %p158 = scmp.eq.s32.totalorder %s33, 0
      %p159 = por %p157, %p158
      %p160 = scmp.ne.s32.totalorder %s148, %s149
      %p161 = scmp.eq.s32.totalorder %s34, 1
      %p162 = por %p160, %p161
      %p164 = scmp.ne.s32.totalorder %s149, %s163
      %p165 = scmp.eq.s32.totalorder %s34, 0
      %p166 = por %p164, %p165
      %s168 = sadd.s32 %s167, 1
      %p171 = scmp.eq.s32.totalorder %s28, 1
      %p172 = scmp.ne.s32.totalorder %s167, %s169
      %p173 = scmp.eq.s32.totalorder %s28, 0
      %p174 = por %p172, %p173
      %p175 = scmp.ne.s32.totalorder %s167, %s169
      %p176 = scmp.eq.s32.totalorder %s33, 1
      %p177 = por %p175, %p176
      %p178 = scmp.ne.s32.totalorder %s169, %s170
      %p179 = scmp.eq.s32.totalorder %s33, 0
      %p180 = por %p178, %p179
      %p181 = scmp.ne.s32.totalorder %s169, %s170
      %p182 = scmp.eq.s32.totalorder %s34, 1
      %p183 = por %p181, %p182
      %p185 = scmp.ne.s32.totalorder %s170, %s184
      %p186 = scmp.eq.s32.totalorder %s34, 0
      %p187 = por %p185, %p186
      %s189 = sadd.s32 %s188, 1
      %p192 = scmp.eq.s32.totalorder %s28, 1
      %p193 = scmp.ne.s32.totalorder %s188, %s190
      %p194 = scmp.eq.s32.totalorder %s28, 0
      %p195 = por %p193, %p194
      %p196 = scmp.ne.s32.totalorder %s188, %s190
      %p197 = scmp.eq.s32.totalorder %s33, 1
      %p198 = por %p196, %p197
      %p199 = scmp.ne.s32.totalorder %s190, %s191
      %p200 = scmp.eq.s32.totalorder %s33, 0
      %p201 = por %p199, %p200
      %p202 = scmp.ne.s32.totalorder %s190, %s191
      %p203 = scmp.eq.s32.totalorder %s34, 1
      %p204 = por %p202, %p203
      %p206 = scmp.ne.s32.totalorder %s191, %s205
      %p207 = scmp.eq.s32.totalorder %s34, 0
      %p208 = por %p206, %p207
      %s210 = sadd.s32 %s209, 1
      %p213 = scmp.eq.s32.totalorder %s28, 1
      %p214 = scmp.ne.s32.totalorder %s209, %s211
      %p215 = scmp.eq.s32.totalorder %s28, 0
      %p216 = por %p214, %p215
      %p217 = scmp.ne.s32.totalorder %s209, %s211
      %p218 = scmp.eq.s32.totalorder %s33, 1
      %p219 = por %p217, %p218
      %p220 = scmp.ne.s32.totalorder %s211, %s212
      %p221 = scmp.eq.s32.totalorder %s33, 0
      %p222 = por %p220, %p221
      %p223 = scmp.ne.s32.totalorder %s211, %s212
      %p224 = scmp.eq.s32.totalorder %s34, 1
      %p225 = por %p223, %p224
      %p227 = scmp.ne.s32.totalorder %s212, %s226
      %p228 = scmp.eq.s32.totalorder %s34, 0
      %p229 = por %p227, %p228
      %s231 = sadd.s32 %s230, 1
      %p234 = scmp.eq.s32.totalorder %s28, 1
      %p235 = scmp.ne.s32.totalorder %s230, %s232
      %p236 = scmp.eq.s32.totalorder %s28, 0
      %p237 = por %p235, %p236
      %p238 = scmp.ne.s32.totalorder %s230, %s232
      %p239 = scmp.eq.s32.totalorder %s33, 1
      %p240 = por %p238, %p239
      %p241 = scmp.ne.s32.totalorder %s232, %s233
      %p242 = scmp.eq.s32.totalorder %s33, 0
      %p243 = por %p241, %p242
      %p244 = scmp.ne.s32.totalorder %s232, %s233
      %p245 = scmp.eq.s32.totalorder %s34, 1
      %p246 = por %p244, %p245
      %p248 = scmp.ne.s32.totalorder %s233, %s247
      %p249 = scmp.eq.s32.totalorder %s34, 0
      %p250 = por %p248, %p249
      %s252 = sadd.s32 %s251, 1
      %p255 = scmp.eq.s32.totalorder %s28, 1
      %p256 = scmp.ne.s32.totalorder %s251, %s253
      %p257 = scmp.eq.s32.totalorder %s28, 0
      %p258 = por %p256, %p257
      %p259 = scmp.ne.s32.totalorder %s251, %s253
      %p260 = scmp.eq.s32.totalorder %s33, 1
      %p261 = por %p259, %p260
      %p262 = scmp.ne.s32.totalorder %s253, %s254
      %p263 = scmp.eq.s32.totalorder %s33, 0
      %p264 = por %p262, %p263
      %p265 = scmp.ne.s32.totalorder %s253, %s254
      %p266 = scmp.eq.s32.totalorder %s34, 1
      %p267 = por %p265, %p266
      %p269 = scmp.ne.s32.totalorder %s254, %s268
      %p270 = scmp.eq.s32.totalorder %s34, 0
      %p271 = por %p269, %p270
      %s273 = sadd.s32 %s272, 1
      %p276 = scmp.eq.s32.totalorder %s28, 1
      %p277 = scmp.ne.s32.totalorder %s272, %s274
      %p278 = scmp.eq.s32.totalorder %s28, 0
      %p279 = por %p277, %p278
      %p280 = scmp.ne.s32.totalorder %s272, %s274
      %p281 = scmp.eq.s32.totalorder %s33, 1
      %p282 = por %p280, %p281
      %p283 = scmp.ne.s32.totalorder %s274, %s275
      %p284 = scmp.eq.s32.totalorder %s33, 0
      %p285 = por %p283, %p284
      %p286 = scmp.ne.s32.totalorder %s274, %s275
      %p287 = scmp.eq.s32.totalorder %s34, 1
      %p288 = por %p286, %p287
      %p290 = scmp.ne.s32.totalorder %s275, %s289
      %p291 = scmp.eq.s32.totalorder %s34, 0
      %p292 = por %p290, %p291
      %s294 = sadd.s32 %s293, 1
      %p297 = scmp.eq.s32.totalorder %s28, 1
      %p298 = scmp.ne.s32.totalorder %s293, %s295
      %p299 = scmp.eq.s32.totalorder %s28, 0
      %p300 = por %p298, %p299
      %p301 = scmp.ne.s32.totalorder %s293, %s295
      %p302 = scmp.eq.s32.totalorder %s33, 1
      %p303 = por %p301, %p302
      %p304 = scmp.ne.s32.totalorder %s295, %s296
      %p305 = scmp.eq.s32.totalorder %s33, 0
      %p306 = por %p304, %p305
      %p307 = scmp.ne.s32.totalorder %s295, %s296
      %p308 = scmp.eq.s32.totalorder %s34, 1
      %p309 = por %p307, %p308
      %p311 = scmp.ne.s32.totalorder %s296, %s310
      %p312 = scmp.eq.s32.totalorder %s34, 0
      %p313 = por %p311, %p312
      %s314 = ssub.s32 %s28, %s35
      %p315 = scmp.eq.s32.totalorder %s314, 0
      %s317 = sadd.s32 %s316, 1
      %s318 = scalar_select %p315, %s316, %s317
      %p321 = pneg %p315
      %p322 = scmp.eq.s32.totalorder %s28, 1
      %p323 = por %p321, %p322
      %p324 = scmp.ne.s32.totalorder %s316, %s319
      %p325 = scmp.eq.s32.totalorder %s28, 0
      %p326 = por %p324, %p325
      %p327 = scmp.ne.s32.totalorder %s316, %s319
      %p328 = scmp.eq.s32.totalorder %s33, 1
      %p329 = por %p327, %p328
      %p330 = scmp.ne.s32.totalorder %s319, %s320
      %p331 = scmp.eq.s32.totalorder %s33, 0
      %p332 = por %p330, %p331
      %p333 = scmp.ne.s32.totalorder %s319, %s320
      %p334 = scmp.eq.s32.totalorder %s34, 1
      %p335 = por %p333, %p334
      %p337 = scmp.ne.s32.totalorder %s320, %s336
      %p338 = scmp.eq.s32.totalorder %s34, 0
      %p339 = por %p337, %p338
      %p340 = scmp.le.s32.totalorder 1, %s28
      %p341 = scmp.lt.s32.totalorder %s28, 3
      %p342 = pnand %p340, %p341
      %p343 = pneg %p342
      // Predicated region
      $region9: #{decoder_forward.1} parent=5 // pred_check
        _
      $region10: #{decoder_forward.1} parent=5 // pred_check_branch
        %345 = sbr.rel (%p342) target = $region12
      $region11: #{decoder_forward.1} parent=5 // pred_region
        %s346 = ssub.s32 %s28, 1
        // Predicated region
        $region13: #{decoder_forward.1} parent=11 // pred_check
          %p347 = pneg %p75
        $region14: #{decoder_forward.1} parent=11 // pred_check_branch
          %349 = sbr.rel (%p347) target = $region16
        $region15: #{decoder_forward.1} parent=11 // pred_region
          %s351 = ssub.s32 256, 256
          %352 = vsyncadd [#allocation6], %s351
          %s353 = sshll.u32 [#allocation5], 4
          %s354 = int_to_ptr.vmem [resolvable:$true] %s353
          %359 = dma.hbm_to_vmem [thread:$0]  %s1, 256, %s354, [#allocation6], 64, 64, 4
        $region16: #{decoder_forward.1} parent=11 // pred_fallthru
          _
        // Predicated region
        $region17: #{decoder_forward.1} parent=11 // pred_check
          %p360 = pneg %p96
        $region18: #{decoder_forward.1} parent=11 // pred_check_branch
          %362 = sbr.rel (%p360) target = $region20
        $region19: #{decoder_forward.1} parent=11 // pred_region
          %s364 = ssub.s32 16, 16
          %365 = vsyncadd [#allocation6], %s364
          %s367 = sshll.u32 [#allocation7], 4
          %s368 = int_to_ptr.vmem [resolvable:$true] %s367
          %370 = dma.hbm_to_vmem [thread:$0]  %s2, 16, %s368, [#allocation6]
        $region20: #{decoder_forward.1} parent=11 // pred_fallthru
          _
        // Predicated region
        $region21: #{decoder_forward.1} parent=11 // pred_check
          %p371 = pneg %p117
        $region22: #{decoder_forward.1} parent=11 // pred_check_branch
          %373 = sbr.rel (%p371) target = $region24
        $region23: #{decoder_forward.1} parent=11 // pred_region
          %s375 = ssub.s32 65536, 65536
          %376 = vsyncadd [#allocation9], %s375
          %s377 = sshll.u32 [#allocation8], 4
          %s378 = int_to_ptr.vmem [resolvable:$true] %s377
          %383 = dma.hbm_to_vmem [thread:$0]  %s3, 65536, %s378, [#allocation9], 128, 128, 8
        $region24: #{decoder_forward.1} parent=11 // pred_fallthru
          _
        // Predicated region
        $region25: #{decoder_forward.1} parent=11 // pred_check
          %p384 = pneg %p138
        $region26: #{decoder_forward.1} parent=11 // pred_check_branch
          %386 = sbr.rel (%p384) target = $region28
        $region27: #{decoder_forward.1} parent=11 // pred_region
          %s388 = ssub.s32 1024, 1024
          %389 = vsyncadd [#allocation9], %s388
          %s390 = sshll.u32 [#allocation10], 4
          %s391 = int_to_ptr.vmem [resolvable:$true] %s390
          %396 = dma.hbm_to_vmem [thread:$0]  %s4, 1024, %s391, [#allocation9], 256, 256, 16
        $region28: #{decoder_forward.1} parent=11 // pred_fallthru
          _
        // Predicated region
        $region29: #{decoder_forward.1} parent=11 // pred_check
          %p397 = pneg %p159
        $region30: #{decoder_forward.1} parent=11 // pred_check_branch
          %399 = sbr.rel (%p397) target = $region32
        $region31: #{decoder_forward.1} parent=11 // pred_region
          %s401 = ssub.s32 256, 256
          %402 = vsyncadd [#allocation12], %s401
          %s403 = sshll.u32 [#allocation11], 4
          %s404 = int_to_ptr.vmem [resolvable:$true] %s403
          %409 = dma.hbm_to_vmem [thread:$0]  %s5, 256, %s404, [#allocation12], 64, 64, 4
        $region32: #{decoder_forward.1} parent=11 // pred_fallthru
          _
        // Predicated region
        $region33: #{decoder_forward.1} parent=11 // pred_check
          %p410 = pneg %p180
        $region34: #{decoder_forward.1} parent=11 // pred_check_branch
          %412 = sbr.rel (%p410) target = $region36
        $region35: #{decoder_forward.1} parent=11 // pred_region
          %s414 = ssub.s32 512, 512
          %415 = vsyncadd [#allocation12], %s414
          %s416 = sshll.u32 [#allocation13], 4
          %s417 = int_to_ptr.vmem [resolvable:$true] %s416
          %422 = dma.hbm_to_vmem [thread:$0]  %s6, 512, %s417, [#allocation12], 128, 128, 8
        $region36: #{decoder_forward.1} parent=11 // pred_fallthru
          _
        // Predicated region
        $region37: #{decoder_forward.1} parent=11 // pred_check
          %p423 = pneg %p201
        $region38: #{decoder_forward.1} parent=11 // pred_check_branch
          %425 = sbr.rel (%p423) target = $region40
        $region39: #{decoder_forward.1} parent=11 // pred_region
          %s427 = ssub.s32 256, 256
          %428 = vsyncadd [#allocation15], %s427
          %s429 = sshll.u32 [#allocation14], 4
          %s430 = int_to_ptr.vmem [resolvable:$true] %s429
          %435 = dma.hbm_to_vmem [thread:$0]  %s7, 256, %s430, [#allocation15], 64, 64, 4
        $region40: #{decoder_forward.1} parent=11 // pred_fallthru
          _
        // Predicated region
        $region41: #{decoder_forward.1} parent=11 // pred_check
          %p436 = pneg %p222
        $region42: #{decoder_forward.1} parent=11 // pred_check_branch
          %438 = sbr.rel (%p436) target = $region44
        $region43: #{decoder_forward.1} parent=11 // pred_region
          %s440 = ssub.s32 512, 512
          %441 = vsyncadd [#allocation15], %s440
          %s442 = sshll.u32 [#allocation16], 4
          %s443 = int_to_ptr.vmem [resolvable:$true] %s442
          %448 = dma.hbm_to_vmem [thread:$0]  %s8, 512, %s443, [#allocation15], 128, 128, 8
        $region44: #{decoder_forward.1} parent=11 // pred_fallthru
          _
        // Predicated region
        $region45: #{decoder_forward.1} parent=11 // pred_check
          %p449 = pneg %p243
        $region46: #{decoder_forward.1} parent=11 // pred_check_branch
          %451 = sbr.rel (%p449) target = $region48
        $region47: #{decoder_forward.1} parent=11 // pred_region
          %s453 = ssub.s32 768, 768
          %454 = vsyncadd [#allocation18], %s453
          %s455 = sshll.u32 [#allocation17], 4
          %s456 = int_to_ptr.vmem [resolvable:$true] %s455
          %461 = dma.hbm_to_vmem [thread:$0]  %s9, 768, %s456, [#allocation18], 192, 192, 12
        $region48: #{decoder_forward.1} parent=11 // pred_fallthru
          _
        // Predicated region
        $region49: #{decoder_forward.1} parent=11 // pred_check
          %p462 = pneg %p264
        $region50: #{decoder_forward.1} parent=11 // pred_check_branch
          %464 = sbr.rel (%p462) target = $region52
        $region51: #{decoder_forward.1} parent=11 // pred_region
          %s466 = ssub.s32 512, 512
          %467 = vsyncadd [#allocation18], %s466
          %s468 = sshll.u32 [#allocation19], 4
          %s469 = int_to_ptr.vmem [resolvable:$true] %s468
          %474 = dma.hbm_to_vmem [thread:$0]  %s10, 512, %s469, [#allocation18], 128, 128, 8
        $region52: #{decoder_forward.1} parent=11 // pred_fallthru
          _
        // Predicated region
        $region53: #{decoder_forward.1} parent=11 // pred_check
          %p475 = pneg %p285
        $region54: #{decoder_forward.1} parent=11 // pred_check_branch
          %477 = sbr.rel (%p475) target = $region56
        $region55: #{decoder_forward.1} parent=11 // pred_region
          %s479 = ssub.s32 32, 32
          %480 = vsyncadd [#allocation21], %s479
          %s482 = sshll.u32 [#allocation20], 4
          %s483 = int_to_ptr.vmem [resolvable:$true] %s482
          %485 = dma.hbm_to_vmem [thread:$0]  %s11, 32, %s483, [#allocation21]
        $region56: #{decoder_forward.1} parent=11 // pred_fallthru
          _
        // Predicated region
        $region57: #{decoder_forward.1} parent=11 // pred_check
          %p486 = pneg %p306
        $region58: #{decoder_forward.1} parent=11 // pred_check_branch
          %488 = sbr.rel (%p486) target = $region60
        $region59: #{decoder_forward.1} parent=11 // pred_region
          %s490 = ssub.s32 64, 64
          %491 = vsyncadd [#allocation21], %s490
          %s493 = sshll.u32 [#allocation22], 4
          %s494 = int_to_ptr.vmem [resolvable:$true] %s493
          %496 = dma.hbm_to_vmem [thread:$0]  %s12, 64, %s494, [#allocation21]
        $region60: #{decoder_forward.1} parent=11 // pred_fallthru
          _
      $region12: #{decoder_forward.1} parent=5 // pred_fallthru
        _
      %p497 = scmp.lt.s32.totalorder %s28, 2
      // Predicated region
      $region61: #{decoder_forward.1} parent=5 // pred_check
        %p498 = pneg %p497
      $region62: #{decoder_forward.1} parent=5 // pred_check_branch
        %500 = sbr.rel (%p498) target = $region64
      $region63: #{decoder_forward.1} parent=5 // pred_region
        // Predicated region
        $region65: #{decoder_forward.1} parent=63 // pred_check
          %p501 = pneg %p48
        $region66: #{decoder_forward.1} parent=63 // pred_check_branch
          %503 = sbr.rel (%p501) target = $region68
        $region67: #{decoder_forward.1} parent=63 // pred_region
          %s504 = sand.u32 %s38, 1
          %s505 = scalar_lea.sflag [#allocation4], %s504
          %s506 = sand.u32 %s38, 1
          %s507 = scalar_lea.vmem [#allocation3], %s506
          %s509 = ssub.s32 16, 16
          %510 = vsyncadd %s505, %s509
          %s511 = smul.addr %s28, 16
          %s512 = scalar_lea.hbm %s0, %s511
          %s514 = sshll.u32 %s507, 4
          %s515 = int_to_ptr.vmem [resolvable:$true] %s514
          %517 = dma.hbm_to_vmem [thread:$0]  %s512, 16, %s515, %s505
        $region68: #{decoder_forward.1} parent=63 // pred_fallthru
          _
      $region64: #{decoder_forward.1} parent=5 // pred_fallthru
        _
      %p518 = scmp.le.s32.totalorder 1, %s28
      %p519 = scmp.lt.s32.totalorder %s28, 3
      %p520 = pnand %p518, %p519
      %p521 = pneg %p520
      // Predicated region
      $region69: #{decoder_forward.1} parent=5 // pred_check
        _
      $region70: #{decoder_forward.1} parent=5 // pred_check_branch
        %523 = sbr.rel (%p520) target = $region72
      $region71: #{decoder_forward.1} parent=5 // pred_region
        %s524 = ssub.s32 %s28, 1
        %s525 = sand.u32 %s41, 1
        %s526 = scalar_lea.sflag [#allocation4], %s525
        %s527 = sand.u32 %s41, 1
        %s528 = scalar_lea.vmem [#allocation3], %s527
        // Predicated region
        $region73: #{decoder_forward.1} parent=71 // pred_check
          %p529 = pneg %p54
        $region74: #{decoder_forward.1} parent=71 // pred_check_branch
          %531 = sbr.rel (%p529) target = $region76
        $region75: #{decoder_forward.1} parent=71 // pred_region
          %532 = dma.done %s526, 16
        $region76: #{decoder_forward.1} parent=71 // pred_fallthru
          _
        // Predicated region
        $region77: #{decoder_forward.1} parent=71 // pred_check
          %p533 = pneg %p75
        $region78: #{decoder_forward.1} parent=71 // pred_check_branch
          %535 = sbr.rel (%p533) target = $region80
        $region79: #{decoder_forward.1} parent=71 // pred_region
          %536 = dma.done [#allocation6], 256
        $region80: #{decoder_forward.1} parent=71 // pred_fallthru
          _
        // Predicated region
        $region81: #{decoder_forward.1} parent=71 // pred_check
          %p537 = pneg %p96
        $region82: #{decoder_forward.1} parent=71 // pred_check_branch
          %539 = sbr.rel (%p537) target = $region84
        $region83: #{decoder_forward.1} parent=71 // pred_region
          %540 = dma.done [#allocation6], 16
        $region84: #{decoder_forward.1} parent=71 // pred_fallthru
          _
        // Predicated region
        $region85: #{decoder_forward.1} parent=71 // pred_check
          %p541 = pneg %p117
        $region86: #{decoder_forward.1} parent=71 // pred_check_branch
          %543 = sbr.rel (%p541) target = $region88
        $region87: #{decoder_forward.1} parent=71 // pred_region
          %544 = dma.done [#allocation9], 65536
        $region88: #{decoder_forward.1} parent=71 // pred_fallthru
          _
        // Predicated region
        $region89: #{decoder_forward.1} parent=71 // pred_check
          %p545 = pneg %p138
        $region90: #{decoder_forward.1} parent=71 // pred_check_branch
          %547 = sbr.rel (%p545) target = $region92
        $region91: #{decoder_forward.1} parent=71 // pred_region
          %548 = dma.done [#allocation9], 1024
        $region92: #{decoder_forward.1} parent=71 // pred_fallthru
          _
        // Predicated region
        $region93: #{decoder_forward.1} parent=71 // pred_check
          %p549 = pneg %p159
        $region94: #{decoder_forward.1} parent=71 // pred_check_branch
          %551 = sbr.rel (%p549) target = $region96
        $region95: #{decoder_forward.1} parent=71 // pred_region
          %552 = dma.done [#allocation12], 256
        $region96: #{decoder_forward.1} parent=71 // pred_fallthru
          _
        // Predicated region
        $region97: #{decoder_forward.1} parent=71 // pred_check
          %p553 = pneg %p180
        $region98: #{decoder_forward.1} parent=71 // pred_check_branch
          %555 = sbr.rel (%p553) target = $region100
        $region99: #{decoder_forward.1} parent=71 // pred_region
          %556 = dma.done [#allocation12], 512
        $region100: #{decoder_forward.1} parent=71 // pred_fallthru
          _
        // Predicated region
        $region101: #{decoder_forward.1} parent=71 // pred_check
          %p557 = pneg %p201
        $region102: #{decoder_forward.1} parent=71 // pred_check_branch
          %559 = sbr.rel (%p557) target = $region104
        $region103: #{decoder_forward.1} parent=71 // pred_region
          %560 = dma.done [#allocation15], 256
        $region104: #{decoder_forward.1} parent=71 // pred_fallthru
          _
        // Predicated region
        $region105: #{decoder_forward.1} parent=71 // pred_check
          %p561 = pneg %p222
        $region106: #{decoder_forward.1} parent=71 // pred_check_branch
          %563 = sbr.rel (%p561) target = $region108
        $region107: #{decoder_forward.1} parent=71 // pred_region
          %564 = dma.done [#allocation15], 512
        $region108: #{decoder_forward.1} parent=71 // pred_fallthru
          _
        // Predicated region
        $region109: #{decoder_forward.1} parent=71 // pred_check
          %p565 = pneg %p243
        $region110: #{decoder_forward.1} parent=71 // pred_check_branch
          %567 = sbr.rel (%p565) target = $region112
        $region111: #{decoder_forward.1} parent=71 // pred_region
          %568 = dma.done [#allocation18], 768
        $region112: #{decoder_forward.1} parent=71 // pred_fallthru
          _
        // Predicated region
        $region113: #{decoder_forward.1} parent=71 // pred_check
          %p569 = pneg %p264
        $region114: #{decoder_forward.1} parent=71 // pred_check_branch
          %571 = sbr.rel (%p569) target = $region116
        $region115: #{decoder_forward.1} parent=71 // pred_region
          %572 = dma.done [#allocation18], 512
        $region116: #{decoder_forward.1} parent=71 // pred_fallthru
          _
        // Predicated region
        $region117: #{decoder_forward.1} parent=71 // pred_check
          %p573 = pneg %p285
        $region118: #{decoder_forward.1} parent=71 // pred_check_branch
          %575 = sbr.rel (%p573) target = $region120
        $region119: #{decoder_forward.1} parent=71 // pred_region
          %576 = dma.done [#allocation21], 32
        $region120: #{decoder_forward.1} parent=71 // pred_fallthru
          _
        // Predicated region
        $region121: #{decoder_forward.1} parent=71 // pred_check
          %p577 = pneg %p306
        $region122: #{decoder_forward.1} parent=71 // pred_check_branch
          %579 = sbr.rel (%p577) target = $region124
        $region123: #{decoder_forward.1} parent=71 // pred_region
          %580 = dma.done [#allocation21], 64
        $region124: #{decoder_forward.1} parent=71 // pred_fallthru
          _
        %s581 = sand.u32 %s41, 1
        %s582 = scalar_lea.sflag [#allocation4], %s581
        %s583 = sand.u32 %s41, 1
        %s584 = scalar_lea.vmem [#allocation3], %s583
        %p585 = pneg %p54
        %p586 = pneg %p51
        %p587 = pneg %p75
        %p588 = pneg %p72
        %p589 = pneg %p96
        %p590 = pneg %p93
        %p591 = pneg %p117
        %p592 = pneg %p114
        %p593 = pneg %p138
        %p594 = pneg %p135
        %p595 = pneg %p159
        %p596 = pneg %p156
        %p597 = pneg %p180
        %p598 = pneg %p177
        %p599 = pneg %p201
        %p600 = pneg %p198
        %p601 = pneg %p222
        %p602 = pneg %p219
        %p603 = pneg %p243
        %p604 = pneg %p240
        %p605 = pneg %p264
        %p606 = pneg %p261
        %p607 = pneg %p285
        %p608 = pneg %p282
        %p609 = pneg %p306
        %p610 = pneg %p303
        %p611 = pneg %p332
        %p612 = pneg %p329
        %p613 = scmp.lt.s32.totalorder %s33, 1
        %s614 = scalar_select %p613, %s33, 1
        %s615 = smul.addr %s614, 4
        %s616 = smul.addr %s615, 8
        %s617 = scalar_lea.vmem %s13, %s616
        %p618 = scmp.lt.s32.totalorder %s33, 1
        %s619 = scalar_select %p618, %s33, 1
        %s620 = smul.addr %s619, 4
        %s621 = smul.addr %s620, 8
        %s622 = scalar_lea.vmem %s13, %s621
        %v624 = vlaneseq
        %v625 = vand.u32 %v624, 127
        %v626 = vadd.s32 %v625, 128
        %v627 = vadd.s32 %v625, 256
        %v628 = vand.u32 %v625, 15
        %v629 = vand.u32 %v626, 15
        %v630 = vand.u32 %v627, 15
        %vm631 = vcmp.ne.s32.totalorder %v628, 0
        %vm632 = vcmp.ne.s32.totalorder %v629, 0
        %vm633 = vcmp.ne.s32.totalorder %v630, 0
        %v634 = vsel %vm631, 1, 0
        %v635 = vsel %vm632, 1, 0
        %v636 = vsel %vm633, 1, 0
        %v637 = vcvt.s32.f32 %v634
        %v638 = vcvt.s32.f32 %v635
        %v639 = vcvt.s32.f32 %v636
        %v640 = vpack.c.bf16 %v637, %v637
        %v641 = vpack.c.bf16 %v638, %v638
        %v642 = vpack.c.bf16 %v639, %v639
        %vm643 = vcmp.ne.s32.totalorder %v628, 15
        %vm644 = vcmp.ne.s32.totalorder %v629, 15
        %vm645 = vcmp.ne.s32.totalorder %v630, 15
        %v646 = vsel %vm643, 1, 0
        %v647 = vsel %vm644, 1, 0
        %v648 = vsel %vm645, 1, 0
        %v649 = vcvt.s32.f32 %v646
        %v650 = vcvt.s32.f32 %v647
        %v651 = vcvt.s32.f32 %v648
        %v652 = vpack.c.bf16 %v649, %v649
        %v653 = vpack.c.bf16 %v650, %v650
        %v654 = vpack.c.bf16 %v651, %v651
        %vm655 = vcmask 261120
        %656 = vst.msk [vmem:[#allocation2] sm:$0xff] %vm655, 0.0
        %657 = vst.msk [vmem:[#allocation2 + $0x18] sm:$0xff] %vm655, 0.0
        %658 = vst.msk [vmem:[#allocation2 + $0x30] sm:$0xff] %vm655, 0.0
        %659 = vst.msk [vmem:[#allocation2 + $0x48] sm:$0xff] %vm655, 0.0
        %vm660 = vcmask 523520
        %661 = vst.msk [vmem:[#allocation2 + $0x10] sm:$0xff] %vm660, 0.0
        %662 = vst.msk [vmem:[#allocation2 + $0x28] sm:$0xff] %vm660, 0.0
        %663 = vst.msk [vmem:[#allocation2 + $0x40] sm:$0xff] %vm660, 0.0
        %664 = vst.msk [vmem:[#allocation2 + $0x58] sm:$0xff] %vm660, 0.0
        %v665 = vld [vmem:[%s528] sm:$0x1]
        %v666 = vpack.c.bf16 %v665, %v665
        %v667 = vld [vmem:[#allocation5] sm:$0xf]
        %v668 = vld [vmem:[#allocation5 + $0x4] sm:$0xf]
        %v669 = vld [vmem:[#allocation5 + $0x8] sm:$0xf]
        %v670 = vld [vmem:[#allocation5 + $0xc] sm:$0xf]
        %v671 = vld [vmem:[#allocation7] sm:$0x1]
        %v676 = vunpack.c.l.b16 %v667
        %v677 = vunpack.c.l.b16 %v668
        %v678 = vunpack.c.l.b16 %v669
        %v679 = vunpack.c.l.b16 %v670
        %v680 = vpack.c.b16 %v677, %v676
        %v681 = vpack.c.b16 %v679, %v678
        %v685 = vsel %vm655, %v666, 0
        %687 = vmatprep.subr.bf16.mxu0 0
        %688 = vmatpush1.bf16.msra.mxu0 0
        %689 = vmatprep.subr.bf16.mxu0 0
        %690 = vmatpush1.bf16.msra.mxu0 0
        %691 = vmatprep.subr.bf16.mxu0 0
        %692 = vmatpush1.bf16.msra.mxu0 0
        %693 = vmatprep.subr.bf16.mxu0 0
        %694 = vmatpush1.bf16.msra.mxu0 0
        %695 = vmatprep.subr.bf16.mxu0 0
        %696 = vmatpush1.bf16.msra.mxu0 0
        %697 = vmatprep.subr.bf16.mxu0 0
        %698 = vmatpush1.bf16.msra.mxu0 0
        %699 = vmatprep.subr.bf16.mxu0 0
        %700 = vmatpush1.bf16.msra.mxu0 %v681
        %701 = vmatprep.subr.bf16.mxu0 0
        %702 = vmatpush1.bf16.msra.mxu0 %v680
        %703 = vmatprep.subr.bf16.mxu0 0
        %704 = vmatpush2.bf16.msra.mxu0 0
        %705 = vmatprep.subr.bf16.mxu0 0
        %706 = vmatpush2.bf16.msra.mxu0 0
        %707 = vmatprep.subr.bf16.mxu0 0
        %708 = vmatpush2.bf16.msra.mxu0 0
        %709 = vmatprep.subr.bf16.mxu0 0
        %710 = vmatpush2.bf16.msra.mxu0 0
        %711 = vmatprep.subr.bf16.mxu0 0
        %712 = vmatpush2.bf16.msra.mxu0 0
        %713 = vmatprep.subr.bf16.mxu0 0
        %714 = vmatpush2.bf16.msra.mxu0 0
        %715 = vmatprep.subr.bf16.mxu0 0
        %716 = vmatpush2.bf16.msra.mxu0 0
        %717 = vmatprep.subr.bf16.mxu0 0
        %718 = vmatpush2.bf16.msra.mxu0 0
        %719 = vmatprep.mubr.bf16.mxu0 0
        %720 = vmatmul.mubr.bf16.gmra.mxu0 %v685
        %v721 = vpop.f32.mrf.mxu0
        %v722 = vadd.f32 %v671, %v721
        %v723 = vpop.f32.mrf.mxu0
        %v724 = vpop.f32.mrf.mxu0
        %v725 = vpop.f32.mrf.mxu0
        %726 = vdwg.mxu0
        %v727 = vmax.f32 %v722, 0.0
        %v728 = vpack.c.bf16 %v727, %v727
        %v730 = vpack.i.b16 %v728, %v728
        %v732 = vlaneseq
        %v733 = vshrl.u32 %v732, 7
        %v734 = vsub.s32 0, %v733
        %v735 = vrot.slane %v730, %v734
        %v736 = vadd.s32 %v625, 384
        %v737 = vadd.s32 %v625, 512
        %v738 = vadd.s32 %v625, 640
        %v739 = vadd.s32 %v625, 768
        %v740 = vadd.s32 %v625, 896
        %v741 = vlaneseq
        %v742 = vshrl.u32 %v741, 7
        %v743 = vshra.s32 %v625, 7
        %v744 = vshra.s32 %v626, 7
        %v745 = vshra.s32 %v627, 7
        %v746 = vshra.s32 %v736, 7
        %v747 = vshra.s32 %v737, 7
        %v748 = vshra.s32 %v738, 7
        %v749 = vshra.s32 %v739, 7
        %v750 = vshra.s32 %v740, 7
        %vm751 = vcmp.eq.s32.totalorder %v743, %v742
        %vm752 = vcmp.eq.s32.totalorder %v744, %v742
        %vm753 = vcmp.eq.s32.totalorder %v745, %v742
        %vm754 = vcmp.eq.s32.totalorder %v746, %v742
        %vm755 = vcmp.eq.s32.totalorder %v747, %v742
        %vm756 = vcmp.eq.s32.totalorder %v748, %v742
        %vm757 = vcmp.eq.s32.totalorder %v749, %v742
        %vm758 = vcmp.eq.s32.totalorder %v750, %v742
        %v759 = vsel %vm751, 1, 0
        %v760 = vsel %vm752, 1, 0
        %v761 = vsel %vm753, 1, 0
        %v762 = vsel %vm754, 1, 0
        %v763 = vsel %vm755, 1, 0
        %v764 = vsel %vm756, 1, 0
        %v765 = vsel %vm757, 1, 0
        %v766 = vsel %vm758, 1, 0
        %v767 = vcvt.s32.f32 %v759
        %v768 = vcvt.s32.f32 %v760
        %v769 = vcvt.s32.f32 %v761
        %v770 = vcvt.s32.f32 %v762
        %v771 = vcvt.s32.f32 %v763
        %v772 = vcvt.s32.f32 %v764
        %v773 = vcvt.s32.f32 %v765
        %v774 = vcvt.s32.f32 %v766
        %v775 = vpack.c.bf16 %v767, %v767
        %v776 = vpack.c.bf16 %v768, %v768
        %v777 = vpack.c.bf16 %v769, %v769
        %v778 = vpack.c.bf16 %v770, %v770
        %v779 = vpack.c.bf16 %v771, %v771
        %v780 = vpack.c.bf16 %v772, %v772
        %v781 = vpack.c.bf16 %v773, %v773
        %v782 = vpack.c.bf16 %v774, %v774
        %v783 = vmul.bf16 %v735, %v775
        %v784 = vmul.bf16 %v735, %v776
        %v785 = vmul.bf16 %v735, %v777
        %v786 = vmul.bf16 %v735, %v778
        %v787 = vmul.bf16 %v735, %v779
        %v788 = vmul.bf16 %v735, %v780
        %v789 = vmul.bf16 %v735, %v781
        %v790 = vmul.bf16 %v735, %v782
        %v791 = vld [vmem:[#allocation8] sm:$0xff]
        %v792 = vld [vmem:[#allocation8 + $0x8] sm:$0xff]
        %v793 = vld [vmem:[#allocation8 + $0x10] sm:$0xff]
        %v794 = vld [vmem:[#allocation8 + $0x18] sm:$0xff]
        %v795 = vld [vmem:[#allocation8 + $0x20] sm:$0xff]
        %v796 = vld [vmem:[#allocation8 + $0x28] sm:$0xff]
        %v797 = vld [vmem:[#allocation8 + $0x30] sm:$0xff]
        %v798 = vld [vmem:[#allocation8 + $0x38] sm:$0xff]
        %v799 = vld [vmem:[#allocation8 + $0x40] sm:$0xff]
        %v800 = vld [vmem:[#allocation8 + $0x48] sm:$0xff]
        %v801 = vld [vmem:[#allocation8 + $0x50] sm:$0xff]
        %v802 = vld [vmem:[#allocation8 + $0x58] sm:$0xff]
        %v803 = vld [vmem:[#allocation8 + $0x60] sm:$0xff]
        %v804 = vld [vmem:[#allocation8 + $0x68] sm:$0xff]
        %v805 = vld [vmem:[#allocation8 + $0x70] sm:$0xff]
        %v806 = vld [vmem:[#allocation8 + $0x78] sm:$0xff]
        %v807 = vld [vmem:[#allocation8 + $0x80] sm:$0xff]
        %v808 = vld [vmem:[#allocation8 + $0x88] sm:$0xff]
        %v809 = vld [vmem:[#allocation8 + $0x90] sm:$0xff]
        %v810 = vld [vmem:[#allocation8 + $0x98] sm:$0xff]
        %v811 = vld [vmem:[#allocation8 + $0xa0] sm:$0xff]
        %v812 = vld [vmem:[#allocation8 + $0xa8] sm:$0xff]
        %v813 = vld [vmem:[#allocation8 + $0xb0] sm:$0xff]
        %v814 = vld [vmem:[#allocation8 + $0xb8] sm:$0xff]
        %v815 = vld [vmem:[#allocation8 + $0xc0] sm:$0xff]
        %v816 = vld [vmem:[#allocation8 + $0xc8] sm:$0xff]
        %v817 = vld [vmem:[#allocation8 + $0xd0] sm:$0xff]
        %v818 = vld [vmem:[#allocation8 + $0xd8] sm:$0xff]
        %v819 = vld [vmem:[#allocation8 + $0xe0] sm:$0xff]
        %v820 = vld [vmem:[#allocation8 + $0xe8] sm:$0xff]
        %v821 = vld [vmem:[#allocation8 + $0xf0] sm:$0xff]
        %v822 = vld [vmem:[#allocation8 + $0xf8] sm:$0xff]
        %v823 = vld [vmem:[#allocation8 + $0x100] sm:$0xff]
        %v824 = vld [vmem:[#allocation8 + $0x108] sm:$0xff]
        %v825 = vld [vmem:[#allocation8 + $0x110] sm:$0xff]
        %v826 = vld [vmem:[#allocation8 + $0x118] sm:$0xff]
        %v827 = vld [vmem:[#allocation8 + $0x120] sm:$0xff]
        %v828 = vld [vmem:[#allocation8 + $0x128] sm:$0xff]
        %v829 = vld [vmem:[#allocation8 + $0x130] sm:$0xff]
        %v830 = vld [vmem:[#allocation8 + $0x138] sm:$0xff]
        %v831 = vld [vmem:[#allocation8 + $0x140] sm:$0xff]
        %v832 = vld [vmem:[#allocation8 + $0x148] sm:$0xff]
        %v833 = vld [vmem:[#allocation8 + $0x150] sm:$0xff]
        %v834 = vld [vmem:[#allocation8 + $0x158] sm:$0xff]
        %v835 = vld [vmem:[#allocation8 + $0x160] sm:$0xff]
        %v836 = vld [vmem:[#allocation8 + $0x168] sm:$0xff]
        %v837 = vld [vmem:[#allocation8 + $0x170] sm:$0xff]
        %v838 = vld [vmem:[#allocation8 + $0x178] sm:$0xff]
        %v839 = vld [vmem:[#allocation8 + $0x180] sm:$0xff]
        %v840 = vld [vmem:[#allocation8 + $0x188] sm:$0xff]
        %v841 = vld [vmem:[#allocation8 + $0x190] sm:$0xff]
        %v842 = vld [vmem:[#allocation8 + $0x198] sm:$0xff]
        %v843 = vld [vmem:[#allocation8 + $0x1a0] sm:$0xff]
        %v844 = vld [vmem:[#allocation8 + $0x1a8] sm:$0xff]
        %v845 = vld [vmem:[#allocation8 + $0x1b0] sm:$0xff]
        %v846 = vld [vmem:[#allocation8 + $0x1b8] sm:$0xff]
        %v847 = vld [vmem:[#allocation8 + $0x1c0] sm:$0xff]
        %v848 = vld [vmem:[#allocation8 + $0x1c8] sm:$0xff]
        %v849 = vld [vmem:[#allocation8 + $0x1d0] sm:$0xff]
        %v850 = vld [vmem:[#allocation8 + $0x1d8] sm:$0xff]
        %v851 = vld [vmem:[#allocation8 + $0x1e0] sm:$0xff]
        %v852 = vld [vmem:[#allocation8 + $0x1e8] sm:$0xff]
        %v853 = vld [vmem:[#allocation8 + $0x1f0] sm:$0xff]
        %v854 = vld [vmem:[#allocation8 + $0x1f8] sm:$0xff]
        %v855 = vld [vmem:[#allocation8 + $0x200] sm:$0xff]
        %v856 = vld [vmem:[#allocation8 + $0x208] sm:$0xff]
        %v857 = vld [vmem:[#allocation8 + $0x210] sm:$0xff]
        %v858 = vld [vmem:[#allocation8 + $0x218] sm:$0xff]
        %v859 = vld [vmem:[#allocation8 + $0x220] sm:$0xff]
        %v860 = vld [vmem:[#allocation8 + $0x228] sm:$0xff]
        %v861 = vld [vmem:[#allocation8 + $0x230] sm:$0xff]
        %v862 = vld [vmem:[#allocation8 + $0x238] sm:$0xff]
        %v863 = vld [vmem:[#allocation8 + $0x240] sm:$0xff]
        %v864 = vld [vmem:[#allocation8 + $0x248] sm:$0xff]
        %v865 = vld [vmem:[#allocation8 + $0x250] sm:$0xff]
        %v866 = vld [vmem:[#allocation8 + $0x258] sm:$0xff]
        %v867 = vld [vmem:[#allocation8 + $0x260] sm:$0xff]
        %v868 = vld [vmem:[#allocation8 + $0x268] sm:$0xff]
        %v869 = vld [vmem:[#allocation8 + $0x270] sm:$0xff]
        %v870 = vld [vmem:[#allocation8 + $0x278] sm:$0xff]
        %v871 = vld [vmem:[#allocation8 + $0x280] sm:$0xff]
        %v872 = vld [vmem:[#allocation8 + $0x288] sm:$0xff]
        %v873 = vld [vmem:[#allocation8 + $0x290] sm:$0xff]
        %v874 = vld [vmem:[#allocation8 + $0x298] sm:$0xff]
        %v875 = vld [vmem:[#allocation8 + $0x2a0] sm:$0xff]
        %v876 = vld [vmem:[#allocation8 + $0x2a8] sm:$0xff]
        %v877 = vld [vmem:[#allocation8 + $0x2b0] sm:$0xff]
        %v878 = vld [vmem:[#allocation8 + $0x2b8] sm:$0xff]
        %v879 = vld [vmem:[#allocation8 + $0x2c0] sm:$0xff]
        %v880 = vld [vmem:[#allocation8 + $0x2c8] sm:$0xff]
        %v881 = vld [vmem:[#allocation8 + $0x2d0] sm:$0xff]
        %v882 = vld [vmem:[#allocation8 + $0x2d8] sm:$0xff]
        %v883 = vld [vmem:[#allocation8 + $0x2e0] sm:$0xff]
        %v884 = vld [vmem:[#allocation8 + $0x2e8] sm:$0xff]
        %v885 = vld [vmem:[#allocation8 + $0x2f0] sm:$0xff]
        %v886 = vld [vmem:[#allocation8 + $0x2f8] sm:$0xff]
        %v887 = vld [vmem:[#allocation8 + $0x300] sm:$0xff]
        %v888 = vld [vmem:[#allocation8 + $0x308] sm:$0xff]
        %v889 = vld [vmem:[#allocation8 + $0x310] sm:$0xff]
        %v890 = vld [vmem:[#allocation8 + $0x318] sm:$0xff]
        %v891 = vld [vmem:[#allocation8 + $0x320] sm:$0xff]
        %v892 = vld [vmem:[#allocation8 + $0x328] sm:$0xff]
        %v893 = vld [vmem:[#allocation8 + $0x330] sm:$0xff]
        %v894 = vld [vmem:[#allocation8 + $0x338] sm:$0xff]
        %v895 = vld [vmem:[#allocation8 + $0x340] sm:$0xff]
        %v896 = vld [vmem:[#allocation8 + $0x348] sm:$0xff]
        %v897 = vld [vmem:[#allocation8 + $0x350] sm:$0xff]
        %v898 = vld [vmem:[#allocation8 + $0x358] sm:$0xff]
        %v899 = vld [vmem:[#allocation8 + $0x360] sm:$0xff]
        %v900 = vld [vmem:[#allocation8 + $0x368] sm:$0xff]
        %v901 = vld [vmem:[#allocation8 + $0x370] sm:$0xff]
        %v902 = vld [vmem:[#allocation8 + $0x378] sm:$0xff]
        %v903 = vld [vmem:[#allocation8 + $0x380] sm:$0xff]
        %v904 = vld [vmem:[#allocation8 + $0x388] sm:$0xff]
        %v905 = vld [vmem:[#allocation8 + $0x390] sm:$0xff]
        %v906 = vld [vmem:[#allocation8 + $0x398] sm:$0xff]
        %v907 = vld [vmem:[#allocation8 + $0x3a0] sm:$0xff]
        %v908 = vld [vmem:[#allocation8 + $0x3a8] sm:$0xff]
        %v909 = vld [vmem:[#allocation8 + $0x3b0] sm:$0xff]
        %v910 = vld [vmem:[#allocation8 + $0x3b8] sm:$0xff]
        %v911 = vld [vmem:[#allocation8 + $0x3c0] sm:$0xff]
        %v912 = vld [vmem:[#allocation8 + $0x3c8] sm:$0xff]
        %v913 = vld [vmem:[#allocation8 + $0x3d0] sm:$0xff]
        %v914 = vld [vmem:[#allocation8 + $0x3d8] sm:$0xff]
        %v915 = vld [vmem:[#allocation8 + $0x3e0] sm:$0xff]
        %v916 = vld [vmem:[#allocation8 + $0x3e8] sm:$0xff]
        %v917 = vld [vmem:[#allocation8 + $0x3f0] sm:$0xff]
        %v918 = vld [vmem:[#allocation8 + $0x3f8] sm:$0xff]
        %v919 = vld [vmem:[#allocation10] sm:$0xff]
        %v920 = vld [vmem:[#allocation10 + $0x8] sm:$0xff]
        %v1049 = vunpack.c.l.b16 %v791
        %v1050 = vunpack.c.h.b16 %v791
        %v1051 = vunpack.c.l.b16 %v792
        %v1052 = vunpack.c.h.b16 %v792
        %v1053 = vunpack.c.l.b16 %v793
        %v1054 = vunpack.c.h.b16 %v793
        %v1055 = vunpack.c.l.b16 %v794
        %v1056 = vunpack.c.h.b16 %v794
        %v1057 = vunpack.c.l.b16 %v795
        %v1058 = vunpack.c.h.b16 %v795
        %v1059 = vunpack.c.l.b16 %v796
        %v1060 = vunpack.c.h.b16 %v796
        %v1061 = vunpack.c.l.b16 %v797
        %v1062 = vunpack.c.h.b16 %v797
        %v1063 = vunpack.c.l.b16 %v798
        %v1064 = vunpack.c.h.b16 %v798
        %v1065 = vunpack.c.l.b16 %v799
        %v1066 = vunpack.c.h.b16 %v799
        %v1067 = vunpack.c.l.b16 %v800
        %v1068 = vunpack.c.h.b16 %v800
        %v1069 = vunpack.c.l.b16 %v801
        %v1070 = vunpack.c.h.b16 %v801
        %v1071 = vunpack.c.l.b16 %v802
        %v1072 = vunpack.c.h.b16 %v802
        %v1073 = vunpack.c.l.b16 %v803
        %v1074 = vunpack.c.h.b16 %v803
        %v1075 = vunpack.c.l.b16 %v804
        %v1076 = vunpack.c.h.b16 %v804
        %v1077 = vunpack.c.l.b16 %v805
        %v1078 = vunpack.c.h.b16 %v805
        %v1079 = vunpack.c.l.b16 %v806
        %v1080 = vunpack.c.h.b16 %v806
        %v1081 = vunpack.c.l.b16 %v807
        %v1082 = vunpack.c.h.b16 %v807
        %v1083 = vunpack.c.l.b16 %v808
        %v1084 = vunpack.c.h.b16 %v808
        %v1085 = vunpack.c.l.b16 %v809
        %v1086 = vunpack.c.h.b16 %v809
        %v1087 = vunpack.c.l.b16 %v810
        %v1088 = vunpack.c.h.b16 %v810
        %v1089 = vunpack.c.l.b16 %v811
        %v1090 = vunpack.c.h.b16 %v811
        %v1091 = vunpack.c.l.b16 %v812
        %v1092 = vunpack.c.h.b16 %v812
        %v1093 = vunpack.c.l.b16 %v813
        %v1094 = vunpack.c.h.b16 %v813
        %v1095 = vunpack.c.l.b16 %v814
        %v1096 = vunpack.c.h.b16 %v814
        %v1097 = vunpack.c.l.b16 %v815
        %v1098 = vunpack.c.h.b16 %v815
        %v1099 = vunpack.c.l.b16 %v816
        %v1100 = vunpack.c.h.b16 %v816
        %v1101 = vunpack.c.l.b16 %v817
        %v1102 = vunpack.c.h.b16 %v817
        %v1103 = vunpack.c.l.b16 %v818
        %v1104 = vunpack.c.h.b16 %v818
        %v1105 = vunpack.c.l.b16 %v819
        %v1106 = vunpack.c.h.b16 %v819
        %v1107 = vunpack.c.l.b16 %v820
        %v1108 = vunpack.c.h.b16 %v820
        %v1109 = vunpack.c.l.b16 %v821
        %v1110 = vunpack.c.h.b16 %v821
        %v1111 = vunpack.c.l.b16 %v822
        %v1112 = vunpack.c.h.b16 %v822
        %v1113 = vunpack.c.l.b16 %v823
        %v1114 = vunpack.c.h.b16 %v823
        %v1115 = vunpack.c.l.b16 %v824
        %v1116 = vunpack.c.h.b16 %v824
        %v1117 = vunpack.c.l.b16 %v825
        %v1118 = vunpack.c.h.b16 %v825
        %v1119 = vunpack.c.l.b16 %v826
        %v1120 = vunpack.c.h.b16 %v826
        %v1121 = vunpack.c.l.b16 %v827
        %v1122 = vunpack.c.h.b16 %v827
        %v1123 = vunpack.c.l.b16 %v828
        %v1124 = vunpack.c.h.b16 %v828
        %v1125 = vunpack.c.l.b16 %v829
        %v1126 = vunpack.c.h.b16 %v829
        %v1127 = vunpack.c.l.b16 %v830
        %v1128 = vunpack.c.h.b16 %v830
        %v1129 = vunpack.c.l.b16 %v831
        %v1130 = vunpack.c.h.b16 %v831
        %v1131 = vunpack.c.l.b16 %v832
        %v1132 = vunpack.c.h.b16 %v832
        %v1133 = vunpack.c.l.b16 %v833
        %v1134 = vunpack.c.h.b16 %v833
        %v1135 = vunpack.c.l.b16 %v834
        %v1136 = vunpack.c.h.b16 %v834
        %v1137 = vunpack.c.l.b16 %v835
        %v1138 = vunpack.c.h.b16 %v835
        %v1139 = vunpack.c.l.b16 %v836
        %v1140 = vunpack.c.h.b16 %v836
        %v1141 = vunpack.c.l.b16 %v837
        %v1142 = vunpack.c.h.b16 %v837
        %v1143 = vunpack.c.l.b16 %v838
        %v1144 = vunpack.c.h.b16 %v838
        %v1145 = vunpack.c.l.b16 %v839
        %v1146 = vunpack.c.h.b16 %v839
        %v1147 = vunpack.c.l.b16 %v840
        %v1148 = vunpack.c.h.b16 %v840
        %v1149 = vunpack.c.l.b16 %v841
        %v1150 = vunpack.c.h.b16 %v841
        %v1151 = vunpack.c.l.b16 %v842
        %v1152 = vunpack.c.h.b16 %v842
        %v1153 = vunpack.c.l.b16 %v843
        %v1154 = vunpack.c.h.b16 %v843
        %v1155 = vunpack.c.l.b16 %v844
        %v1156 = vunpack.c.h.b16 %v844
        %v1157 = vunpack.c.l.b16 %v845
        %v1158 = vunpack.c.h.b16 %v845
        %v1159 = vunpack.c.l.b16 %v846
        %v1160 = vunpack.c.h.b16 %v846
        %v1161 = vunpack.c.l.b16 %v847
        %v1162 = vunpack.c.h.b16 %v847
        %v1163 = vunpack.c.l.b16 %v848
        %v1164 = vunpack.c.h.b16 %v848
        %v1165 = vunpack.c.l.b16 %v849
        %v1166 = vunpack.c.h.b16 %v849
        %v1167 = vunpack.c.l.b16 %v850
        %v1168 = vunpack.c.h.b16 %v850
        %v1169 = vunpack.c.l.b16 %v851
        %v1170 = vunpack.c.h.b16 %v851
        %v1171 = vunpack.c.l.b16 %v852
        %v1172 = vunpack.c.h.b16 %v852
        %v1173 = vunpack.c.l.b16 %v853
        %v1174 = vunpack.c.h.b16 %v853
        %v1175 = vunpack.c.l.b16 %v854
        %v1176 = vunpack.c.h.b16 %v854
        %v1177 = vunpack.c.l.b16 %v855
        %v1178 = vunpack.c.h.b16 %v855
        %v1179 = vunpack.c.l.b16 %v856
        %v1180 = vunpack.c.h.b16 %v856
        %v1181 = vunpack.c.l.b16 %v857
        %v1182 = vunpack.c.h.b16 %v857
        %v1183 = vunpack.c.l.b16 %v858
        %v1184 = vunpack.c.h.b16 %v858
        %v1185 = vunpack.c.l.b16 %v859
        %v1186 = vunpack.c.h.b16 %v859
        %v1187 = vunpack.c.l.b16 %v860
        %v1188 = vunpack.c.h.b16 %v860
        %v1189 = vunpack.c.l.b16 %v861
        %v1190 = vunpack.c.h.b16 %v861
        %v1191 = vunpack.c.l.b16 %v862
        %v1192 = vunpack.c.h.b16 %v862
        %v1193 = vunpack.c.l.b16 %v863
        %v1194 = vunpack.c.h.b16 %v863
        %v1195 = vunpack.c.l.b16 %v864
        %v1196 = vunpack.c.h.b16 %v864
        %v1197 = vunpack.c.l.b16 %v865
        %v1198 = vunpack.c.h.b16 %v865
        %v1199 = vunpack.c.l.b16 %v866
        %v1200 = vunpack.c.h.b16 %v866
        %v1201 = vunpack.c.l.b16 %v867
        %v1202 = vunpack.c.h.b16 %v867
        %v1203 = vunpack.c.l.b16 %v868
        %v1204 = vunpack.c.h.b16 %v868
        %v1205 = vunpack.c.l.b16 %v869
        %v1206 = vunpack.c.h.b16 %v869
        %v1207 = vunpack.c.l.b16 %v870
        %v1208 = vunpack.c.h.b16 %v870
        %v1209 = vunpack.c.l.b16 %v871
        %v1210 = vunpack.c.h.b16 %v871
        %v1211 = vunpack.c.l.b16 %v872
        %v1212 = vunpack.c.h.b16 %v872
        %v1213 = vunpack.c.l.b16 %v873
        %v1214 = vunpack.c.h.b16 %v873
        %v1215 = vunpack.c.l.b16 %v874
        %v1216 = vunpack.c.h.b16 %v874
        %v1217 = vunpack.c.l.b16 %v875
        %v1218 = vunpack.c.h.b16 %v875
        %v1219 = vunpack.c.l.b16 %v876
        %v1220 = vunpack.c.h.b16 %v876
        %v1221 = vunpack.c.l.b16 %v877
        %v1222 = vunpack.c.h.b16 %v877
        %v1223 = vunpack.c.l.b16 %v878
        %v1224 = vunpack.c.h.b16 %v878
        %v1225 = vunpack.c.l.b16 %v879
        %v1226 = vunpack.c.h.b16 %v879
        %v1227 = vunpack.c.l.b16 %v880
        %v1228 = vunpack.c.h.b16 %v880
        %v1229 = vunpack.c.l.b16 %v881
        %v1230 = vunpack.c.h.b16 %v881
        %v1231 = vunpack.c.l.b16 %v882
        %v1232 = vunpack.c.h.b16 %v882
        %v1233 = vunpack.c.l.b16 %v883
        %v1234 = vunpack.c.h.b16 %v883
        %v1235 = vunpack.c.l.b16 %v884
        %v1236 = vunpack.c.h.b16 %v884
        %v1237 = vunpack.c.l.b16 %v885
        %v1238 = vunpack.c.h.b16 %v885
        %v1239 = vunpack.c.l.b16 %v886
        %v1240 = vunpack.c.h.b16 %v886
        %v1241 = vunpack.c.l.b16 %v887
        %v1242 = vunpack.c.h.b16 %v887
        %v1243 = vunpack.c.l.b16 %v888
        %v1244 = vunpack.c.h.b16 %v888
        %v1245 = vunpack.c.l.b16 %v889
        %v1246 = vunpack.c.h.b16 %v889
        %v1247 = vunpack.c.l.b16 %v890
        %v1248 = vunpack.c.h.b16 %v890
        %v1249 = vunpack.c.l.b16 %v891
        %v1250 = vunpack.c.h.b16 %v891
        %v1251 = vunpack.c.l.b16 %v892
        %v1252 = vunpack.c.h.b16 %v892
        %v1253 = vunpack.c.l.b16 %v893
        %v1254 = vunpack.c.h.b16 %v893
        %v1255 = vunpack.c.l.b16 %v894
        %v1256 = vunpack.c.h.b16 %v894
        %v1257 = vunpack.c.l.b16 %v895
        %v1258 = vunpack.c.h.b16 %v895
        %v1259 = vunpack.c.l.b16 %v896
        %v1260 = vunpack.c.h.b16 %v896
        %v1261 = vunpack.c.l.b16 %v897
        %v1262 = vunpack.c.h.b16 %v897
        %v1263 = vunpack.c.l.b16 %v898
        %v1264 = vunpack.c.h.b16 %v898
        %v1265 = vunpack.c.l.b16 %v899
        %v1266 = vunpack.c.h.b16 %v899
        %v1267 = vunpack.c.l.b16 %v900
        %v1268 = vunpack.c.h.b16 %v900
        %v1269 = vunpack.c.l.b16 %v901
        %v1270 = vunpack.c.h.b16 %v901
        %v1271 = vunpack.c.l.b16 %v902
        %v1272 = vunpack.c.h.b16 %v902
        %v1273 = vunpack.c.l.b16 %v903
        %v1274 = vunpack.c.h.b16 %v903
        %v1275 = vunpack.c.l.b16 %v904
        %v1276 = vunpack.c.h.b16 %v904
        %v1277 = vunpack.c.l.b16 %v905
        %v1278 = vunpack.c.h.b16 %v905
        %v1279 = vunpack.c.l.b16 %v906
        %v1280 = vunpack.c.h.b16 %v906
        %v1281 = vunpack.c.l.b16 %v907
        %v1282 = vunpack.c.h.b16 %v907
        %v1283 = vunpack.c.l.b16 %v908
        %v1284 = vunpack.c.h.b16 %v908
        %v1285 = vunpack.c.l.b16 %v909
        %v1286 = vunpack.c.h.b16 %v909
        %v1287 = vunpack.c.l.b16 %v910
        %v1288 = vunpack.c.h.b16 %v910
        %v1289 = vunpack.c.l.b16 %v911
        %v1290 = vunpack.c.h.b16 %v911
        %v1291 = vunpack.c.l.b16 %v912
        %v1292 = vunpack.c.h.b16 %v912
        %v1293 = vunpack.c.l.b16 %v913
        %v1294 = vunpack.c.h.b16 %v913
        %v1295 = vunpack.c.l.b16 %v914
        %v1296 = vunpack.c.h.b16 %v914
        %v1297 = vunpack.c.l.b16 %v915
        %v1298 = vunpack.c.h.b16 %v915
        %v1299 = vunpack.c.l.b16 %v916
        %v1300 = vunpack.c.h.b16 %v916
        %v1301 = vunpack.c.l.b16 %v917
        %v1302 = vunpack.c.h.b16 %v917
        %v1303 = vunpack.c.l.b16 %v918
        %v1304 = vunpack.c.h.b16 %v918
        %v1305 = vpack.c.b16 %v1051, %v1049
        %v1306 = vpack.c.b16 %v1052, %v1050
        %v1307 = vpack.c.b16 %v1055, %v1053
        %v1308 = vpack.c.b16 %v1056, %v1054
        %v1309 = vpack.c.b16 %v1059, %v1057
        %v1310 = vpack.c.b16 %v1060, %v1058
        %v1311 = vpack.c.b16 %v1063, %v1061
        %v1312 = vpack.c.b16 %v1064, %v1062
        %v1313 = vpack.c.b16 %v1067, %v1065
        %v1314 = vpack.c.b16 %v1068, %v1066
        %v1315 = vpack.c.b16 %v1071, %v1069
        %v1316 = vpack.c.b16 %v1072, %v1070
        %v1317 = vpack.c.b16 %v1075, %v1073
        %v1318 = vpack.c.b16 %v1076, %v1074
        %v1319 = vpack.c.b16 %v1079, %v1077
        %v1320 = vpack.c.b16 %v1080, %v1078
        %v1321 = vpack.c.b16 %v1083, %v1081
        %v1322 = vpack.c.b16 %v1084, %v1082
        %v1323 = vpack.c.b16 %v1087, %v1085
        %v1324 = vpack.c.b16 %v1088, %v1086
        %v1325 = vpack.c.b16 %v1091, %v1089
        %v1326 = vpack.c.b16 %v1092, %v1090
        %v1327 = vpack.c.b16 %v1095, %v1093
        %v1328 = vpack.c.b16 %v1096, %v1094
        %v1329 = vpack.c.b16 %v1099, %v1097
        %v1330 = vpack.c.b16 %v1100, %v1098
        %v1331 = vpack.c.b16 %v1103, %v1101
        %v1332 = vpack.c.b16 %v1104, %v1102
        %v1333 = vpack.c.b16 %v1107, %v1105
        %v1334 = vpack.c.b16 %v1108, %v1106
        %v1335 = vpack.c.b16 %v1111, %v1109
        %v1336 = vpack.c.b16 %v1112, %v1110
        %v1337 = vpack.c.b16 %v1115, %v1113
        %v1338 = vpack.c.b16 %v1116, %v1114
        %v1339 = vpack.c.b16 %v1119, %v1117
        %v1340 = vpack.c.b16 %v1120, %v1118
        %v1341 = vpack.c.b16 %v1123, %v1121
        %v1342 = vpack.c.b16 %v1124, %v1122
        %v1343 = vpack.c.b16 %v1127, %v1125
        %v1344 = vpack.c.b16 %v1128, %v1126
        %v1345 = vpack.c.b16 %v1131, %v1129
        %v1346 = vpack.c.b16 %v1132, %v1130
        %v1347 = vpack.c.b16 %v1135, %v1133
        %v1348 = vpack.c.b16 %v1136, %v1134
        %v1349 = vpack.c.b16 %v1139, %v1137
        %v1350 = vpack.c.b16 %v1140, %v1138
        %v1351 = vpack.c.b16 %v1143, %v1141
        %v1352 = vpack.c.b16 %v1144, %v1142
        %v1353 = vpack.c.b16 %v1147, %v1145
        %v1354 = vpack.c.b16 %v1148, %v1146
        %v1355 = vpack.c.b16 %v1151, %v1149
        %v1356 = vpack.c.b16 %v1152, %v1150
        %v1357 = vpack.c.b16 %v1155, %v1153
        %v1358 = vpack.c.b16 %v1156, %v1154
        %v1359 = vpack.c.b16 %v1159, %v1157
        %v1360 = vpack.c.b16 %v1160, %v1158
        %v1361 = vpack.c.b16 %v1163, %v1161
        %v1362 = vpack.c.b16 %v1164, %v1162
        %v1363 = vpack.c.b16 %v1167, %v1165
        %v1364 = vpack.c.b16 %v1168, %v1166
        %v1365 = vpack.c.b16 %v1171, %v1169
        %v1366 = vpack.c.b16 %v1172, %v1170
        %v1367 = vpack.c.b16 %v1175, %v1173
        %v1368 = vpack.c.b16 %v1176, %v1174
        %v1369 = vpack.c.b16 %v1179, %v1177
        %v1370 = vpack.c.b16 %v1180, %v1178
        %v1371 = vpack.c.b16 %v1183, %v1181
        %v1372 = vpack.c.b16 %v1184, %v1182
        %v1373 = vpack.c.b16 %v1187, %v1185
        %v1374 = vpack.c.b16 %v1188, %v1186
        %v1375 = vpack.c.b16 %v1191, %v1189
        %v1376 = vpack.c.b16 %v1192, %v1190
        %v1377 = vpack.c.b16 %v1195, %v1193
        %v1378 = vpack.c.b16 %v1196, %v1194
        %v1379 = vpack.c.b16 %v1199, %v1197
        %v1380 = vpack.c.b16 %v1200, %v1198
        %v1381 = vpack.c.b16 %v1203, %v1201
        %v1382 = vpack.c.b16 %v1204, %v1202
        %v1383 = vpack.c.b16 %v1207, %v1205
        %v1384 = vpack.c.b16 %v1208, %v1206
        %v1385 = vpack.c.b16 %v1211, %v1209
        %v1386 = vpack.c.b16 %v1212, %v1210
        %v1387 = vpack.c.b16 %v1215, %v1213
        %v1388 = vpack.c.b16 %v1216, %v1214
        %v1389 = vpack.c.b16 %v1219, %v1217
        %v1390 = vpack.c.b16 %v1220, %v1218
        %v1391 = vpack.c.b16 %v1223, %v1221
        %v1392 = vpack.c.b16 %v1224, %v1222
        %v1393 = vpack.c.b16 %v1227, %v1225
        %v1394 = vpack.c.b16 %v1228, %v1226
        %v1395 = vpack.c.b16 %v1231, %v1229
        %v1396 = vpack.c.b16 %v1232, %v1230
        %v1397 = vpack.c.b16 %v1235, %v1233
        %v1398 = vpack.c.b16 %v1236, %v1234
        %v1399 = vpack.c.b16 %v1239, %v1237
        %v1400 = vpack.c.b16 %v1240, %v1238
        %v1401 = vpack.c.b16 %v1243, %v1241
        %v1402 = vpack.c.b16 %v1244, %v1242
        %v1403 = vpack.c.b16 %v1247, %v1245
        %v1404 = vpack.c.b16 %v1248, %v1246
        %v1405 = vpack.c.b16 %v1251, %v1249
        %v1406 = vpack.c.b16 %v1252, %v1250
        %v1407 = vpack.c.b16 %v1255, %v1253
        %v1408 = vpack.c.b16 %v1256, %v1254
        %v1409 = vpack.c.b16 %v1259, %v1257
        %v1410 = vpack.c.b16 %v1260, %v1258
        %v1411 = vpack.c.b16 %v1263, %v1261
        %v1412 = vpack.c.b16 %v1264, %v1262
        %v1413 = vpack.c.b16 %v1267, %v1265
        %v1414 = vpack.c.b16 %v1268, %v1266
        %v1415 = vpack.c.b16 %v1271, %v1269
        %v1416 = vpack.c.b16 %v1272, %v1270
        %v1417 = vpack.c.b16 %v1275, %v1273
        %v1418 = vpack.c.b16 %v1276, %v1274
        %v1419 = vpack.c.b16 %v1279, %v1277
        %v1420 = vpack.c.b16 %v1280, %v1278
        %v1421 = vpack.c.b16 %v1283, %v1281
        %v1422 = vpack.c.b16 %v1284, %v1282
        %v1423 = vpack.c.b16 %v1287, %v1285
        %v1424 = vpack.c.b16 %v1288, %v1286
        %v1425 = vpack.c.b16 %v1291, %v1289
        %v1426 = vpack.c.b16 %v1292, %v1290
        %v1427 = vpack.c.b16 %v1295, %v1293
        %v1428 = vpack.c.b16 %v1296, %v1294
        %v1429 = vpack.c.b16 %v1299, %v1297
        %v1430 = vpack.c.b16 %v1300, %v1298
        %v1431 = vpack.c.b16 %v1303, %v1301
        %v1432 = vpack.c.b16 %v1304, %v1302
        %1561 = vmatprep.subr.bf16.mxu0 %v1320
        %1562 = vmatpush1.bf16.msra.mxu0 %v1319
        %1563 = vmatprep.subr.bf16.mxu0 %v1318
        %1564 = vmatpush1.bf16.msra.mxu0 %v1317
        %1565 = vmatprep.subr.bf16.mxu0 %v1316
        %1566 = vmatpush1.bf16.msra.mxu0 %v1315
        %1567 = vmatprep.subr.bf16.mxu0 %v1314
        %1568 = vmatpush1.bf16.msra.mxu0 %v1313
        %1569 = vmatprep.subr.bf16.mxu0 %v1312
        %1570 = vmatpush1.bf16.msra.mxu0 %v1311
        %1571 = vmatprep.subr.bf16.mxu0 %v1310
        %1572 = vmatpush1.bf16.msra.mxu0 %v1309
        %1573 = vmatprep.subr.bf16.mxu0 %v1308
        %1574 = vmatpush1.bf16.msra.mxu0 %v1307
        %1575 = vmatprep.subr.bf16.mxu0 %v1306
        %1576 = vmatpush1.bf16.msra.mxu0 %v1305
        %1577 = vmatprep.subr.bf16.mxu0 %v1336
        %1578 = vmatpush2.bf16.msra.mxu0 %v1335
        %1579 = vmatprep.subr.bf16.mxu0 %v1334
        %1580 = vmatpush2.bf16.msra.mxu0 %v1333
        %1581 = vmatprep.subr.bf16.mxu0 %v1332
        %1582 = vmatpush2.bf16.msra.mxu0 %v1331
        %1583 = vmatprep.subr.bf16.mxu0 %v1330
        %1584 = vmatpush2.bf16.msra.mxu0 %v1329
        %1585 = vmatprep.subr.bf16.mxu0 %v1328
        %1586 = vmatpush2.bf16.msra.mxu0 %v1327
        %1587 = vmatprep.subr.bf16.mxu0 %v1326
        %1588 = vmatpush2.bf16.msra.mxu0 %v1325
        %1589 = vmatprep.subr.bf16.mxu0 %v1324
        %1590 = vmatpush2.bf16.msra.mxu0 %v1323
        %1591 = vmatprep.subr.bf16.mxu0 %v1322
        %1592 = vmatpush2.bf16.msra.mxu0 %v1321
        %1593 = vmatprep.mubr.bf16.mxu0 %v784
        %1594 = vmatmul.mubr.bf16.gmra.mxu0 %v783
        %v1595 = vpop.f32.mrf.mxu0
        %v1596 = vadd.f32 %v919, %v1595
        %v1597 = vpop.f32.mrf.mxu0
        %v1598 = vadd.f32 %v920, %v1597
        %v1599 = vpop.f32.mrf.mxu0
        %v1600 = vpop.f32.mrf.mxu0
        %1601 = vdwg.mxu0
        %1602 = vmatprep.subr.bf16.mxu0 %v1352
        %1603 = vmatpush1.bf16.msra.mxu0 %v1351
        %1604 = vmatprep.subr.bf16.mxu0 %v1350
        %1605 = vmatpush1.bf16.msra.mxu0 %v1349
        %1606 = vmatprep.subr.bf16.mxu0 %v1348
        %1607 = vmatpush1.bf16.msra.mxu0 %v1347
        %1608 = vmatprep.subr.bf16.mxu0 %v1346
        %1609 = vmatpush1.bf16.msra.mxu0 %v1345
        %1610 = vmatprep.subr.bf16.mxu0 %v1344
        %1611 = vmatpush1.bf16.msra.mxu0 %v1343
        %1612 = vmatprep.subr.bf16.mxu0 %v1342
        %1613 = vmatpush1.bf16.msra.mxu0 %v1341
        %1614 = vmatprep.subr.bf16.mxu0 %v1340
        %1615 = vmatpush1.bf16.msra.mxu0 %v1339
        %1616 = vmatprep.subr.bf16.mxu0 %v1338
        %1617 = vmatpush1.bf16.msra.mxu0 %v1337
        %1618 = vmatprep.subr.bf16.mxu0 %v1368
        %1619 = vmatpush2.bf16.msra.mxu0 %v1367
        %1620 = vmatprep.subr.bf16.mxu0 %v1366
        %1621 = vmatpush2.bf16.msra.mxu0 %v1365
        %1622 = vmatprep.subr.bf16.mxu0 %v1364
        %1623 = vmatpush2.bf16.msra.mxu0 %v1363
        %1624 = vmatprep.subr.bf16.mxu0 %v1362
        %1625 = vmatpush2.bf16.msra.mxu0 %v1361
        %1626 = vmatprep.subr.bf16.mxu0 %v1360
        %1627 = vmatpush2.bf16.msra.mxu0 %v1359
        %1628 = vmatprep.subr.bf16.mxu0 %v1358
        %1629 = vmatpush2.bf16.msra.mxu0 %v1357
        %1630 = vmatprep.subr.bf16.mxu0 %v1356
        %1631 = vmatpush2.bf16.msra.mxu0 %v1355
        %1632 = vmatprep.subr.bf16.mxu0 %v1354
        %1633 = vmatpush2.bf16.msra.mxu0 %v1353
        %1634 = vmatprep.mubr.bf16.mxu0 %v786
        %1635 = vmatmul.mubr.bf16.gmra.mxu0 %v785
        %v1636 = vpop.f32.mrf.mxu0
        %v1637 = vadd.f32 %v1596, %v1636
        %v1638 = vpop.f32.mrf.mxu0
        %v1639 = vadd.f32 %v1598, %v1638
        %v1640 = vpop.f32.mrf.mxu0
        %v1641 = vpop.f32.mrf.mxu0
        %1642 = vdwg.mxu0
        %1643 = vmatprep.subr.bf16.mxu0 %v1384
        %1644 = vmatpush1.bf16.msra.mxu0 %v1383
        %1645 = vmatprep.subr.bf16.mxu0 %v1382
        %1646 = vmatpush1.bf16.msra.mxu0 %v1381
        %1647 = vmatprep.subr.bf16.mxu0 %v1380
        %1648 = vmatpush1.bf16.msra.mxu0 %v1379
        %1649 = vmatprep.subr.bf16.mxu0 %v1378
        %1650 = vmatpush1.bf16.msra.mxu0 %v1377
        %1651 = vmatprep.subr.bf16.mxu0 %v1376
        %1652 = vmatpush1.bf16.msra.mxu0 %v1375
        %1653 = vmatprep.subr.bf16.mxu0 %v1374
        %1654 = vmatpush1.bf16.msra.mxu0 %v1373
        %1655 = vmatprep.subr.bf16.mxu0 %v1372
        %1656 = vmatpush1.bf16.msra.mxu0 %v1371
        %1657 = vmatprep.subr.bf16.mxu0 %v1370
        %1658 = vmatpush1.bf16.msra.mxu0 %v1369
        %1659 = vmatprep.subr.bf16.mxu0 %v1400
        %1660 = vmatpush2.bf16.msra.mxu0 %v1399
        %1661 = vmatprep.subr.bf16.mxu0 %v1398
        %1662 = vmatpush2.bf16.msra.mxu0 %v1397
        %1663 = vmatprep.subr.bf16.mxu0 %v1396
        %1664 = vmatpush2.bf16.msra.mxu0 %v1395
        %1665 = vmatprep.subr.bf16.mxu0 %v1394
        %1666 = vmatpush2.bf16.msra.mxu0 %v1393
        %1667 = vmatprep.subr.bf16.mxu0 %v1392
        %1668 = vmatpush2.bf16.msra.mxu0 %v1391
        %1669 = vmatprep.subr.bf16.mxu0 %v1390
        %1670 = vmatpush2.bf16.msra.mxu0 %v1389
        %1671 = vmatprep.subr.bf16.mxu0 %v1388
        %1672 = vmatpush2.bf16.msra.mxu0 %v1387
        %1673 = vmatprep.subr.bf16.mxu0 %v1386
        %1674 = vmatpush2.bf16.msra.mxu0 %v1385
        %1675 = vmatprep.mubr.bf16.mxu0 %v788
        %1676 = vmatmul.mubr.bf16.gmra.mxu0 %v787
        %v1677 = vpop.f32.mrf.mxu0
        %v1678 = vadd.f32 %v1637, %v1677
        %v1679 = vpop.f32.mrf.mxu0
        %v1680 = vadd.f32 %v1639, %v1679
        %v1681 = vpop.f32.mrf.mxu0
        %v1682 = vpop.f32.mrf.mxu0
        %1683 = vdwg.mxu0
        %1684 = vmatprep.subr.bf16.mxu0 %v1416
        %1685 = vmatpush1.bf16.msra.mxu0 %v1415
        %1686 = vmatprep.subr.bf16.mxu0 %v1414
        %1687 = vmatpush1.bf16.msra.mxu0 %v1413
        %1688 = vmatprep.subr.bf16.mxu0 %v1412
        %1689 = vmatpush1.bf16.msra.mxu0 %v1411
        %1690 = vmatprep.subr.bf16.mxu0 %v1410
        %1691 = vmatpush1.bf16.msra.mxu0 %v1409
        %1692 = vmatprep.subr.bf16.mxu0 %v1408
        %1693 = vmatpush1.bf16.msra.mxu0 %v1407
        %1694 = vmatprep.subr.bf16.mxu0 %v1406
        %1695 = vmatpush1.bf16.msra.mxu0 %v1405
        %1696 = vmatprep.subr.bf16.mxu0 %v1404
        %1697 = vmatpush1.bf16.msra.mxu0 %v1403
        %1698 = vmatprep.subr.bf16.mxu0 %v1402
        %1699 = vmatpush1.bf16.msra.mxu0 %v1401
        %1700 = vmatprep.subr.bf16.mxu0 %v1432
        %1701 = vmatpush2.bf16.msra.mxu0 %v1431
        %1702 = vmatprep.subr.bf16.mxu0 %v1430
        %1703 = vmatpush2.bf16.msra.mxu0 %v1429
        %1704 = vmatprep.subr.bf16.mxu0 %v1428
        %1705 = vmatpush2.bf16.msra.mxu0 %v1427
        %1706 = vmatprep.subr.bf16.mxu0 %v1426
        %1707 = vmatpush2.bf16.msra.mxu0 %v1425
        %1708 = vmatprep.subr.bf16.mxu0 %v1424
        %1709 = vmatpush2.bf16.msra.mxu0 %v1423
        %1710 = vmatprep.subr.bf16.mxu0 %v1422
        %1711 = vmatpush2.bf16.msra.mxu0 %v1421
        %1712 = vmatprep.subr.bf16.mxu0 %v1420
        %1713 = vmatpush2.bf16.msra.mxu0 %v1419
        %1714 = vmatprep.subr.bf16.mxu0 %v1418
        %1715 = vmatpush2.bf16.msra.mxu0 %v1417
        %1716 = vmatprep.mubr.bf16.mxu0 %v790
        %1717 = vmatmul.mubr.bf16.gmra.mxu0 %v789
        %v1718 = vpop.f32.mrf.mxu0
        %v1719 = vadd.f32 %v1678, %v1718
        %v1720 = vpop.f32.mrf.mxu0
        %v1721 = vadd.f32 %v1680, %v1720
        %v1722 = vpop.f32.mrf.mxu0
        %v1723 = vpop.f32.mrf.mxu0
        %1724 = vdwg.mxu0
        %v1725 = vmax.f32 %v1719, 0.0
        %v1726 = vmax.f32 %v1721, 0.0
        %1729 = vrot.lane.b32.xlu0 %v1725, 32
        %v1730 = vpop.permute.xlu0 %1729
        %1731 = vrot.lane.b32.xlu0 %v1726, 32
        %v1732 = vpop.permute.xlu0 %1731
        %v1733 = vsel %vm655, %v1730, %v1732
        %vm1737 = vcmask 1047808
        %1738 = vst.msk [vmem:[#allocation2] sm:$0xff] %vm1737, %v1730
        %1739 = vst [vmem:[#allocation2 + $0x8] sm:$0xff] %v1733
        %1740 = vst.msk [vmem:[#allocation2 + $0x10] sm:$0xff] %vm655, %v1732
        %s1741 = scalar_lea.vmem [#allocation8], 1024
        %v1742 = vld [vmem:[%s1741] sm:$0xff]
        %v1743 = vld [vmem:[%s1741 + $0x8] sm:$0xff]
        %v1744 = vld [vmem:[%s1741 + $0x10] sm:$0xff]
        %v1745 = vld [vmem:[%s1741 + $0x18] sm:$0xff]
        %v1746 = vld [vmem:[%s1741 + $0x20] sm:$0xff]
        %v1747 = vld [vmem:[%s1741 + $0x28] sm:$0xff]
        %v1748 = vld [vmem:[%s1741 + $0x30] sm:$0xff]
        %v1749 = vld [vmem:[%s1741 + $0x38] sm:$0xff]
        %v1750 = vld [vmem:[%s1741 + $0x40] sm:$0xff]
        %v1751 = vld [vmem:[%s1741 + $0x48] sm:$0xff]
        %v1752 = vld [vmem:[%s1741 + $0x50] sm:$0xff]
        %v1753 = vld [vmem:[%s1741 + $0x58] sm:$0xff]
        %v1754 = vld [vmem:[%s1741 + $0x60] sm:$0xff]
        %v1755 = vld [vmem:[%s1741 + $0x68] sm:$0xff]
        %v1756 = vld [vmem:[%s1741 + $0x70] sm:$0xff]
        %v1757 = vld [vmem:[%s1741 + $0x78] sm:$0xff]
        %v1758 = vld [vmem:[%s1741 + $0x80] sm:$0xff]
        %v1759 = vld [vmem:[%s1741 + $0x88] sm:$0xff]
        %v1760 = vld [vmem:[%s1741 + $0x90] sm:$0xff]
        %v1761 = vld [vmem:[%s1741 + $0x98] sm:$0xff]
        %v1762 = vld [vmem:[%s1741 + $0xa0] sm:$0xff]
        %v1763 = vld [vmem:[%s1741 + $0xa8] sm:$0xff]
        %v1764 = vld [vmem:[%s1741 + $0xb0] sm:$0xff]
        %v1765 = vld [vmem:[%s1741 + $0xb8] sm:$0xff]
        %v1766 = vld [vmem:[%s1741 + $0xc0] sm:$0xff]
        %v1767 = vld [vmem:[%s1741 + $0xc8] sm:$0xff]
        %v1768 = vld [vmem:[%s1741 + $0xd0] sm:$0xff]
        %v1769 = vld [vmem:[%s1741 + $0xd8] sm:$0xff]
        %v1770 = vld [vmem:[%s1741 + $0xe0] sm:$0xff]
        %v1771 = vld [vmem:[%s1741 + $0xe8] sm:$0xff]
        %v1772 = vld [vmem:[%s1741 + $0xf0] sm:$0xff]
        %v1773 = vld [vmem:[%s1741 + $0xf8] sm:$0xff]
        %v1774 = vld [vmem:[%s1741 + $0x100] sm:$0xff]
        %v1775 = vld [vmem:[%s1741 + $0x108] sm:$0xff]
        %v1776 = vld [vmem:[%s1741 + $0x110] sm:$0xff]
        %v1777 = vld [vmem:[%s1741 + $0x118] sm:$0xff]
        %v1778 = vld [vmem:[%s1741 + $0x120] sm:$0xff]
        %v1779 = vld [vmem:[%s1741 + $0x128] sm:$0xff]
        %v1780 = vld [vmem:[%s1741 + $0x130] sm:$0xff]
        %v1781 = vld [vmem:[%s1741 + $0x138] sm:$0xff]
        %v1782 = vld [vmem:[%s1741 + $0x140] sm:$0xff]
        %v1783 = vld [vmem:[%s1741 + $0x148] sm:$0xff]
        %v1784 = vld [vmem:[%s1741 + $0x150] sm:$0xff]
        %v1785 = vld [vmem:[%s1741 + $0x158] sm:$0xff]
        %v1786 = vld [vmem:[%s1741 + $0x160] sm:$0xff]
        %v1787 = vld [vmem:[%s1741 + $0x168] sm:$0xff]
        %v1788 = vld [vmem:[%s1741 + $0x170] sm:$0xff]
        %v1789 = vld [vmem:[%s1741 + $0x178] sm:$0xff]
        %v1790 = vld [vmem:[%s1741 + $0x180] sm:$0xff]
        %v1791 = vld [vmem:[%s1741 + $0x188] sm:$0xff]
        %v1792 = vld [vmem:[%s1741 + $0x190] sm:$0xff]
        %v1793 = vld [vmem:[%s1741 + $0x198] sm:$0xff]
        %v1794 = vld [vmem:[%s1741 + $0x1a0] sm:$0xff]
        %v1795 = vld [vmem:[%s1741 + $0x1a8] sm:$0xff]
        %v1796 = vld [vmem:[%s1741 + $0x1b0] sm:$0xff]
        %v1797 = vld [vmem:[%s1741 + $0x1b8] sm:$0xff]
        %v1798 = vld [vmem:[%s1741 + $0x1c0] sm:$0xff]
        %v1799 = vld [vmem:[%s1741 + $0x1c8] sm:$0xff]
        %v1800 = vld [vmem:[%s1741 + $0x1d0] sm:$0xff]
        %v1801 = vld [vmem:[%s1741 + $0x1d8] sm:$0xff]
        %v1802 = vld [vmem:[%s1741 + $0x1e0] sm:$0xff]
        %v1803 = vld [vmem:[%s1741 + $0x1e8] sm:$0xff]
        %v1804 = vld [vmem:[%s1741 + $0x1f0] sm:$0xff]
        %v1805 = vld [vmem:[%s1741 + $0x1f8] sm:$0xff]
        %v1806 = vld [vmem:[%s1741 + $0x200] sm:$0xff]
        %v1807 = vld [vmem:[%s1741 + $0x208] sm:$0xff]
        %v1808 = vld [vmem:[%s1741 + $0x210] sm:$0xff]
        %v1809 = vld [vmem:[%s1741 + $0x218] sm:$0xff]
        %v1810 = vld [vmem:[%s1741 + $0x220] sm:$0xff]
        %v1811 = vld [vmem:[%s1741 + $0x228] sm:$0xff]
        %v1812 = vld [vmem:[%s1741 + $0x230] sm:$0xff]
        %v1813 = vld [vmem:[%s1741 + $0x238] sm:$0xff]
        %v1814 = vld [vmem:[%s1741 + $0x240] sm:$0xff]
        %v1815 = vld [vmem:[%s1741 + $0x248] sm:$0xff]
        %v1816 = vld [vmem:[%s1741 + $0x250] sm:$0xff]
        %v1817 = vld [vmem:[%s1741 + $0x258] sm:$0xff]
        %v1818 = vld [vmem:[%s1741 + $0x260] sm:$0xff]
        %v1819 = vld [vmem:[%s1741 + $0x268] sm:$0xff]
        %v1820 = vld [vmem:[%s1741 + $0x270] sm:$0xff]
        %v1821 = vld [vmem:[%s1741 + $0x278] sm:$0xff]
        %v1822 = vld [vmem:[%s1741 + $0x280] sm:$0xff]
        %v1823 = vld [vmem:[%s1741 + $0x288] sm:$0xff]
        %v1824 = vld [vmem:[%s1741 + $0x290] sm:$0xff]
        %v1825 = vld [vmem:[%s1741 + $0x298] sm:$0xff]
        %v1826 = vld [vmem:[%s1741 + $0x2a0] sm:$0xff]
        %v1827 = vld [vmem:[%s1741 + $0x2a8] sm:$0xff]
        %v1828 = vld [vmem:[%s1741 + $0x2b0] sm:$0xff]
        %v1829 = vld [vmem:[%s1741 + $0x2b8] sm:$0xff]
        %v1830 = vld [vmem:[%s1741 + $0x2c0] sm:$0xff]
        %v1831 = vld [vmem:[%s1741 + $0x2c8] sm:$0xff]
        %v1832 = vld [vmem:[%s1741 + $0x2d0] sm:$0xff]
        %v1833 = vld [vmem:[%s1741 + $0x2d8] sm:$0xff]
        %v1834 = vld [vmem:[%s1741 + $0x2e0] sm:$0xff]
        %v1835 = vld [vmem:[%s1741 + $0x2e8] sm:$0xff]
        %v1836 = vld [vmem:[%s1741 + $0x2f0] sm:$0xff]
        %v1837 = vld [vmem:[%s1741 + $0x2f8] sm:$0xff]
        %v1838 = vld [vmem:[%s1741 + $0x300] sm:$0xff]
        %v1839 = vld [vmem:[%s1741 + $0x308] sm:$0xff]
        %v1840 = vld [vmem:[%s1741 + $0x310] sm:$0xff]
        %v1841 = vld [vmem:[%s1741 + $0x318] sm:$0xff]
        %v1842 = vld [vmem:[%s1741 + $0x320] sm:$0xff]
        %v1843 = vld [vmem:[%s1741 + $0x328] sm:$0xff]
        %v1844 = vld [vmem:[%s1741 + $0x330] sm:$0xff]
        %v1845 = vld [vmem:[%s1741 + $0x338] sm:$0xff]
        %v1846 = vld [vmem:[%s1741 + $0x340] sm:$0xff]
        %v1847 = vld [vmem:[%s1741 + $0x348] sm:$0xff]
        %v1848 = vld [vmem:[%s1741 + $0x350] sm:$0xff]
        %v1849 = vld [vmem:[%s1741 + $0x358] sm:$0xff]
        %v1850 = vld [vmem:[%s1741 + $0x360] sm:$0xff]
        %v1851 = vld [vmem:[%s1741 + $0x368] sm:$0xff]
        %v1852 = vld [vmem:[%s1741 + $0x370] sm:$0xff]
        %v1853 = vld [vmem:[%s1741 + $0x378] sm:$0xff]
        %v1854 = vld [vmem:[%s1741 + $0x380] sm:$0xff]
        %v1855 = vld [vmem:[%s1741 + $0x388] sm:$0xff]
        %v1856 = vld [vmem:[%s1741 + $0x390] sm:$0xff]
        %v1857 = vld [vmem:[%s1741 + $0x398] sm:$0xff]
        %v1858 = vld [vmem:[%s1741 + $0x3a0] sm:$0xff]
        %v1859 = vld [vmem:[%s1741 + $0x3a8] sm:$0xff]
        %v1860 = vld [vmem:[%s1741 + $0x3b0] sm:$0xff]
        %v1861 = vld [vmem:[%s1741 + $0x3b8] sm:$0xff]
        %v1862 = vld [vmem:[%s1741 + $0x3c0] sm:$0xff]
        %v1863 = vld [vmem:[%s1741 + $0x3c8] sm:$0xff]
        %v1864 = vld [vmem:[%s1741 + $0x3d0] sm:$0xff]
        %v1865 = vld [vmem:[%s1741 + $0x3d8] sm:$0xff]
        %v1866 = vld [vmem:[%s1741 + $0x3e0] sm:$0xff]
        %v1867 = vld [vmem:[%s1741 + $0x3e8] sm:$0xff]
        %v1868 = vld [vmem:[%s1741 + $0x3f0] sm:$0xff]
        %v1869 = vld [vmem:[%s1741 + $0x3f8] sm:$0xff]
        %v1870 = vld [vmem:[#allocation10 + $0x10] sm:$0xff]
        %v1871 = vld [vmem:[#allocation10 + $0x18] sm:$0xff]
        %v2000 = vunpack.c.l.b16 %v1742
        %v2001 = vunpack.c.h.b16 %v1742
        %v2002 = vunpack.c.l.b16 %v1743
        %v2003 = vunpack.c.h.b16 %v1743
        %v2004 = vunpack.c.l.b16 %v1744
        %v2005 = vunpack.c.h.b16 %v1744
        %v2006 = vunpack.c.l.b16 %v1745
        %v2007 = vunpack.c.h.b16 %v1745
        %v2008 = vunpack.c.l.b16 %v1746
        %v2009 = vunpack.c.h.b16 %v1746
        %v2010 = vunpack.c.l.b16 %v1747
        %v2011 = vunpack.c.h.b16 %v1747
        %v2012 = vunpack.c.l.b16 %v1748
        %v2013 = vunpack.c.h.b16 %v1748
        %v2014 = vunpack.c.l.b16 %v1749
        %v2015 = vunpack.c.h.b16 %v1749
        %v2016 = vunpack.c.l.b16 %v1750
        %v2017 = vunpack.c.h.b16 %v1750
        %v2018 = vunpack.c.l.b16 %v1751
        %v2019 = vunpack.c.h.b16 %v1751
        %v2020 = vunpack.c.l.b16 %v1752
        %v2021 = vunpack.c.h.b16 %v1752
        %v2022 = vunpack.c.l.b16 %v1753
        %v2023 = vunpack.c.h.b16 %v1753
        %v2024 = vunpack.c.l.b16 %v1754
        %v2025 = vunpack.c.h.b16 %v1754
        %v2026 = vunpack.c.l.b16 %v1755
        %v2027 = vunpack.c.h.b16 %v1755
        %v2028 = vunpack.c.l.b16 %v1756
        %v2029 = vunpack.c.h.b16 %v1756
        %v2030 = vunpack.c.l.b16 %v1757
        %v2031 = vunpack.c.h.b16 %v1757
        %v2032 = vunpack.c.l.b16 %v1758
        %v2033 = vunpack.c.h.b16 %v1758
        %v2034 = vunpack.c.l.b16 %v1759
        %v2035 = vunpack.c.h.b16 %v1759
        %v2036 = vunpack.c.l.b16 %v1760
        %v2037 = vunpack.c.h.b16 %v1760
        %v2038 = vunpack.c.l.b16 %v1761
        %v2039 = vunpack.c.h.b16 %v1761
        %v2040 = vunpack.c.l.b16 %v1762
        %v2041 = vunpack.c.h.b16 %v1762
        %v2042 = vunpack.c.l.b16 %v1763
        %v2043 = vunpack.c.h.b16 %v1763
        %v2044 = vunpack.c.l.b16 %v1764
        %v2045 = vunpack.c.h.b16 %v1764
        %v2046 = vunpack.c.l.b16 %v1765
        %v2047 = vunpack.c.h.b16 %v1765
        %v2048 = vunpack.c.l.b16 %v1766
        %v2049 = vunpack.c.h.b16 %v1766
        %v2050 = vunpack.c.l.b16 %v1767
        %v2051 = vunpack.c.h.b16 %v1767
        %v2052 = vunpack.c.l.b16 %v1768
        %v2053 = vunpack.c.h.b16 %v1768
        %v2054 = vunpack.c.l.b16 %v1769
        %v2055 = vunpack.c.h.b16 %v1769
        %v2056 = vunpack.c.l.b16 %v1770
        %v2057 = vunpack.c.h.b16 %v1770
        %v2058 = vunpack.c.l.b16 %v1771
        %v2059 = vunpack.c.h.b16 %v1771
        %v2060 = vunpack.c.l.b16 %v1772
        %v2061 = vunpack.c.h.b16 %v1772
        %v2062 = vunpack.c.l.b16 %v1773
        %v2063 = vunpack.c.h.b16 %v1773
        %v2064 = vunpack.c.l.b16 %v1774
        %v2065 = vunpack.c.h.b16 %v1774
        %v2066 = vunpack.c.l.b16 %v1775
        %v2067 = vunpack.c.h.b16 %v1775
        %v2068 = vunpack.c.l.b16 %v1776
        %v2069 = vunpack.c.h.b16 %v1776
        %v2070 = vunpack.c.l.b16 %v1777
        %v2071 = vunpack.c.h.b16 %v1777
        %v2072 = vunpack.c.l.b16 %v1778
        %v2073 = vunpack.c.h.b16 %v1778
        %v2074 = vunpack.c.l.b16 %v1779
        %v2075 = vunpack.c.h.b16 %v1779
        %v2076 = vunpack.c.l.b16 %v1780
        %v2077 = vunpack.c.h.b16 %v1780
        %v2078 = vunpack.c.l.b16 %v1781
        %v2079 = vunpack.c.h.b16 %v1781
        %v2080 = vunpack.c.l.b16 %v1782
        %v2081 = vunpack.c.h.b16 %v1782
        %v2082 = vunpack.c.l.b16 %v1783
        %v2083 = vunpack.c.h.b16 %v1783
        %v2084 = vunpack.c.l.b16 %v1784
        %v2085 = vunpack.c.h.b16 %v1784
        %v2086 = vunpack.c.l.b16 %v1785
        %v2087 = vunpack.c.h.b16 %v1785
        %v2088 = vunpack.c.l.b16 %v1786
        %v2089 = vunpack.c.h.b16 %v1786
        %v2090 = vunpack.c.l.b16 %v1787
        %v2091 = vunpack.c.h.b16 %v1787
        %v2092 = vunpack.c.l.b16 %v1788
        %v2093 = vunpack.c.h.b16 %v1788
        %v2094 = vunpack.c.l.b16 %v1789
        %v2095 = vunpack.c.h.b16 %v1789
        %v2096 = vunpack.c.l.b16 %v1790
        %v2097 = vunpack.c.h.b16 %v1790
        %v2098 = vunpack.c.l.b16 %v1791
        %v2099 = vunpack.c.h.b16 %v1791
        %v2100 = vunpack.c.l.b16 %v1792
        %v2101 = vunpack.c.h.b16 %v1792
        %v2102 = vunpack.c.l.b16 %v1793
        %v2103 = vunpack.c.h.b16 %v1793
        %v2104 = vunpack.c.l.b16 %v1794
        %v2105 = vunpack.c.h.b16 %v1794
        %v2106 = vunpack.c.l.b16 %v1795
        %v2107 = vunpack.c.h.b16 %v1795
        %v2108 = vunpack.c.l.b16 %v1796
        %v2109 = vunpack.c.h.b16 %v1796
        %v2110 = vunpack.c.l.b16 %v1797
        %v2111 = vunpack.c.h.b16 %v1797
        %v2112 = vunpack.c.l.b16 %v1798
        %v2113 = vunpack.c.h.b16 %v1798
        %v2114 = vunpack.c.l.b16 %v1799
        %v2115 = vunpack.c.h.b16 %v1799
        %v2116 = vunpack.c.l.b16 %v1800
        %v2117 = vunpack.c.h.b16 %v1800
        %v2118 = vunpack.c.l.b16 %v1801
        %v2119 = vunpack.c.h.b16 %v1801
        %v2120 = vunpack.c.l.b16 %v1802
        %v2121 = vunpack.c.h.b16 %v1802
        %v2122 = vunpack.c.l.b16 %v1803
        %v2123 = vunpack.c.h.b16 %v1803
        %v2124 = vunpack.c.l.b16 %v1804
        %v2125 = vunpack.c.h.b16 %v1804
        %v2126 = vunpack.c.l.b16 %v1805
        %v2127 = vunpack.c.h.b16 %v1805
        %v2128 = vunpack.c.l.b16 %v1806
        %v2129 = vunpack.c.h.b16 %v1806
        %v2130 = vunpack.c.l.b16 %v1807
        %v2131 = vunpack.c.h.b16 %v1807
        %v2132 = vunpack.c.l.b16 %v1808
        %v2133 = vunpack.c.h.b16 %v1808
        %v2134 = vunpack.c.l.b16 %v1809
        %v2135 = vunpack.c.h.b16 %v1809
        %v2136 = vunpack.c.l.b16 %v1810
        %v2137 = vunpack.c.h.b16 %v1810
        %v2138 = vunpack.c.l.b16 %v1811
        %v2139 = vunpack.c.h.b16 %v1811
        %v2140 = vunpack.c.l.b16 %v1812
        %v2141 = vunpack.c.h.b16 %v1812
        %v2142 = vunpack.c.l.b16 %v1813
        %v2143 = vunpack.c.h.b16 %v1813
        %v2144 = vunpack.c.l.b16 %v1814
        %v2145 = vunpack.c.h.b16 %v1814
        %v2146 = vunpack.c.l.b16 %v1815
        %v2147 = vunpack.c.h.b16 %v1815
        %v2148 = vunpack.c.l.b16 %v1816
        %v2149 = vunpack.c.h.b16 %v1816
        %v2150 = vunpack.c.l.b16 %v1817
        %v2151 = vunpack.c.h.b16 %v1817
        %v2152 = vunpack.c.l.b16 %v1818
        %v2153 = vunpack.c.h.b16 %v1818
        %v2154 = vunpack.c.l.b16 %v1819
        %v2155 = vunpack.c.h.b16 %v1819
        %v2156 = vunpack.c.l.b16 %v1820
        %v2157 = vunpack.c.h.b16 %v1820
        %v2158 = vunpack.c.l.b16 %v1821
        %v2159 = vunpack.c.h.b16 %v1821
        %v2160 = vunpack.c.l.b16 %v1822
        %v2161 = vunpack.c.h.b16 %v1822
        %v2162 = vunpack.c.l.b16 %v1823
        %v2163 = vunpack.c.h.b16 %v1823
        %v2164 = vunpack.c.l.b16 %v1824
        %v2165 = vunpack.c.h.b16 %v1824
        %v2166 = vunpack.c.l.b16 %v1825
        %v2167 = vunpack.c.h.b16 %v1825
        %v2168 = vunpack.c.l.b16 %v1826
        %v2169 = vunpack.c.h.b16 %v1826
        %v2170 = vunpack.c.l.b16 %v1827
        %v2171 = vunpack.c.h.b16 %v1827
        %v2172 = vunpack.c.l.b16 %v1828
        %v2173 = vunpack.c.h.b16 %v1828
        %v2174 = vunpack.c.l.b16 %v1829
        %v2175 = vunpack.c.h.b16 %v1829
        %v2176 = vunpack.c.l.b16 %v1830
        %v2177 = vunpack.c.h.b16 %v1830
        %v2178 = vunpack.c.l.b16 %v1831
        %v2179 = vunpack.c.h.b16 %v1831
        %v2180 = vunpack.c.l.b16 %v1832
        %v2181 = vunpack.c.h.b16 %v1832
        %v2182 = vunpack.c.l.b16 %v1833
        %v2183 = vunpack.c.h.b16 %v1833
        %v2184 = vunpack.c.l.b16 %v1834
        %v2185 = vunpack.c.h.b16 %v1834
        %v2186 = vunpack.c.l.b16 %v1835
        %v2187 = vunpack.c.h.b16 %v1835
        %v2188 = vunpack.c.l.b16 %v1836
        %v2189 = vunpack.c.h.b16 %v1836
        %v2190 = vunpack.c.l.b16 %v1837
        %v2191 = vunpack.c.h.b16 %v1837
        %v2192 = vunpack.c.l.b16 %v1838
        %v2193 = vunpack.c.h.b16 %v1838
        %v2194 = vunpack.c.l.b16 %v1839
        %v2195 = vunpack.c.h.b16 %v1839
        %v2196 = vunpack.c.l.b16 %v1840
        %v2197 = vunpack.c.h.b16 %v1840
        %v2198 = vunpack.c.l.b16 %v1841
        %v2199 = vunpack.c.h.b16 %v1841
        %v2200 = vunpack.c.l.b16 %v1842
        %v2201 = vunpack.c.h.b16 %v1842
        %v2202 = vunpack.c.l.b16 %v1843
        %v2203 = vunpack.c.h.b16 %v1843
        %v2204 = vunpack.c.l.b16 %v1844
        %v2205 = vunpack.c.h.b16 %v1844
        %v2206 = vunpack.c.l.b16 %v1845
        %v2207 = vunpack.c.h.b16 %v1845
        %v2208 = vunpack.c.l.b16 %v1846
        %v2209 = vunpack.c.h.b16 %v1846
        %v2210 = vunpack.c.l.b16 %v1847
        %v2211 = vunpack.c.h.b16 %v1847
        %v2212 = vunpack.c.l.b16 %v1848
        %v2213 = vunpack.c.h.b16 %v1848
        %v2214 = vunpack.c.l.b16 %v1849
        %v2215 = vunpack.c.h.b16 %v1849
        %v2216 = vunpack.c.l.b16 %v1850
        %v2217 = vunpack.c.h.b16 %v1850
        %v2218 = vunpack.c.l.b16 %v1851
        %v2219 = vunpack.c.h.b16 %v1851
        %v2220 = vunpack.c.l.b16 %v1852
        %v2221 = vunpack.c.h.b16 %v1852
        %v2222 = vunpack.c.l.b16 %v1853
        %v2223 = vunpack.c.h.b16 %v1853
        %v2224 = vunpack.c.l.b16 %v1854
        %v2225 = vunpack.c.h.b16 %v1854
        %v2226 = vunpack.c.l.b16 %v1855
        %v2227 = vunpack.c.h.b16 %v1855
        %v2228 = vunpack.c.l.b16 %v1856
        %v2229 = vunpack.c.h.b16 %v1856
        %v2230 = vunpack.c.l.b16 %v1857
        %v2231 = vunpack.c.h.b16 %v1857
        %v2232 = vunpack.c.l.b16 %v1858
        %v2233 = vunpack.c.h.b16 %v1858
        %v2234 = vunpack.c.l.b16 %v1859
        %v2235 = vunpack.c.h.b16 %v1859
        %v2236 = vunpack.c.l.b16 %v1860
        %v2237 = vunpack.c.h.b16 %v1860
        %v2238 = vunpack.c.l.b16 %v1861
        %v2239 = vunpack.c.h.b16 %v1861
        %v2240 = vunpack.c.l.b16 %v1862
        %v2241 = vunpack.c.h.b16 %v1862
        %v2242 = vunpack.c.l.b16 %v1863
        %v2243 = vunpack.c.h.b16 %v1863
        %v2244 = vunpack.c.l.b16 %v1864
        %v2245 = vunpack.c.h.b16 %v1864
        %v2246 = vunpack.c.l.b16 %v1865
        %v2247 = vunpack.c.h.b16 %v1865
        %v2248 = vunpack.c.l.b16 %v1866
        %v2249 = vunpack.c.h.b16 %v1866
        %v2250 = vunpack.c.l.b16 %v1867
        %v2251 = vunpack.c.h.b16 %v1867
        %v2252 = vunpack.c.l.b16 %v1868
        %v2253 = vunpack.c.h.b16 %v1868
        %v2254 = vunpack.c.l.b16 %v1869
        %v2255 = vunpack.c.h.b16 %v1869
        %v2256 = vpack.c.b16 %v2002, %v2000
        %v2257 = vpack.c.b16 %v2003, %v2001
        %v2258 = vpack.c.b16 %v2006, %v2004
        %v2259 = vpack.c.b16 %v2007, %v2005
        %v2260 = vpack.c.b16 %v2010, %v2008
        %v2261 = vpack.c.b16 %v2011, %v2009
        %v2262 = vpack.c.b16 %v2014, %v2012
        %v2263 = vpack.c.b16 %v2015, %v2013
        %v2264 = vpack.c.b16 %v2018, %v2016
        %v2265 = vpack.c.b16 %v2019, %v2017
        %v2266 = vpack.c.b16 %v2022, %v2020
        %v2267 = vpack.c.b16 %v2023, %v2021
        %v2268 = vpack.c.b16 %v2026, %v2024
        %v2269 = vpack.c.b16 %v2027, %v2025
        %v2270 = vpack.c.b16 %v2030, %v2028
        %v2271 = vpack.c.b16 %v2031, %v2029
        %v2272 = vpack.c.b16 %v2034, %v2032
        %v2273 = vpack.c.b16 %v2035, %v2033
        %v2274 = vpack.c.b16 %v2038, %v2036
        %v2275 = vpack.c.b16 %v2039, %v2037
        %v2276 = vpack.c.b16 %v2042, %v2040
        %v2277 = vpack.c.b16 %v2043, %v2041
        %v2278 = vpack.c.b16 %v2046, %v2044
        %v2279 = vpack.c.b16 %v2047, %v2045
        %v2280 = vpack.c.b16 %v2050, %v2048
        %v2281 = vpack.c.b16 %v2051, %v2049
        %v2282 = vpack.c.b16 %v2054, %v2052
        %v2283 = vpack.c.b16 %v2055, %v2053
        %v2284 = vpack.c.b16 %v2058, %v2056
        %v2285 = vpack.c.b16 %v2059, %v2057
        %v2286 = vpack.c.b16 %v2062, %v2060
        %v2287 = vpack.c.b16 %v2063, %v2061
        %v2288 = vpack.c.b16 %v2066, %v2064
        %v2289 = vpack.c.b16 %v2067, %v2065
        %v2290 = vpack.c.b16 %v2070, %v2068
        %v2291 = vpack.c.b16 %v2071, %v2069
        %v2292 = vpack.c.b16 %v2074, %v2072
        %v2293 = vpack.c.b16 %v2075, %v2073
        %v2294 = vpack.c.b16 %v2078, %v2076
        %v2295 = vpack.c.b16 %v2079, %v2077
        %v2296 = vpack.c.b16 %v2082, %v2080
        %v2297 = vpack.c.b16 %v2083, %v2081
        %v2298 = vpack.c.b16 %v2086, %v2084
        %v2299 = vpack.c.b16 %v2087, %v2085
        %v2300 = vpack.c.b16 %v2090, %v2088
        %v2301 = vpack.c.b16 %v2091, %v2089
        %v2302 = vpack.c.b16 %v2094, %v2092
        %v2303 = vpack.c.b16 %v2095, %v2093
        %v2304 = vpack.c.b16 %v2098, %v2096
        %v2305 = vpack.c.b16 %v2099, %v2097
        %v2306 = vpack.c.b16 %v2102, %v2100
        %v2307 = vpack.c.b16 %v2103, %v2101
        %v2308 = vpack.c.b16 %v2106, %v2104
        %v2309 = vpack.c.b16 %v2107, %v2105
        %v2310 = vpack.c.b16 %v2110, %v2108
        %v2311 = vpack.c.b16 %v2111, %v2109
        %v2312 = vpack.c.b16 %v2114, %v2112
        %v2313 = vpack.c.b16 %v2115, %v2113
        %v2314 = vpack.c.b16 %v2118, %v2116
        %v2315 = vpack.c.b16 %v2119, %v2117
        %v2316 = vpack.c.b16 %v2122, %v2120
        %v2317 = vpack.c.b16 %v2123, %v2121
        %v2318 = vpack.c.b16 %v2126, %v2124
        %v2319 = vpack.c.b16 %v2127, %v2125
        %v2320 = vpack.c.b16 %v2130, %v2128
        %v2321 = vpack.c.b16 %v2131, %v2129
        %v2322 = vpack.c.b16 %v2134, %v2132
        %v2323 = vpack.c.b16 %v2135, %v2133
        %v2324 = vpack.c.b16 %v2138, %v2136
        %v2325 = vpack.c.b16 %v2139, %v2137
        %v2326 = vpack.c.b16 %v2142, %v2140
        %v2327 = vpack.c.b16 %v2143, %v2141
        %v2328 = vpack.c.b16 %v2146, %v2144
        %v2329 = vpack.c.b16 %v2147, %v2145
        %v2330 = vpack.c.b16 %v2150, %v2148
        %v2331 = vpack.c.b16 %v2151, %v2149
        %v2332 = vpack.c.b16 %v2154, %v2152
        %v2333 = vpack.c.b16 %v2155, %v2153
        %v2334 = vpack.c.b16 %v2158, %v2156
        %v2335 = vpack.c.b16 %v2159, %v2157
        %v2336 = vpack.c.b16 %v2162, %v2160
        %v2337 = vpack.c.b16 %v2163, %v2161
        %v2338 = vpack.c.b16 %v2166, %v2164
        %v2339 = vpack.c.b16 %v2167, %v2165
        %v2340 = vpack.c.b16 %v2170, %v2168
        %v2341 = vpack.c.b16 %v2171, %v2169
        %v2342 = vpack.c.b16 %v2174, %v2172
        %v2343 = vpack.c.b16 %v2175, %v2173
        %v2344 = vpack.c.b16 %v2178, %v2176
        %v2345 = vpack.c.b16 %v2179, %v2177
        %v2346 = vpack.c.b16 %v2182, %v2180
        %v2347 = vpack.c.b16 %v2183, %v2181
        %v2348 = vpack.c.b16 %v2186, %v2184
        %v2349 = vpack.c.b16 %v2187, %v2185
        %v2350 = vpack.c.b16 %v2190, %v2188
        %v2351 = vpack.c.b16 %v2191, %v2189
        %v2352 = vpack.c.b16 %v2194, %v2192
        %v2353 = vpack.c.b16 %v2195, %v2193
        %v2354 = vpack.c.b16 %v2198, %v2196
        %v2355 = vpack.c.b16 %v2199, %v2197
        %v2356 = vpack.c.b16 %v2202, %v2200
        %v2357 = vpack.c.b16 %v2203, %v2201
        %v2358 = vpack.c.b16 %v2206, %v2204
        %v2359 = vpack.c.b16 %v2207, %v2205
        %v2360 = vpack.c.b16 %v2210, %v2208
        %v2361 = vpack.c.b16 %v2211, %v2209
        %v2362 = vpack.c.b16 %v2214, %v2212
        %v2363 = vpack.c.b16 %v2215, %v2213
        %v2364 = vpack.c.b16 %v2218, %v2216
        %v2365 = vpack.c.b16 %v2219, %v2217
        %v2366 = vpack.c.b16 %v2222, %v2220
        %v2367 = vpack.c.b16 %v2223, %v2221
        %v2368 = vpack.c.b16 %v2226, %v2224
        %v2369 = vpack.c.b16 %v2227, %v2225
        %v2370 = vpack.c.b16 %v2230, %v2228
        %v2371 = vpack.c.b16 %v2231, %v2229
        %v2372 = vpack.c.b16 %v2234, %v2232
        %v2373 = vpack.c.b16 %v2235, %v2233
        %v2374 = vpack.c.b16 %v2238, %v2236
        %v2375 = vpack.c.b16 %v2239, %v2237
        %v2376 = vpack.c.b16 %v2242, %v2240
        %v2377 = vpack.c.b16 %v2243, %v2241
        %v2378 = vpack.c.b16 %v2246, %v2244
        %v2379 = vpack.c.b16 %v2247, %v2245
        %v2380 = vpack.c.b16 %v2250, %v2248
        %v2381 = vpack.c.b16 %v2251, %v2249
        %v2382 = vpack.c.b16 %v2254, %v2252
        %v2383 = vpack.c.b16 %v2255, %v2253
        %2512 = vmatprep.subr.bf16.mxu0 %v2271
        %2513 = vmatpush1.bf16.msra.mxu0 %v2270
        %2514 = vmatprep.subr.bf16.mxu0 %v2269
        %2515 = vmatpush1.bf16.msra.mxu0 %v2268
        %2516 = vmatprep.subr.bf16.mxu0 %v2267
        %2517 = vmatpush1.bf16.msra.mxu0 %v2266
        %2518 = vmatprep.subr.bf16.mxu0 %v2265
        %2519 = vmatpush1.bf16.msra.mxu0 %v2264
        %2520 = vmatprep.subr.bf16.mxu0 %v2263
        %2521 = vmatpush1.bf16.msra.mxu0 %v2262
        %2522 = vmatprep.subr.bf16.mxu0 %v2261
        %2523 = vmatpush1.bf16.msra.mxu0 %v2260
        %2524 = vmatprep.subr.bf16.mxu0 %v2259
        %2525 = vmatpush1.bf16.msra.mxu0 %v2258
        %2526 = vmatprep.subr.bf16.mxu0 %v2257
        %2527 = vmatpush1.bf16.msra.mxu0 %v2256
        %2528 = vmatprep.subr.bf16.mxu0 %v2287
        %2529 = vmatpush2.bf16.msra.mxu0 %v2286
        %2530 = vmatprep.subr.bf16.mxu0 %v2285
        %2531 = vmatpush2.bf16.msra.mxu0 %v2284
        %2532 = vmatprep.subr.bf16.mxu0 %v2283
        %2533 = vmatpush2.bf16.msra.mxu0 %v2282
        %2534 = vmatprep.subr.bf16.mxu0 %v2281
        %2535 = vmatpush2.bf16.msra.mxu0 %v2280
        %2536 = vmatprep.subr.bf16.mxu0 %v2279
        %2537 = vmatpush2.bf16.msra.mxu0 %v2278
        %2538 = vmatprep.subr.bf16.mxu0 %v2277
        %2539 = vmatpush2.bf16.msra.mxu0 %v2276
        %2540 = vmatprep.subr.bf16.mxu0 %v2275
        %2541 = vmatpush2.bf16.msra.mxu0 %v2274
        %2542 = vmatprep.subr.bf16.mxu0 %v2273
        %2543 = vmatpush2.bf16.msra.mxu0 %v2272
        %2544 = vmatprep.mubr.bf16.mxu0 %v784
        %2545 = vmatmul.mubr.bf16.gmra.mxu0 %v783
        %v2546 = vpop.f32.mrf.mxu0
        %v2547 = vadd.f32 %v1870, %v2546
        %v2548 = vpop.f32.mrf.mxu0
        %v2549 = vadd.f32 %v1871, %v2548
        %v2550 = vpop.f32.mrf.mxu0
        %v2551 = vpop.f32.mrf.mxu0
        %2552 = vdwg.mxu0
        %2553 = vmatprep.subr.bf16.mxu0 %v2303
        %2554 = vmatpush1.bf16.msra.mxu0 %v2302
        %2555 = vmatprep.subr.bf16.mxu0 %v2301
        %2556 = vmatpush1.bf16.msra.mxu0 %v2300
        %2557 = vmatprep.subr.bf16.mxu0 %v2299
        %2558 = vmatpush1.bf16.msra.mxu0 %v2298
        %2559 = vmatprep.subr.bf16.mxu0 %v2297
        %2560 = vmatpush1.bf16.msra.mxu0 %v2296
        %2561 = vmatprep.subr.bf16.mxu0 %v2295
        %2562 = vmatpush1.bf16.msra.mxu0 %v2294
        %2563 = vmatprep.subr.bf16.mxu0 %v2293
        %2564 = vmatpush1.bf16.msra.mxu0 %v2292
        %2565 = vmatprep.subr.bf16.mxu0 %v2291
        %2566 = vmatpush1.bf16.msra.mxu0 %v2290
        %2567 = vmatprep.subr.bf16.mxu0 %v2289
        %2568 = vmatpush1.bf16.msra.mxu0 %v2288
        %2569 = vmatprep.subr.bf16.mxu0 %v2319
        %2570 = vmatpush2.bf16.msra.mxu0 %v2318
        %2571 = vmatprep.subr.bf16.mxu0 %v2317
        %2572 = vmatpush2.bf16.msra.mxu0 %v2316
        %2573 = vmatprep.subr.bf16.mxu0 %v2315
        %2574 = vmatpush2.bf16.msra.mxu0 %v2314
        %2575 = vmatprep.subr.bf16.mxu0 %v2313
        %2576 = vmatpush2.bf16.msra.mxu0 %v2312
        %2577 = vmatprep.subr.bf16.mxu0 %v2311
        %2578 = vmatpush2.bf16.msra.mxu0 %v2310
        %2579 = vmatprep.subr.bf16.mxu0 %v2309
        %2580 = vmatpush2.bf16.msra.mxu0 %v2308
        %2581 = vmatprep.subr.bf16.mxu0 %v2307
        %2582 = vmatpush2.bf16.msra.mxu0 %v2306
        %2583 = vmatprep.subr.bf16.mxu0 %v2305
        %2584 = vmatpush2.bf16.msra.mxu0 %v2304
        %2585 = vmatprep.mubr.bf16.mxu0 %v786
        %2586 = vmatmul.mubr.bf16.gmra.mxu0 %v785
        %v2587 = vpop.f32.mrf.mxu0
        %v2588 = vadd.f32 %v2547, %v2587
        %v2589 = vpop.f32.mrf.mxu0
        %v2590 = vadd.f32 %v2549, %v2589
        %v2591 = vpop.f32.mrf.mxu0
        %v2592 = vpop.f32.mrf.mxu0
        %2593 = vdwg.mxu0
        %2594 = vmatprep.subr.bf16.mxu0 %v2335
        %2595 = vmatpush1.bf16.msra.mxu0 %v2334
        %2596 = vmatprep.subr.bf16.mxu0 %v2333
        %2597 = vmatpush1.bf16.msra.mxu0 %v2332
        %2598 = vmatprep.subr.bf16.mxu0 %v2331
        %2599 = vmatpush1.bf16.msra.mxu0 %v2330
        %2600 = vmatprep.subr.bf16.mxu0 %v2329
        %2601 = vmatpush1.bf16.msra.mxu0 %v2328
        %2602 = vmatprep.subr.bf16.mxu0 %v2327
        %2603 = vmatpush1.bf16.msra.mxu0 %v2326
        %2604 = vmatprep.subr.bf16.mxu0 %v2325
        %2605 = vmatpush1.bf16.msra.mxu0 %v2324
        %2606 = vmatprep.subr.bf16.mxu0 %v2323
        %2607 = vmatpush1.bf16.msra.mxu0 %v2322
        %2608 = vmatprep.subr.bf16.mxu0 %v2321
        %2609 = vmatpush1.bf16.msra.mxu0 %v2320
        %2610 = vmatprep.subr.bf16.mxu0 %v2351
        %2611 = vmatpush2.bf16.msra.mxu0 %v2350
        %2612 = vmatprep.subr.bf16.mxu0 %v2349
        %2613 = vmatpush2.bf16.msra.mxu0 %v2348
        %2614 = vmatprep.subr.bf16.mxu0 %v2347
        %2615 = vmatpush2.bf16.msra.mxu0 %v2346
        %2616 = vmatprep.subr.bf16.mxu0 %v2345
        %2617 = vmatpush2.bf16.msra.mxu0 %v2344
        %2618 = vmatprep.subr.bf16.mxu0 %v2343
        %2619 = vmatpush2.bf16.msra.mxu0 %v2342
        %2620 = vmatprep.subr.bf16.mxu0 %v2341
        %2621 = vmatpush2.bf16.msra.mxu0 %v2340
        %2622 = vmatprep.subr.bf16.mxu0 %v2339
        %2623 = vmatpush2.bf16.msra.mxu0 %v2338
        %2624 = vmatprep.subr.bf16.mxu0 %v2337
        %2625 = vmatpush2.bf16.msra.mxu0 %v2336
        %2626 = vmatprep.mubr.bf16.mxu0 %v788
        %2627 = vmatmul.mubr.bf16.gmra.mxu0 %v787
        %v2628 = vpop.f32.mrf.mxu0
        %v2629 = vadd.f32 %v2588, %v2628
        %v2630 = vpop.f32.mrf.mxu0
        %v2631 = vadd.f32 %v2590, %v2630
        %v2632 = vpop.f32.mrf.mxu0
        %v2633 = vpop.f32.mrf.mxu0
        %2634 = vdwg.mxu0
        %2635 = vmatprep.subr.bf16.mxu0 %v2367
        %2636 = vmatpush1.bf16.msra.mxu0 %v2366
        %2637 = vmatprep.subr.bf16.mxu0 %v2365
        %2638 = vmatpush1.bf16.msra.mxu0 %v2364
        %2639 = vmatprep.subr.bf16.mxu0 %v2363
        %2640 = vmatpush1.bf16.msra.mxu0 %v2362
        %2641 = vmatprep.subr.bf16.mxu0 %v2361
        %2642 = vmatpush1.bf16.msra.mxu0 %v2360
        %2643 = vmatprep.subr.bf16.mxu0 %v2359
        %2644 = vmatpush1.bf16.msra.mxu0 %v2358
        %2645 = vmatprep.subr.bf16.mxu0 %v2357
        %2646 = vmatpush1.bf16.msra.mxu0 %v2356
        %2647 = vmatprep.subr.bf16.mxu0 %v2355
        %2648 = vmatpush1.bf16.msra.mxu0 %v2354
        %2649 = vmatprep.subr.bf16.mxu0 %v2353
        %2650 = vmatpush1.bf16.msra.mxu0 %v2352
        %2651 = vmatprep.subr.bf16.mxu0 %v2383
        %2652 = vmatpush2.bf16.msra.mxu0 %v2382
        %2653 = vmatprep.subr.bf16.mxu0 %v2381
        %2654 = vmatpush2.bf16.msra.mxu0 %v2380
        %2655 = vmatprep.subr.bf16.mxu0 %v2379
        %2656 = vmatpush2.bf16.msra.mxu0 %v2378
        %2657 = vmatprep.subr.bf16.mxu0 %v2377
        %2658 = vmatpush2.bf16.msra.mxu0 %v2376
        %2659 = vmatprep.subr.bf16.mxu0 %v2375
        %2660 = vmatpush2.bf16.msra.mxu0 %v2374
        %2661 = vmatprep.subr.bf16.mxu0 %v2373
        %2662 = vmatpush2.bf16.msra.mxu0 %v2372
        %2663 = vmatprep.subr.bf16.mxu0 %v2371
        %2664 = vmatpush2.bf16.msra.mxu0 %v2370
        %2665 = vmatprep.subr.bf16.mxu0 %v2369
        %2666 = vmatpush2.bf16.msra.mxu0 %v2368
        %2667 = vmatprep.mubr.bf16.mxu0 %v790
        %2668 = vmatmul.mubr.bf16.gmra.mxu0 %v789
        %v2669 = vpop.f32.mrf.mxu0
        %v2670 = vadd.f32 %v2629, %v2669
        %v2671 = vpop.f32.mrf.mxu0
        %v2672 = vadd.f32 %v2631, %v2671
        %v2673 = vpop.f32.mrf.mxu0
        %v2674 = vpop.f32.mrf.mxu0
        %2675 = vdwg.mxu0
        %v2676 = vmax.f32 %v2670, 0.0
        %v2677 = vmax.f32 %v2672, 0.0
        %2680 = vrot.lane.b32.xlu0 %v2676, 32
        %v2681 = vpop.permute.xlu0 %2680
        %2682 = vrot.lane.b32.xlu0 %v2677, 32
        %v2683 = vpop.permute.xlu0 %2682
        %v2684 = vsel %vm655, %v2681, %v2683
        %2688 = vst.msk [vmem:[#allocation2 + $0x18] sm:$0xff] %vm1737, %v2681
        %2689 = vst [vmem:[#allocation2 + $0x20] sm:$0xff] %v2684
        %2690 = vst.msk [vmem:[#allocation2 + $0x28] sm:$0xff] %vm655, %v2683
        %s2691 = scalar_lea.vmem [#allocation8], 2048
        %v2692 = vld [vmem:[%s2691] sm:$0xff]
        %v2693 = vld [vmem:[%s2691 + $0x8] sm:$0xff]
        %v2694 = vld [vmem:[%s2691 + $0x10] sm:$0xff]
        %v2695 = vld [vmem:[%s2691 + $0x18] sm:$0xff]
        %v2696 = vld [vmem:[%s2691 + $0x20] sm:$0xff]
        %v2697 = vld [vmem:[%s2691 + $0x28] sm:$0xff]
        %v2698 = vld [vmem:[%s2691 + $0x30] sm:$0xff]
        %v2699 = vld [vmem:[%s2691 + $0x38] sm:$0xff]
        %v2700 = vld [vmem:[%s2691 + $0x40] sm:$0xff]
        %v2701 = vld [vmem:[%s2691 + $0x48] sm:$0xff]
        %v2702 = vld [vmem:[%s2691 + $0x50] sm:$0xff]
        %v2703 = vld [vmem:[%s2691 + $0x58] sm:$0xff]
        %v2704 = vld [vmem:[%s2691 + $0x60] sm:$0xff]
        %v2705 = vld [vmem:[%s2691 + $0x68] sm:$0xff]
        %v2706 = vld [vmem:[%s2691 + $0x70] sm:$0xff]
        %v2707 = vld [vmem:[%s2691 + $0x78] sm:$0xff]
        %v2708 = vld [vmem:[%s2691 + $0x80] sm:$0xff]
        %v2709 = vld [vmem:[%s2691 + $0x88] sm:$0xff]
        %v2710 = vld [vmem:[%s2691 + $0x90] sm:$0xff]
        %v2711 = vld [vmem:[%s2691 + $0x98] sm:$0xff]
        %v2712 = vld [vmem:[%s2691 + $0xa0] sm:$0xff]
        %v2713 = vld [vmem:[%s2691 + $0xa8] sm:$0xff]
        %v2714 = vld [vmem:[%s2691 + $0xb0] sm:$0xff]
        %v2715 = vld [vmem:[%s2691 + $0xb8] sm:$0xff]
        %v2716 = vld [vmem:[%s2691 + $0xc0] sm:$0xff]
        %v2717 = vld [vmem:[%s2691 + $0xc8] sm:$0xff]
        %v2718 = vld [vmem:[%s2691 + $0xd0] sm:$0xff]
        %v2719 = vld [vmem:[%s2691 + $0xd8] sm:$0xff]
        %v2720 = vld [vmem:[%s2691 + $0xe0] sm:$0xff]
        %v2721 = vld [vmem:[%s2691 + $0xe8] sm:$0xff]
        %v2722 = vld [vmem:[%s2691 + $0xf0] sm:$0xff]
        %v2723 = vld [vmem:[%s2691 + $0xf8] sm:$0xff]
        %v2724 = vld [vmem:[%s2691 + $0x100] sm:$0xff]
        %v2725 = vld [vmem:[%s2691 + $0x108] sm:$0xff]
        %v2726 = vld [vmem:[%s2691 + $0x110] sm:$0xff]
        %v2727 = vld [vmem:[%s2691 + $0x118] sm:$0xff]
        %v2728 = vld [vmem:[%s2691 + $0x120] sm:$0xff]
        %v2729 = vld [vmem:[%s2691 + $0x128] sm:$0xff]
        %v2730 = vld [vmem:[%s2691 + $0x130] sm:$0xff]
        %v2731 = vld [vmem:[%s2691 + $0x138] sm:$0xff]
        %v2732 = vld [vmem:[%s2691 + $0x140] sm:$0xff]
        %v2733 = vld [vmem:[%s2691 + $0x148] sm:$0xff]
        %v2734 = vld [vmem:[%s2691 + $0x150] sm:$0xff]
        %v2735 = vld [vmem:[%s2691 + $0x158] sm:$0xff]
        %v2736 = vld [vmem:[%s2691 + $0x160] sm:$0xff]
        %v2737 = vld [vmem:[%s2691 + $0x168] sm:$0xff]
        %v2738 = vld [vmem:[%s2691 + $0x170] sm:$0xff]
        %v2739 = vld [vmem:[%s2691 + $0x178] sm:$0xff]
        %v2740 = vld [vmem:[%s2691 + $0x180] sm:$0xff]
        %v2741 = vld [vmem:[%s2691 + $0x188] sm:$0xff]
        %v2742 = vld [vmem:[%s2691 + $0x190] sm:$0xff]
        %v2743 = vld [vmem:[%s2691 + $0x198] sm:$0xff]
        %v2744 = vld [vmem:[%s2691 + $0x1a0] sm:$0xff]
        %v2745 = vld [vmem:[%s2691 + $0x1a8] sm:$0xff]
        %v2746 = vld [vmem:[%s2691 + $0x1b0] sm:$0xff]
        %v2747 = vld [vmem:[%s2691 + $0x1b8] sm:$0xff]
        %v2748 = vld [vmem:[%s2691 + $0x1c0] sm:$0xff]
        %v2749 = vld [vmem:[%s2691 + $0x1c8] sm:$0xff]
        %v2750 = vld [vmem:[%s2691 + $0x1d0] sm:$0xff]
        %v2751 = vld [vmem:[%s2691 + $0x1d8] sm:$0xff]
        %v2752 = vld [vmem:[%s2691 + $0x1e0] sm:$0xff]
        %v2753 = vld [vmem:[%s2691 + $0x1e8] sm:$0xff]
        %v2754 = vld [vmem:[%s2691 + $0x1f0] sm:$0xff]
        %v2755 = vld [vmem:[%s2691 + $0x1f8] sm:$0xff]
        %v2756 = vld [vmem:[%s2691 + $0x200] sm:$0xff]
        %v2757 = vld [vmem:[%s2691 + $0x208] sm:$0xff]
        %v2758 = vld [vmem:[%s2691 + $0x210] sm:$0xff]
        %v2759 = vld [vmem:[%s2691 + $0x218] sm:$0xff]
        %v2760 = vld [vmem:[%s2691 + $0x220] sm:$0xff]
        %v2761 = vld [vmem:[%s2691 + $0x228] sm:$0xff]
        %v2762 = vld [vmem:[%s2691 + $0x230] sm:$0xff]
        %v2763 = vld [vmem:[%s2691 + $0x238] sm:$0xff]
        %v2764 = vld [vmem:[%s2691 + $0x240] sm:$0xff]
        %v2765 = vld [vmem:[%s2691 + $0x248] sm:$0xff]
        %v2766 = vld [vmem:[%s2691 + $0x250] sm:$0xff]
        %v2767 = vld [vmem:[%s2691 + $0x258] sm:$0xff]
        %v2768 = vld [vmem:[%s2691 + $0x260] sm:$0xff]
        %v2769 = vld [vmem:[%s2691 + $0x268] sm:$0xff]
        %v2770 = vld [vmem:[%s2691 + $0x270] sm:$0xff]
        %v2771 = vld [vmem:[%s2691 + $0x278] sm:$0xff]
        %v2772 = vld [vmem:[%s2691 + $0x280] sm:$0xff]
        %v2773 = vld [vmem:[%s2691 + $0x288] sm:$0xff]
        %v2774 = vld [vmem:[%s2691 + $0x290] sm:$0xff]
        %v2775 = vld [vmem:[%s2691 + $0x298] sm:$0xff]
        %v2776 = vld [vmem:[%s2691 + $0x2a0] sm:$0xff]
        %v2777 = vld [vmem:[%s2691 + $0x2a8] sm:$0xff]
        %v2778 = vld [vmem:[%s2691 + $0x2b0] sm:$0xff]
        %v2779 = vld [vmem:[%s2691 + $0x2b8] sm:$0xff]
        %v2780 = vld [vmem:[%s2691 + $0x2c0] sm:$0xff]
        %v2781 = vld [vmem:[%s2691 + $0x2c8] sm:$0xff]
        %v2782 = vld [vmem:[%s2691 + $0x2d0] sm:$0xff]
        %v2783 = vld [vmem:[%s2691 + $0x2d8] sm:$0xff]
        %v2784 = vld [vmem:[%s2691 + $0x2e0] sm:$0xff]
        %v2785 = vld [vmem:[%s2691 + $0x2e8] sm:$0xff]
        %v2786 = vld [vmem:[%s2691 + $0x2f0] sm:$0xff]
        %v2787 = vld [vmem:[%s2691 + $0x2f8] sm:$0xff]
        %v2788 = vld [vmem:[%s2691 + $0x300] sm:$0xff]
        %v2789 = vld [vmem:[%s2691 + $0x308] sm:$0xff]
        %v2790 = vld [vmem:[%s2691 + $0x310] sm:$0xff]
        %v2791 = vld [vmem:[%s2691 + $0x318] sm:$0xff]
        %v2792 = vld [vmem:[%s2691 + $0x320] sm:$0xff]
        %v2793 = vld [vmem:[%s2691 + $0x328] sm:$0xff]
        %v2794 = vld [vmem:[%s2691 + $0x330] sm:$0xff]
        %v2795 = vld [vmem:[%s2691 + $0x338] sm:$0xff]
        %v2796 = vld [vmem:[%s2691 + $0x340] sm:$0xff]
        %v2797 = vld [vmem:[%s2691 + $0x348] sm:$0xff]
        %v2798 = vld [vmem:[%s2691 + $0x350] sm:$0xff]
        %v2799 = vld [vmem:[%s2691 + $0x358] sm:$0xff]
        %v2800 = vld [vmem:[%s2691 + $0x360] sm:$0xff]
        %v2801 = vld [vmem:[%s2691 + $0x368] sm:$0xff]
        %v2802 = vld [vmem:[%s2691 + $0x370] sm:$0xff]
        %v2803 = vld [vmem:[%s2691 + $0x378] sm:$0xff]
        %v2804 = vld [vmem:[%s2691 + $0x380] sm:$0xff]
        %v2805 = vld [vmem:[%s2691 + $0x388] sm:$0xff]
        %v2806 = vld [vmem:[%s2691 + $0x390] sm:$0xff]
        %v2807 = vld [vmem:[%s2691 + $0x398] sm:$0xff]
        %v2808 = vld [vmem:[%s2691 + $0x3a0] sm:$0xff]
        %v2809 = vld [vmem:[%s2691 + $0x3a8] sm:$0xff]
        %v2810 = vld [vmem:[%s2691 + $0x3b0] sm:$0xff]
        %v2811 = vld [vmem:[%s2691 + $0x3b8] sm:$0xff]
        %v2812 = vld [vmem:[%s2691 + $0x3c0] sm:$0xff]
        %v2813 = vld [vmem:[%s2691 + $0x3c8] sm:$0xff]
        %v2814 = vld [vmem:[%s2691 + $0x3d0] sm:$0xff]
        %v2815 = vld [vmem:[%s2691 + $0x3d8] sm:$0xff]
        %v2816 = vld [vmem:[%s2691 + $0x3e0] sm:$0xff]
        %v2817 = vld [vmem:[%s2691 + $0x3e8] sm:$0xff]
        %v2818 = vld [vmem:[%s2691 + $0x3f0] sm:$0xff]
        %v2819 = vld [vmem:[%s2691 + $0x3f8] sm:$0xff]
        %v2820 = vld [vmem:[#allocation10 + $0x20] sm:$0xff]
        %v2821 = vld [vmem:[#allocation10 + $0x28] sm:$0xff]
        %v2950 = vunpack.c.l.b16 %v2692
        %v2951 = vunpack.c.h.b16 %v2692
        %v2952 = vunpack.c.l.b16 %v2693
        %v2953 = vunpack.c.h.b16 %v2693
        %v2954 = vunpack.c.l.b16 %v2694
        %v2955 = vunpack.c.h.b16 %v2694
        %v2956 = vunpack.c.l.b16 %v2695
        %v2957 = vunpack.c.h.b16 %v2695
        %v2958 = vunpack.c.l.b16 %v2696
        %v2959 = vunpack.c.h.b16 %v2696
        %v2960 = vunpack.c.l.b16 %v2697
        %v2961 = vunpack.c.h.b16 %v2697
        %v2962 = vunpack.c.l.b16 %v2698
        %v2963 = vunpack.c.h.b16 %v2698
        %v2964 = vunpack.c.l.b16 %v2699
        %v2965 = vunpack.c.h.b16 %v2699
        %v2966 = vunpack.c.l.b16 %v2700
        %v2967 = vunpack.c.h.b16 %v2700
        %v2968 = vunpack.c.l.b16 %v2701
        %v2969 = vunpack.c.h.b16 %v2701
        %v2970 = vunpack.c.l.b16 %v2702
        %v2971 = vunpack.c.h.b16 %v2702
        %v2972 = vunpack.c.l.b16 %v2703
        %v2973 = vunpack.c.h.b16 %v2703
        %v2974 = vunpack.c.l.b16 %v2704
        %v2975 = vunpack.c.h.b16 %v2704
        %v2976 = vunpack.c.l.b16 %v2705
        %v2977 = vunpack.c.h.b16 %v2705
        %v2978 = vunpack.c.l.b16 %v2706
        %v2979 = vunpack.c.h.b16 %v2706
        %v2980 = vunpack.c.l.b16 %v2707
        %v2981 = vunpack.c.h.b16 %v2707
        %v2982 = vunpack.c.l.b16 %v2708
        %v2983 = vunpack.c.h.b16 %v2708
        %v2984 = vunpack.c.l.b16 %v2709
        %v2985 = vunpack.c.h.b16 %v2709
        %v2986 = vunpack.c.l.b16 %v2710
        %v2987 = vunpack.c.h.b16 %v2710
        %v2988 = vunpack.c.l.b16 %v2711
        %v2989 = vunpack.c.h.b16 %v2711
        %v2990 = vunpack.c.l.b16 %v2712
        %v2991 = vunpack.c.h.b16 %v2712
        %v2992 = vunpack.c.l.b16 %v2713
        %v2993 = vunpack.c.h.b16 %v2713
        %v2994 = vunpack.c.l.b16 %v2714
        %v2995 = vunpack.c.h.b16 %v2714
        %v2996 = vunpack.c.l.b16 %v2715
        %v2997 = vunpack.c.h.b16 %v2715
        %v2998 = vunpack.c.l.b16 %v2716
        %v2999 = vunpack.c.h.b16 %v2716
        %v3000 = vunpack.c.l.b16 %v2717
        %v3001 = vunpack.c.h.b16 %v2717
        %v3002 = vunpack.c.l.b16 %v2718
        %v3003 = vunpack.c.h.b16 %v2718
        %v3004 = vunpack.c.l.b16 %v2719
        %v3005 = vunpack.c.h.b16 %v2719
        %v3006 = vunpack.c.l.b16 %v2720
        %v3007 = vunpack.c.h.b16 %v2720
        %v3008 = vunpack.c.l.b16 %v2721
        %v3009 = vunpack.c.h.b16 %v2721
        %v3010 = vunpack.c.l.b16 %v2722
        %v3011 = vunpack.c.h.b16 %v2722
        %v3012 = vunpack.c.l.b16 %v2723
        %v3013 = vunpack.c.h.b16 %v2723
        %v3014 = vunpack.c.l.b16 %v2724
        %v3015 = vunpack.c.h.b16 %v2724
        %v3016 = vunpack.c.l.b16 %v2725
        %v3017 = vunpack.c.h.b16 %v2725
        %v3018 = vunpack.c.l.b16 %v2726
        %v3019 = vunpack.c.h.b16 %v2726
        %v3020 = vunpack.c.l.b16 %v2727
        %v3021 = vunpack.c.h.b16 %v2727
        %v3022 = vunpack.c.l.b16 %v2728
        %v3023 = vunpack.c.h.b16 %v2728
        %v3024 = vunpack.c.l.b16 %v2729
        %v3025 = vunpack.c.h.b16 %v2729
        %v3026 = vunpack.c.l.b16 %v2730
        %v3027 = vunpack.c.h.b16 %v2730
        %v3028 = vunpack.c.l.b16 %v2731
        %v3029 = vunpack.c.h.b16 %v2731
        %v3030 = vunpack.c.l.b16 %v2732
        %v3031 = vunpack.c.h.b16 %v2732
        %v3032 = vunpack.c.l.b16 %v2733
        %v3033 = vunpack.c.h.b16 %v2733
        %v3034 = vunpack.c.l.b16 %v2734
        %v3035 = vunpack.c.h.b16 %v2734
        %v3036 = vunpack.c.l.b16 %v2735
        %v3037 = vunpack.c.h.b16 %v2735
        %v3038 = vunpack.c.l.b16 %v2736
        %v3039 = vunpack.c.h.b16 %v2736
        %v3040 = vunpack.c.l.b16 %v2737
        %v3041 = vunpack.c.h.b16 %v2737
        %v3042 = vunpack.c.l.b16 %v2738
        %v3043 = vunpack.c.h.b16 %v2738
        %v3044 = vunpack.c.l.b16 %v2739
        %v3045 = vunpack.c.h.b16 %v2739
        %v3046 = vunpack.c.l.b16 %v2740
        %v3047 = vunpack.c.h.b16 %v2740
        %v3048 = vunpack.c.l.b16 %v2741
        %v3049 = vunpack.c.h.b16 %v2741
        %v3050 = vunpack.c.l.b16 %v2742
        %v3051 = vunpack.c.h.b16 %v2742
        %v3052 = vunpack.c.l.b16 %v2743
        %v3053 = vunpack.c.h.b16 %v2743
        %v3054 = vunpack.c.l.b16 %v2744
        %v3055 = vunpack.c.h.b16 %v2744
        %v3056 = vunpack.c.l.b16 %v2745
        %v3057 = vunpack.c.h.b16 %v2745
        %v3058 = vunpack.c.l.b16 %v2746
        %v3059 = vunpack.c.h.b16 %v2746
        %v3060 = vunpack.c.l.b16 %v2747
        %v3061 = vunpack.c.h.b16 %v2747
        %v3062 = vunpack.c.l.b16 %v2748
        %v3063 = vunpack.c.h.b16 %v2748
        %v3064 = vunpack.c.l.b16 %v2749
        %v3065 = vunpack.c.h.b16 %v2749
        %v3066 = vunpack.c.l.b16 %v2750
        %v3067 = vunpack.c.h.b16 %v2750
        %v3068 = vunpack.c.l.b16 %v2751
        %v3069 = vunpack.c.h.b16 %v2751
        %v3070 = vunpack.c.l.b16 %v2752
        %v3071 = vunpack.c.h.b16 %v2752
        %v3072 = vunpack.c.l.b16 %v2753
        %v3073 = vunpack.c.h.b16 %v2753
        %v3074 = vunpack.c.l.b16 %v2754
        %v3075 = vunpack.c.h.b16 %v2754
        %v3076 = vunpack.c.l.b16 %v2755
        %v3077 = vunpack.c.h.b16 %v2755
        %v3078 = vunpack.c.l.b16 %v2756
        %v3079 = vunpack.c.h.b16 %v2756
        %v3080 = vunpack.c.l.b16 %v2757
        %v3081 = vunpack.c.h.b16 %v2757
        %v3082 = vunpack.c.l.b16 %v2758
        %v3083 = vunpack.c.h.b16 %v2758
        %v3084 = vunpack.c.l.b16 %v2759
        %v3085 = vunpack.c.h.b16 %v2759
        %v3086 = vunpack.c.l.b16 %v2760
        %v3087 = vunpack.c.h.b16 %v2760
        %v3088 = vunpack.c.l.b16 %v2761
        %v3089 = vunpack.c.h.b16 %v2761
        %v3090 = vunpack.c.l.b16 %v2762
        %v3091 = vunpack.c.h.b16 %v2762
        %v3092 = vunpack.c.l.b16 %v2763
        %v3093 = vunpack.c.h.b16 %v2763
        %v3094 = vunpack.c.l.b16 %v2764
        %v3095 = vunpack.c.h.b16 %v2764
        %v3096 = vunpack.c.l.b16 %v2765
        %v3097 = vunpack.c.h.b16 %v2765
        %v3098 = vunpack.c.l.b16 %v2766
        %v3099 = vunpack.c.h.b16 %v2766
        %v3100 = vunpack.c.l.b16 %v2767
        %v3101 = vunpack.c.h.b16 %v2767
        %v3102 = vunpack.c.l.b16 %v2768
        %v3103 = vunpack.c.h.b16 %v2768
        %v3104 = vunpack.c.l.b16 %v2769
        %v3105 = vunpack.c.h.b16 %v2769
        %v3106 = vunpack.c.l.b16 %v2770
        %v3107 = vunpack.c.h.b16 %v2770
        %v3108 = vunpack.c.l.b16 %v2771
        %v3109 = vunpack.c.h.b16 %v2771
        %v3110 = vunpack.c.l.b16 %v2772
        %v3111 = vunpack.c.h.b16 %v2772
        %v3112 = vunpack.c.l.b16 %v2773
        %v3113 = vunpack.c.h.b16 %v2773
        %v3114 = vunpack.c.l.b16 %v2774
        %v3115 = vunpack.c.h.b16 %v2774
        %v3116 = vunpack.c.l.b16 %v2775
        %v3117 = vunpack.c.h.b16 %v2775
        %v3118 = vunpack.c.l.b16 %v2776
        %v3119 = vunpack.c.h.b16 %v2776
        %v3120 = vunpack.c.l.b16 %v2777
        %v3121 = vunpack.c.h.b16 %v2777
        %v3122 = vunpack.c.l.b16 %v2778
        %v3123 = vunpack.c.h.b16 %v2778
        %v3124 = vunpack.c.l.b16 %v2779
        %v3125 = vunpack.c.h.b16 %v2779
        %v3126 = vunpack.c.l.b16 %v2780
        %v3127 = vunpack.c.h.b16 %v2780
        %v3128 = vunpack.c.l.b16 %v2781
        %v3129 = vunpack.c.h.b16 %v2781
        %v3130 = vunpack.c.l.b16 %v2782
        %v3131 = vunpack.c.h.b16 %v2782
        %v3132 = vunpack.c.l.b16 %v2783
        %v3133 = vunpack.c.h.b16 %v2783
        %v3134 = vunpack.c.l.b16 %v2784
        %v3135 = vunpack.c.h.b16 %v2784
        %v3136 = vunpack.c.l.b16 %v2785
        %v3137 = vunpack.c.h.b16 %v2785
        %v3138 = vunpack.c.l.b16 %v2786
        %v3139 = vunpack.c.h.b16 %v2786
        %v3140 = vunpack.c.l.b16 %v2787
        %v3141 = vunpack.c.h.b16 %v2787
        %v3142 = vunpack.c.l.b16 %v2788
        %v3143 = vunpack.c.h.b16 %v2788
        %v3144 = vunpack.c.l.b16 %v2789
        %v3145 = vunpack.c.h.b16 %v2789
        %v3146 = vunpack.c.l.b16 %v2790
        %v3147 = vunpack.c.h.b16 %v2790
        %v3148 = vunpack.c.l.b16 %v2791
        %v3149 = vunpack.c.h.b16 %v2791
        %v3150 = vunpack.c.l.b16 %v2792
        %v3151 = vunpack.c.h.b16 %v2792
        %v3152 = vunpack.c.l.b16 %v2793
        %v3153 = vunpack.c.h.b16 %v2793
        %v3154 = vunpack.c.l.b16 %v2794
        %v3155 = vunpack.c.h.b16 %v2794
        %v3156 = vunpack.c.l.b16 %v2795
        %v3157 = vunpack.c.h.b16 %v2795
        %v3158 = vunpack.c.l.b16 %v2796
        %v3159 = vunpack.c.h.b16 %v2796
        %v3160 = vunpack.c.l.b16 %v2797
        %v3161 = vunpack.c.h.b16 %v2797
        %v3162 = vunpack.c.l.b16 %v2798
        %v3163 = vunpack.c.h.b16 %v2798
        %v3164 = vunpack.c.l.b16 %v2799
        %v3165 = vunpack.c.h.b16 %v2799
        %v3166 = vunpack.c.l.b16 %v2800
        %v3167 = vunpack.c.h.b16 %v2800
        %v3168 = vunpack.c.l.b16 %v2801
        %v3169 = vunpack.c.h.b16 %v2801
        %v3170 = vunpack.c.l.b16 %v2802
        %v3171 = vunpack.c.h.b16 %v2802
        %v3172 = vunpack.c.l.b16 %v2803
        %v3173 = vunpack.c.h.b16 %v2803
        %v3174 = vunpack.c.l.b16 %v2804
        %v3175 = vunpack.c.h.b16 %v2804
        %v3176 = vunpack.c.l.b16 %v2805
        %v3177 = vunpack.c.h.b16 %v2805
        %v3178 = vunpack.c.l.b16 %v2806
        %v3179 = vunpack.c.h.b16 %v2806
        %v3180 = vunpack.c.l.b16 %v2807
        %v3181 = vunpack.c.h.b16 %v2807
        %v3182 = vunpack.c.l.b16 %v2808
        %v3183 = vunpack.c.h.b16 %v2808
        %v3184 = vunpack.c.l.b16 %v2809
        %v3185 = vunpack.c.h.b16 %v2809
        %v3186 = vunpack.c.l.b16 %v2810
        %v3187 = vunpack.c.h.b16 %v2810
        %v3188 = vunpack.c.l.b16 %v2811
        %v3189 = vunpack.c.h.b16 %v2811
        %v3190 = vunpack.c.l.b16 %v2812
        %v3191 = vunpack.c.h.b16 %v2812
        %v3192 = vunpack.c.l.b16 %v2813
        %v3193 = vunpack.c.h.b16 %v2813
        %v3194 = vunpack.c.l.b16 %v2814
        %v3195 = vunpack.c.h.b16 %v2814
        %v3196 = vunpack.c.l.b16 %v2815
        %v3197 = vunpack.c.h.b16 %v2815
        %v3198 = vunpack.c.l.b16 %v2816
        %v3199 = vunpack.c.h.b16 %v2816
        %v3200 = vunpack.c.l.b16 %v2817
        %v3201 = vunpack.c.h.b16 %v2817
        %v3202 = vunpack.c.l.b16 %v2818
        %v3203 = vunpack.c.h.b16 %v2818
        %v3204 = vunpack.c.l.b16 %v2819
        %v3205 = vunpack.c.h.b16 %v2819
        %v3206 = vpack.c.b16 %v2952, %v2950
        %v3207 = vpack.c.b16 %v2953, %v2951
        %v3208 = vpack.c.b16 %v2956, %v2954
        %v3209 = vpack.c.b16 %v2957, %v2955
        %v3210 = vpack.c.b16 %v2960, %v2958
        %v3211 = vpack.c.b16 %v2961, %v2959
        %v3212 = vpack.c.b16 %v2964, %v2962
        %v3213 = vpack.c.b16 %v2965, %v2963
        %v3214 = vpack.c.b16 %v2968, %v2966
        %v3215 = vpack.c.b16 %v2969, %v2967
        %v3216 = vpack.c.b16 %v2972, %v2970
        %v3217 = vpack.c.b16 %v2973, %v2971
        %v3218 = vpack.c.b16 %v2976, %v2974
        %v3219 = vpack.c.b16 %v2977, %v2975
        %v3220 = vpack.c.b16 %v2980, %v2978
        %v3221 = vpack.c.b16 %v2981, %v2979
        %v3222 = vpack.c.b16 %v2984, %v2982
        %v3223 = vpack.c.b16 %v2985, %v2983
        %v3224 = vpack.c.b16 %v2988, %v2986
        %v3225 = vpack.c.b16 %v2989, %v2987
        %v3226 = vpack.c.b16 %v2992, %v2990
        %v3227 = vpack.c.b16 %v2993, %v2991
        %v3228 = vpack.c.b16 %v2996, %v2994
        %v3229 = vpack.c.b16 %v2997, %v2995
        %v3230 = vpack.c.b16 %v3000, %v2998
        %v3231 = vpack.c.b16 %v3001, %v2999
        %v3232 = vpack.c.b16 %v3004, %v3002
        %v3233 = vpack.c.b16 %v3005, %v3003
        %v3234 = vpack.c.b16 %v3008, %v3006
        %v3235 = vpack.c.b16 %v3009, %v3007
        %v3236 = vpack.c.b16 %v3012, %v3010
        %v3237 = vpack.c.b16 %v3013, %v3011
        %v3238 = vpack.c.b16 %v3016, %v3014
        %v3239 = vpack.c.b16 %v3017, %v3015
        %v3240 = vpack.c.b16 %v3020, %v3018
        %v3241 = vpack.c.b16 %v3021, %v3019
        %v3242 = vpack.c.b16 %v3024, %v3022
        %v3243 = vpack.c.b16 %v3025, %v3023
        %v3244 = vpack.c.b16 %v3028, %v3026
        %v3245 = vpack.c.b16 %v3029, %v3027
        %v3246 = vpack.c.b16 %v3032, %v3030
        %v3247 = vpack.c.b16 %v3033, %v3031
        %v3248 = vpack.c.b16 %v3036, %v3034
        %v3249 = vpack.c.b16 %v3037, %v3035
        %v3250 = vpack.c.b16 %v3040, %v3038
        %v3251 = vpack.c.b16 %v3041, %v3039
        %v3252 = vpack.c.b16 %v3044, %v3042
        %v3253 = vpack.c.b16 %v3045, %v3043
        %v3254 = vpack.c.b16 %v3048, %v3046
        %v3255 = vpack.c.b16 %v3049, %v3047
        %v3256 = vpack.c.b16 %v3052, %v3050
        %v3257 = vpack.c.b16 %v3053, %v3051
        %v3258 = vpack.c.b16 %v3056, %v3054
        %v3259 = vpack.c.b16 %v3057, %v3055
        %v3260 = vpack.c.b16 %v3060, %v3058
        %v3261 = vpack.c.b16 %v3061, %v3059
        %v3262 = vpack.c.b16 %v3064, %v3062
        %v3263 = vpack.c.b16 %v3065, %v3063
        %v3264 = vpack.c.b16 %v3068, %v3066
        %v3265 = vpack.c.b16 %v3069, %v3067
        %v3266 = vpack.c.b16 %v3072, %v3070
        %v3267 = vpack.c.b16 %v3073, %v3071
        %v3268 = vpack.c.b16 %v3076, %v3074
        %v3269 = vpack.c.b16 %v3077, %v3075
        %v3270 = vpack.c.b16 %v3080, %v3078
        %v3271 = vpack.c.b16 %v3081, %v3079
        %v3272 = vpack.c.b16 %v3084, %v3082
        %v3273 = vpack.c.b16 %v3085, %v3083
        %v3274 = vpack.c.b16 %v3088, %v3086
        %v3275 = vpack.c.b16 %v3089, %v3087
        %v3276 = vpack.c.b16 %v3092, %v3090
        %v3277 = vpack.c.b16 %v3093, %v3091
        %v3278 = vpack.c.b16 %v3096, %v3094
        %v3279 = vpack.c.b16 %v3097, %v3095
        %v3280 = vpack.c.b16 %v3100, %v3098
        %v3281 = vpack.c.b16 %v3101, %v3099
        %v3282 = vpack.c.b16 %v3104, %v3102
        %v3283 = vpack.c.b16 %v3105, %v3103
        %v3284 = vpack.c.b16 %v3108, %v3106
        %v3285 = vpack.c.b16 %v3109, %v3107
        %v3286 = vpack.c.b16 %v3112, %v3110
        %v3287 = vpack.c.b16 %v3113, %v3111
        %v3288 = vpack.c.b16 %v3116, %v3114
        %v3289 = vpack.c.b16 %v3117, %v3115
        %v3290 = vpack.c.b16 %v3120, %v3118
        %v3291 = vpack.c.b16 %v3121, %v3119
        %v3292 = vpack.c.b16 %v3124, %v3122
        %v3293 = vpack.c.b16 %v3125, %v3123
        %v3294 = vpack.c.b16 %v3128, %v3126
        %v3295 = vpack.c.b16 %v3129, %v3127
        %v3296 = vpack.c.b16 %v3132, %v3130
        %v3297 = vpack.c.b16 %v3133, %v3131
        %v3298 = vpack.c.b16 %v3136, %v3134
        %v3299 = vpack.c.b16 %v3137, %v3135
        %v3300 = vpack.c.b16 %v3140, %v3138
        %v3301 = vpack.c.b16 %v3141, %v3139
        %v3302 = vpack.c.b16 %v3144, %v3142
        %v3303 = vpack.c.b16 %v3145, %v3143
        %v3304 = vpack.c.b16 %v3148, %v3146
        %v3305 = vpack.c.b16 %v3149, %v3147
        %v3306 = vpack.c.b16 %v3152, %v3150
        %v3307 = vpack.c.b16 %v3153, %v3151
        %v3308 = vpack.c.b16 %v3156, %v3154
        %v3309 = vpack.c.b16 %v3157, %v3155
        %v3310 = vpack.c.b16 %v3160, %v3158
        %v3311 = vpack.c.b16 %v3161, %v3159
        %v3312 = vpack.c.b16 %v3164, %v3162
        %v3313 = vpack.c.b16 %v3165, %v3163
        %v3314 = vpack.c.b16 %v3168, %v3166
        %v3315 = vpack.c.b16 %v3169, %v3167
        %v3316 = vpack.c.b16 %v3172, %v3170
        %v3317 = vpack.c.b16 %v3173, %v3171
        %v3318 = vpack.c.b16 %v3176, %v3174
        %v3319 = vpack.c.b16 %v3177, %v3175
        %v3320 = vpack.c.b16 %v3180, %v3178
        %v3321 = vpack.c.b16 %v3181, %v3179
        %v3322 = vpack.c.b16 %v3184, %v3182
        %v3323 = vpack.c.b16 %v3185, %v3183
        %v3324 = vpack.c.b16 %v3188, %v3186
        %v3325 = vpack.c.b16 %v3189, %v3187
        %v3326 = vpack.c.b16 %v3192, %v3190
        %v3327 = vpack.c.b16 %v3193, %v3191
        %v3328 = vpack.c.b16 %v3196, %v3194
        %v3329 = vpack.c.b16 %v3197, %v3195
        %v3330 = vpack.c.b16 %v3200, %v3198
        %v3331 = vpack.c.b16 %v3201, %v3199
        %v3332 = vpack.c.b16 %v3204, %v3202
        %v3333 = vpack.c.b16 %v3205, %v3203
        %3462 = vmatprep.subr.bf16.mxu0 %v3221
        %3463 = vmatpush1.bf16.msra.mxu0 %v3220
        %3464 = vmatprep.subr.bf16.mxu0 %v3219
        %3465 = vmatpush1.bf16.msra.mxu0 %v3218
        %3466 = vmatprep.subr.bf16.mxu0 %v3217
        %3467 = vmatpush1.bf16.msra.mxu0 %v3216
        %3468 = vmatprep.subr.bf16.mxu0 %v3215
        %3469 = vmatpush1.bf16.msra.mxu0 %v3214
        %3470 = vmatprep.subr.bf16.mxu0 %v3213
        %3471 = vmatpush1.bf16.msra.mxu0 %v3212
        %3472 = vmatprep.subr.bf16.mxu0 %v3211
        %3473 = vmatpush1.bf16.msra.mxu0 %v3210
        %3474 = vmatprep.subr.bf16.mxu0 %v3209
        %3475 = vmatpush1.bf16.msra.mxu0 %v3208
        %3476 = vmatprep.subr.bf16.mxu0 %v3207
        %3477 = vmatpush1.bf16.msra.mxu0 %v3206
        %3478 = vmatprep.subr.bf16.mxu0 %v3237
        %3479 = vmatpush2.bf16.msra.mxu0 %v3236
        %3480 = vmatprep.subr.bf16.mxu0 %v3235
        %3481 = vmatpush2.bf16.msra.mxu0 %v3234
        %3482 = vmatprep.subr.bf16.mxu0 %v3233
        %3483 = vmatpush2.bf16.msra.mxu0 %v3232
        %3484 = vmatprep.subr.bf16.mxu0 %v3231
        %3485 = vmatpush2.bf16.msra.mxu0 %v3230
        %3486 = vmatprep.subr.bf16.mxu0 %v3229
        %3487 = vmatpush2.bf16.msra.mxu0 %v3228
        %3488 = vmatprep.subr.bf16.mxu0 %v3227
        %3489 = vmatpush2.bf16.msra.mxu0 %v3226
        %3490 = vmatprep.subr.bf16.mxu0 %v3225
        %3491 = vmatpush2.bf16.msra.mxu0 %v3224
        %3492 = vmatprep.subr.bf16.mxu0 %v3223
        %3493 = vmatpush2.bf16.msra.mxu0 %v3222
        %3494 = vmatprep.mubr.bf16.mxu0 %v784
        %3495 = vmatmul.mubr.bf16.gmra.mxu0 %v783
        %v3496 = vpop.f32.mrf.mxu0
        %v3497 = vadd.f32 %v2820, %v3496
        %v3498 = vpop.f32.mrf.mxu0
        %v3499 = vadd.f32 %v2821, %v3498
        %v3500 = vpop.f32.mrf.mxu0
        %v3501 = vpop.f32.mrf.mxu0
        %3502 = vdwg.mxu0
        %3503 = vmatprep.subr.bf16.mxu0 %v3253
        %3504 = vmatpush1.bf16.msra.mxu0 %v3252
        %3505 = vmatprep.subr.bf16.mxu0 %v3251
        %3506 = vmatpush1.bf16.msra.mxu0 %v3250
        %3507 = vmatprep.subr.bf16.mxu0 %v3249
        %3508 = vmatpush1.bf16.msra.mxu0 %v3248
        %3509 = vmatprep.subr.bf16.mxu0 %v3247
        %3510 = vmatpush1.bf16.msra.mxu0 %v3246
        %3511 = vmatprep.subr.bf16.mxu0 %v3245
        %3512 = vmatpush1.bf16.msra.mxu0 %v3244
        %3513 = vmatprep.subr.bf16.mxu0 %v3243
        %3514 = vmatpush1.bf16.msra.mxu0 %v3242
        %3515 = vmatprep.subr.bf16.mxu0 %v3241
        %3516 = vmatpush1.bf16.msra.mxu0 %v3240
        %3517 = vmatprep.subr.bf16.mxu0 %v3239
        %3518 = vmatpush1.bf16.msra.mxu0 %v3238
        %3519 = vmatprep.subr.bf16.mxu0 %v3269
        %3520 = vmatpush2.bf16.msra.mxu0 %v3268
        %3521 = vmatprep.subr.bf16.mxu0 %v3267
        %3522 = vmatpush2.bf16.msra.mxu0 %v3266
        %3523 = vmatprep.subr.bf16.mxu0 %v3265
        %3524 = vmatpush2.bf16.msra.mxu0 %v3264
        %3525 = vmatprep.subr.bf16.mxu0 %v3263
        %3526 = vmatpush2.bf16.msra.mxu0 %v3262
        %3527 = vmatprep.subr.bf16.mxu0 %v3261
        %3528 = vmatpush2.bf16.msra.mxu0 %v3260
        %3529 = vmatprep.subr.bf16.mxu0 %v3259
        %3530 = vmatpush2.bf16.msra.mxu0 %v3258
        %3531 = vmatprep.subr.bf16.mxu0 %v3257
        %3532 = vmatpush2.bf16.msra.mxu0 %v3256
        %3533 = vmatprep.subr.bf16.mxu0 %v3255
        %3534 = vmatpush2.bf16.msra.mxu0 %v3254
        %3535 = vmatprep.mubr.bf16.mxu0 %v786
        %3536 = vmatmul.mubr.bf16.gmra.mxu0 %v785
        %v3537 = vpop.f32.mrf.mxu0
        %v3538 = vadd.f32 %v3497, %v3537
        %v3539 = vpop.f32.mrf.mxu0
        %v3540 = vadd.f32 %v3499, %v3539
        %v3541 = vpop.f32.mrf.mxu0
        %v3542 = vpop.f32.mrf.mxu0
        %3543 = vdwg.mxu0
        %3544 = vmatprep.subr.bf16.mxu0 %v3285
        %3545 = vmatpush1.bf16.msra.mxu0 %v3284
        %3546 = vmatprep.subr.bf16.mxu0 %v3283
        %3547 = vmatpush1.bf16.msra.mxu0 %v3282
        %3548 = vmatprep.subr.bf16.mxu0 %v3281
        %3549 = vmatpush1.bf16.msra.mxu0 %v3280
        %3550 = vmatprep.subr.bf16.mxu0 %v3279
        %3551 = vmatpush1.bf16.msra.mxu0 %v3278
        %3552 = vmatprep.subr.bf16.mxu0 %v3277
        %3553 = vmatpush1.bf16.msra.mxu0 %v3276
        %3554 = vmatprep.subr.bf16.mxu0 %v3275
        %3555 = vmatpush1.bf16.msra.mxu0 %v3274
        %3556 = vmatprep.subr.bf16.mxu0 %v3273
        %3557 = vmatpush1.bf16.msra.mxu0 %v3272
        %3558 = vmatprep.subr.bf16.mxu0 %v3271
        %3559 = vmatpush1.bf16.msra.mxu0 %v3270
        %3560 = vmatprep.subr.bf16.mxu0 %v3301
        %3561 = vmatpush2.bf16.msra.mxu0 %v3300
        %3562 = vmatprep.subr.bf16.mxu0 %v3299
        %3563 = vmatpush2.bf16.msra.mxu0 %v3298
        %3564 = vmatprep.subr.bf16.mxu0 %v3297
        %3565 = vmatpush2.bf16.msra.mxu0 %v3296
        %3566 = vmatprep.subr.bf16.mxu0 %v3295
        %3567 = vmatpush2.bf16.msra.mxu0 %v3294
        %3568 = vmatprep.subr.bf16.mxu0 %v3293
        %3569 = vmatpush2.bf16.msra.mxu0 %v3292
        %3570 = vmatprep.subr.bf16.mxu0 %v3291
        %3571 = vmatpush2.bf16.msra.mxu0 %v3290
        %3572 = vmatprep.subr.bf16.mxu0 %v3289
        %3573 = vmatpush2.bf16.msra.mxu0 %v3288
        %3574 = vmatprep.subr.bf16.mxu0 %v3287
        %3575 = vmatpush2.bf16.msra.mxu0 %v3286
        %3576 = vmatprep.mubr.bf16.mxu0 %v788
        %3577 = vmatmul.mubr.bf16.gmra.mxu0 %v787
        %v3578 = vpop.f32.mrf.mxu0
        %v3579 = vadd.f32 %v3538, %v3578
        %v3580 = vpop.f32.mrf.mxu0
        %v3581 = vadd.f32 %v3540, %v3580
        %v3582 = vpop.f32.mrf.mxu0
        %v3583 = vpop.f32.mrf.mxu0
        %3584 = vdwg.mxu0
        %3585 = vmatprep.subr.bf16.mxu0 %v3317
        %3586 = vmatpush1.bf16.msra.mxu0 %v3316
        %3587 = vmatprep.subr.bf16.mxu0 %v3315
        %3588 = vmatpush1.bf16.msra.mxu0 %v3314
        %3589 = vmatprep.subr.bf16.mxu0 %v3313
        %3590 = vmatpush1.bf16.msra.mxu0 %v3312
        %3591 = vmatprep.subr.bf16.mxu0 %v3311
        %3592 = vmatpush1.bf16.msra.mxu0 %v3310
        %3593 = vmatprep.subr.bf16.mxu0 %v3309
        %3594 = vmatpush1.bf16.msra.mxu0 %v3308
        %3595 = vmatprep.subr.bf16.mxu0 %v3307
        %3596 = vmatpush1.bf16.msra.mxu0 %v3306
        %3597 = vmatprep.subr.bf16.mxu0 %v3305
        %3598 = vmatpush1.bf16.msra.mxu0 %v3304
        %3599 = vmatprep.subr.bf16.mxu0 %v3303
        %3600 = vmatpush1.bf16.msra.mxu0 %v3302
        %3601 = vmatprep.subr.bf16.mxu0 %v3333
        %3602 = vmatpush2.bf16.msra.mxu0 %v3332
        %3603 = vmatprep.subr.bf16.mxu0 %v3331
        %3604 = vmatpush2.bf16.msra.mxu0 %v3330
        %3605 = vmatprep.subr.bf16.mxu0 %v3329
        %3606 = vmatpush2.bf16.msra.mxu0 %v3328
        %3607 = vmatprep.subr.bf16.mxu0 %v3327
        %3608 = vmatpush2.bf16.msra.mxu0 %v3326
        %3609 = vmatprep.subr.bf16.mxu0 %v3325
        %3610 = vmatpush2.bf16.msra.mxu0 %v3324
        %3611 = vmatprep.subr.bf16.mxu0 %v3323
        %3612 = vmatpush2.bf16.msra.mxu0 %v3322
        %3613 = vmatprep.subr.bf16.mxu0 %v3321
        %3614 = vmatpush2.bf16.msra.mxu0 %v3320
        %3615 = vmatprep.subr.bf16.mxu0 %v3319
        %3616 = vmatpush2.bf16.msra.mxu0 %v3318
        %3617 = vmatprep.mubr.bf16.mxu0 %v790
        %3618 = vmatmul.mubr.bf16.gmra.mxu0 %v789
        %v3619 = vpop.f32.mrf.mxu0
        %v3620 = vadd.f32 %v3579, %v3619
        %v3621 = vpop.f32.mrf.mxu0
        %v3622 = vadd.f32 %v3581, %v3621
        %v3623 = vpop.f32.mrf.mxu0
        %v3624 = vpop.f32.mrf.mxu0
        %3625 = vdwg.mxu0
        %v3626 = vmax.f32 %v3620, 0.0
        %v3627 = vmax.f32 %v3622, 0.0
        %3630 = vrot.lane.b32.xlu0 %v3626, 32
        %v3631 = vpop.permute.xlu0 %3630
        %3632 = vrot.lane.b32.xlu0 %v3627, 32
        %v3633 = vpop.permute.xlu0 %3632
        %v3634 = vsel %vm655, %v3631, %v3633
        %3638 = vst.msk [vmem:[#allocation2 + $0x30] sm:$0xff] %vm1737, %v3631
        %3639 = vst [vmem:[#allocation2 + $0x38] sm:$0xff] %v3634
        %3640 = vst.msk [vmem:[#allocation2 + $0x40] sm:$0xff] %vm655, %v3633
        %s3641 = scalar_lea.vmem [#allocation8], 3072
        %v3642 = vld [vmem:[%s3641] sm:$0xff]
        %v3643 = vld [vmem:[%s3641 + $0x8] sm:$0xff]
        %v3644 = vld [vmem:[%s3641 + $0x10] sm:$0xff]
        %v3645 = vld [vmem:[%s3641 + $0x18] sm:$0xff]
        %v3646 = vld [vmem:[%s3641 + $0x20] sm:$0xff]
        %v3647 = vld [vmem:[%s3641 + $0x28] sm:$0xff]
        %v3648 = vld [vmem:[%s3641 + $0x30] sm:$0xff]
        %v3649 = vld [vmem:[%s3641 + $0x38] sm:$0xff]
        %v3650 = vld [vmem:[%s3641 + $0x40] sm:$0xff]
        %v3651 = vld [vmem:[%s3641 + $0x48] sm:$0xff]
        %v3652 = vld [vmem:[%s3641 + $0x50] sm:$0xff]
        %v3653 = vld [vmem:[%s3641 + $0x58] sm:$0xff]
        %v3654 = vld [vmem:[%s3641 + $0x60] sm:$0xff]
        %v3655 = vld [vmem:[%s3641 + $0x68] sm:$0xff]
        %v3656 = vld [vmem:[%s3641 + $0x70] sm:$0xff]
        %v3657 = vld [vmem:[%s3641 + $0x78] sm:$0xff]
        %v3658 = vld [vmem:[%s3641 + $0x80] sm:$0xff]
        %v3659 = vld [vmem:[%s3641 + $0x88] sm:$0xff]
        %v3660 = vld [vmem:[%s3641 + $0x90] sm:$0xff]
        %v3661 = vld [vmem:[%s3641 + $0x98] sm:$0xff]
        %v3662 = vld [vmem:[%s3641 + $0xa0] sm:$0xff]
        %v3663 = vld [vmem:[%s3641 + $0xa8] sm:$0xff]
        %v3664 = vld [vmem:[%s3641 + $0xb0] sm:$0xff]
        %v3665 = vld [vmem:[%s3641 + $0xb8] sm:$0xff]
        %v3666 = vld [vmem:[%s3641 + $0xc0] sm:$0xff]
        %v3667 = vld [vmem:[%s3641 + $0xc8] sm:$0xff]
        %v3668 = vld [vmem:[%s3641 + $0xd0] sm:$0xff]
        %v3669 = vld [vmem:[%s3641 + $0xd8] sm:$0xff]
        %v3670 = vld [vmem:[%s3641 + $0xe0] sm:$0xff]
        %v3671 = vld [vmem:[%s3641 + $0xe8] sm:$0xff]
        %v3672 = vld [vmem:[%s3641 + $0xf0] sm:$0xff]
        %v3673 = vld [vmem:[%s3641 + $0xf8] sm:$0xff]
        %v3674 = vld [vmem:[%s3641 + $0x100] sm:$0xff]
        %v3675 = vld [vmem:[%s3641 + $0x108] sm:$0xff]
        %v3676 = vld [vmem:[%s3641 + $0x110] sm:$0xff]
        %v3677 = vld [vmem:[%s3641 + $0x118] sm:$0xff]
        %v3678 = vld [vmem:[%s3641 + $0x120] sm:$0xff]
        %v3679 = vld [vmem:[%s3641 + $0x128] sm:$0xff]
        %v3680 = vld [vmem:[%s3641 + $0x130] sm:$0xff]
        %v3681 = vld [vmem:[%s3641 + $0x138] sm:$0xff]
        %v3682 = vld [vmem:[%s3641 + $0x140] sm:$0xff]
        %v3683 = vld [vmem:[%s3641 + $0x148] sm:$0xff]
        %v3684 = vld [vmem:[%s3641 + $0x150] sm:$0xff]
        %v3685 = vld [vmem:[%s3641 + $0x158] sm:$0xff]
        %v3686 = vld [vmem:[%s3641 + $0x160] sm:$0xff]
        %v3687 = vld [vmem:[%s3641 + $0x168] sm:$0xff]
        %v3688 = vld [vmem:[%s3641 + $0x170] sm:$0xff]
        %v3689 = vld [vmem:[%s3641 + $0x178] sm:$0xff]
        %v3690 = vld [vmem:[%s3641 + $0x180] sm:$0xff]
        %v3691 = vld [vmem:[%s3641 + $0x188] sm:$0xff]
        %v3692 = vld [vmem:[%s3641 + $0x190] sm:$0xff]
        %v3693 = vld [vmem:[%s3641 + $0x198] sm:$0xff]
        %v3694 = vld [vmem:[%s3641 + $0x1a0] sm:$0xff]
        %v3695 = vld [vmem:[%s3641 + $0x1a8] sm:$0xff]
        %v3696 = vld [vmem:[%s3641 + $0x1b0] sm:$0xff]
        %v3697 = vld [vmem:[%s3641 + $0x1b8] sm:$0xff]
        %v3698 = vld [vmem:[%s3641 + $0x1c0] sm:$0xff]
        %v3699 = vld [vmem:[%s3641 + $0x1c8] sm:$0xff]
        %v3700 = vld [vmem:[%s3641 + $0x1d0] sm:$0xff]
        %v3701 = vld [vmem:[%s3641 + $0x1d8] sm:$0xff]
        %v3702 = vld [vmem:[%s3641 + $0x1e0] sm:$0xff]
        %v3703 = vld [vmem:[%s3641 + $0x1e8] sm:$0xff]
        %v3704 = vld [vmem:[%s3641 + $0x1f0] sm:$0xff]
        %v3705 = vld [vmem:[%s3641 + $0x1f8] sm:$0xff]
        %v3706 = vld [vmem:[%s3641 + $0x200] sm:$0xff]
        %v3707 = vld [vmem:[%s3641 + $0x208] sm:$0xff]
        %v3708 = vld [vmem:[%s3641 + $0x210] sm:$0xff]
        %v3709 = vld [vmem:[%s3641 + $0x218] sm:$0xff]
        %v3710 = vld [vmem:[%s3641 + $0x220] sm:$0xff]
        %v3711 = vld [vmem:[%s3641 + $0x228] sm:$0xff]
        %v3712 = vld [vmem:[%s3641 + $0x230] sm:$0xff]
        %v3713 = vld [vmem:[%s3641 + $0x238] sm:$0xff]
        %v3714 = vld [vmem:[%s3641 + $0x240] sm:$0xff]
        %v3715 = vld [vmem:[%s3641 + $0x248] sm:$0xff]
        %v3716 = vld [vmem:[%s3641 + $0x250] sm:$0xff]
        %v3717 = vld [vmem:[%s3641 + $0x258] sm:$0xff]
        %v3718 = vld [vmem:[%s3641 + $0x260] sm:$0xff]
        %v3719 = vld [vmem:[%s3641 + $0x268] sm:$0xff]
        %v3720 = vld [vmem:[%s3641 + $0x270] sm:$0xff]
        %v3721 = vld [vmem:[%s3641 + $0x278] sm:$0xff]
        %v3722 = vld [vmem:[%s3641 + $0x280] sm:$0xff]
        %v3723 = vld [vmem:[%s3641 + $0x288] sm:$0xff]
        %v3724 = vld [vmem:[%s3641 + $0x290] sm:$0xff]
        %v3725 = vld [vmem:[%s3641 + $0x298] sm:$0xff]
        %v3726 = vld [vmem:[%s3641 + $0x2a0] sm:$0xff]
        %v3727 = vld [vmem:[%s3641 + $0x2a8] sm:$0xff]
        %v3728 = vld [vmem:[%s3641 + $0x2b0] sm:$0xff]
        %v3729 = vld [vmem:[%s3641 + $0x2b8] sm:$0xff]
        %v3730 = vld [vmem:[%s3641 + $0x2c0] sm:$0xff]
        %v3731 = vld [vmem:[%s3641 + $0x2c8] sm:$0xff]
        %v3732 = vld [vmem:[%s3641 + $0x2d0] sm:$0xff]
        %v3733 = vld [vmem:[%s3641 + $0x2d8] sm:$0xff]
        %v3734 = vld [vmem:[%s3641 + $0x2e0] sm:$0xff]
        %v3735 = vld [vmem:[%s3641 + $0x2e8] sm:$0xff]
        %v3736 = vld [vmem:[%s3641 + $0x2f0] sm:$0xff]
        %v3737 = vld [vmem:[%s3641 + $0x2f8] sm:$0xff]
        %v3738 = vld [vmem:[%s3641 + $0x300] sm:$0xff]
        %v3739 = vld [vmem:[%s3641 + $0x308] sm:$0xff]
        %v3740 = vld [vmem:[%s3641 + $0x310] sm:$0xff]
        %v3741 = vld [vmem:[%s3641 + $0x318] sm:$0xff]
        %v3742 = vld [vmem:[%s3641 + $0x320] sm:$0xff]
        %v3743 = vld [vmem:[%s3641 + $0x328] sm:$0xff]
        %v3744 = vld [vmem:[%s3641 + $0x330] sm:$0xff]
        %v3745 = vld [vmem:[%s3641 + $0x338] sm:$0xff]
        %v3746 = vld [vmem:[%s3641 + $0x340] sm:$0xff]
        %v3747 = vld [vmem:[%s3641 + $0x348] sm:$0xff]
        %v3748 = vld [vmem:[%s3641 + $0x350] sm:$0xff]
        %v3749 = vld [vmem:[%s3641 + $0x358] sm:$0xff]
        %v3750 = vld [vmem:[%s3641 + $0x360] sm:$0xff]
        %v3751 = vld [vmem:[%s3641 + $0x368] sm:$0xff]
        %v3752 = vld [vmem:[%s3641 + $0x370] sm:$0xff]
        %v3753 = vld [vmem:[%s3641 + $0x378] sm:$0xff]
        %v3754 = vld [vmem:[%s3641 + $0x380] sm:$0xff]
        %v3755 = vld [vmem:[%s3641 + $0x388] sm:$0xff]
        %v3756 = vld [vmem:[%s3641 + $0x390] sm:$0xff]
        %v3757 = vld [vmem:[%s3641 + $0x398] sm:$0xff]
        %v3758 = vld [vmem:[%s3641 + $0x3a0] sm:$0xff]
        %v3759 = vld [vmem:[%s3641 + $0x3a8] sm:$0xff]
        %v3760 = vld [vmem:[%s3641 + $0x3b0] sm:$0xff]
        %v3761 = vld [vmem:[%s3641 + $0x3b8] sm:$0xff]
        %v3762 = vld [vmem:[%s3641 + $0x3c0] sm:$0xff]
        %v3763 = vld [vmem:[%s3641 + $0x3c8] sm:$0xff]
        %v3764 = vld [vmem:[%s3641 + $0x3d0] sm:$0xff]
        %v3765 = vld [vmem:[%s3641 + $0x3d8] sm:$0xff]
        %v3766 = vld [vmem:[%s3641 + $0x3e0] sm:$0xff]
        %v3767 = vld [vmem:[%s3641 + $0x3e8] sm:$0xff]
        %v3768 = vld [vmem:[%s3641 + $0x3f0] sm:$0xff]
        %v3769 = vld [vmem:[%s3641 + $0x3f8] sm:$0xff]
        %v3770 = vld [vmem:[#allocation10 + $0x30] sm:$0xff]
        %v3771 = vld [vmem:[#allocation10 + $0x38] sm:$0xff]
        %v3900 = vunpack.c.l.b16 %v3642
        %v3901 = vunpack.c.h.b16 %v3642
        %v3902 = vunpack.c.l.b16 %v3643
        %v3903 = vunpack.c.h.b16 %v3643
        %v3904 = vunpack.c.l.b16 %v3644
        %v3905 = vunpack.c.h.b16 %v3644
        %v3906 = vunpack.c.l.b16 %v3645
        %v3907 = vunpack.c.h.b16 %v3645
        %v3908 = vunpack.c.l.b16 %v3646
        %v3909 = vunpack.c.h.b16 %v3646
        %v3910 = vunpack.c.l.b16 %v3647
        %v3911 = vunpack.c.h.b16 %v3647
        %v3912 = vunpack.c.l.b16 %v3648
        %v3913 = vunpack.c.h.b16 %v3648
        %v3914 = vunpack.c.l.b16 %v3649
        %v3915 = vunpack.c.h.b16 %v3649
        %v3916 = vunpack.c.l.b16 %v3650
        %v3917 = vunpack.c.h.b16 %v3650
        %v3918 = vunpack.c.l.b16 %v3651
        %v3919 = vunpack.c.h.b16 %v3651
        %v3920 = vunpack.c.l.b16 %v3652
        %v3921 = vunpack.c.h.b16 %v3652
        %v3922 = vunpack.c.l.b16 %v3653
        %v3923 = vunpack.c.h.b16 %v3653
        %v3924 = vunpack.c.l.b16 %v3654
        %v3925 = vunpack.c.h.b16 %v3654
        %v3926 = vunpack.c.l.b16 %v3655
        %v3927 = vunpack.c.h.b16 %v3655
        %v3928 = vunpack.c.l.b16 %v3656
        %v3929 = vunpack.c.h.b16 %v3656
        %v3930 = vunpack.c.l.b16 %v3657
        %v3931 = vunpack.c.h.b16 %v3657
        %v3932 = vunpack.c.l.b16 %v3658
        %v3933 = vunpack.c.h.b16 %v3658
        %v3934 = vunpack.c.l.b16 %v3659
        %v3935 = vunpack.c.h.b16 %v3659
        %v3936 = vunpack.c.l.b16 %v3660
        %v3937 = vunpack.c.h.b16 %v3660
        %v3938 = vunpack.c.l.b16 %v3661
        %v3939 = vunpack.c.h.b16 %v3661
        %v3940 = vunpack.c.l.b16 %v3662
        %v3941 = vunpack.c.h.b16 %v3662
        %v3942 = vunpack.c.l.b16 %v3663
        %v3943 = vunpack.c.h.b16 %v3663
        %v3944 = vunpack.c.l.b16 %v3664
        %v3945 = vunpack.c.h.b16 %v3664
        %v3946 = vunpack.c.l.b16 %v3665
        %v3947 = vunpack.c.h.b16 %v3665
        %v3948 = vunpack.c.l.b16 %v3666
        %v3949 = vunpack.c.h.b16 %v3666
        %v3950 = vunpack.c.l.b16 %v3667
        %v3951 = vunpack.c.h.b16 %v3667
        %v3952 = vunpack.c.l.b16 %v3668
        %v3953 = vunpack.c.h.b16 %v3668
        %v3954 = vunpack.c.l.b16 %v3669
        %v3955 = vunpack.c.h.b16 %v3669
        %v3956 = vunpack.c.l.b16 %v3670
        %v3957 = vunpack.c.h.b16 %v3670
        %v3958 = vunpack.c.l.b16 %v3671
        %v3959 = vunpack.c.h.b16 %v3671
        %v3960 = vunpack.c.l.b16 %v3672
        %v3961 = vunpack.c.h.b16 %v3672
        %v3962 = vunpack.c.l.b16 %v3673
        %v3963 = vunpack.c.h.b16 %v3673
        %v3964 = vunpack.c.l.b16 %v3674
        %v3965 = vunpack.c.h.b16 %v3674
        %v3966 = vunpack.c.l.b16 %v3675
        %v3967 = vunpack.c.h.b16 %v3675
        %v3968 = vunpack.c.l.b16 %v3676
        %v3969 = vunpack.c.h.b16 %v3676
        %v3970 = vunpack.c.l.b16 %v3677
        %v3971 = vunpack.c.h.b16 %v3677
        %v3972 = vunpack.c.l.b16 %v3678
        %v3973 = vunpack.c.h.b16 %v3678
        %v3974 = vunpack.c.l.b16 %v3679
        %v3975 = vunpack.c.h.b16 %v3679
        %v3976 = vunpack.c.l.b16 %v3680
        %v3977 = vunpack.c.h.b16 %v3680
        %v3978 = vunpack.c.l.b16 %v3681
        %v3979 = vunpack.c.h.b16 %v3681
        %v3980 = vunpack.c.l.b16 %v3682
        %v3981 = vunpack.c.h.b16 %v3682
        %v3982 = vunpack.c.l.b16 %v3683
        %v3983 = vunpack.c.h.b16 %v3683
        %v3984 = vunpack.c.l.b16 %v3684
        %v3985 = vunpack.c.h.b16 %v3684
        %v3986 = vunpack.c.l.b16 %v3685
        %v3987 = vunpack.c.h.b16 %v3685
        %v3988 = vunpack.c.l.b16 %v3686
        %v3989 = vunpack.c.h.b16 %v3686
        %v3990 = vunpack.c.l.b16 %v3687
        %v3991 = vunpack.c.h.b16 %v3687
        %v3992 = vunpack.c.l.b16 %v3688
        %v3993 = vunpack.c.h.b16 %v3688
        %v3994 = vunpack.c.l.b16 %v3689
        %v3995 = vunpack.c.h.b16 %v3689
        %v3996 = vunpack.c.l.b16 %v3690
        %v3997 = vunpack.c.h.b16 %v3690
        %v3998 = vunpack.c.l.b16 %v3691
        %v3999 = vunpack.c.h.b16 %v3691
        %v4000 = vunpack.c.l.b16 %v3692
        %v4001 = vunpack.c.h.b16 %v3692
        %v4002 = vunpack.c.l.b16 %v3693
        %v4003 = vunpack.c.h.b16 %v3693
        %v4004 = vunpack.c.l.b16 %v3694
        %v4005 = vunpack.c.h.b16 %v3694
        %v4006 = vunpack.c.l.b16 %v3695
        %v4007 = vunpack.c.h.b16 %v3695
        %v4008 = vunpack.c.l.b16 %v3696
        %v4009 = vunpack.c.h.b16 %v3696
        %v4010 = vunpack.c.l.b16 %v3697
        %v4011 = vunpack.c.h.b16 %v3697
        %v4012 = vunpack.c.l.b16 %v3698
        %v4013 = vunpack.c.h.b16 %v3698
        %v4014 = vunpack.c.l.b16 %v3699
        %v4015 = vunpack.c.h.b16 %v3699
        %v4016 = vunpack.c.l.b16 %v3700
        %v4017 = vunpack.c.h.b16 %v3700
        %v4018 = vunpack.c.l.b16 %v3701
        %v4019 = vunpack.c.h.b16 %v3701
        %v4020 = vunpack.c.l.b16 %v3702
        %v4021 = vunpack.c.h.b16 %v3702
        %v4022 = vunpack.c.l.b16 %v3703
        %v4023 = vunpack.c.h.b16 %v3703
        %v4024 = vunpack.c.l.b16 %v3704
        %v4025 = vunpack.c.h.b16 %v3704
        %v4026 = vunpack.c.l.b16 %v3705
        %v4027 = vunpack.c.h.b16 %v3705
        %v4028 = vunpack.c.l.b16 %v3706
        %v4029 = vunpack.c.h.b16 %v3706
        %v4030 = vunpack.c.l.b16 %v3707
        %v4031 = vunpack.c.h.b16 %v3707
        %v4032 = vunpack.c.l.b16 %v3708
        %v4033 = vunpack.c.h.b16 %v3708
        %v4034 = vunpack.c.l.b16 %v3709
        %v4035 = vunpack.c.h.b16 %v3709
        %v4036 = vunpack.c.l.b16 %v3710
        %v4037 = vunpack.c.h.b16 %v3710
        %v4038 = vunpack.c.l.b16 %v3711
        %v4039 = vunpack.c.h.b16 %v3711
        %v4040 = vunpack.c.l.b16 %v3712
        %v4041 = vunpack.c.h.b16 %v3712
        %v4042 = vunpack.c.l.b16 %v3713
        %v4043 = vunpack.c.h.b16 %v3713
        %v4044 = vunpack.c.l.b16 %v3714
        %v4045 = vunpack.c.h.b16 %v3714
        %v4046 = vunpack.c.l.b16 %v3715
        %v4047 = vunpack.c.h.b16 %v3715
        %v4048 = vunpack.c.l.b16 %v3716
        %v4049 = vunpack.c.h.b16 %v3716
        %v4050 = vunpack.c.l.b16 %v3717
        %v4051 = vunpack.c.h.b16 %v3717
        %v4052 = vunpack.c.l.b16 %v3718
        %v4053 = vunpack.c.h.b16 %v3718
        %v4054 = vunpack.c.l.b16 %v3719
        %v4055 = vunpack.c.h.b16 %v3719
        %v4056 = vunpack.c.l.b16 %v3720
        %v4057 = vunpack.c.h.b16 %v3720
        %v4058 = vunpack.c.l.b16 %v3721
        %v4059 = vunpack.c.h.b16 %v3721
        %v4060 = vunpack.c.l.b16 %v3722
        %v4061 = vunpack.c.h.b16 %v3722
        %v4062 = vunpack.c.l.b16 %v3723
        %v4063 = vunpack.c.h.b16 %v3723
        %v4064 = vunpack.c.l.b16 %v3724
        %v4065 = vunpack.c.h.b16 %v3724
        %v4066 = vunpack.c.l.b16 %v3725
        %v4067 = vunpack.c.h.b16 %v3725
        %v4068 = vunpack.c.l.b16 %v3726
        %v4069 = vunpack.c.h.b16 %v3726
        %v4070 = vunpack.c.l.b16 %v3727
        %v4071 = vunpack.c.h.b16 %v3727
        %v4072 = vunpack.c.l.b16 %v3728
        %v4073 = vunpack.c.h.b16 %v3728
        %v4074 = vunpack.c.l.b16 %v3729
        %v4075 = vunpack.c.h.b16 %v3729
        %v4076 = vunpack.c.l.b16 %v3730
        %v4077 = vunpack.c.h.b16 %v3730
        %v4078 = vunpack.c.l.b16 %v3731
        %v4079 = vunpack.c.h.b16 %v3731
        %v4080 = vunpack.c.l.b16 %v3732
        %v4081 = vunpack.c.h.b16 %v3732
        %v4082 = vunpack.c.l.b16 %v3733
        %v4083 = vunpack.c.h.b16 %v3733
        %v4084 = vunpack.c.l.b16 %v3734
        %v4085 = vunpack.c.h.b16 %v3734
        %v4086 = vunpack.c.l.b16 %v3735
        %v4087 = vunpack.c.h.b16 %v3735
        %v4088 = vunpack.c.l.b16 %v3736
        %v4089 = vunpack.c.h.b16 %v3736
        %v4090 = vunpack.c.l.b16 %v3737
        %v4091 = vunpack.c.h.b16 %v3737
        %v4092 = vunpack.c.l.b16 %v3738
        %v4093 = vunpack.c.h.b16 %v3738
        %v4094 = vunpack.c.l.b16 %v3739
        %v4095 = vunpack.c.h.b16 %v3739
        %v4096 = vunpack.c.l.b16 %v3740
        %v4097 = vunpack.c.h.b16 %v3740
        %v4098 = vunpack.c.l.b16 %v3741
        %v4099 = vunpack.c.h.b16 %v3741
        %v4100 = vunpack.c.l.b16 %v3742
        %v4101 = vunpack.c.h.b16 %v3742
        %v4102 = vunpack.c.l.b16 %v3743
        %v4103 = vunpack.c.h.b16 %v3743
        %v4104 = vunpack.c.l.b16 %v3744
        %v4105 = vunpack.c.h.b16 %v3744
        %v4106 = vunpack.c.l.b16 %v3745
        %v4107 = vunpack.c.h.b16 %v3745
        %v4108 = vunpack.c.l.b16 %v3746
        %v4109 = vunpack.c.h.b16 %v3746
        %v4110 = vunpack.c.l.b16 %v3747
        %v4111 = vunpack.c.h.b16 %v3747
        %v4112 = vunpack.c.l.b16 %v3748
        %v4113 = vunpack.c.h.b16 %v3748
        %v4114 = vunpack.c.l.b16 %v3749
        %v4115 = vunpack.c.h.b16 %v3749
        %v4116 = vunpack.c.l.b16 %v3750
        %v4117 = vunpack.c.h.b16 %v3750
        %v4118 = vunpack.c.l.b16 %v3751
        %v4119 = vunpack.c.h.b16 %v3751
        %v4120 = vunpack.c.l.b16 %v3752
        %v4121 = vunpack.c.h.b16 %v3752
        %v4122 = vunpack.c.l.b16 %v3753
        %v4123 = vunpack.c.h.b16 %v3753
        %v4124 = vunpack.c.l.b16 %v3754
        %v4125 = vunpack.c.h.b16 %v3754
        %v4126 = vunpack.c.l.b16 %v3755
        %v4127 = vunpack.c.h.b16 %v3755
        %v4128 = vunpack.c.l.b16 %v3756
        %v4129 = vunpack.c.h.b16 %v3756
        %v4130 = vunpack.c.l.b16 %v3757
        %v4131 = vunpack.c.h.b16 %v3757
        %v4132 = vunpack.c.l.b16 %v3758
        %v4133 = vunpack.c.h.b16 %v3758
        %v4134 = vunpack.c.l.b16 %v3759
        %v4135 = vunpack.c.h.b16 %v3759
        %v4136 = vunpack.c.l.b16 %v3760
        %v4137 = vunpack.c.h.b16 %v3760
        %v4138 = vunpack.c.l.b16 %v3761
        %v4139 = vunpack.c.h.b16 %v3761
        %v4140 = vunpack.c.l.b16 %v3762
        %v4141 = vunpack.c.h.b16 %v3762
        %v4142 = vunpack.c.l.b16 %v3763
        %v4143 = vunpack.c.h.b16 %v3763
        %v4144 = vunpack.c.l.b16 %v3764
        %v4145 = vunpack.c.h.b16 %v3764
        %v4146 = vunpack.c.l.b16 %v3765
        %v4147 = vunpack.c.h.b16 %v3765
        %v4148 = vunpack.c.l.b16 %v3766
        %v4149 = vunpack.c.h.b16 %v3766
        %v4150 = vunpack.c.l.b16 %v3767
        %v4151 = vunpack.c.h.b16 %v3767
        %v4152 = vunpack.c.l.b16 %v3768
        %v4153 = vunpack.c.h.b16 %v3768
        %v4154 = vunpack.c.l.b16 %v3769
        %v4155 = vunpack.c.h.b16 %v3769
        %v4156 = vpack.c.b16 %v3902, %v3900
        %v4157 = vpack.c.b16 %v3903, %v3901
        %v4158 = vpack.c.b16 %v3906, %v3904
        %v4159 = vpack.c.b16 %v3907, %v3905
        %v4160 = vpack.c.b16 %v3910, %v3908
        %v4161 = vpack.c.b16 %v3911, %v3909
        %v4162 = vpack.c.b16 %v3914, %v3912
        %v4163 = vpack.c.b16 %v3915, %v3913
        %v4164 = vpack.c.b16 %v3918, %v3916
        %v4165 = vpack.c.b16 %v3919, %v3917
        %v4166 = vpack.c.b16 %v3922, %v3920
        %v4167 = vpack.c.b16 %v3923, %v3921
        %v4168 = vpack.c.b16 %v3926, %v3924
        %v4169 = vpack.c.b16 %v3927, %v3925
        %v4170 = vpack.c.b16 %v3930, %v3928
        %v4171 = vpack.c.b16 %v3931, %v3929
        %v4172 = vpack.c.b16 %v3934, %v3932
        %v4173 = vpack.c.b16 %v3935, %v3933
        %v4174 = vpack.c.b16 %v3938, %v3936
        %v4175 = vpack.c.b16 %v3939, %v3937
        %v4176 = vpack.c.b16 %v3942, %v3940
        %v4177 = vpack.c.b16 %v3943, %v3941
        %v4178 = vpack.c.b16 %v3946, %v3944
        %v4179 = vpack.c.b16 %v3947, %v3945
        %v4180 = vpack.c.b16 %v3950, %v3948
        %v4181 = vpack.c.b16 %v3951, %v3949
        %v4182 = vpack.c.b16 %v3954, %v3952
        %v4183 = vpack.c.b16 %v3955, %v3953
        %v4184 = vpack.c.b16 %v3958, %v3956
        %v4185 = vpack.c.b16 %v3959, %v3957
        %v4186 = vpack.c.b16 %v3962, %v3960
        %v4187 = vpack.c.b16 %v3963, %v3961
        %v4188 = vpack.c.b16 %v3966, %v3964
        %v4189 = vpack.c.b16 %v3967, %v3965
        %v4190 = vpack.c.b16 %v3970, %v3968
        %v4191 = vpack.c.b16 %v3971, %v3969
        %v4192 = vpack.c.b16 %v3974, %v3972
        %v4193 = vpack.c.b16 %v3975, %v3973
        %v4194 = vpack.c.b16 %v3978, %v3976
        %v4195 = vpack.c.b16 %v3979, %v3977
        %v4196 = vpack.c.b16 %v3982, %v3980
        %v4197 = vpack.c.b16 %v3983, %v3981
        %v4198 = vpack.c.b16 %v3986, %v3984
        %v4199 = vpack.c.b16 %v3987, %v3985
        %v4200 = vpack.c.b16 %v3990, %v3988
        %v4201 = vpack.c.b16 %v3991, %v3989
        %v4202 = vpack.c.b16 %v3994, %v3992
        %v4203 = vpack.c.b16 %v3995, %v3993
        %v4204 = vpack.c.b16 %v3998, %v3996
        %v4205 = vpack.c.b16 %v3999, %v3997
        %v4206 = vpack.c.b16 %v4002, %v4000
        %v4207 = vpack.c.b16 %v4003, %v4001
        %v4208 = vpack.c.b16 %v4006, %v4004
        %v4209 = vpack.c.b16 %v4007, %v4005
        %v4210 = vpack.c.b16 %v4010, %v4008
        %v4211 = vpack.c.b16 %v4011, %v4009
        %v4212 = vpack.c.b16 %v4014, %v4012
        %v4213 = vpack.c.b16 %v4015, %v4013
        %v4214 = vpack.c.b16 %v4018, %v4016
        %v4215 = vpack.c.b16 %v4019, %v4017
        %v4216 = vpack.c.b16 %v4022, %v4020
        %v4217 = vpack.c.b16 %v4023, %v4021
        %v4218 = vpack.c.b16 %v4026, %v4024
        %v4219 = vpack.c.b16 %v4027, %v4025
        %v4220 = vpack.c.b16 %v4030, %v4028
        %v4221 = vpack.c.b16 %v4031, %v4029
        %v4222 = vpack.c.b16 %v4034, %v4032
        %v4223 = vpack.c.b16 %v4035, %v4033
        %v4224 = vpack.c.b16 %v4038, %v4036
        %v4225 = vpack.c.b16 %v4039, %v4037
        %v4226 = vpack.c.b16 %v4042, %v4040
        %v4227 = vpack.c.b16 %v4043, %v4041
        %v4228 = vpack.c.b16 %v4046, %v4044
        %v4229 = vpack.c.b16 %v4047, %v4045
        %v4230 = vpack.c.b16 %v4050, %v4048
        %v4231 = vpack.c.b16 %v4051, %v4049
        %v4232 = vpack.c.b16 %v4054, %v4052
        %v4233 = vpack.c.b16 %v4055, %v4053
        %v4234 = vpack.c.b16 %v4058, %v4056
        %v4235 = vpack.c.b16 %v4059, %v4057
        %v4236 = vpack.c.b16 %v4062, %v4060
        %v4237 = vpack.c.b16 %v4063, %v4061
        %v4238 = vpack.c.b16 %v4066, %v4064
        %v4239 = vpack.c.b16 %v4067, %v4065
        %v4240 = vpack.c.b16 %v4070, %v4068
        %v4241 = vpack.c.b16 %v4071, %v4069
        %v4242 = vpack.c.b16 %v4074, %v4072
        %v4243 = vpack.c.b16 %v4075, %v4073
        %v4244 = vpack.c.b16 %v4078, %v4076
        %v4245 = vpack.c.b16 %v4079, %v4077
        %v4246 = vpack.c.b16 %v4082, %v4080
        %v4247 = vpack.c.b16 %v4083, %v4081
        %v4248 = vpack.c.b16 %v4086, %v4084
        %v4249 = vpack.c.b16 %v4087, %v4085
        %v4250 = vpack.c.b16 %v4090, %v4088
        %v4251 = vpack.c.b16 %v4091, %v4089
        %v4252 = vpack.c.b16 %v4094, %v4092
        %v4253 = vpack.c.b16 %v4095, %v4093
        %v4254 = vpack.c.b16 %v4098, %v4096
        %v4255 = vpack.c.b16 %v4099, %v4097
        %v4256 = vpack.c.b16 %v4102, %v4100
        %v4257 = vpack.c.b16 %v4103, %v4101
        %v4258 = vpack.c.b16 %v4106, %v4104
        %v4259 = vpack.c.b16 %v4107, %v4105
        %v4260 = vpack.c.b16 %v4110, %v4108
        %v4261 = vpack.c.b16 %v4111, %v4109
        %v4262 = vpack.c.b16 %v4114, %v4112
        %v4263 = vpack.c.b16 %v4115, %v4113
        %v4264 = vpack.c.b16 %v4118, %v4116
        %v4265 = vpack.c.b16 %v4119, %v4117
        %v4266 = vpack.c.b16 %v4122, %v4120
        %v4267 = vpack.c.b16 %v4123, %v4121
        %v4268 = vpack.c.b16 %v4126, %v4124
        %v4269 = vpack.c.b16 %v4127, %v4125
        %v4270 = vpack.c.b16 %v4130, %v4128
        %v4271 = vpack.c.b16 %v4131, %v4129
        %v4272 = vpack.c.b16 %v4134, %v4132
        %v4273 = vpack.c.b16 %v4135, %v4133
        %v4274 = vpack.c.b16 %v4138, %v4136
        %v4275 = vpack.c.b16 %v4139, %v4137
        %v4276 = vpack.c.b16 %v4142, %v4140
        %v4277 = vpack.c.b16 %v4143, %v4141
        %v4278 = vpack.c.b16 %v4146, %v4144
        %v4279 = vpack.c.b16 %v4147, %v4145
        %v4280 = vpack.c.b16 %v4150, %v4148
        %v4281 = vpack.c.b16 %v4151, %v4149
        %v4282 = vpack.c.b16 %v4154, %v4152
        %v4283 = vpack.c.b16 %v4155, %v4153
        %4412 = vmatprep.subr.bf16.mxu0 %v4171
        %4413 = vmatpush1.bf16.msra.mxu0 %v4170
        %4414 = vmatprep.subr.bf16.mxu0 %v4169
        %4415 = vmatpush1.bf16.msra.mxu0 %v4168
        %4416 = vmatprep.subr.bf16.mxu0 %v4167
        %4417 = vmatpush1.bf16.msra.mxu0 %v4166
        %4418 = vmatprep.subr.bf16.mxu0 %v4165
        %4419 = vmatpush1.bf16.msra.mxu0 %v4164
        %4420 = vmatprep.subr.bf16.mxu0 %v4163
        %4421 = vmatpush1.bf16.msra.mxu0 %v4162
        %4422 = vmatprep.subr.bf16.mxu0 %v4161
        %4423 = vmatpush1.bf16.msra.mxu0 %v4160
        %4424 = vmatprep.subr.bf16.mxu0 %v4159
        %4425 = vmatpush1.bf16.msra.mxu0 %v4158
        %4426 = vmatprep.subr.bf16.mxu0 %v4157
        %4427 = vmatpush1.bf16.msra.mxu0 %v4156
        %4428 = vmatprep.subr.bf16.mxu0 %v4187
        %4429 = vmatpush2.bf16.msra.mxu0 %v4186
        %4430 = vmatprep.subr.bf16.mxu0 %v4185
        %4431 = vmatpush2.bf16.msra.mxu0 %v4184
        %4432 = vmatprep.subr.bf16.mxu0 %v4183
        %4433 = vmatpush2.bf16.msra.mxu0 %v4182
        %4434 = vmatprep.subr.bf16.mxu0 %v4181
        %4435 = vmatpush2.bf16.msra.mxu0 %v4180
        %4436 = vmatprep.subr.bf16.mxu0 %v4179
        %4437 = vmatpush2.bf16.msra.mxu0 %v4178
        %4438 = vmatprep.subr.bf16.mxu0 %v4177
        %4439 = vmatpush2.bf16.msra.mxu0 %v4176
        %4440 = vmatprep.subr.bf16.mxu0 %v4175
        %4441 = vmatpush2.bf16.msra.mxu0 %v4174
        %4442 = vmatprep.subr.bf16.mxu0 %v4173
        %4443 = vmatpush2.bf16.msra.mxu0 %v4172
        %4444 = vmatprep.mubr.bf16.mxu0 %v784
        %4445 = vmatmul.mubr.bf16.gmra.mxu0 %v783
        %v4446 = vpop.f32.mrf.mxu0
        %v4447 = vadd.f32 %v3770, %v4446
        %v4448 = vpop.f32.mrf.mxu0
        %v4449 = vadd.f32 %v3771, %v4448
        %v4450 = vpop.f32.mrf.mxu0
        %v4451 = vpop.f32.mrf.mxu0
        %4452 = vdwg.mxu0
        %4453 = vmatprep.subr.bf16.mxu0 %v4203
        %4454 = vmatpush1.bf16.msra.mxu0 %v4202
        %4455 = vmatprep.subr.bf16.mxu0 %v4201
        %4456 = vmatpush1.bf16.msra.mxu0 %v4200
        %4457 = vmatprep.subr.bf16.mxu0 %v4199
        %4458 = vmatpush1.bf16.msra.mxu0 %v4198
        %4459 = vmatprep.subr.bf16.mxu0 %v4197
        %4460 = vmatpush1.bf16.msra.mxu0 %v4196
        %4461 = vmatprep.subr.bf16.mxu0 %v4195
        %4462 = vmatpush1.bf16.msra.mxu0 %v4194
        %4463 = vmatprep.subr.bf16.mxu0 %v4193
        %4464 = vmatpush1.bf16.msra.mxu0 %v4192
        %4465 = vmatprep.subr.bf16.mxu0 %v4191
        %4466 = vmatpush1.bf16.msra.mxu0 %v4190
        %4467 = vmatprep.subr.bf16.mxu0 %v4189
        %4468 = vmatpush1.bf16.msra.mxu0 %v4188
        %4469 = vmatprep.subr.bf16.mxu0 %v4219
        %4470 = vmatpush2.bf16.msra.mxu0 %v4218
        %4471 = vmatprep.subr.bf16.mxu0 %v4217
        %4472 = vmatpush2.bf16.msra.mxu0 %v4216
        %4473 = vmatprep.subr.bf16.mxu0 %v4215
        %4474 = vmatpush2.bf16.msra.mxu0 %v4214
        %4475 = vmatprep.subr.bf16.mxu0 %v4213
        %4476 = vmatpush2.bf16.msra.mxu0 %v4212
        %4477 = vmatprep.subr.bf16.mxu0 %v4211
        %4478 = vmatpush2.bf16.msra.mxu0 %v4210
        %4479 = vmatprep.subr.bf16.mxu0 %v4209
        %4480 = vmatpush2.bf16.msra.mxu0 %v4208
        %4481 = vmatprep.subr.bf16.mxu0 %v4207
        %4482 = vmatpush2.bf16.msra.mxu0 %v4206
        %4483 = vmatprep.subr.bf16.mxu0 %v4205
        %4484 = vmatpush2.bf16.msra.mxu0 %v4204
        %4485 = vmatprep.mubr.bf16.mxu0 %v786
        %4486 = vmatmul.mubr.bf16.gmra.mxu0 %v785
        %v4487 = vpop.f32.mrf.mxu0
        %v4488 = vadd.f32 %v4447, %v4487
        %v4489 = vpop.f32.mrf.mxu0
        %v4490 = vadd.f32 %v4449, %v4489
        %v4491 = vpop.f32.mrf.mxu0
        %v4492 = vpop.f32.mrf.mxu0
        %4493 = vdwg.mxu0
        %4494 = vmatprep.subr.bf16.mxu0 %v4235
        %4495 = vmatpush1.bf16.msra.mxu0 %v4234
        %4496 = vmatprep.subr.bf16.mxu0 %v4233
        %4497 = vmatpush1.bf16.msra.mxu0 %v4232
        %4498 = vmatprep.subr.bf16.mxu0 %v4231
        %4499 = vmatpush1.bf16.msra.mxu0 %v4230
        %4500 = vmatprep.subr.bf16.mxu0 %v4229
        %4501 = vmatpush1.bf16.msra.mxu0 %v4228
        %4502 = vmatprep.subr.bf16.mxu0 %v4227
        %4503 = vmatpush1.bf16.msra.mxu0 %v4226
        %4504 = vmatprep.subr.bf16.mxu0 %v4225
        %4505 = vmatpush1.bf16.msra.mxu0 %v4224
        %4506 = vmatprep.subr.bf16.mxu0 %v4223
        %4507 = vmatpush1.bf16.msra.mxu0 %v4222
        %4508 = vmatprep.subr.bf16.mxu0 %v4221
        %4509 = vmatpush1.bf16.msra.mxu0 %v4220
        %4510 = vmatprep.subr.bf16.mxu0 %v4251
        %4511 = vmatpush2.bf16.msra.mxu0 %v4250
        %4512 = vmatprep.subr.bf16.mxu0 %v4249
        %4513 = vmatpush2.bf16.msra.mxu0 %v4248
        %4514 = vmatprep.subr.bf16.mxu0 %v4247
        %4515 = vmatpush2.bf16.msra.mxu0 %v4246
        %4516 = vmatprep.subr.bf16.mxu0 %v4245
        %4517 = vmatpush2.bf16.msra.mxu0 %v4244
        %4518 = vmatprep.subr.bf16.mxu0 %v4243
        %4519 = vmatpush2.bf16.msra.mxu0 %v4242
        %4520 = vmatprep.subr.bf16.mxu0 %v4241
        %4521 = vmatpush2.bf16.msra.mxu0 %v4240
        %4522 = vmatprep.subr.bf16.mxu0 %v4239
        %4523 = vmatpush2.bf16.msra.mxu0 %v4238
        %4524 = vmatprep.subr.bf16.mxu0 %v4237
        %4525 = vmatpush2.bf16.msra.mxu0 %v4236
        %4526 = vmatprep.mubr.bf16.mxu0 %v788
        %4527 = vmatmul.mubr.bf16.gmra.mxu0 %v787
        %v4528 = vpop.f32.mrf.mxu0
        %v4529 = vadd.f32 %v4488, %v4528
        %v4530 = vpop.f32.mrf.mxu0
        %v4531 = vadd.f32 %v4490, %v4530
        %v4532 = vpop.f32.mrf.mxu0
        %v4533 = vpop.f32.mrf.mxu0
        %4534 = vdwg.mxu0
        %4535 = vmatprep.subr.bf16.mxu0 %v4267
        %4536 = vmatpush1.bf16.msra.mxu0 %v4266
        %4537 = vmatprep.subr.bf16.mxu0 %v4265
        %4538 = vmatpush1.bf16.msra.mxu0 %v4264
        %4539 = vmatprep.subr.bf16.mxu0 %v4263
        %4540 = vmatpush1.bf16.msra.mxu0 %v4262
        %4541 = vmatprep.subr.bf16.mxu0 %v4261
        %4542 = vmatpush1.bf16.msra.mxu0 %v4260
        %4543 = vmatprep.subr.bf16.mxu0 %v4259
        %4544 = vmatpush1.bf16.msra.mxu0 %v4258
        %4545 = vmatprep.subr.bf16.mxu0 %v4257
        %4546 = vmatpush1.bf16.msra.mxu0 %v4256
        %4547 = vmatprep.subr.bf16.mxu0 %v4255
        %4548 = vmatpush1.bf16.msra.mxu0 %v4254
        %4549 = vmatprep.subr.bf16.mxu0 %v4253
        %4550 = vmatpush1.bf16.msra.mxu0 %v4252
        %4551 = vmatprep.subr.bf16.mxu0 %v4283
        %4552 = vmatpush2.bf16.msra.mxu0 %v4282
        %4553 = vmatprep.subr.bf16.mxu0 %v4281
        %4554 = vmatpush2.bf16.msra.mxu0 %v4280
        %4555 = vmatprep.subr.bf16.mxu0 %v4279
        %4556 = vmatpush2.bf16.msra.mxu0 %v4278
        %4557 = vmatprep.subr.bf16.mxu0 %v4277
        %4558 = vmatpush2.bf16.msra.mxu0 %v4276
        %4559 = vmatprep.subr.bf16.mxu0 %v4275
        %4560 = vmatpush2.bf16.msra.mxu0 %v4274
        %4561 = vmatprep.subr.bf16.mxu0 %v4273
        %4562 = vmatpush2.bf16.msra.mxu0 %v4272
        %4563 = vmatprep.subr.bf16.mxu0 %v4271
        %4564 = vmatpush2.bf16.msra.mxu0 %v4270
        %4565 = vmatprep.subr.bf16.mxu0 %v4269
        %4566 = vmatpush2.bf16.msra.mxu0 %v4268
        %4567 = vmatprep.mubr.bf16.mxu0 %v790
        %4568 = vmatmul.mubr.bf16.gmra.mxu0 %v789
        %v4569 = vpop.f32.mrf.mxu0
        %v4570 = vadd.f32 %v4529, %v4569
        %v4571 = vpop.f32.mrf.mxu0
        %v4572 = vadd.f32 %v4531, %v4571
        %v4573 = vpop.f32.mrf.mxu0
        %v4574 = vpop.f32.mrf.mxu0
        %4575 = vdwg.mxu0
        %v4576 = vmax.f32 %v4570, 0.0
        %v4577 = vmax.f32 %v4572, 0.0
        %4580 = vrot.lane.b32.xlu0 %v4576, 32
        %v4581 = vpop.permute.xlu0 %4580
        %4582 = vrot.lane.b32.xlu0 %v4577, 32
        %v4583 = vpop.permute.xlu0 %4582
        %v4584 = vsel %vm655, %v4581, %v4583
        %4588 = vst.msk [vmem:[#allocation2 + $0x48] sm:$0xff] %vm1737, %v4581
        %4589 = vst [vmem:[#allocation2 + $0x50] sm:$0xff] %v4584
        %4590 = vst.msk [vmem:[#allocation2 + $0x58] sm:$0xff] %vm655, %v4583
        %v4591 = vld [vmem:[#allocation2] sm:$0xff]
        %v4592 = vld [vmem:[#allocation2 + $0x8] sm:$0xff]
        %v4593 = vld [vmem:[#allocation2 + $0x10] sm:$0xff]
        %v4594 = vld [vmem:[#allocation2 + $0x18] sm:$0xff]
        %v4595 = vld [vmem:[#allocation2 + $0x20] sm:$0xff]
        %v4596 = vld [vmem:[#allocation2 + $0x28] sm:$0xff]
        %v4597 = vld [vmem:[#allocation2 + $0x30] sm:$0xff]
        %v4598 = vld [vmem:[#allocation2 + $0x38] sm:$0xff]
        %v4599 = vld [vmem:[#allocation2 + $0x40] sm:$0xff]
        %v4600 = vld [vmem:[#allocation2 + $0x48] sm:$0xff]
        %v4601 = vld [vmem:[#allocation2 + $0x50] sm:$0xff]
        %v4602 = vld [vmem:[#allocation2 + $0x58] sm:$0xff]
        %v4603 = vpack.c.bf16 %v4594, %v4591
        %v4604 = vpack.c.bf16 %v4595, %v4592
        %v4605 = vpack.c.bf16 %v4596, %v4593
        %v4606 = vpack.c.bf16 %v4600, %v4597
        %v4607 = vpack.c.bf16 %v4601, %v4598
        %v4608 = vpack.c.bf16 %v4602, %v4599
        %4611 = vrot.lane.b32.xlu0 %v652, 33
        %v4612 = vpop.permute.xlu0 %4611
        %4613 = vrot.lane.b32.xlu0 %v653, 33
        %v4614 = vpop.permute.xlu0 %4613
        %vm4615 = vcmask 269312
        %v4616 = vsel %vm4615, %v4612, %v4614
        %v4620 = vmul.bf16 %v4603, %v4612
        %v4621 = vmul.bf16 %v4604, %v4616
        %v4622 = vmul.bf16 %v4605, %v4614
        %v4623 = vmul.bf16 %v4606, %v4612
        %v4624 = vmul.bf16 %v4607, %v4616
        %v4625 = vmul.bf16 %v4608, %v4614
        %4626 = vrot.lane.b32.xlu0 %v652, 49
        %v4627 = vpop.permute.xlu0 %4626
        %4628 = vrot.lane.b32.xlu0 %v653, 49
        %v4629 = vpop.permute.xlu0 %4628
        %vm4630 = vcmask 400384
        %v4631 = vsel %vm4630, %v4627, %v4629
        %v4635 = vmul.bf16 %v4603, %v4627
        %v4636 = vmul.bf16 %v4604, %v4631
        %v4637 = vmul.bf16 %v4605, %v4629
        %v4638 = vmul.bf16 %v4606, %v4627
        %v4639 = vmul.bf16 %v4607, %v4631
        %v4640 = vmul.bf16 %v4608, %v4629
        %4647 = vrot.lane.b32.xlu0 %v4620, 127
        %v4648 = vpop.permute.xlu0 %4647
        %4649 = vrot.lane.b32.xlu0 %v4621, 127
        %v4650 = vpop.permute.xlu0 %4649
        %4651 = vrot.lane.b32.xlu0 %v4622, 127
        %v4652 = vpop.permute.xlu0 %4651
        %4653 = vrot.lane.b32.xlu0 %v4623, 127
        %v4654 = vpop.permute.xlu0 %4653
        %4655 = vrot.lane.b32.xlu0 %v4624, 127
        %v4656 = vpop.permute.xlu0 %4655
        %4657 = vrot.lane.b32.xlu0 %v4625, 127
        %v4658 = vpop.permute.xlu0 %4657
        %vm4659 = vcmask 1039360
        %v4660 = vsel %vm4659, %v4648, %v4650
        %v4661 = vsel %vm4659, %v4650, %v4652
        %v4662 = vsel %vm4659, %v4654, %v4656
        %v4663 = vsel %vm4659, %v4656, %v4658
        %4670 = vrot.lane.b32.xlu0 %v4603, 112
        %v4671 = vpop.permute.xlu0 %4670
        %4672 = vrot.lane.b32.xlu0 %v4604, 112
        %v4673 = vpop.permute.xlu0 %4672
        %4674 = vrot.lane.b32.xlu0 %v4605, 112
        %v4675 = vpop.permute.xlu0 %4674
        %4676 = vrot.lane.b32.xlu0 %v4606, 112
        %v4677 = vpop.permute.xlu0 %4676
        %4678 = vrot.lane.b32.xlu0 %v4607, 112
        %v4679 = vpop.permute.xlu0 %4678
        %4680 = vrot.lane.b32.xlu0 %v4608, 112
        %v4681 = vpop.permute.xlu0 %4680
        %vm4682 = vcmask 916480
        %v4683 = vsel %vm4682, %v4671, %v4673
        %v4684 = vsel %vm4682, %v4673, %v4675
        %v4685 = vsel %vm4682, %v4677, %v4679
        %v4686 = vsel %vm4682, %v4679, %v4681
        %4693 = vrot.lane.b32.xlu0 %v4635, 111
        %v4694 = vpop.permute.xlu0 %4693
        %4695 = vrot.lane.b32.xlu0 %v4636, 111
        %v4696 = vpop.permute.xlu0 %4695
        %4697 = vrot.lane.b32.xlu0 %v4637, 111
        %v4698 = vpop.permute.xlu0 %4697
        %4699 = vrot.lane.b32.xlu0 %v4638, 111
        %v4700 = vpop.permute.xlu0 %4699
        %4701 = vrot.lane.b32.xlu0 %v4639, 111
        %v4702 = vpop.permute.xlu0 %4701
        %4703 = vrot.lane.b32.xlu0 %v4640, 111
        %v4704 = vpop.permute.xlu0 %4703
        %vm4705 = vcmask 908288
        %v4706 = vsel %vm4705, %v4694, %v4696
        %v4707 = vsel %vm4705, %v4696, %v4698
        %v4708 = vsel %vm4705, %v4700, %v4702
        %v4709 = vsel %vm4705, %v4702, %v4704
        %v4710 = vld [vmem:[#allocation11] sm:$0xf]
        %v4711 = vld [vmem:[#allocation11 + $0x4] sm:$0xf]
        %v4712 = vld [vmem:[#allocation11 + $0x8] sm:$0xf]
        %v4713 = vld [vmem:[#allocation11 + $0xc] sm:$0xf]
        %v4714 = vld [vmem:[#allocation13] sm:$0xff]
        %v4715 = vld [vmem:[#allocation13 + $0x8] sm:$0xff]
        %v4716 = vld [vmem:[#allocation13 + $0x10] sm:$0xff]
        %v4717 = vld [vmem:[#allocation13 + $0x18] sm:$0xff]
        %4719 = vset.pattern.permute.xlu0 0
        %4720 = vperm.xlu0 %4719, %v4714
        %v4721 = vpop.permute.xlu0 %4720
        %4724 = vset.pattern.permute.xlu0 0
        %4725 = vperm.xlu0 %4724, %v4715
        %v4726 = vpop.permute.xlu0 %4725
        %4729 = vset.pattern.permute.xlu0 0
        %4730 = vperm.xlu0 %4729, %v4716
        %v4731 = vpop.permute.xlu0 %4730
        %4734 = vset.pattern.permute.xlu0 0
        %4735 = vperm.xlu0 %4734, %v4717
        %v4736 = vpop.permute.xlu0 %4735
        %v4742 = vunpack.c.l.b16 %v4710
        %v4743 = vunpack.c.l.b16 %v4711
        %v4744 = vunpack.c.l.b16 %v4712
        %v4745 = vunpack.c.l.b16 %v4713
        %v4746 = vpack.c.b16 %v4743, %v4742
        %v4747 = vpack.c.b16 %v4745, %v4744
        %4750 = vrot.lane.b32.xlu0 %v4603, 96
        %v4751 = vpop.permute.xlu0 %4750
        %4752 = vrot.lane.b32.xlu0 %v4604, 96
        %v4753 = vpop.permute.xlu0 %4752
        %4754 = vrot.lane.b32.xlu0 %v4605, 96
        %v4755 = vpop.permute.xlu0 %4754
        %4756 = vrot.lane.b32.xlu0 %v4606, 96
        %v4757 = vpop.permute.xlu0 %4756
        %4758 = vrot.lane.b32.xlu0 %v4607, 96
        %v4759 = vpop.permute.xlu0 %4758
        %4760 = vrot.lane.b32.xlu0 %v4608, 96
        %v4761 = vpop.permute.xlu0 %4760
        %4762 = vrot.lane.b32.xlu0 %v4660, 96
        %v4763 = vpop.permute.xlu0 %4762
        %4764 = vrot.lane.b32.xlu0 %v4661, 96
        %v4765 = vpop.permute.xlu0 %4764
        %4766 = vrot.lane.b32.xlu0 %v4652, 96
        %v4767 = vpop.permute.xlu0 %4766
        %4768 = vrot.lane.b32.xlu0 %v4662, 96
        %v4769 = vpop.permute.xlu0 %4768
        %4770 = vrot.lane.b32.xlu0 %v4663, 96
        %v4771 = vpop.permute.xlu0 %4770
        %4772 = vrot.lane.b32.xlu0 %v4658, 96
        %v4773 = vpop.permute.xlu0 %4772
        %4774 = vrot.lane.b32.xlu0 %v4683, 96
        %v4775 = vpop.permute.xlu0 %4774
        %4776 = vrot.lane.b32.xlu0 %v4684, 96
        %v4777 = vpop.permute.xlu0 %4776
        %4778 = vrot.lane.b32.xlu0 %v4675, 96
        %v4779 = vpop.permute.xlu0 %4778
        %4780 = vrot.lane.b32.xlu0 %v4685, 96
        %v4781 = vpop.permute.xlu0 %4780
        %4782 = vrot.lane.b32.xlu0 %v4686, 96
        %v4783 = vpop.permute.xlu0 %4782
        %4784 = vrot.lane.b32.xlu0 %v4681, 96
        %v4785 = vpop.permute.xlu0 %4784
        %4786 = vrot.lane.b32.xlu0 %v4706, 96
        %v4787 = vpop.permute.xlu0 %4786
        %4788 = vrot.lane.b32.xlu0 %v4707, 96
        %v4789 = vpop.permute.xlu0 %4788
        %4790 = vrot.lane.b32.xlu0 %v4698, 96
        %v4791 = vpop.permute.xlu0 %4790
        %4792 = vrot.lane.b32.xlu0 %v4708, 96
        %v4793 = vpop.permute.xlu0 %4792
        %4794 = vrot.lane.b32.xlu0 %v4709, 96
        %v4795 = vpop.permute.xlu0 %4794
        %4796 = vrot.lane.b32.xlu0 %v4704, 96
        %v4797 = vpop.permute.xlu0 %4796
        %vm4798 = vcmask 785408
        %v4799 = vsel %vm4798, %v4751, %v4753
        %v4800 = vsel %vm4798, %v4753, %v4755
        %v4801 = vsel %vm4798, %v4757, %v4759
        %v4802 = vsel %vm4798, %v4759, %v4761
        %v4803 = vsel %vm4798, %v4763, %v4765
        %v4804 = vsel %vm4798, %v4765, %v4767
        %v4805 = vsel %vm4798, %v4769, %v4771
        %v4806 = vsel %vm4798, %v4771, %v4773
        %v4807 = vsel %vm4798, %v4775, %v4777
        %v4808 = vsel %vm4798, %v4777, %v4779
        %v4809 = vsel %vm4798, %v4781, %v4783
        %v4810 = vsel %vm4798, %v4783, %v4785
        %v4811 = vsel %vm4798, %v4787, %v4789
        %v4812 = vsel %vm4798, %v4789, %v4791
        %v4813 = vsel %vm4798, %v4793, %v4795
        %v4814 = vsel %vm4798, %v4795, %v4797
        %4831 = vmatprep.subr.bf16.mxu0 %v4814
        %4832 = vmatpush1.bf16.msra.mxu0 %v4813
        %4833 = vmatprep.subr.bf16.mxu0 %v4812
        %4834 = vmatpush1.bf16.msra.mxu0 %v4811
        %4835 = vmatprep.subr.bf16.mxu0 %v4810
        %4836 = vmatpush1.bf16.msra.mxu0 %v4809
        %4837 = vmatprep.subr.bf16.mxu0 %v4808
        %4838 = vmatpush1.bf16.msra.mxu0 %v4807
        %4839 = vmatprep.subr.bf16.mxu0 %v4806
        %4840 = vmatpush1.bf16.msra.mxu0 %v4805
        %4841 = vmatprep.subr.bf16.mxu0 %v4804
        %4842 = vmatpush1.bf16.msra.mxu0 %v4803
        %4843 = vmatprep.subr.bf16.mxu0 %v4802
        %4844 = vmatpush1.bf16.msra.mxu0 %v4801
        %4845 = vmatprep.subr.bf16.mxu0 %v4800
        %4846 = vmatpush1.bf16.msra.mxu0 %v4799
        %4847 = vmatprep.subr.bf16.mxu0 0
        %4848 = vmatpush2.bf16.msra.mxu0 0
        %4849 = vmatprep.subr.bf16.mxu0 0
        %4850 = vmatpush2.bf16.msra.mxu0 0
        %4851 = vmatprep.subr.bf16.mxu0 0
        %4852 = vmatpush2.bf16.msra.mxu0 0
        %4853 = vmatprep.subr.bf16.mxu0 0
        %4854 = vmatpush2.bf16.msra.mxu0 0
        %4855 = vmatprep.subr.bf16.mxu0 0
        %4856 = vmatpush2.bf16.msra.mxu0 0
        %4857 = vmatprep.subr.bf16.mxu0 0
        %4858 = vmatpush2.bf16.msra.mxu0 0
        %4859 = vmatprep.subr.bf16.mxu0 0
        %4860 = vmatpush2.bf16.msra.mxu0 0
        %4861 = vmatprep.subr.bf16.mxu0 0
        %4862 = vmatpush2.bf16.msra.mxu0 0
        %4863 = vmatprep.mubr.bf16.mxu0 0
        %4864 = vmatmul.mubr.bf16.gmra.mxu0 %v4746
        %v4865 = vpop.f32.mrf.mxu0
        %v4866 = vadd.f32 %v4721, %v4865
        %v4867 = vpop.f32.mrf.mxu0
        %v4868 = vadd.f32 %v4721, %v4867
        %v4869 = vpop.f32.mrf.mxu0
        %v4870 = vadd.f32 %v4726, %v4869
        %v4871 = vpop.f32.mrf.mxu0
        %v4872 = vadd.f32 %v4726, %v4871
        %4873 = vmatprep.mubr.bf16.mxu0 0
        %4874 = vmatmul.mubr.bf16.gmra.mxu0 %v4747
        %v4875 = vpop.f32.mrf.mxu0
        %v4876 = vadd.f32 %v4731, %v4875
        %v4877 = vpop.f32.mrf.mxu0
        %v4878 = vadd.f32 %v4731, %v4877
        %v4879 = vpop.f32.mrf.mxu0
        %v4880 = vadd.f32 %v4736, %v4879
        %v4881 = vpop.f32.mrf.mxu0
        %v4882 = vadd.f32 %v4736, %v4881
        %4883 = vdwg.mxu0
        %v4884 = vmax.f32 %v4866, 0.0
        %v4885 = vmax.f32 %v4868, 0.0
        %v4886 = vmax.f32 %v4870, 0.0
        %v4887 = vmax.f32 %v4872, 0.0
        %v4888 = vmax.f32 %v4876, 0.0
        %v4889 = vmax.f32 %v4878, 0.0
        %v4890 = vmax.f32 %v4880, 0.0
        %v4891 = vmax.f32 %v4882, 0.0
        %4900 = vrot.lane.b32.xlu0 %v4884, 32
        %v4901 = vpop.permute.xlu0 %4900
        %4902 = vrot.lane.b32.xlu0 %v4885, 32
        %v4903 = vpop.permute.xlu0 %4902
        %4904 = vrot.lane.b32.xlu0 %v4886, 32
        %v4905 = vpop.permute.xlu0 %4904
        %4906 = vrot.lane.b32.xlu0 %v4887, 32
        %v4907 = vpop.permute.xlu0 %4906
        %4908 = vrot.lane.b32.xlu0 %v4888, 32
        %v4909 = vpop.permute.xlu0 %4908
        %4910 = vrot.lane.b32.xlu0 %v4889, 32
        %v4911 = vpop.permute.xlu0 %4910
        %4912 = vrot.lane.b32.xlu0 %v4890, 32
        %v4913 = vpop.permute.xlu0 %4912
        %4914 = vrot.lane.b32.xlu0 %v4891, 32
        %v4915 = vpop.permute.xlu0 %4914
        %v4916 = vsel %vm655, %v4901, %v4903
        %v4917 = vsel %vm655, %v4905, %v4907
        %v4918 = vsel %vm655, %v4909, %v4911
        %v4919 = vsel %vm655, %v4913, %v4915
        %4932 = vst.msk [vmem:[#allocation2] sm:$0xff] %vm1737, %v4901
        %4933 = vst [vmem:[#allocation2 + $0x8] sm:$0xff] %v4916
        %4934 = vst.msk [vmem:[#allocation2 + $0x10] sm:$0xff] %vm655, %v4903
        %4935 = vst.msk [vmem:[#allocation2 + $0x18] sm:$0xff] %vm1737, %v4905
        %4936 = vst [vmem:[#allocation2 + $0x20] sm:$0xff] %v4917
        %4937 = vst.msk [vmem:[#allocation2 + $0x28] sm:$0xff] %vm655, %v4907
        %4938 = vst.msk [vmem:[#allocation2 + $0x30] sm:$0xff] %vm1737, %v4909
        %4939 = vst [vmem:[#allocation2 + $0x38] sm:$0xff] %v4918
        %4940 = vst.msk [vmem:[#allocation2 + $0x40] sm:$0xff] %vm655, %v4911
        %4941 = vst.msk [vmem:[#allocation2 + $0x48] sm:$0xff] %vm1737, %v4913
        %4942 = vst [vmem:[#allocation2 + $0x50] sm:$0xff] %v4919
        %4943 = vst.msk [vmem:[#allocation2 + $0x58] sm:$0xff] %vm655, %v4915
        %v4944 = vld [vmem:[#allocation2] sm:$0xff]
        %v4945 = vld [vmem:[#allocation2 + $0x8] sm:$0xff]
        %v4946 = vld [vmem:[#allocation2 + $0x10] sm:$0xff]
        %v4947 = vld [vmem:[#allocation2 + $0x18] sm:$0xff]
        %v4948 = vld [vmem:[#allocation2 + $0x20] sm:$0xff]
        %v4949 = vld [vmem:[#allocation2 + $0x28] sm:$0xff]
        %v4950 = vld [vmem:[#allocation2 + $0x30] sm:$0xff]
        %v4951 = vld [vmem:[#allocation2 + $0x38] sm:$0xff]
        %v4952 = vld [vmem:[#allocation2 + $0x40] sm:$0xff]
        %v4953 = vld [vmem:[#allocation2 + $0x48] sm:$0xff]
        %v4954 = vld [vmem:[#allocation2 + $0x50] sm:$0xff]
        %v4955 = vld [vmem:[#allocation2 + $0x58] sm:$0xff]
        %v4956 = vpack.c.bf16 %v4947, %v4944
        %v4957 = vpack.c.bf16 %v4948, %v4945
        %v4958 = vpack.c.bf16 %v4949, %v4946
        %v4959 = vpack.c.bf16 %v4953, %v4950
        %v4960 = vpack.c.bf16 %v4954, %v4951
        %v4961 = vpack.c.bf16 %v4955, %v4952
        %v4962 = vmul.bf16 %v4956, %v4612
        %v4963 = vmul.bf16 %v4957, %v4616
        %v4964 = vmul.bf16 %v4958, %v4614
        %v4965 = vmul.bf16 %v4959, %v4612
        %v4966 = vmul.bf16 %v4960, %v4616
        %v4967 = vmul.bf16 %v4961, %v4614
        %v4968 = vmul.bf16 %v4956, %v4627
        %v4969 = vmul.bf16 %v4957, %v4631
        %v4970 = vmul.bf16 %v4958, %v4629
        %v4971 = vmul.bf16 %v4959, %v4627
        %v4972 = vmul.bf16 %v4960, %v4631
        %v4973 = vmul.bf16 %v4961, %v4629
        %4980 = vrot.lane.b32.xlu0 %v4962, 127
        %v4981 = vpop.permute.xlu0 %4980
        %4982 = vrot.lane.b32.xlu0 %v4963, 127
        %v4983 = vpop.permute.xlu0 %4982
        %4984 = vrot.lane.b32.xlu0 %v4964, 127
        %v4985 = vpop.permute.xlu0 %4984
        %4986 = vrot.lane.b32.xlu0 %v4965, 127
        %v4987 = vpop.permute.xlu0 %4986
        %4988 = vrot.lane.b32.xlu0 %v4966, 127
        %v4989 = vpop.permute.xlu0 %4988
        %4990 = vrot.lane.b32.xlu0 %v4967, 127
        %v4991 = vpop.permute.xlu0 %4990
        %v4992 = vsel %vm4659, %v4981, %v4983
        %v4993 = vsel %vm4659, %v4983, %v4985
        %v4994 = vsel %vm4659, %v4987, %v4989
        %v4995 = vsel %vm4659, %v4989, %v4991
        %5002 = vrot.lane.b32.xlu0 %v4956, 112
        %v5003 = vpop.permute.xlu0 %5002
        %5004 = vrot.lane.b32.xlu0 %v4957, 112
        %v5005 = vpop.permute.xlu0 %5004
        %5006 = vrot.lane.b32.xlu0 %v4958, 112
        %v5007 = vpop.permute.xlu0 %5006
        %5008 = vrot.lane.b32.xlu0 %v4959, 112
        %v5009 = vpop.permute.xlu0 %5008
        %5010 = vrot.lane.b32.xlu0 %v4960, 112
        %v5011 = vpop.permute.xlu0 %5010
        %5012 = vrot.lane.b32.xlu0 %v4961, 112
        %v5013 = vpop.permute.xlu0 %5012
        %v5014 = vsel %vm4682, %v5003, %v5005
        %v5015 = vsel %vm4682, %v5005, %v5007
        %v5016 = vsel %vm4682, %v5009, %v5011
        %v5017 = vsel %vm4682, %v5011, %v5013
        %5024 = vrot.lane.b32.xlu0 %v4968, 111
        %v5025 = vpop.permute.xlu0 %5024
        %5026 = vrot.lane.b32.xlu0 %v4969, 111
        %v5027 = vpop.permute.xlu0 %5026
        %5028 = vrot.lane.b32.xlu0 %v4970, 111
        %v5029 = vpop.permute.xlu0 %5028
        %5030 = vrot.lane.b32.xlu0 %v4971, 111
        %v5031 = vpop.permute.xlu0 %5030
        %5032 = vrot.lane.b32.xlu0 %v4972, 111
        %v5033 = vpop.permute.xlu0 %5032
        %5034 = vrot.lane.b32.xlu0 %v4973, 111
        %v5035 = vpop.permute.xlu0 %5034
        %v5036 = vsel %vm4705, %v5025, %v5027
        %v5037 = vsel %vm4705, %v5027, %v5029
        %v5038 = vsel %vm4705, %v5031, %v5033
        %v5039 = vsel %vm4705, %v5033, %v5035
        %v5040 = vld [vmem:[#allocation14] sm:$0xf]
        %v5041 = vld [vmem:[#allocation14 + $0x4] sm:$0xf]
        %v5042 = vld [vmem:[#allocation14 + $0x8] sm:$0xf]
        %v5043 = vld [vmem:[#allocation14 + $0xc] sm:$0xf]
        %v5044 = vld [vmem:[#allocation16] sm:$0xff]
        %v5045 = vld [vmem:[#allocation16 + $0x8] sm:$0xff]
        %v5046 = vld [vmem:[#allocation16 + $0x10] sm:$0xff]
        %v5047 = vld [vmem:[#allocation16 + $0x18] sm:$0xff]
        %5049 = vset.pattern.permute.xlu0 0
        %5050 = vperm.xlu0 %5049, %v5044
        %v5051 = vpop.permute.xlu0 %5050
        %5054 = vset.pattern.permute.xlu0 0
        %5055 = vperm.xlu0 %5054, %v5045
        %v5056 = vpop.permute.xlu0 %5055
        %5059 = vset.pattern.permute.xlu0 0
        %5060 = vperm.xlu0 %5059, %v5046
        %v5061 = vpop.permute.xlu0 %5060
        %5064 = vset.pattern.permute.xlu0 0
        %5065 = vperm.xlu0 %5064, %v5047
        %v5066 = vpop.permute.xlu0 %5065
        %v5072 = vunpack.c.l.b16 %v5040
        %v5073 = vunpack.c.l.b16 %v5041
        %v5074 = vunpack.c.l.b16 %v5042
        %v5075 = vunpack.c.l.b16 %v5043
        %v5076 = vpack.c.b16 %v5073, %v5072
        %v5077 = vpack.c.b16 %v5075, %v5074
        %5080 = vrot.lane.b32.xlu0 %v4956, 96
        %v5081 = vpop.permute.xlu0 %5080
        %5082 = vrot.lane.b32.xlu0 %v4957, 96
        %v5083 = vpop.permute.xlu0 %5082
        %5084 = vrot.lane.b32.xlu0 %v4958, 96
        %v5085 = vpop.permute.xlu0 %5084
        %5086 = vrot.lane.b32.xlu0 %v4959, 96
        %v5087 = vpop.permute.xlu0 %5086
        %5088 = vrot.lane.b32.xlu0 %v4960, 96
        %v5089 = vpop.permute.xlu0 %5088
        %5090 = vrot.lane.b32.xlu0 %v4961, 96
        %v5091 = vpop.permute.xlu0 %5090
        %5092 = vrot.lane.b32.xlu0 %v4992, 96
        %v5093 = vpop.permute.xlu0 %5092
        %5094 = vrot.lane.b32.xlu0 %v4993, 96
        %v5095 = vpop.permute.xlu0 %5094
        %5096 = vrot.lane.b32.xlu0 %v4985, 96
        %v5097 = vpop.permute.xlu0 %5096
        %5098 = vrot.lane.b32.xlu0 %v4994, 96
        %v5099 = vpop.permute.xlu0 %5098
        %5100 = vrot.lane.b32.xlu0 %v4995, 96
        %v5101 = vpop.permute.xlu0 %5100
        %5102 = vrot.lane.b32.xlu0 %v4991, 96
        %v5103 = vpop.permute.xlu0 %5102
        %5104 = vrot.lane.b32.xlu0 %v5014, 96
        %v5105 = vpop.permute.xlu0 %5104
        %5106 = vrot.lane.b32.xlu0 %v5015, 96
        %v5107 = vpop.permute.xlu0 %5106
        %5108 = vrot.lane.b32.xlu0 %v5007, 96
        %v5109 = vpop.permute.xlu0 %5108
        %5110 = vrot.lane.b32.xlu0 %v5016, 96
        %v5111 = vpop.permute.xlu0 %5110
        %5112 = vrot.lane.b32.xlu0 %v5017, 96
        %v5113 = vpop.permute.xlu0 %5112
        %5114 = vrot.lane.b32.xlu0 %v5013, 96
        %v5115 = vpop.permute.xlu0 %5114
        %5116 = vrot.lane.b32.xlu0 %v5036, 96
        %v5117 = vpop.permute.xlu0 %5116
        %5118 = vrot.lane.b32.xlu0 %v5037, 96
        %v5119 = vpop.permute.xlu0 %5118
        %5120 = vrot.lane.b32.xlu0 %v5029, 96
        %v5121 = vpop.permute.xlu0 %5120
        %5122 = vrot.lane.b32.xlu0 %v5038, 96
        %v5123 = vpop.permute.xlu0 %5122
        %5124 = vrot.lane.b32.xlu0 %v5039, 96
        %v5125 = vpop.permute.xlu0 %5124
        %5126 = vrot.lane.b32.xlu0 %v5035, 96
        %v5127 = vpop.permute.xlu0 %5126
        %v5128 = vsel %vm4798, %v5081, %v5083
        %v5129 = vsel %vm4798, %v5083, %v5085
        %v5130 = vsel %vm4798, %v5087, %v5089
        %v5131 = vsel %vm4798, %v5089, %v5091
        %v5132 = vsel %vm4798, %v5093, %v5095
        %v5133 = vsel %vm4798, %v5095, %v5097
        %v5134 = vsel %vm4798, %v5099, %v5101
        %v5135 = vsel %vm4798, %v5101, %v5103
        %v5136 = vsel %vm4798, %v5105, %v5107
        %v5137 = vsel %vm4798, %v5107, %v5109
        %v5138 = vsel %vm4798, %v5111, %v5113
        %v5139 = vsel %vm4798, %v5113, %v5115
        %v5140 = vsel %vm4798, %v5117, %v5119
        %v5141 = vsel %vm4798, %v5119, %v5121
        %v5142 = vsel %vm4798, %v5123, %v5125
        %v5143 = vsel %vm4798, %v5125, %v5127
        %5160 = vmatprep.subr.bf16.mxu0 %v5143
        %5161 = vmatpush1.bf16.msra.mxu0 %v5142
        %5162 = vmatprep.subr.bf16.mxu0 %v5141
        %5163 = vmatpush1.bf16.msra.mxu0 %v5140
        %5164 = vmatprep.subr.bf16.mxu0 %v5139
        %5165 = vmatpush1.bf16.msra.mxu0 %v5138
        %5166 = vmatprep.subr.bf16.mxu0 %v5137
        %5167 = vmatpush1.bf16.msra.mxu0 %v5136
        %5168 = vmatprep.subr.bf16.mxu0 %v5135
        %5169 = vmatpush1.bf16.msra.mxu0 %v5134
        %5170 = vmatprep.subr.bf16.mxu0 %v5133
        %5171 = vmatpush1.bf16.msra.mxu0 %v5132
        %5172 = vmatprep.subr.bf16.mxu0 %v5131
        %5173 = vmatpush1.bf16.msra.mxu0 %v5130
        %5174 = vmatprep.subr.bf16.mxu0 %v5129
        %5175 = vmatpush1.bf16.msra.mxu0 %v5128
        %5176 = vmatprep.subr.bf16.mxu0 0
        %5177 = vmatpush2.bf16.msra.mxu0 0
        %5178 = vmatprep.subr.bf16.mxu0 0
        %5179 = vmatpush2.bf16.msra.mxu0 0
        %5180 = vmatprep.subr.bf16.mxu0 0
        %5181 = vmatpush2.bf16.msra.mxu0 0
        %5182 = vmatprep.subr.bf16.mxu0 0
        %5183 = vmatpush2.bf16.msra.mxu0 0
        %5184 = vmatprep.subr.bf16.mxu0 0
        %5185 = vmatpush2.bf16.msra.mxu0 0
        %5186 = vmatprep.subr.bf16.mxu0 0
        %5187 = vmatpush2.bf16.msra.mxu0 0
        %5188 = vmatprep.subr.bf16.mxu0 0
        %5189 = vmatpush2.bf16.msra.mxu0 0
        %5190 = vmatprep.subr.bf16.mxu0 0
        %5191 = vmatpush2.bf16.msra.mxu0 0
        %5192 = vmatprep.mubr.bf16.mxu0 0
        %5193 = vmatmul.mubr.bf16.gmra.mxu0 %v5076
        %v5194 = vpop.f32.mrf.mxu0
        %v5195 = vadd.f32 %v5051, %v5194
        %v5196 = vpop.f32.mrf.mxu0
        %v5197 = vadd.f32 %v5051, %v5196
        %v5198 = vpop.f32.mrf.mxu0
        %v5199 = vadd.f32 %v5056, %v5198
        %v5200 = vpop.f32.mrf.mxu0
        %v5201 = vadd.f32 %v5056, %v5200
        %5202 = vmatprep.mubr.bf16.mxu0 0
        %5203 = vmatmul.mubr.bf16.gmra.mxu0 %v5077
        %v5204 = vpop.f32.mrf.mxu0
        %v5205 = vadd.f32 %v5061, %v5204
        %v5206 = vpop.f32.mrf.mxu0
        %v5207 = vadd.f32 %v5061, %v5206
        %v5208 = vpop.f32.mrf.mxu0
        %v5209 = vadd.f32 %v5066, %v5208
        %v5210 = vpop.f32.mrf.mxu0
        %v5211 = vadd.f32 %v5066, %v5210
        %5212 = vdwg.mxu0
        %v5213 = vmax.f32 %v5195, 0.0
        %v5214 = vmax.f32 %v5197, 0.0
        %v5215 = vmax.f32 %v5199, 0.0
        %v5216 = vmax.f32 %v5201, 0.0
        %v5217 = vmax.f32 %v5205, 0.0
        %v5218 = vmax.f32 %v5207, 0.0
        %v5219 = vmax.f32 %v5209, 0.0
        %v5220 = vmax.f32 %v5211, 0.0
        %5229 = vrot.lane.b32.xlu0 %v5213, 32
        %v5230 = vpop.permute.xlu0 %5229
        %5231 = vrot.lane.b32.xlu0 %v5214, 32
        %v5232 = vpop.permute.xlu0 %5231
        %5233 = vrot.lane.b32.xlu0 %v5215, 32
        %v5234 = vpop.permute.xlu0 %5233
        %5235 = vrot.lane.b32.xlu0 %v5216, 32
        %v5236 = vpop.permute.xlu0 %5235
        %5237 = vrot.lane.b32.xlu0 %v5217, 32
        %v5238 = vpop.permute.xlu0 %5237
        %5239 = vrot.lane.b32.xlu0 %v5218, 32
        %v5240 = vpop.permute.xlu0 %5239
        %5241 = vrot.lane.b32.xlu0 %v5219, 32
        %v5242 = vpop.permute.xlu0 %5241
        %5243 = vrot.lane.b32.xlu0 %v5220, 32
        %v5244 = vpop.permute.xlu0 %5243
        %v5245 = vsel %vm655, %v5230, %v5232
        %v5246 = vsel %vm655, %v5234, %v5236
        %v5247 = vsel %vm655, %v5238, %v5240
        %v5248 = vsel %vm655, %v5242, %v5244
        %5261 = vst.msk [vmem:[#allocation2] sm:$0xff] %vm1737, %v5230
        %5262 = vst [vmem:[#allocation2 + $0x8] sm:$0xff] %v5245
        %5263 = vst.msk [vmem:[#allocation2 + $0x10] sm:$0xff] %vm655, %v5232
        %5264 = vst.msk [vmem:[#allocation2 + $0x18] sm:$0xff] %vm1737, %v5234
        %5265 = vst [vmem:[#allocation2 + $0x20] sm:$0xff] %v5246
        %5266 = vst.msk [vmem:[#allocation2 + $0x28] sm:$0xff] %vm655, %v5236
        %5267 = vst.msk [vmem:[#allocation2 + $0x30] sm:$0xff] %vm1737, %v5238
        %5268 = vst [vmem:[#allocation2 + $0x38] sm:$0xff] %v5247
        %5269 = vst.msk [vmem:[#allocation2 + $0x40] sm:$0xff] %vm655, %v5240
        %5270 = vst.msk [vmem:[#allocation2 + $0x48] sm:$0xff] %vm1737, %v5242
        %5271 = vst [vmem:[#allocation2 + $0x50] sm:$0xff] %v5248
        %5272 = vst.msk [vmem:[#allocation2 + $0x58] sm:$0xff] %vm655, %v5244
        %v5273 = vld [vmem:[#allocation19] sm:$0xff]
        %v5274 = vld [vmem:[#allocation19 + $0x8] sm:$0xff]
        %v5275 = vld [vmem:[#allocation19 + $0x10] sm:$0xff]
        %v5276 = vld [vmem:[#allocation19 + $0x18] sm:$0xff]
        %v5277 = vld [vmem:[#allocation22] sm:$0x7]
        %5279 = vset.pattern.permute.xlu0 0
        %5280 = vperm.xlu0 %5279, %v5277
        %v5281 = vpop.permute.xlu0 %5280
        %v5283 = vld [vmem:[#allocation2] sm:$0xff]
        %v5284 = vld [vmem:[#allocation2 + $0x8] sm:$0xff]
        %v5285 = vld [vmem:[#allocation2 + $0x10] sm:$0xff]
        %v5286 = vld [vmem:[#allocation2 + $0x18] sm:$0xff]
        %v5287 = vld [vmem:[#allocation2 + $0x20] sm:$0xff]
        %v5288 = vld [vmem:[#allocation2 + $0x28] sm:$0xff]
        %v5289 = vld [vmem:[#allocation2 + $0x30] sm:$0xff]
        %v5290 = vld [vmem:[#allocation2 + $0x38] sm:$0xff]
        %v5291 = vld [vmem:[#allocation2 + $0x40] sm:$0xff]
        %v5292 = vld [vmem:[#allocation2 + $0x48] sm:$0xff]
        %v5293 = vld [vmem:[#allocation2 + $0x50] sm:$0xff]
        %v5294 = vld [vmem:[#allocation2 + $0x58] sm:$0xff]
        %v5295 = vpack.c.bf16 %v5286, %v5283
        %v5296 = vpack.c.bf16 %v5287, %v5284
        %v5297 = vpack.c.bf16 %v5288, %v5285
        %v5298 = vpack.c.bf16 %v5292, %v5289
        %v5299 = vpack.c.bf16 %v5293, %v5290
        %v5300 = vpack.c.bf16 %v5294, %v5291
        %5304 = vrot.lane.b32.xlu0 %v640, 31
        %v5305 = vpop.permute.xlu0 %5304
        %5306 = vrot.lane.b32.xlu0 %v641, 31
        %v5307 = vpop.permute.xlu0 %5306
        %5308 = vrot.lane.b32.xlu0 %v642, 31
        %v5309 = vpop.permute.xlu0 %5308
        %vm5310 = vcmask 252928
        %v5311 = vsel %vm5310, %v5305, %v5307
        %v5312 = vsel %vm5310, %v5307, %v5309
        %v5316 = vmul.bf16 %v5295, %v5305
        %v5317 = vmul.bf16 %v5296, %v5311
        %v5318 = vmul.bf16 %v5297, %v5312
        %v5319 = vmul.bf16 %v5298, %v5305
        %v5320 = vmul.bf16 %v5299, %v5311
        %v5321 = vmul.bf16 %v5300, %v5312
        %5322 = vrot.lane.b32.xlu0 %v640, 15
        %v5323 = vpop.permute.xlu0 %5322
        %5324 = vrot.lane.b32.xlu0 %v641, 15
        %v5325 = vpop.permute.xlu0 %5324
        %5326 = vrot.lane.b32.xlu0 %v642, 15
        %v5327 = vpop.permute.xlu0 %5326
        %vm5328 = vcmask 121856
        %v5329 = vsel %vm5328, %v5323, %v5325
        %v5330 = vsel %vm5328, %v5325, %v5327
        %v5334 = vmul.bf16 %v5295, %v5323
        %v5335 = vmul.bf16 %v5296, %v5329
        %v5336 = vmul.bf16 %v5297, %v5330
        %v5337 = vmul.bf16 %v5298, %v5323
        %v5338 = vmul.bf16 %v5299, %v5329
        %v5339 = vmul.bf16 %v5300, %v5330
        %5346 = vrot.lane.b32.xlu0 %v5316, 1
        %v5347 = vpop.permute.xlu0 %5346
        %5348 = vrot.lane.b32.xlu0 %v5317, 1
        %v5349 = vpop.permute.xlu0 %5348
        %5350 = vrot.lane.b32.xlu0 %v5318, 1
        %v5351 = vpop.permute.xlu0 %5350
        %5352 = vrot.lane.b32.xlu0 %v5319, 1
        %v5353 = vpop.permute.xlu0 %5352
        %5354 = vrot.lane.b32.xlu0 %v5320, 1
        %v5355 = vpop.permute.xlu0 %5354
        %5356 = vrot.lane.b32.xlu0 %v5321, 1
        %v5357 = vpop.permute.xlu0 %5356
        %vm5358 = vcmask 7168
        %v5359 = vsel %vm5358, %v5347, %v5349
        %v5360 = vsel %vm5358, %v5349, %v5351
        %v5361 = vsel %vm5358, %v5353, %v5355
        %v5362 = vsel %vm5358, %v5355, %v5357
        %5369 = vrot.lane.b32.xlu0 %v5295, 16
        %v5370 = vpop.permute.xlu0 %5369
        %5371 = vrot.lane.b32.xlu0 %v5296, 16
        %v5372 = vpop.permute.xlu0 %5371
        %5373 = vrot.lane.b32.xlu0 %v5297, 16
        %v5374 = vpop.permute.xlu0 %5373
        %5375 = vrot.lane.b32.xlu0 %v5298, 16
        %v5376 = vpop.permute.xlu0 %5375
        %5377 = vrot.lane.b32.xlu0 %v5299, 16
        %v5378 = vpop.permute.xlu0 %5377
        %5379 = vrot.lane.b32.xlu0 %v5300, 16
        %v5380 = vpop.permute.xlu0 %5379
        %vm5381 = vcmask 130048
        %v5382 = vsel %vm5381, %v5370, %v5372
        %v5383 = vsel %vm5381, %v5372, %v5374
        %v5384 = vsel %vm5381, %v5376, %v5378
        %v5385 = vsel %vm5381, %v5378, %v5380
        %5392 = vrot.lane.b32.xlu0 %v5334, 17
        %v5393 = vpop.permute.xlu0 %5392
        %5394 = vrot.lane.b32.xlu0 %v5335, 17
        %v5395 = vpop.permute.xlu0 %5394
        %5396 = vrot.lane.b32.xlu0 %v5336, 17
        %v5397 = vpop.permute.xlu0 %5396
        %5398 = vrot.lane.b32.xlu0 %v5337, 17
        %v5399 = vpop.permute.xlu0 %5398
        %5400 = vrot.lane.b32.xlu0 %v5338, 17
        %v5401 = vpop.permute.xlu0 %5400
        %5402 = vrot.lane.b32.xlu0 %v5339, 17
        %v5403 = vpop.permute.xlu0 %5402
        %vm5404 = vcmask 138240
        %v5405 = vsel %vm5404, %v5393, %v5395
        %v5406 = vsel %vm5404, %v5395, %v5397
        %v5407 = vsel %vm5404, %v5399, %v5401
        %v5408 = vsel %vm5404, %v5401, %v5403
        %v5409 = vld [vmem:[#allocation17] sm:$0xf]
        %v5410 = vld [vmem:[#allocation17 + $0xc] sm:$0xf]
        %v5411 = vld [vmem:[#allocation17 + $0x18] sm:$0xf]
        %v5412 = vld [vmem:[#allocation17 + $0x24] sm:$0xf]
        %5414 = vset.pattern.permute.xlu0 0
        %5415 = vperm.xlu0 %5414, %v5273
        %v5416 = vpop.permute.xlu0 %5415
        %5419 = vset.pattern.permute.xlu0 0
        %5420 = vperm.xlu0 %5419, %v5274
        %v5421 = vpop.permute.xlu0 %5420
        %5424 = vset.pattern.permute.xlu0 0
        %5425 = vperm.xlu0 %5424, %v5275
        %v5426 = vpop.permute.xlu0 %5425
        %5429 = vset.pattern.permute.xlu0 0
        %5430 = vperm.xlu0 %5429, %v5276
        %v5431 = vpop.permute.xlu0 %5430
        %v5437 = vunpack.c.l.b16 %v5409
        %v5438 = vunpack.c.l.b16 %v5410
        %v5439 = vunpack.c.l.b16 %v5411
        %v5440 = vunpack.c.l.b16 %v5412
        %v5441 = vpack.c.b16 %v5438, %v5437
        %v5442 = vpack.c.b16 %v5440, %v5439
        %5445 = vrot.lane.b32.xlu0 %v5295, 96
        %v5446 = vpop.permute.xlu0 %5445
        %5447 = vrot.lane.b32.xlu0 %v5296, 96
        %v5448 = vpop.permute.xlu0 %5447
        %5449 = vrot.lane.b32.xlu0 %v5297, 96
        %v5450 = vpop.permute.xlu0 %5449
        %5451 = vrot.lane.b32.xlu0 %v5298, 96
        %v5452 = vpop.permute.xlu0 %5451
        %5453 = vrot.lane.b32.xlu0 %v5299, 96
        %v5454 = vpop.permute.xlu0 %5453
        %5455 = vrot.lane.b32.xlu0 %v5300, 96
        %v5456 = vpop.permute.xlu0 %5455
        %5457 = vrot.lane.b32.xlu0 %v5347, 96
        %v5458 = vpop.permute.xlu0 %5457
        %5459 = vrot.lane.b32.xlu0 %v5359, 96
        %v5460 = vpop.permute.xlu0 %5459
        %5461 = vrot.lane.b32.xlu0 %v5360, 96
        %v5462 = vpop.permute.xlu0 %5461
        %5463 = vrot.lane.b32.xlu0 %v5353, 96
        %v5464 = vpop.permute.xlu0 %5463
        %5465 = vrot.lane.b32.xlu0 %v5361, 96
        %v5466 = vpop.permute.xlu0 %5465
        %5467 = vrot.lane.b32.xlu0 %v5362, 96
        %v5468 = vpop.permute.xlu0 %5467
        %5469 = vrot.lane.b32.xlu0 %v5370, 96
        %v5470 = vpop.permute.xlu0 %5469
        %5471 = vrot.lane.b32.xlu0 %v5382, 96
        %v5472 = vpop.permute.xlu0 %5471
        %5473 = vrot.lane.b32.xlu0 %v5383, 96
        %v5474 = vpop.permute.xlu0 %5473
        %5475 = vrot.lane.b32.xlu0 %v5376, 96
        %v5476 = vpop.permute.xlu0 %5475
        %5477 = vrot.lane.b32.xlu0 %v5384, 96
        %v5478 = vpop.permute.xlu0 %5477
        %5479 = vrot.lane.b32.xlu0 %v5385, 96
        %v5480 = vpop.permute.xlu0 %5479
        %5481 = vrot.lane.b32.xlu0 %v5393, 96
        %v5482 = vpop.permute.xlu0 %5481
        %5483 = vrot.lane.b32.xlu0 %v5405, 96
        %v5484 = vpop.permute.xlu0 %5483
        %5485 = vrot.lane.b32.xlu0 %v5406, 96
        %v5486 = vpop.permute.xlu0 %5485
        %5487 = vrot.lane.b32.xlu0 %v5399, 96
        %v5488 = vpop.permute.xlu0 %5487
        %5489 = vrot.lane.b32.xlu0 %v5407, 96
        %v5490 = vpop.permute.xlu0 %5489
        %5491 = vrot.lane.b32.xlu0 %v5408, 96
        %v5492 = vpop.permute.xlu0 %5491
        %v5493 = vsel %vm4798, %v5446, %v5448
        %v5494 = vsel %vm4798, %v5448, %v5450
        %v5495 = vsel %vm4798, %v5452, %v5454
        %v5496 = vsel %vm4798, %v5454, %v5456
        %v5497 = vsel %vm4798, %v5458, %v5460
        %v5498 = vsel %vm4798, %v5460, %v5462
        %v5499 = vsel %vm4798, %v5464, %v5466
        %v5500 = vsel %vm4798, %v5466, %v5468
        %v5501 = vsel %vm4798, %v5470, %v5472
        %v5502 = vsel %vm4798, %v5472, %v5474
        %v5503 = vsel %vm4798, %v5476, %v5478
        %v5504 = vsel %vm4798, %v5478, %v5480
        %v5505 = vsel %vm4798, %v5482, %v5484
        %v5506 = vsel %vm4798, %v5484, %v5486
        %v5507 = vsel %vm4798, %v5488, %v5490
        %v5508 = vsel %vm4798, %v5490, %v5492
        %5533 = vmatprep.subr.bf16.mxu0 %v5508
        %5534 = vmatpush1.bf16.msra.mxu0 %v5507
        %5535 = vmatprep.subr.bf16.mxu0 %v5506
        %5536 = vmatpush1.bf16.msra.mxu0 %v5505
        %5537 = vmatprep.subr.bf16.mxu0 %v5504
        %5538 = vmatpush1.bf16.msra.mxu0 %v5503
        %5539 = vmatprep.subr.bf16.mxu0 %v5502
        %5540 = vmatpush1.bf16.msra.mxu0 %v5501
        %5541 = vmatprep.subr.bf16.mxu0 %v5500
        %5542 = vmatpush1.bf16.msra.mxu0 %v5499
        %5543 = vmatprep.subr.bf16.mxu0 %v5498
        %5544 = vmatpush1.bf16.msra.mxu0 %v5497
        %5545 = vmatprep.subr.bf16.mxu0 %v5496
        %5546 = vmatpush1.bf16.msra.mxu0 %v5495
        %5547 = vmatprep.subr.bf16.mxu0 %v5494
        %5548 = vmatpush1.bf16.msra.mxu0 %v5493
        %5549 = vmatprep.subr.bf16.mxu0 0
        %5550 = vmatpush2.bf16.msra.mxu0 0
        %5551 = vmatprep.subr.bf16.mxu0 0
        %5552 = vmatpush2.bf16.msra.mxu0 0
        %5553 = vmatprep.subr.bf16.mxu0 0
        %5554 = vmatpush2.bf16.msra.mxu0 0
        %5555 = vmatprep.subr.bf16.mxu0 0
        %5556 = vmatpush2.bf16.msra.mxu0 0
        %5557 = vmatprep.subr.bf16.mxu0 0
        %5558 = vmatpush2.bf16.msra.mxu0 0
        %5559 = vmatprep.subr.bf16.mxu0 0
        %5560 = vmatpush2.bf16.msra.mxu0 0
        %5561 = vmatprep.subr.bf16.mxu0 0
        %5562 = vmatpush2.bf16.msra.mxu0 0
        %5563 = vmatprep.subr.bf16.mxu0 0
        %5564 = vmatpush2.bf16.msra.mxu0 0
        %5565 = vmatprep.mubr.bf16.mxu0 0
        %5566 = vmatmul.mubr.bf16.gmra.mxu0 %v5441
        %v5567 = vpop.f32.mrf.mxu0
        %v5568 = vadd.f32 %v5416, %v5567
        %v5569 = vpop.f32.mrf.mxu0
        %v5570 = vadd.f32 %v5416, %v5569
        %v5571 = vpop.f32.mrf.mxu0
        %v5572 = vadd.f32 %v5421, %v5571
        %v5573 = vpop.f32.mrf.mxu0
        %v5574 = vadd.f32 %v5421, %v5573
        %5575 = vmatprep.mubr.bf16.mxu0 0
        %5576 = vmatmul.mubr.bf16.gmra.mxu0 %v5442
        %v5577 = vpop.f32.mrf.mxu0
        %v5578 = vadd.f32 %v5426, %v5577
        %v5579 = vpop.f32.mrf.mxu0
        %v5580 = vadd.f32 %v5426, %v5579
        %v5581 = vpop.f32.mrf.mxu0
        %v5582 = vadd.f32 %v5431, %v5581
        %v5583 = vpop.f32.mrf.mxu0
        %v5584 = vadd.f32 %v5431, %v5583
        %5585 = vdwg.mxu0
        %5586 = vmatprep.subr.bf16.mxu0 0
        %5587 = vmatpush1.bf16.msra.mxu0 %v5492
        %5588 = vmatprep.subr.bf16.mxu0 0
        %5589 = vmatpush1.bf16.msra.mxu0 %v5486
        %5590 = vmatprep.subr.bf16.mxu0 0
        %5591 = vmatpush1.bf16.msra.mxu0 %v5480
        %5592 = vmatprep.subr.bf16.mxu0 0
        %5593 = vmatpush1.bf16.msra.mxu0 %v5474
        %5594 = vmatprep.subr.bf16.mxu0 0
        %5595 = vmatpush1.bf16.msra.mxu0 %v5468
        %5596 = vmatprep.subr.bf16.mxu0 0
        %5597 = vmatpush1.bf16.msra.mxu0 %v5462
        %5598 = vmatprep.subr.bf16.mxu0 0
        %5599 = vmatpush1.bf16.msra.mxu0 %v5456
        %5600 = vmatprep.subr.bf16.mxu0 0
        %5601 = vmatpush1.bf16.msra.mxu0 %v5450
        %5602 = vmatprep.subr.bf16.mxu0 0
        %5603 = vmatpush2.bf16.msra.mxu0 0
        %5604 = vmatprep.subr.bf16.mxu0 0
        %5605 = vmatpush2.bf16.msra.mxu0 0
        %5606 = vmatprep.subr.bf16.mxu0 0
        %5607 = vmatpush2.bf16.msra.mxu0 0
        %5608 = vmatprep.subr.bf16.mxu0 0
        %5609 = vmatpush2.bf16.msra.mxu0 0
        %5610 = vmatprep.subr.bf16.mxu0 0
        %5611 = vmatpush2.bf16.msra.mxu0 0
        %5612 = vmatprep.subr.bf16.mxu0 0
        %5613 = vmatpush2.bf16.msra.mxu0 0
        %5614 = vmatprep.subr.bf16.mxu0 0
        %5615 = vmatpush2.bf16.msra.mxu0 0
        %5616 = vmatprep.subr.bf16.mxu0 0
        %5617 = vmatpush2.bf16.msra.mxu0 0
        %5618 = vmatprep.mubr.bf16.mxu0 0
        %5619 = vmatmul.mubr.bf16.gmra.mxu0 %v5441
        %v5620 = vpop.f32.mrf.mxu0
        %v5621 = vadd.f32 %v5416, %v5620
        %v5622 = vpop.f32.mrf.mxu0
        %v5623 = vpop.f32.mrf.mxu0
        %v5624 = vadd.f32 %v5421, %v5623
        %v5625 = vpop.f32.mrf.mxu0
        %5626 = vmatprep.mubr.bf16.mxu0 0
        %5627 = vmatmul.mubr.bf16.gmra.mxu0 %v5442
        %v5628 = vpop.f32.mrf.mxu0
        %v5629 = vadd.f32 %v5426, %v5628
        %v5630 = vpop.f32.mrf.mxu0
        %v5631 = vpop.f32.mrf.mxu0
        %v5632 = vadd.f32 %v5431, %v5631
        %v5633 = vpop.f32.mrf.mxu0
        %5634 = vdwg.mxu0
        %v5635 = vmax.f32 %v5568, 0.0
        %v5636 = vmax.f32 %v5570, 0.0
        %v5637 = vmax.f32 %v5621, 0.0
        %v5638 = vmax.f32 %v5572, 0.0
        %v5639 = vmax.f32 %v5574, 0.0
        %v5640 = vmax.f32 %v5624, 0.0
        %v5641 = vmax.f32 %v5578, 0.0
        %v5642 = vmax.f32 %v5580, 0.0
        %v5643 = vmax.f32 %v5629, 0.0
        %v5644 = vmax.f32 %v5582, 0.0
        %v5645 = vmax.f32 %v5584, 0.0
        %v5646 = vmax.f32 %v5632, 0.0
        %v5647 = vpack.c.bf16 %v5638, %v5635
        %v5648 = vpack.c.bf16 %v5639, %v5636
        %v5649 = vpack.c.bf16 %v5640, %v5637
        %v5650 = vpack.c.bf16 %v5644, %v5641
        %v5651 = vpack.c.bf16 %v5645, %v5642
        %v5652 = vpack.c.bf16 %v5646, %v5643
        %v5653 = vld [vmem:[#allocation20] sm:$0x3]
        %v5655 = vsel %vm655, %v5653, 0
        %5657 = vmatprep.subr.bf16.mxu0 0
        %5658 = vmatpush1.bf16.msra.mxu0 0
        %5659 = vmatprep.subr.bf16.mxu0 0
        %5660 = vmatpush1.bf16.msra.mxu0 0
        %5661 = vmatprep.subr.bf16.mxu0 0
        %5662 = vmatpush1.bf16.msra.mxu0 0
        %5663 = vmatprep.subr.bf16.mxu0 0
        %5664 = vmatpush1.bf16.msra.mxu0 0
        %5665 = vmatprep.subr.bf16.mxu0 0
        %5666 = vmatpush1.bf16.msra.mxu0 0
        %5667 = vmatprep.subr.bf16.mxu0 0
        %5668 = vmatpush1.bf16.msra.mxu0 0
        %5669 = vmatprep.subr.bf16.mxu0 %v5651
        %5670 = vmatpush1.bf16.msra.mxu0 %v5650
        %5671 = vmatprep.subr.bf16.mxu0 %v5648
        %5672 = vmatpush1.bf16.msra.mxu0 %v5647
        %5673 = vmatprep.subr.bf16.mxu0 0
        %5674 = vmatpush2.bf16.msra.mxu0 0
        %5675 = vmatprep.subr.bf16.mxu0 0
        %5676 = vmatpush2.bf16.msra.mxu0 0
        %5677 = vmatprep.subr.bf16.mxu0 0
        %5678 = vmatpush2.bf16.msra.mxu0 0
        %5679 = vmatprep.subr.bf16.mxu0 0
        %5680 = vmatpush2.bf16.msra.mxu0 0
        %5681 = vmatprep.subr.bf16.mxu0 0
        %5682 = vmatpush2.bf16.msra.mxu0 0
        %5683 = vmatprep.subr.bf16.mxu0 0
        %5684 = vmatpush2.bf16.msra.mxu0 0
        %5685 = vmatprep.subr.bf16.mxu0 0
        %5686 = vmatpush2.bf16.msra.mxu0 0
        %5687 = vmatprep.subr.bf16.mxu0 0
        %5688 = vmatpush2.bf16.msra.mxu0 0
        %5689 = vmatprep.mubr.bf16.mxu0 0
        %5690 = vmatmul.mubr.bf16.gmra.mxu0 %v5655
        %v5691 = vpop.f32.mrf.mxu0
        %v5692 = vadd.f32 0.0, %v5691
        %v5693 = vpop.f32.mrf.mxu0
        %v5694 = vadd.f32 0.0, %v5693
        %v5695 = vpop.f32.mrf.mxu0
        %v5696 = vpop.f32.mrf.mxu0
        %5697 = vdwg.mxu0
        %v5698 = vadd.f32 %v5281, %v5692
        %v5699 = vadd.f32 %v5281, %v5694
        %v5702 = vunpack.c.l.s4 1983009808
        %v5703 = vunpack.c.0.s8 %v5702
        %v5704 = vlaneseq
        %v5705 = vshrl.u32 %v5704, 7
        %v5706 = vsub.s32 %v5703, %v5705
        %v5707 = vrot.slane %v5653, %v5706
        %5708 = vrot.lane.b32.xlu0 %v5707, 64
        %v5709 = vpop.permute.xlu0 %5708
        %5716 = vrot.lane.b32.xlu0 %v5647, 112
        %v5717 = vpop.permute.xlu0 %5716
        %5718 = vrot.lane.b32.xlu0 %v5648, 112
        %v5719 = vpop.permute.xlu0 %5718
        %5720 = vrot.lane.b32.xlu0 %v5649, 112
        %v5721 = vpop.permute.xlu0 %5720
        %5722 = vrot.lane.b32.xlu0 %v5650, 112
        %v5723 = vpop.permute.xlu0 %5722
        %5724 = vrot.lane.b32.xlu0 %v5651, 112
        %v5725 = vpop.permute.xlu0 %5724
        %5726 = vrot.lane.b32.xlu0 %v5652, 112
        %v5727 = vpop.permute.xlu0 %5726
        %v5728 = vsel %vm4682, %v5717, %v5719
        %v5729 = vsel %vm4682, %v5719, %v5721
        %v5730 = vsel %vm4682, %v5723, %v5725
        %v5731 = vsel %vm4682, %v5725, %v5727
        %v5737 = vsel %vm655, %v5709, 0
        %5739 = vmatprep.subr.bf16.mxu0 0
        %5740 = vmatpush1.bf16.msra.mxu0 0
        %5741 = vmatprep.subr.bf16.mxu0 0
        %5742 = vmatpush1.bf16.msra.mxu0 0
        %5743 = vmatprep.subr.bf16.mxu0 0
        %5744 = vmatpush1.bf16.msra.mxu0 0
        %5745 = vmatprep.subr.bf16.mxu0 0
        %5746 = vmatpush1.bf16.msra.mxu0 0
        %5747 = vmatprep.subr.bf16.mxu0 0
        %5748 = vmatpush1.bf16.msra.mxu0 0
        %5749 = vmatprep.subr.bf16.mxu0 0
        %5750 = vmatpush1.bf16.msra.mxu0 0
        %5751 = vmatprep.subr.bf16.mxu0 %v5731
        %5752 = vmatpush1.bf16.msra.mxu0 %v5730
        %5753 = vmatprep.subr.bf16.mxu0 %v5729
        %5754 = vmatpush1.bf16.msra.mxu0 %v5728
        %5755 = vmatprep.subr.bf16.mxu0 0
        %5756 = vmatpush2.bf16.msra.mxu0 0
        %5757 = vmatprep.subr.bf16.mxu0 0
        %5758 = vmatpush2.bf16.msra.mxu0 0
        %5759 = vmatprep.subr.bf16.mxu0 0
        %5760 = vmatpush2.bf16.msra.mxu0 0
        %5761 = vmatprep.subr.bf16.mxu0 0
        %5762 = vmatpush2.bf16.msra.mxu0 0
        %5763 = vmatprep.subr.bf16.mxu0 0
        %5764 = vmatpush2.bf16.msra.mxu0 0
        %5765 = vmatprep.subr.bf16.mxu0 0
        %5766 = vmatpush2.bf16.msra.mxu0 0
        %5767 = vmatprep.subr.bf16.mxu0 0
        %5768 = vmatpush2.bf16.msra.mxu0 0
        %5769 = vmatprep.subr.bf16.mxu0 0
        %5770 = vmatpush2.bf16.msra.mxu0 0
        %5771 = vmatprep.mubr.bf16.mxu0 0
        %5772 = vmatmul.mubr.bf16.gmra.mxu0 %v5737
        %v5773 = vpop.f32.mrf.mxu0
        %v5774 = vadd.f32 0.0, %v5773
        %v5775 = vpop.f32.mrf.mxu0
        %v5776 = vadd.f32 0.0, %v5775
        %v5777 = vpop.f32.mrf.mxu0
        %v5778 = vpop.f32.mrf.mxu0
        %5779 = vdwg.mxu0
        %v5780 = vadd.f32 %v5281, %v5774
        %v5781 = vadd.f32 %v5281, %v5776
        %v5782 = vld [vmem:[#allocation2] sm:$0xff]
        %v5783 = vld [vmem:[#allocation2 + $0x8] sm:$0xff]
        %v5784 = vld [vmem:[#allocation2 + $0x10] sm:$0xff]
        %v5785 = vld [vmem:[#allocation2 + $0x18] sm:$0xff]
        %v5786 = vld [vmem:[#allocation2 + $0x20] sm:$0xff]
        %v5787 = vld [vmem:[#allocation2 + $0x28] sm:$0xff]
        %v5788 = vld [vmem:[#allocation2 + $0x30] sm:$0xff]
        %v5789 = vld [vmem:[#allocation2 + $0x38] sm:$0xff]
        %v5790 = vld [vmem:[#allocation2 + $0x40] sm:$0xff]
        %v5791 = vld [vmem:[#allocation2 + $0x48] sm:$0xff]
        %v5792 = vld [vmem:[#allocation2 + $0x50] sm:$0xff]
        %v5793 = vld [vmem:[#allocation2 + $0x58] sm:$0xff]
        %v5794 = vpack.c.bf16 %v5785, %v5782
        %v5795 = vpack.c.bf16 %v5786, %v5783
        %v5796 = vpack.c.bf16 %v5787, %v5784
        %v5797 = vpack.c.bf16 %v5791, %v5788
        %v5798 = vpack.c.bf16 %v5792, %v5789
        %v5799 = vpack.c.bf16 %v5793, %v5790
        %5801 = vrot.lane.b32.xlu0 %v654, 33
        %v5802 = vpop.permute.xlu0 %5801
        %v5803 = vsel %vm4615, %v4614, %v5802
        %v5805 = vmul.bf16 %v5794, %v4612
        %v5806 = vmul.bf16 %v5795, %v4616
        %v5807 = vmul.bf16 %v5796, %v5803
        %v5808 = vmul.bf16 %v5797, %v4612
        %v5809 = vmul.bf16 %v5798, %v4616
        %v5810 = vmul.bf16 %v5799, %v5803
        %5811 = vrot.lane.b32.xlu0 %v652, 17
        %v5812 = vpop.permute.xlu0 %5811
        %5813 = vrot.lane.b32.xlu0 %v653, 17
        %v5814 = vpop.permute.xlu0 %5813
        %5815 = vrot.lane.b32.xlu0 %v654, 17
        %v5816 = vpop.permute.xlu0 %5815
        %v5817 = vsel %vm5404, %v5812, %v5814
        %v5818 = vsel %vm5404, %v5814, %v5816
        %v5822 = vmul.bf16 %v5794, %v5812
        %v5823 = vmul.bf16 %v5795, %v5817
        %v5824 = vmul.bf16 %v5796, %v5818
        %v5825 = vmul.bf16 %v5797, %v5812
        %v5826 = vmul.bf16 %v5798, %v5817
        %v5827 = vmul.bf16 %v5799, %v5818
        %5828 = vrot.lane.b32.xlu0 %v5295, 1
        %v5829 = vpop.permute.xlu0 %5828
        %5830 = vrot.lane.b32.xlu0 %v5296, 1
        %v5831 = vpop.permute.xlu0 %5830
        %5832 = vrot.lane.b32.xlu0 %v5297, 1
        %v5833 = vpop.permute.xlu0 %5832
        %5834 = vrot.lane.b32.xlu0 %v5298, 1
        %v5835 = vpop.permute.xlu0 %5834
        %5836 = vrot.lane.b32.xlu0 %v5299, 1
        %v5837 = vpop.permute.xlu0 %5836
        %5838 = vrot.lane.b32.xlu0 %v5300, 1
        %v5839 = vpop.permute.xlu0 %5838
        %v5840 = vsel %vm5358, %v5829, %v5831
        %v5841 = vsel %vm5358, %v5831, %v5833
        %v5842 = vsel %vm5358, %v5835, %v5837
        %v5843 = vsel %vm5358, %v5837, %v5839
        %5850 = vrot.lane.b32.xlu0 %v5822, 16
        %v5851 = vpop.permute.xlu0 %5850
        %5852 = vrot.lane.b32.xlu0 %v5823, 16
        %v5853 = vpop.permute.xlu0 %5852
        %5854 = vrot.lane.b32.xlu0 %v5824, 16
        %v5855 = vpop.permute.xlu0 %5854
        %5856 = vrot.lane.b32.xlu0 %v5825, 16
        %v5857 = vpop.permute.xlu0 %5856
        %5858 = vrot.lane.b32.xlu0 %v5826, 16
        %v5859 = vpop.permute.xlu0 %5858
        %5860 = vrot.lane.b32.xlu0 %v5827, 16
        %v5861 = vpop.permute.xlu0 %5860
        %v5862 = vsel %vm5381, %v5851, %v5853
        %v5863 = vsel %vm5381, %v5853, %v5855
        %v5864 = vsel %vm5381, %v5857, %v5859
        %v5865 = vsel %vm5381, %v5859, %v5861
        %5866 = vrot.lane.b32.xlu0 %v5295, 17
        %v5867 = vpop.permute.xlu0 %5866
        %5868 = vrot.lane.b32.xlu0 %v5296, 17
        %v5869 = vpop.permute.xlu0 %5868
        %5870 = vrot.lane.b32.xlu0 %v5297, 17
        %v5871 = vpop.permute.xlu0 %5870
        %5872 = vrot.lane.b32.xlu0 %v5298, 17
        %v5873 = vpop.permute.xlu0 %5872
        %5874 = vrot.lane.b32.xlu0 %v5299, 17
        %v5875 = vpop.permute.xlu0 %5874
        %5876 = vrot.lane.b32.xlu0 %v5300, 17
        %v5877 = vpop.permute.xlu0 %5876
        %v5878 = vsel %vm5404, %v5867, %v5869
        %v5879 = vsel %vm5404, %v5869, %v5871
        %v5880 = vsel %vm5404, %v5873, %v5875
        %v5881 = vsel %vm5404, %v5875, %v5877
        %5888 = vrot.lane.b32.xlu0 %v5805, 95
        %v5889 = vpop.permute.xlu0 %5888
        %5890 = vrot.lane.b32.xlu0 %v5806, 95
        %v5891 = vpop.permute.xlu0 %5890
        %5892 = vrot.lane.b32.xlu0 %v5807, 95
        %v5893 = vpop.permute.xlu0 %5892
        %5894 = vrot.lane.b32.xlu0 %v5808, 95
        %v5895 = vpop.permute.xlu0 %5894
        %5896 = vrot.lane.b32.xlu0 %v5809, 95
        %v5897 = vpop.permute.xlu0 %5896
        %5898 = vrot.lane.b32.xlu0 %v5810, 95
        %v5899 = vpop.permute.xlu0 %5898
        %5900 = vrot.lane.b32.xlu0 %v5829, 95
        %v5901 = vpop.permute.xlu0 %5900
        %5902 = vrot.lane.b32.xlu0 %v5840, 95
        %v5903 = vpop.permute.xlu0 %5902
        %5904 = vrot.lane.b32.xlu0 %v5841, 95
        %v5905 = vpop.permute.xlu0 %5904
        %5906 = vrot.lane.b32.xlu0 %v5835, 95
        %v5907 = vpop.permute.xlu0 %5906
        %5908 = vrot.lane.b32.xlu0 %v5842, 95
        %v5909 = vpop.permute.xlu0 %5908
        %5910 = vrot.lane.b32.xlu0 %v5843, 95
        %v5911 = vpop.permute.xlu0 %5910
        %5912 = vrot.lane.b32.xlu0 %v5851, 95
        %v5913 = vpop.permute.xlu0 %5912
        %5914 = vrot.lane.b32.xlu0 %v5862, 95
        %v5915 = vpop.permute.xlu0 %5914
        %5916 = vrot.lane.b32.xlu0 %v5863, 95
        %v5917 = vpop.permute.xlu0 %5916
        %5918 = vrot.lane.b32.xlu0 %v5857, 95
        %v5919 = vpop.permute.xlu0 %5918
        %5920 = vrot.lane.b32.xlu0 %v5864, 95
        %v5921 = vpop.permute.xlu0 %5920
        %5922 = vrot.lane.b32.xlu0 %v5865, 95
        %v5923 = vpop.permute.xlu0 %5922
        %5924 = vrot.lane.b32.xlu0 %v5867, 95
        %v5925 = vpop.permute.xlu0 %5924
        %5926 = vrot.lane.b32.xlu0 %v5878, 95
        %v5927 = vpop.permute.xlu0 %5926
        %5928 = vrot.lane.b32.xlu0 %v5879, 95
        %v5929 = vpop.permute.xlu0 %5928
        %5930 = vrot.lane.b32.xlu0 %v5873, 95
        %v5931 = vpop.permute.xlu0 %5930
        %5932 = vrot.lane.b32.xlu0 %v5880, 95
        %v5933 = vpop.permute.xlu0 %5932
        %5934 = vrot.lane.b32.xlu0 %v5881, 95
        %v5935 = vpop.permute.xlu0 %5934
        %vm5936 = vcmask 777216
        %v5937 = vsel %vm5936, %v5889, %v5891
        %v5938 = vsel %vm5936, %v5891, %v5893
        %v5939 = vsel %vm5936, %v5895, %v5897
        %v5940 = vsel %vm5936, %v5897, %v5899
        %v5941 = vsel %vm5936, %v5901, %v5903
        %v5942 = vsel %vm5936, %v5903, %v5905
        %v5943 = vsel %vm5936, %v5907, %v5909
        %v5944 = vsel %vm5936, %v5909, %v5911
        %v5945 = vsel %vm5936, %v5913, %v5915
        %v5946 = vsel %vm5936, %v5915, %v5917
        %v5947 = vsel %vm5936, %v5919, %v5921
        %v5948 = vsel %vm5936, %v5921, %v5923
        %v5949 = vsel %vm5936, %v5925, %v5927
        %v5950 = vsel %vm5936, %v5927, %v5929
        %v5951 = vsel %vm5936, %v5931, %v5933
        %v5952 = vsel %vm5936, %v5933, %v5935
        %5977 = vmatprep.subr.bf16.mxu0 %v5952
        %5978 = vmatpush1.bf16.msra.mxu0 %v5951
        %5979 = vmatprep.subr.bf16.mxu0 %v5950
        %5980 = vmatpush1.bf16.msra.mxu0 %v5949
        %5981 = vmatprep.subr.bf16.mxu0 %v5948
        %5982 = vmatpush1.bf16.msra.mxu0 %v5947
        %5983 = vmatprep.subr.bf16.mxu0 %v5946
        %5984 = vmatpush1.bf16.msra.mxu0 %v5945
        %5985 = vmatprep.subr.bf16.mxu0 %v5944
        %5986 = vmatpush1.bf16.msra.mxu0 %v5943
        %5987 = vmatprep.subr.bf16.mxu0 %v5942
        %5988 = vmatpush1.bf16.msra.mxu0 %v5941
        %5989 = vmatprep.subr.bf16.mxu0 %v5940
        %5990 = vmatpush1.bf16.msra.mxu0 %v5939
        %5991 = vmatprep.subr.bf16.mxu0 %v5938
        %5992 = vmatpush1.bf16.msra.mxu0 %v5937
        %5993 = vmatprep.subr.bf16.mxu0 0
        %5994 = vmatpush2.bf16.msra.mxu0 0
        %5995 = vmatprep.subr.bf16.mxu0 0
        %5996 = vmatpush2.bf16.msra.mxu0 0
        %5997 = vmatprep.subr.bf16.mxu0 0
        %5998 = vmatpush2.bf16.msra.mxu0 0
        %5999 = vmatprep.subr.bf16.mxu0 0
        %6000 = vmatpush2.bf16.msra.mxu0 0
        %6001 = vmatprep.subr.bf16.mxu0 0
        %6002 = vmatpush2.bf16.msra.mxu0 0
        %6003 = vmatprep.subr.bf16.mxu0 0
        %6004 = vmatpush2.bf16.msra.mxu0 0
        %6005 = vmatprep.subr.bf16.mxu0 0
        %6006 = vmatpush2.bf16.msra.mxu0 0
        %6007 = vmatprep.subr.bf16.mxu0 0
        %6008 = vmatpush2.bf16.msra.mxu0 0
        %6009 = vmatprep.mubr.bf16.mxu0 0
        %6010 = vmatmul.mubr.bf16.gmra.mxu0 %v5441
        %v6011 = vpop.f32.mrf.mxu0
        %v6012 = vadd.f32 %v5416, %v6011
        %v6013 = vpop.f32.mrf.mxu0
        %v6014 = vadd.f32 %v5416, %v6013
        %v6015 = vpop.f32.mrf.mxu0
        %v6016 = vadd.f32 %v5421, %v6015
        %v6017 = vpop.f32.mrf.mxu0
        %v6018 = vadd.f32 %v5421, %v6017
        %6019 = vmatprep.mubr.bf16.mxu0 0
        %6020 = vmatmul.mubr.bf16.gmra.mxu0 %v5442
        %v6021 = vpop.f32.mrf.mxu0
        %v6022 = vadd.f32 %v5426, %v6021
        %v6023 = vpop.f32.mrf.mxu0
        %v6024 = vadd.f32 %v5426, %v6023
        %v6025 = vpop.f32.mrf.mxu0
        %v6026 = vadd.f32 %v5431, %v6025
        %v6027 = vpop.f32.mrf.mxu0
        %v6028 = vadd.f32 %v5431, %v6027
        %6029 = vdwg.mxu0
        %6030 = vmatprep.subr.bf16.mxu0 0
        %6031 = vmatpush1.bf16.msra.mxu0 %v5935
        %6032 = vmatprep.subr.bf16.mxu0 0
        %6033 = vmatpush1.bf16.msra.mxu0 %v5929
        %6034 = vmatprep.subr.bf16.mxu0 0
        %6035 = vmatpush1.bf16.msra.mxu0 %v5923
        %6036 = vmatprep.subr.bf16.mxu0 0
        %6037 = vmatpush1.bf16.msra.mxu0 %v5917
        %6038 = vmatprep.subr.bf16.mxu0 0
        %6039 = vmatpush1.bf16.msra.mxu0 %v5911
        %6040 = vmatprep.subr.bf16.mxu0 0
        %6041 = vmatpush1.bf16.msra.mxu0 %v5905
        %6042 = vmatprep.subr.bf16.mxu0 0
        %6043 = vmatpush1.bf16.msra.mxu0 %v5899
        %6044 = vmatprep.subr.bf16.mxu0 0
        %6045 = vmatpush1.bf16.msra.mxu0 %v5893
        %6046 = vmatprep.subr.bf16.mxu0 0
        %6047 = vmatpush2.bf16.msra.mxu0 0
        %6048 = vmatprep.subr.bf16.mxu0 0
        %6049 = vmatpush2.bf16.msra.mxu0 0
        %6050 = vmatprep.subr.bf16.mxu0 0
        %6051 = vmatpush2.bf16.msra.mxu0 0
        %6052 = vmatprep.subr.bf16.mxu0 0
        %6053 = vmatpush2.bf16.msra.mxu0 0
        %6054 = vmatprep.subr.bf16.mxu0 0
        %6055 = vmatpush2.bf16.msra.mxu0 0
        %6056 = vmatprep.subr.bf16.mxu0 0
        %6057 = vmatpush2.bf16.msra.mxu0 0
        %6058 = vmatprep.subr.bf16.mxu0 0
        %6059 = vmatpush2.bf16.msra.mxu0 0
        %6060 = vmatprep.subr.bf16.mxu0 0
        %6061 = vmatpush2.bf16.msra.mxu0 0
        %6062 = vmatprep.mubr.bf16.mxu0 0
        %6063 = vmatmul.mubr.bf16.gmra.mxu0 %v5441
        %v6064 = vpop.f32.mrf.mxu0
        %v6065 = vadd.f32 %v5416, %v6064
        %v6066 = vpop.f32.mrf.mxu0
        %v6067 = vpop.f32.mrf.mxu0
        %v6068 = vadd.f32 %v5421, %v6067
        %v6069 = vpop.f32.mrf.mxu0
        %6070 = vmatprep.mubr.bf16.mxu0 0
        %6071 = vmatmul.mubr.bf16.gmra.mxu0 %v5442
        %v6072 = vpop.f32.mrf.mxu0
        %v6073 = vadd.f32 %v5426, %v6072
        %v6074 = vpop.f32.mrf.mxu0
        %v6075 = vpop.f32.mrf.mxu0
        %v6076 = vadd.f32 %v5431, %v6075
        %v6077 = vpop.f32.mrf.mxu0
        %6078 = vdwg.mxu0
        %v6079 = vmax.f32 %v6012, 0.0
        %v6080 = vmax.f32 %v6014, 0.0
        %v6081 = vmax.f32 %v6065, 0.0
        %v6082 = vmax.f32 %v6016, 0.0
        %v6083 = vmax.f32 %v6018, 0.0
        %v6084 = vmax.f32 %v6068, 0.0
        %v6085 = vmax.f32 %v6022, 0.0
        %v6086 = vmax.f32 %v6024, 0.0
        %v6087 = vmax.f32 %v6073, 0.0
        %v6088 = vmax.f32 %v6026, 0.0
        %v6089 = vmax.f32 %v6028, 0.0
        %v6090 = vmax.f32 %v6076, 0.0
        %v6091 = vpack.c.bf16 %v6082, %v6079
        %v6092 = vpack.c.bf16 %v6083, %v6080
        %v6093 = vpack.c.bf16 %v6084, %v6081
        %v6094 = vpack.c.bf16 %v6088, %v6085
        %v6095 = vpack.c.bf16 %v6089, %v6086
        %v6096 = vpack.c.bf16 %v6090, %v6087
        %v6097 = vld [vmem:[#allocation20] sm:$0x3]
        %v6100 = vunpack.c.l.s4 1983009808
        %v6101 = vunpack.c.0.s8 %v6100
        %v6102 = vlaneseq
        %v6103 = vshrl.u32 %v6102, 7
        %v6104 = vsub.s32 %v6101, %v6103
        %v6105 = vrot.slane %v6097, %v6104
        %6106 = vrot.lane.b32.xlu0 %v6105, 96
        %v6107 = vpop.permute.xlu0 %6106
        %v6109 = vsel %vm655, %v6107, 0
        %6111 = vmatprep.subr.bf16.mxu0 0
        %6112 = vmatpush1.bf16.msra.mxu0 0
        %6113 = vmatprep.subr.bf16.mxu0 0
        %6114 = vmatpush1.bf16.msra.mxu0 0
        %6115 = vmatprep.subr.bf16.mxu0 0
        %6116 = vmatpush1.bf16.msra.mxu0 0
        %6117 = vmatprep.subr.bf16.mxu0 0
        %6118 = vmatpush1.bf16.msra.mxu0 0
        %6119 = vmatprep.subr.bf16.mxu0 0
        %6120 = vmatpush1.bf16.msra.mxu0 0
        %6121 = vmatprep.subr.bf16.mxu0 0
        %6122 = vmatpush1.bf16.msra.mxu0 0
        %6123 = vmatprep.subr.bf16.mxu0 %v6095
        %6124 = vmatpush1.bf16.msra.mxu0 %v6094
        %6125 = vmatprep.subr.bf16.mxu0 %v6092
        %6126 = vmatpush1.bf16.msra.mxu0 %v6091
        %6127 = vmatprep.subr.bf16.mxu0 0
        %6128 = vmatpush2.bf16.msra.mxu0 0
        %6129 = vmatprep.subr.bf16.mxu0 0
        %6130 = vmatpush2.bf16.msra.mxu0 0
        %6131 = vmatprep.subr.bf16.mxu0 0
        %6132 = vmatpush2.bf16.msra.mxu0 0
        %6133 = vmatprep.subr.bf16.mxu0 0
        %6134 = vmatpush2.bf16.msra.mxu0 0
        %6135 = vmatprep.subr.bf16.mxu0 0
        %6136 = vmatpush2.bf16.msra.mxu0 0
        %6137 = vmatprep.subr.bf16.mxu0 0
        %6138 = vmatpush2.bf16.msra.mxu0 0
        %6139 = vmatprep.subr.bf16.mxu0 0
        %6140 = vmatpush2.bf16.msra.mxu0 0
        %6141 = vmatprep.subr.bf16.mxu0 0
        %6142 = vmatpush2.bf16.msra.mxu0 0
        %6143 = vmatprep.mubr.bf16.mxu0 0
        %6144 = vmatmul.mubr.bf16.gmra.mxu0 %v6109
        %v6145 = vpop.f32.mrf.mxu0
        %v6146 = vadd.f32 0.0, %v6145
        %v6147 = vpop.f32.mrf.mxu0
        %v6148 = vadd.f32 0.0, %v6147
        %v6149 = vpop.f32.mrf.mxu0
        %v6150 = vpop.f32.mrf.mxu0
        %6151 = vdwg.mxu0
        %v6152 = vadd.f32 %v5281, %v6146
        %v6153 = vadd.f32 %v5281, %v6148
        %v6154 = vld [vmem:[#allocation20] sm:$0x3]
        %v6157 = vunpack.c.l.s4 1983009808
        %v6158 = vunpack.c.0.s8 %v6157
        %v6159 = vlaneseq
        %v6160 = vshrl.u32 %v6159, 7
        %v6161 = vsub.s32 %v6158, %v6160
        %v6162 = vrot.slane %v6154, %v6161
        %6163 = vrot.lane.b32.xlu0 %v6162, 32
        %v6164 = vpop.permute.xlu0 %6163
        %6171 = vrot.lane.b32.xlu0 %v6091, 112
        %v6172 = vpop.permute.xlu0 %6171
        %6173 = vrot.lane.b32.xlu0 %v6092, 112
        %v6174 = vpop.permute.xlu0 %6173
        %6175 = vrot.lane.b32.xlu0 %v6093, 112
        %v6176 = vpop.permute.xlu0 %6175
        %6177 = vrot.lane.b32.xlu0 %v6094, 112
        %v6178 = vpop.permute.xlu0 %6177
        %6179 = vrot.lane.b32.xlu0 %v6095, 112
        %v6180 = vpop.permute.xlu0 %6179
        %6181 = vrot.lane.b32.xlu0 %v6096, 112
        %v6182 = vpop.permute.xlu0 %6181
        %v6183 = vsel %vm4682, %v6172, %v6174
        %v6184 = vsel %vm4682, %v6174, %v6176
        %v6185 = vsel %vm4682, %v6178, %v6180
        %v6186 = vsel %vm4682, %v6180, %v6182
        %v6192 = vsel %vm655, %v6164, 0
        %6194 = vmatprep.subr.bf16.mxu0 0
        %6195 = vmatpush1.bf16.msra.mxu0 0
        %6196 = vmatprep.subr.bf16.mxu0 0
        %6197 = vmatpush1.bf16.msra.mxu0 0
        %6198 = vmatprep.subr.bf16.mxu0 0
        %6199 = vmatpush1.bf16.msra.mxu0 0
        %6200 = vmatprep.subr.bf16.mxu0 0
        %6201 = vmatpush1.bf16.msra.mxu0 0
        %6202 = vmatprep.subr.bf16.mxu0 0
        %6203 = vmatpush1.bf16.msra.mxu0 0
        %6204 = vmatprep.subr.bf16.mxu0 0
        %6205 = vmatpush1.bf16.msra.mxu0 0
        %6206 = vmatprep.subr.bf16.mxu0 %v6186
        %6207 = vmatpush1.bf16.msra.mxu0 %v6185
        %6208 = vmatprep.subr.bf16.mxu0 %v6184
        %6209 = vmatpush1.bf16.msra.mxu0 %v6183
        %6210 = vmatprep.subr.bf16.mxu0 0
        %6211 = vmatpush2.bf16.msra.mxu0 0
        %6212 = vmatprep.subr.bf16.mxu0 0
        %6213 = vmatpush2.bf16.msra.mxu0 0
        %6214 = vmatprep.subr.bf16.mxu0 0
        %6215 = vmatpush2.bf16.msra.mxu0 0
        %6216 = vmatprep.subr.bf16.mxu0 0
        %6217 = vmatpush2.bf16.msra.mxu0 0
        %6218 = vmatprep.subr.bf16.mxu0 0
        %6219 = vmatpush2.bf16.msra.mxu0 0
        %6220 = vmatprep.subr.bf16.mxu0 0
        %6221 = vmatpush2.bf16.msra.mxu0 0
        %6222 = vmatprep.subr.bf16.mxu0 0
        %6223 = vmatpush2.bf16.msra.mxu0 0
        %6224 = vmatprep.subr.bf16.mxu0 0
        %6225 = vmatpush2.bf16.msra.mxu0 0
        %6226 = vmatprep.mubr.bf16.mxu0 0
        %6227 = vmatmul.mubr.bf16.gmra.mxu0 %v6192
        %v6228 = vpop.f32.mrf.mxu0
        %v6229 = vadd.f32 0.0, %v6228
        %v6230 = vpop.f32.mrf.mxu0
        %v6231 = vadd.f32 0.0, %v6230
        %v6232 = vpop.f32.mrf.mxu0
        %v6233 = vpop.f32.mrf.mxu0
        %6234 = vdwg.mxu0
        %v6235 = vadd.f32 %v5281, %v6229
        %v6236 = vadd.f32 %v5281, %v6231
        %v6237 = vld [vmem:[#allocation17 + $0x4] sm:$0xf]
        %v6238 = vld [vmem:[#allocation17 + $0x10] sm:$0xf]
        %v6239 = vld [vmem:[#allocation17 + $0x1c] sm:$0xf]
        %v6240 = vld [vmem:[#allocation17 + $0x28] sm:$0xf]
        %v6245 = vunpack.c.l.b16 %v6237
        %v6246 = vunpack.c.l.b16 %v6238
        %v6247 = vunpack.c.l.b16 %v6239
        %v6248 = vunpack.c.l.b16 %v6240
        %v6249 = vpack.c.b16 %v6246, %v6245
        %v6250 = vpack.c.b16 %v6248, %v6247
        %vm6251 = vcmask 523264
        %v6253 = vsel %vm6251, %v6249, 0
        %v6256 = vsel %vm6251, %v6250, 0
        %6258 = vmatprep.subr.bf16.mxu0 0
        %6259 = vmatpush1.bf16.msra.mxu0 0
        %6260 = vmatprep.subr.bf16.mxu0 0
        %6261 = vmatpush1.bf16.msra.mxu0 0
        %6262 = vmatprep.subr.bf16.mxu0 0
        %6263 = vmatpush1.bf16.msra.mxu0 0
        %6264 = vmatprep.subr.bf16.mxu0 0
        %6265 = vmatpush1.bf16.msra.mxu0 0
        %6266 = vmatprep.subr.bf16.mxu0 %v5504
        %6267 = vmatpush1.bf16.msra.mxu0 %v5503
        %6268 = vmatprep.subr.bf16.mxu0 %v5502
        %6269 = vmatpush1.bf16.msra.mxu0 %v5501
        %6270 = vmatprep.subr.bf16.mxu0 %v5496
        %6271 = vmatpush1.bf16.msra.mxu0 %v5495
        %6272 = vmatprep.subr.bf16.mxu0 %v5494
        %6273 = vmatpush1.bf16.msra.mxu0 %v5493
        %6274 = vmatprep.subr.bf16.mxu0 0
        %6275 = vmatpush2.bf16.msra.mxu0 0
        %6276 = vmatprep.subr.bf16.mxu0 0
        %6277 = vmatpush2.bf16.msra.mxu0 0
        %6278 = vmatprep.subr.bf16.mxu0 0
        %6279 = vmatpush2.bf16.msra.mxu0 0
        %6280 = vmatprep.subr.bf16.mxu0 0
        %6281 = vmatpush2.bf16.msra.mxu0 0
        %6282 = vmatprep.subr.bf16.mxu0 0
        %6283 = vmatpush2.bf16.msra.mxu0 0
        %6284 = vmatprep.subr.bf16.mxu0 0
        %6285 = vmatpush2.bf16.msra.mxu0 0
        %6286 = vmatprep.subr.bf16.mxu0 0
        %6287 = vmatpush2.bf16.msra.mxu0 0
        %6288 = vmatprep.subr.bf16.mxu0 0
        %6289 = vmatpush2.bf16.msra.mxu0 0
        %6290 = vmatprep.mubr.bf16.mxu0 0
        %6291 = vmatmul.mubr.bf16.gmra.mxu0 %v6253
        %v6292 = vpop.f32.mrf.mxu0
        %v6293 = vadd.f32 %v5416, %v6292
        %v6294 = vpop.f32.mrf.mxu0
        %v6295 = vadd.f32 %v5416, %v6294
        %v6296 = vpop.f32.mrf.mxu0
        %v6297 = vadd.f32 %v5421, %v6296
        %v6298 = vpop.f32.mrf.mxu0
        %v6299 = vadd.f32 %v5421, %v6298
        %6300 = vmatprep.mubr.bf16.mxu0 0
        %6301 = vmatmul.mubr.bf16.gmra.mxu0 %v6256
        %v6302 = vpop.f32.mrf.mxu0
        %v6303 = vadd.f32 %v5426, %v6302
        %v6304 = vpop.f32.mrf.mxu0
        %v6305 = vadd.f32 %v5426, %v6304
        %v6306 = vpop.f32.mrf.mxu0
        %v6307 = vadd.f32 %v5431, %v6306
        %v6308 = vpop.f32.mrf.mxu0
        %v6309 = vadd.f32 %v5431, %v6308
        %6310 = vdwg.mxu0
        %6311 = vmatprep.subr.bf16.mxu0 0
        %6312 = vmatpush1.bf16.msra.mxu0 0
        %6313 = vmatprep.subr.bf16.mxu0 0
        %6314 = vmatpush1.bf16.msra.mxu0 0
        %6315 = vmatprep.subr.bf16.mxu0 0
        %6316 = vmatpush1.bf16.msra.mxu0 0
        %6317 = vmatprep.subr.bf16.mxu0 0
        %6318 = vmatpush1.bf16.msra.mxu0 0
        %6319 = vmatprep.subr.bf16.mxu0 0
        %6320 = vmatpush1.bf16.msra.mxu0 %v5480
        %6321 = vmatprep.subr.bf16.mxu0 0
        %6322 = vmatpush1.bf16.msra.mxu0 %v5474
        %6323 = vmatprep.subr.bf16.mxu0 0
        %6324 = vmatpush1.bf16.msra.mxu0 %v5456
        %6325 = vmatprep.subr.bf16.mxu0 0
        %6326 = vmatpush1.bf16.msra.mxu0 %v5450
        %6327 = vmatprep.subr.bf16.mxu0 0
        %6328 = vmatpush2.bf16.msra.mxu0 0
        %6329 = vmatprep.subr.bf16.mxu0 0
        %6330 = vmatpush2.bf16.msra.mxu0 0
        %6331 = vmatprep.subr.bf16.mxu0 0
        %6332 = vmatpush2.bf16.msra.mxu0 0
        %6333 = vmatprep.subr.bf16.mxu0 0
        %6334 = vmatpush2.bf16.msra.mxu0 0
        %6335 = vmatprep.subr.bf16.mxu0 0
        %6336 = vmatpush2.bf16.msra.mxu0 0
        %6337 = vmatprep.subr.bf16.mxu0 0
        %6338 = vmatpush2.bf16.msra.mxu0 0
        %6339 = vmatprep.subr.bf16.mxu0 0
        %6340 = vmatpush2.bf16.msra.mxu0 0
        %6341 = vmatprep.subr.bf16.mxu0 0
        %6342 = vmatpush2.bf16.msra.mxu0 0
        %6343 = vmatprep.mubr.bf16.mxu0 0
        %6344 = vmatmul.mubr.bf16.gmra.mxu0 %v6253
        %v6345 = vpop.f32.mrf.mxu0
        %v6346 = vadd.f32 %v5416, %v6345
        %v6347 = vpop.f32.mrf.mxu0
        %v6348 = vpop.f32.mrf.mxu0
        %v6349 = vadd.f32 %v5421, %v6348
        %v6350 = vpop.f32.mrf.mxu0
        %6351 = vmatprep.mubr.bf16.mxu0 0
        %6352 = vmatmul.mubr.bf16.gmra.mxu0 %v6256
        %v6353 = vpop.f32.mrf.mxu0
        %v6354 = vadd.f32 %v5426, %v6353
        %v6355 = vpop.f32.mrf.mxu0
        %v6356 = vpop.f32.mrf.mxu0
        %v6357 = vadd.f32 %v5431, %v6356
        %v6358 = vpop.f32.mrf.mxu0
        %6359 = vdwg.mxu0
        %v6360 = vmax.f32 %v6293, 0.0
        %v6361 = vmax.f32 %v6295, 0.0
        %v6362 = vmax.f32 %v6346, 0.0
        %v6363 = vmax.f32 %v6297, 0.0
        %v6364 = vmax.f32 %v6299, 0.0
        %v6365 = vmax.f32 %v6349, 0.0
        %v6366 = vmax.f32 %v6303, 0.0
        %v6367 = vmax.f32 %v6305, 0.0
        %v6368 = vmax.f32 %v6354, 0.0
        %v6369 = vmax.f32 %v6307, 0.0
        %v6370 = vmax.f32 %v6309, 0.0
        %v6371 = vmax.f32 %v6357, 0.0
        %v6372 = vpack.c.bf16 %v6363, %v6360
        %v6373 = vpack.c.bf16 %v6364, %v6361
        %v6374 = vpack.c.bf16 %v6365, %v6362
        %v6375 = vpack.c.bf16 %v6369, %v6366
        %v6376 = vpack.c.bf16 %v6370, %v6367
        %v6377 = vpack.c.bf16 %v6371, %v6368
        %6378 = vmatprep.subr.bf16.mxu0 0
        %6379 = vmatpush1.bf16.msra.mxu0 0
        %6380 = vmatprep.subr.bf16.mxu0 0
        %6381 = vmatpush1.bf16.msra.mxu0 0
        %6382 = vmatprep.subr.bf16.mxu0 0
        %6383 = vmatpush1.bf16.msra.mxu0 0
        %6384 = vmatprep.subr.bf16.mxu0 0
        %6385 = vmatpush1.bf16.msra.mxu0 0
        %6386 = vmatprep.subr.bf16.mxu0 0
        %6387 = vmatpush1.bf16.msra.mxu0 0
        %6388 = vmatprep.subr.bf16.mxu0 0
        %6389 = vmatpush1.bf16.msra.mxu0 0
        %6390 = vmatprep.subr.bf16.mxu0 %v6376
        %6391 = vmatpush1.bf16.msra.mxu0 %v6375
        %6392 = vmatprep.subr.bf16.mxu0 %v6373
        %6393 = vmatpush1.bf16.msra.mxu0 %v6372
        %6394 = vmatprep.subr.bf16.mxu0 0
        %6395 = vmatpush2.bf16.msra.mxu0 0
        %6396 = vmatprep.subr.bf16.mxu0 0
        %6397 = vmatpush2.bf16.msra.mxu0 0
        %6398 = vmatprep.subr.bf16.mxu0 0
        %6399 = vmatpush2.bf16.msra.mxu0 0
        %6400 = vmatprep.subr.bf16.mxu0 0
        %6401 = vmatpush2.bf16.msra.mxu0 0
        %6402 = vmatprep.subr.bf16.mxu0 0
        %6403 = vmatpush2.bf16.msra.mxu0 0
        %6404 = vmatprep.subr.bf16.mxu0 0
        %6405 = vmatpush2.bf16.msra.mxu0 0
        %6406 = vmatprep.subr.bf16.mxu0 0
        %6407 = vmatpush2.bf16.msra.mxu0 0
        %6408 = vmatprep.subr.bf16.mxu0 0
        %6409 = vmatpush2.bf16.msra.mxu0 0
        %6410 = vmatprep.mubr.bf16.mxu0 0
        %6411 = vmatmul.mubr.bf16.gmra.mxu0 %v6109
        %v6412 = vpop.f32.mrf.mxu0
        %v6413 = vadd.f32 0.0, %v6412
        %v6414 = vpop.f32.mrf.mxu0
        %v6415 = vadd.f32 0.0, %v6414
        %v6416 = vpop.f32.mrf.mxu0
        %v6417 = vpop.f32.mrf.mxu0
        %6418 = vdwg.mxu0
        %v6419 = vadd.f32 %v5698, %v6413
        %v6420 = vadd.f32 %v5699, %v6415
        %6421 = vmatprep.subr.bf16.mxu0 0
        %6422 = vmatpush1.bf16.msra.mxu0 0
        %6423 = vmatprep.subr.bf16.mxu0 0
        %6424 = vmatpush1.bf16.msra.mxu0 0
        %6425 = vmatprep.subr.bf16.mxu0 0
        %6426 = vmatpush1.bf16.msra.mxu0 0
        %6427 = vmatprep.subr.bf16.mxu0 0
        %6428 = vmatpush1.bf16.msra.mxu0 0
        %6429 = vmatprep.subr.bf16.mxu0 0
        %6430 = vmatpush1.bf16.msra.mxu0 0
        %6431 = vmatprep.subr.bf16.mxu0 0
        %6432 = vmatpush1.bf16.msra.mxu0 0
        %6433 = vmatprep.subr.bf16.mxu0 %v6376
        %6434 = vmatpush1.bf16.msra.mxu0 %v6375
        %6435 = vmatprep.subr.bf16.mxu0 %v6373
        %6436 = vmatpush1.bf16.msra.mxu0 %v6372
        %6437 = vmatprep.subr.bf16.mxu0 0
        %6438 = vmatpush2.bf16.msra.mxu0 0
        %6439 = vmatprep.subr.bf16.mxu0 0
        %6440 = vmatpush2.bf16.msra.mxu0 0
        %6441 = vmatprep.subr.bf16.mxu0 0
        %6442 = vmatpush2.bf16.msra.mxu0 0
        %6443 = vmatprep.subr.bf16.mxu0 0
        %6444 = vmatpush2.bf16.msra.mxu0 0
        %6445 = vmatprep.subr.bf16.mxu0 0
        %6446 = vmatpush2.bf16.msra.mxu0 0
        %6447 = vmatprep.subr.bf16.mxu0 0
        %6448 = vmatpush2.bf16.msra.mxu0 0
        %6449 = vmatprep.subr.bf16.mxu0 0
        %6450 = vmatpush2.bf16.msra.mxu0 0
        %6451 = vmatprep.subr.bf16.mxu0 0
        %6452 = vmatpush2.bf16.msra.mxu0 0
        %6453 = vmatprep.mubr.bf16.mxu0 0
        %6454 = vmatmul.mubr.bf16.gmra.mxu0 %v5655
        %v6455 = vpop.f32.mrf.mxu0
        %v6456 = vadd.f32 0.0, %v6455
        %v6457 = vpop.f32.mrf.mxu0
        %v6458 = vadd.f32 0.0, %v6457
        %v6459 = vpop.f32.mrf.mxu0
        %v6460 = vpop.f32.mrf.mxu0
        %6461 = vdwg.mxu0
        %v6462 = vadd.f32 %v6152, %v6456
        %v6463 = vadd.f32 %v6153, %v6458
        %6470 = vrot.lane.b32.xlu0 %v6372, 112
        %v6471 = vpop.permute.xlu0 %6470
        %6472 = vrot.lane.b32.xlu0 %v6373, 112
        %v6473 = vpop.permute.xlu0 %6472
        %6474 = vrot.lane.b32.xlu0 %v6374, 112
        %v6475 = vpop.permute.xlu0 %6474
        %6476 = vrot.lane.b32.xlu0 %v6375, 112
        %v6477 = vpop.permute.xlu0 %6476
        %6478 = vrot.lane.b32.xlu0 %v6376, 112
        %v6479 = vpop.permute.xlu0 %6478
        %6480 = vrot.lane.b32.xlu0 %v6377, 112
        %v6481 = vpop.permute.xlu0 %6480
        %v6482 = vsel %vm4682, %v6471, %v6473
        %v6483 = vsel %vm4682, %v6473, %v6475
        %v6484 = vsel %vm4682, %v6477, %v6479
        %v6485 = vsel %vm4682, %v6479, %v6481
        %6490 = vmatprep.subr.bf16.mxu0 0
        %6491 = vmatpush1.bf16.msra.mxu0 0
        %6492 = vmatprep.subr.bf16.mxu0 0
        %6493 = vmatpush1.bf16.msra.mxu0 0
        %6494 = vmatprep.subr.bf16.mxu0 0
        %6495 = vmatpush1.bf16.msra.mxu0 0
        %6496 = vmatprep.subr.bf16.mxu0 0
        %6497 = vmatpush1.bf16.msra.mxu0 0
        %6498 = vmatprep.subr.bf16.mxu0 0
        %6499 = vmatpush1.bf16.msra.mxu0 0
        %6500 = vmatprep.subr.bf16.mxu0 0
        %6501 = vmatpush1.bf16.msra.mxu0 0
        %6502 = vmatprep.subr.bf16.mxu0 %v6485
        %6503 = vmatpush1.bf16.msra.mxu0 %v6484
        %6504 = vmatprep.subr.bf16.mxu0 %v6483
        %6505 = vmatpush1.bf16.msra.mxu0 %v6482
        %6506 = vmatprep.subr.bf16.mxu0 0
        %6507 = vmatpush2.bf16.msra.mxu0 0
        %6508 = vmatprep.subr.bf16.mxu0 0
        %6509 = vmatpush2.bf16.msra.mxu0 0
        %6510 = vmatprep.subr.bf16.mxu0 0
        %6511 = vmatpush2.bf16.msra.mxu0 0
        %6512 = vmatprep.subr.bf16.mxu0 0
        %6513 = vmatpush2.bf16.msra.mxu0 0
        %6514 = vmatprep.subr.bf16.mxu0 0
        %6515 = vmatpush2.bf16.msra.mxu0 0
        %6516 = vmatprep.subr.bf16.mxu0 0
        %6517 = vmatpush2.bf16.msra.mxu0 0
        %6518 = vmatprep.subr.bf16.mxu0 0
        %6519 = vmatpush2.bf16.msra.mxu0 0
        %6520 = vmatprep.subr.bf16.mxu0 0
        %6521 = vmatpush2.bf16.msra.mxu0 0
        %6522 = vmatprep.mubr.bf16.mxu0 0
        %6523 = vmatmul.mubr.bf16.gmra.mxu0 %v6192
        %v6524 = vpop.f32.mrf.mxu0
        %v6525 = vadd.f32 0.0, %v6524
        %v6526 = vpop.f32.mrf.mxu0
        %v6527 = vadd.f32 0.0, %v6526
        %v6528 = vpop.f32.mrf.mxu0
        %v6529 = vpop.f32.mrf.mxu0
        %6530 = vdwg.mxu0
        %v6531 = vadd.f32 %v5780, %v6525
        %v6532 = vadd.f32 %v5781, %v6527
        %6533 = vmatprep.subr.bf16.mxu0 0
        %6534 = vmatpush1.bf16.msra.mxu0 0
        %6535 = vmatprep.subr.bf16.mxu0 0
        %6536 = vmatpush1.bf16.msra.mxu0 0
        %6537 = vmatprep.subr.bf16.mxu0 0
        %6538 = vmatpush1.bf16.msra.mxu0 0
        %6539 = vmatprep.subr.bf16.mxu0 0
        %6540 = vmatpush1.bf16.msra.mxu0 0
        %6541 = vmatprep.subr.bf16.mxu0 0
        %6542 = vmatpush1.bf16.msra.mxu0 0
        %6543 = vmatprep.subr.bf16.mxu0 0
        %6544 = vmatpush1.bf16.msra.mxu0 0
        %6545 = vmatprep.subr.bf16.mxu0 %v6485
        %6546 = vmatpush1.bf16.msra.mxu0 %v6484
        %6547 = vmatprep.subr.bf16.mxu0 %v6483
        %6548 = vmatpush1.bf16.msra.mxu0 %v6482
        %6549 = vmatprep.subr.bf16.mxu0 0
        %6550 = vmatpush2.bf16.msra.mxu0 0
        %6551 = vmatprep.subr.bf16.mxu0 0
        %6552 = vmatpush2.bf16.msra.mxu0 0
        %6553 = vmatprep.subr.bf16.mxu0 0
        %6554 = vmatpush2.bf16.msra.mxu0 0
        %6555 = vmatprep.subr.bf16.mxu0 0
        %6556 = vmatpush2.bf16.msra.mxu0 0
        %6557 = vmatprep.subr.bf16.mxu0 0
        %6558 = vmatpush2.bf16.msra.mxu0 0
        %6559 = vmatprep.subr.bf16.mxu0 0
        %6560 = vmatpush2.bf16.msra.mxu0 0
        %6561 = vmatprep.subr.bf16.mxu0 0
        %6562 = vmatpush2.bf16.msra.mxu0 0
        %6563 = vmatprep.subr.bf16.mxu0 0
        %6564 = vmatpush2.bf16.msra.mxu0 0
        %6565 = vmatprep.mubr.bf16.mxu0 0
        %6566 = vmatmul.mubr.bf16.gmra.mxu0 %v5737
        %v6567 = vpop.f32.mrf.mxu0
        %v6568 = vadd.f32 0.0, %v6567
        %v6569 = vpop.f32.mrf.mxu0
        %v6570 = vadd.f32 0.0, %v6569
        %v6571 = vpop.f32.mrf.mxu0
        %v6572 = vpop.f32.mrf.mxu0
        %6573 = vdwg.mxu0
        %v6574 = vadd.f32 %v6235, %v6568
        %v6575 = vadd.f32 %v6236, %v6570
        %v6576 = vld [vmem:[#allocation2] sm:$0xff]
        %v6577 = vld [vmem:[#allocation2 + $0x8] sm:$0xff]
        %v6578 = vld [vmem:[#allocation2 + $0x10] sm:$0xff]
        %v6579 = vld [vmem:[#allocation2 + $0x18] sm:$0xff]
        %v6580 = vld [vmem:[#allocation2 + $0x20] sm:$0xff]
        %v6581 = vld [vmem:[#allocation2 + $0x28] sm:$0xff]
        %v6582 = vld [vmem:[#allocation2 + $0x30] sm:$0xff]
        %v6583 = vld [vmem:[#allocation2 + $0x38] sm:$0xff]
        %v6584 = vld [vmem:[#allocation2 + $0x40] sm:$0xff]
        %v6585 = vld [vmem:[#allocation2 + $0x48] sm:$0xff]
        %v6586 = vld [vmem:[#allocation2 + $0x50] sm:$0xff]
        %v6587 = vld [vmem:[#allocation2 + $0x58] sm:$0xff]
        %v6588 = vpack.c.bf16 %v6579, %v6576
        %v6589 = vpack.c.bf16 %v6580, %v6577
        %v6590 = vpack.c.bf16 %v6581, %v6578
        %v6591 = vpack.c.bf16 %v6585, %v6582
        %v6592 = vpack.c.bf16 %v6586, %v6583
        %v6593 = vpack.c.bf16 %v6587, %v6584
        %v6595 = vmul.bf16 %v6588, %v5305
        %v6596 = vmul.bf16 %v6589, %v5311
        %v6597 = vmul.bf16 %v6590, %v5307
        %v6598 = vmul.bf16 %v6591, %v5305
        %v6599 = vmul.bf16 %v6592, %v5311
        %v6600 = vmul.bf16 %v6593, %v5307
        %6607 = vrot.lane.b32.xlu0 %v6595, 1
        %v6608 = vpop.permute.xlu0 %6607
        %6609 = vrot.lane.b32.xlu0 %v6596, 1
        %v6610 = vpop.permute.xlu0 %6609
        %6611 = vrot.lane.b32.xlu0 %v6597, 1
        %v6612 = vpop.permute.xlu0 %6611
        %6613 = vrot.lane.b32.xlu0 %v6598, 1
        %v6614 = vpop.permute.xlu0 %6613
        %6615 = vrot.lane.b32.xlu0 %v6599, 1
        %v6616 = vpop.permute.xlu0 %6615
        %6617 = vrot.lane.b32.xlu0 %v6600, 1
        %v6618 = vpop.permute.xlu0 %6617
        %v6619 = vsel %vm5358, %v6608, %v6610
        %v6620 = vsel %vm5358, %v6610, %v6612
        %v6621 = vsel %vm5358, %v6614, %v6616
        %v6622 = vsel %vm5358, %v6616, %v6618
        %v6623 = vld [vmem:[#allocation17 + $0x4] sm:$0xf]
        %v6624 = vld [vmem:[#allocation17 + $0x10] sm:$0xf]
        %v6625 = vld [vmem:[#allocation17 + $0x1c] sm:$0xf]
        %v6626 = vld [vmem:[#allocation17 + $0x28] sm:$0xf]
        %v6631 = vunpack.c.l.b16 %v6623
        %v6632 = vunpack.c.l.b16 %v6624
        %v6633 = vunpack.c.l.b16 %v6625
        %v6634 = vunpack.c.l.b16 %v6626
        %v6635 = vpack.c.b16 %v6632, %v6631
        %v6636 = vpack.c.b16 %v6634, %v6633
        %6637 = vrot.lane.b32.xlu0 %v6635, 64
        %v6638 = vpop.permute.xlu0 %6637
        %6639 = vrot.lane.b32.xlu0 %v6636, 64
        %v6640 = vpop.permute.xlu0 %6639
        %6647 = vrot.lane.b32.xlu0 %v6588, 96
        %v6648 = vpop.permute.xlu0 %6647
        %6649 = vrot.lane.b32.xlu0 %v6589, 96
        %v6650 = vpop.permute.xlu0 %6649
        %6651 = vrot.lane.b32.xlu0 %v6590, 96
        %v6652 = vpop.permute.xlu0 %6651
        %6653 = vrot.lane.b32.xlu0 %v6591, 96
        %v6654 = vpop.permute.xlu0 %6653
        %6655 = vrot.lane.b32.xlu0 %v6592, 96
        %v6656 = vpop.permute.xlu0 %6655
        %6657 = vrot.lane.b32.xlu0 %v6593, 96
        %v6658 = vpop.permute.xlu0 %6657
        %6659 = vrot.lane.b32.xlu0 %v6608, 96
        %v6660 = vpop.permute.xlu0 %6659
        %6661 = vrot.lane.b32.xlu0 %v6619, 96
        %v6662 = vpop.permute.xlu0 %6661
        %6663 = vrot.lane.b32.xlu0 %v6620, 96
        %v6664 = vpop.permute.xlu0 %6663
        %6665 = vrot.lane.b32.xlu0 %v6614, 96
        %v6666 = vpop.permute.xlu0 %6665
        %6667 = vrot.lane.b32.xlu0 %v6621, 96
        %v6668 = vpop.permute.xlu0 %6667
        %6669 = vrot.lane.b32.xlu0 %v6622, 96
        %v6670 = vpop.permute.xlu0 %6669
        %v6671 = vsel %vm4798, %v6648, %v6650
        %v6672 = vsel %vm4798, %v6650, %v6652
        %v6673 = vsel %vm4798, %v6654, %v6656
        %v6674 = vsel %vm4798, %v6656, %v6658
        %v6675 = vsel %vm4798, %v6660, %v6662
        %v6676 = vsel %vm4798, %v6662, %v6664
        %v6677 = vsel %vm4798, %v6666, %v6668
        %v6678 = vsel %vm4798, %v6668, %v6670
        %v6688 = vsel %vm6251, %v6638, 0
        %v6691 = vsel %vm6251, %v6640, 0
        %6693 = vmatprep.subr.bf16.mxu0 0
        %6694 = vmatpush1.bf16.msra.mxu0 0
        %6695 = vmatprep.subr.bf16.mxu0 0
        %6696 = vmatpush1.bf16.msra.mxu0 0
        %6697 = vmatprep.subr.bf16.mxu0 0
        %6698 = vmatpush1.bf16.msra.mxu0 0
        %6699 = vmatprep.subr.bf16.mxu0 0
        %6700 = vmatpush1.bf16.msra.mxu0 0
        %6701 = vmatprep.subr.bf16.mxu0 %v6678
        %6702 = vmatpush1.bf16.msra.mxu0 %v6677
        %6703 = vmatprep.subr.bf16.mxu0 %v6676
        %6704 = vmatpush1.bf16.msra.mxu0 %v6675
        %6705 = vmatprep.subr.bf16.mxu0 %v6674
        %6706 = vmatpush1.bf16.msra.mxu0 %v6673
        %6707 = vmatprep.subr.bf16.mxu0 %v6672
        %6708 = vmatpush1.bf16.msra.mxu0 %v6671
        %6709 = vmatprep.subr.bf16.mxu0 0
        %6710 = vmatpush2.bf16.msra.mxu0 0
        %6711 = vmatprep.subr.bf16.mxu0 0
        %6712 = vmatpush2.bf16.msra.mxu0 0
        %6713 = vmatprep.subr.bf16.mxu0 0
        %6714 = vmatpush2.bf16.msra.mxu0 0
        %6715 = vmatprep.subr.bf16.mxu0 0
        %6716 = vmatpush2.bf16.msra.mxu0 0
        %6717 = vmatprep.subr.bf16.mxu0 0
        %6718 = vmatpush2.bf16.msra.mxu0 0
        %6719 = vmatprep.subr.bf16.mxu0 0
        %6720 = vmatpush2.bf16.msra.mxu0 0
        %6721 = vmatprep.subr.bf16.mxu0 0
        %6722 = vmatpush2.bf16.msra.mxu0 0
        %6723 = vmatprep.subr.bf16.mxu0 0
        %6724 = vmatpush2.bf16.msra.mxu0 0
        %6725 = vmatprep.mubr.bf16.mxu0 0
        %6726 = vmatmul.mubr.bf16.gmra.mxu0 %v6688
        %v6727 = vpop.f32.mrf.mxu0
        %v6728 = vadd.f32 %v5416, %v6727
        %v6729 = vpop.f32.mrf.mxu0
        %v6730 = vadd.f32 %v5416, %v6729
        %v6731 = vpop.f32.mrf.mxu0
        %v6732 = vadd.f32 %v5421, %v6731
        %v6733 = vpop.f32.mrf.mxu0
        %v6734 = vadd.f32 %v5421, %v6733
        %6735 = vmatprep.mubr.bf16.mxu0 0
        %6736 = vmatmul.mubr.bf16.gmra.mxu0 %v6691
        %v6737 = vpop.f32.mrf.mxu0
        %v6738 = vadd.f32 %v5426, %v6737
        %v6739 = vpop.f32.mrf.mxu0
        %v6740 = vadd.f32 %v5426, %v6739
        %v6741 = vpop.f32.mrf.mxu0
        %v6742 = vadd.f32 %v5431, %v6741
        %v6743 = vpop.f32.mrf.mxu0
        %v6744 = vadd.f32 %v5431, %v6743
        %6745 = vdwg.mxu0
        %v6746 = vmax.f32 %v6728, 0.0
        %v6747 = vmax.f32 %v6730, 0.0
        %v6748 = vmax.f32 %v6732, 0.0
        %v6749 = vmax.f32 %v6734, 0.0
        %v6750 = vmax.f32 %v6738, 0.0
        %v6751 = vmax.f32 %v6740, 0.0
        %v6752 = vmax.f32 %v6742, 0.0
        %v6753 = vmax.f32 %v6744, 0.0
        %v6754 = vpack.c.bf16 %v6748, %v6746
        %v6755 = vpack.c.bf16 %v6749, %v6747
        %v6756 = vpack.c.bf16 %v6752, %v6750
        %v6757 = vpack.c.bf16 %v6753, %v6751
        %6758 = vmatprep.subr.bf16.mxu0 0
        %6759 = vmatpush1.bf16.msra.mxu0 0
        %6760 = vmatprep.subr.bf16.mxu0 0
        %6761 = vmatpush1.bf16.msra.mxu0 0
        %6762 = vmatprep.subr.bf16.mxu0 0
        %6763 = vmatpush1.bf16.msra.mxu0 0
        %6764 = vmatprep.subr.bf16.mxu0 0
        %6765 = vmatpush1.bf16.msra.mxu0 0
        %6766 = vmatprep.subr.bf16.mxu0 0
        %6767 = vmatpush1.bf16.msra.mxu0 0
        %6768 = vmatprep.subr.bf16.mxu0 0
        %6769 = vmatpush1.bf16.msra.mxu0 0
        %6770 = vmatprep.subr.bf16.mxu0 %v6757
        %6771 = vmatpush1.bf16.msra.mxu0 %v6756
        %6772 = vmatprep.subr.bf16.mxu0 %v6755
        %6773 = vmatpush1.bf16.msra.mxu0 %v6754
        %6774 = vmatprep.subr.bf16.mxu0 0
        %6775 = vmatpush2.bf16.msra.mxu0 0
        %6776 = vmatprep.subr.bf16.mxu0 0
        %6777 = vmatpush2.bf16.msra.mxu0 0
        %6778 = vmatprep.subr.bf16.mxu0 0
        %6779 = vmatpush2.bf16.msra.mxu0 0
        %6780 = vmatprep.subr.bf16.mxu0 0
        %6781 = vmatpush2.bf16.msra.mxu0 0
        %6782 = vmatprep.subr.bf16.mxu0 0
        %6783 = vmatpush2.bf16.msra.mxu0 0
        %6784 = vmatprep.subr.bf16.mxu0 0
        %6785 = vmatpush2.bf16.msra.mxu0 0
        %6786 = vmatprep.subr.bf16.mxu0 0
        %6787 = vmatpush2.bf16.msra.mxu0 0
        %6788 = vmatprep.subr.bf16.mxu0 0
        %6789 = vmatpush2.bf16.msra.mxu0 0
        %6790 = vmatprep.mubr.bf16.mxu0 0
        %6791 = vmatmul.mubr.bf16.gmra.mxu0 %v5737
        %v6792 = vpop.f32.mrf.mxu0
        %v6793 = vadd.f32 0.0, %v6792
        %v6794 = vpop.f32.mrf.mxu0
        %v6795 = vadd.f32 0.0, %v6794
        %v6796 = vpop.f32.mrf.mxu0
        %v6797 = vpop.f32.mrf.mxu0
        %6798 = vdwg.mxu0
        %v6799 = vadd.f32 %v6419, %v6793
        %v6800 = vadd.f32 %v6420, %v6795
        %6801 = vmatprep.subr.bf16.mxu0 0
        %6802 = vmatpush1.bf16.msra.mxu0 0
        %6803 = vmatprep.subr.bf16.mxu0 0
        %6804 = vmatpush1.bf16.msra.mxu0 0
        %6805 = vmatprep.subr.bf16.mxu0 0
        %6806 = vmatpush1.bf16.msra.mxu0 0
        %6807 = vmatprep.subr.bf16.mxu0 0
        %6808 = vmatpush1.bf16.msra.mxu0 0
        %6809 = vmatprep.subr.bf16.mxu0 0
        %6810 = vmatpush1.bf16.msra.mxu0 0
        %6811 = vmatprep.subr.bf16.mxu0 0
        %6812 = vmatpush1.bf16.msra.mxu0 0
        %6813 = vmatprep.subr.bf16.mxu0 %v6757
        %6814 = vmatpush1.bf16.msra.mxu0 %v6756
        %6815 = vmatprep.subr.bf16.mxu0 %v6755
        %6816 = vmatpush1.bf16.msra.mxu0 %v6754
        %6817 = vmatprep.subr.bf16.mxu0 0
        %6818 = vmatpush2.bf16.msra.mxu0 0
        %6819 = vmatprep.subr.bf16.mxu0 0
        %6820 = vmatpush2.bf16.msra.mxu0 0
        %6821 = vmatprep.subr.bf16.mxu0 0
        %6822 = vmatpush2.bf16.msra.mxu0 0
        %6823 = vmatprep.subr.bf16.mxu0 0
        %6824 = vmatpush2.bf16.msra.mxu0 0
        %6825 = vmatprep.subr.bf16.mxu0 0
        %6826 = vmatpush2.bf16.msra.mxu0 0
        %6827 = vmatprep.subr.bf16.mxu0 0
        %6828 = vmatpush2.bf16.msra.mxu0 0
        %6829 = vmatprep.subr.bf16.mxu0 0
        %6830 = vmatpush2.bf16.msra.mxu0 0
        %6831 = vmatprep.subr.bf16.mxu0 0
        %6832 = vmatpush2.bf16.msra.mxu0 0
        %6833 = vmatprep.mubr.bf16.mxu0 0
        %6834 = vmatmul.mubr.bf16.gmra.mxu0 %v5655
        %v6835 = vpop.f32.mrf.mxu0
        %v6836 = vadd.f32 0.0, %v6835
        %v6837 = vpop.f32.mrf.mxu0
        %v6838 = vadd.f32 0.0, %v6837
        %v6839 = vpop.f32.mrf.mxu0
        %v6840 = vpop.f32.mrf.mxu0
        %6841 = vdwg.mxu0
        %v6842 = vadd.f32 %v6531, %v6836
        %v6843 = vadd.f32 %v6532, %v6838
        %v6844 = vld [vmem:[#allocation2] sm:$0xff]
        %v6845 = vld [vmem:[#allocation2 + $0x8] sm:$0xff]
        %v6846 = vld [vmem:[#allocation2 + $0x10] sm:$0xff]
        %v6847 = vld [vmem:[#allocation2 + $0x18] sm:$0xff]
        %v6848 = vld [vmem:[#allocation2 + $0x20] sm:$0xff]
        %v6849 = vld [vmem:[#allocation2 + $0x28] sm:$0xff]
        %v6850 = vld [vmem:[#allocation2 + $0x30] sm:$0xff]
        %v6851 = vld [vmem:[#allocation2 + $0x38] sm:$0xff]
        %v6852 = vld [vmem:[#allocation2 + $0x40] sm:$0xff]
        %v6853 = vld [vmem:[#allocation2 + $0x48] sm:$0xff]
        %v6854 = vld [vmem:[#allocation2 + $0x50] sm:$0xff]
        %v6855 = vld [vmem:[#allocation2 + $0x58] sm:$0xff]
        %v6856 = vpack.c.bf16 %v6847, %v6844
        %v6857 = vpack.c.bf16 %v6848, %v6845
        %v6858 = vpack.c.bf16 %v6849, %v6846
        %v6859 = vpack.c.bf16 %v6853, %v6850
        %v6860 = vpack.c.bf16 %v6854, %v6851
        %v6861 = vpack.c.bf16 %v6855, %v6852
        %v6862 = vmul.bf16 %v6856, %v4612
        %v6863 = vmul.bf16 %v6857, %v4616
        %v6864 = vmul.bf16 %v6858, %v4614
        %v6865 = vmul.bf16 %v6859, %v4612
        %v6866 = vmul.bf16 %v6860, %v4616
        %v6867 = vmul.bf16 %v6861, %v4614
        %6868 = vrot.lane.b32.xlu0 %v6588, 1
        %v6869 = vpop.permute.xlu0 %6868
        %6870 = vrot.lane.b32.xlu0 %v6589, 1
        %v6871 = vpop.permute.xlu0 %6870
        %6872 = vrot.lane.b32.xlu0 %v6590, 1
        %v6873 = vpop.permute.xlu0 %6872
        %6874 = vrot.lane.b32.xlu0 %v6591, 1
        %v6875 = vpop.permute.xlu0 %6874
        %6876 = vrot.lane.b32.xlu0 %v6592, 1
        %v6877 = vpop.permute.xlu0 %6876
        %6878 = vrot.lane.b32.xlu0 %v6593, 1
        %v6879 = vpop.permute.xlu0 %6878
        %v6880 = vsel %vm5358, %v6869, %v6871
        %v6881 = vsel %vm5358, %v6871, %v6873
        %v6882 = vsel %vm5358, %v6875, %v6877
        %v6883 = vsel %vm5358, %v6877, %v6879
        %6890 = vrot.lane.b32.xlu0 %v6862, 95
        %v6891 = vpop.permute.xlu0 %6890
        %6892 = vrot.lane.b32.xlu0 %v6863, 95
        %v6893 = vpop.permute.xlu0 %6892
        %6894 = vrot.lane.b32.xlu0 %v6864, 95
        %v6895 = vpop.permute.xlu0 %6894
        %6896 = vrot.lane.b32.xlu0 %v6865, 95
        %v6897 = vpop.permute.xlu0 %6896
        %6898 = vrot.lane.b32.xlu0 %v6866, 95
        %v6899 = vpop.permute.xlu0 %6898
        %6900 = vrot.lane.b32.xlu0 %v6867, 95
        %v6901 = vpop.permute.xlu0 %6900
        %6902 = vrot.lane.b32.xlu0 %v6869, 95
        %v6903 = vpop.permute.xlu0 %6902
        %6904 = vrot.lane.b32.xlu0 %v6880, 95
        %v6905 = vpop.permute.xlu0 %6904
        %6906 = vrot.lane.b32.xlu0 %v6881, 95
        %v6907 = vpop.permute.xlu0 %6906
        %6908 = vrot.lane.b32.xlu0 %v6875, 95
        %v6909 = vpop.permute.xlu0 %6908
        %6910 = vrot.lane.b32.xlu0 %v6882, 95
        %v6911 = vpop.permute.xlu0 %6910
        %6912 = vrot.lane.b32.xlu0 %v6883, 95
        %v6913 = vpop.permute.xlu0 %6912
        %v6914 = vsel %vm5936, %v6891, %v6893
        %v6915 = vsel %vm5936, %v6893, %v6895
        %v6916 = vsel %vm5936, %v6897, %v6899
        %v6917 = vsel %vm5936, %v6899, %v6901
        %v6918 = vsel %vm5936, %v6903, %v6905
        %v6919 = vsel %vm5936, %v6905, %v6907
        %v6920 = vsel %vm5936, %v6909, %v6911
        %v6921 = vsel %vm5936, %v6911, %v6913
        %6930 = vmatprep.subr.bf16.mxu0 0
        %6931 = vmatpush1.bf16.msra.mxu0 0
        %6932 = vmatprep.subr.bf16.mxu0 0
        %6933 = vmatpush1.bf16.msra.mxu0 0
        %6934 = vmatprep.subr.bf16.mxu0 0
        %6935 = vmatpush1.bf16.msra.mxu0 0
        %6936 = vmatprep.subr.bf16.mxu0 0
        %6937 = vmatpush1.bf16.msra.mxu0 0
        %6938 = vmatprep.subr.bf16.mxu0 %v6921
        %6939 = vmatpush1.bf16.msra.mxu0 %v6920
        %6940 = vmatprep.subr.bf16.mxu0 %v6919
        %6941 = vmatpush1.bf16.msra.mxu0 %v6918
        %6942 = vmatprep.subr.bf16.mxu0 %v6917
        %6943 = vmatpush1.bf16.msra.mxu0 %v6916
        %6944 = vmatprep.subr.bf16.mxu0 %v6915
        %6945 = vmatpush1.bf16.msra.mxu0 %v6914
        %6946 = vmatprep.subr.bf16.mxu0 0
        %6947 = vmatpush2.bf16.msra.mxu0 0
        %6948 = vmatprep.subr.bf16.mxu0 0
        %6949 = vmatpush2.bf16.msra.mxu0 0
        %6950 = vmatprep.subr.bf16.mxu0 0
        %6951 = vmatpush2.bf16.msra.mxu0 0
        %6952 = vmatprep.subr.bf16.mxu0 0
        %6953 = vmatpush2.bf16.msra.mxu0 0
        %6954 = vmatprep.subr.bf16.mxu0 0
        %6955 = vmatpush2.bf16.msra.mxu0 0
        %6956 = vmatprep.subr.bf16.mxu0 0
        %6957 = vmatpush2.bf16.msra.mxu0 0
        %6958 = vmatprep.subr.bf16.mxu0 0
        %6959 = vmatpush2.bf16.msra.mxu0 0
        %6960 = vmatprep.subr.bf16.mxu0 0
        %6961 = vmatpush2.bf16.msra.mxu0 0
        %6962 = vmatprep.mubr.bf16.mxu0 0
        %6963 = vmatmul.mubr.bf16.gmra.mxu0 %v6688
        %v6964 = vpop.f32.mrf.mxu0
        %v6965 = vadd.f32 %v5416, %v6964
        %v6966 = vpop.f32.mrf.mxu0
        %v6967 = vadd.f32 %v5416, %v6966
        %v6968 = vpop.f32.mrf.mxu0
        %v6969 = vadd.f32 %v5421, %v6968
        %v6970 = vpop.f32.mrf.mxu0
        %v6971 = vadd.f32 %v5421, %v6970
        %6972 = vmatprep.mubr.bf16.mxu0 0
        %6973 = vmatmul.mubr.bf16.gmra.mxu0 %v6691
        %v6974 = vpop.f32.mrf.mxu0
        %v6975 = vadd.f32 %v5426, %v6974
        %v6976 = vpop.f32.mrf.mxu0
        %v6977 = vadd.f32 %v5426, %v6976
        %v6978 = vpop.f32.mrf.mxu0
        %v6979 = vadd.f32 %v5431, %v6978
        %v6980 = vpop.f32.mrf.mxu0
        %v6981 = vadd.f32 %v5431, %v6980
        %6982 = vdwg.mxu0
        %v6983 = vmax.f32 %v6965, 0.0
        %v6984 = vmax.f32 %v6967, 0.0
        %v6985 = vmax.f32 %v6969, 0.0
        %v6986 = vmax.f32 %v6971, 0.0
        %v6987 = vmax.f32 %v6975, 0.0
        %v6988 = vmax.f32 %v6977, 0.0
        %v6989 = vmax.f32 %v6979, 0.0
        %v6990 = vmax.f32 %v6981, 0.0
        %v6991 = vpack.c.bf16 %v6985, %v6983
        %v6992 = vpack.c.bf16 %v6986, %v6984
        %v6993 = vpack.c.bf16 %v6989, %v6987
        %v6994 = vpack.c.bf16 %v6990, %v6988
        %6995 = vmatprep.subr.bf16.mxu0 0
        %6996 = vmatpush1.bf16.msra.mxu0 0
        %6997 = vmatprep.subr.bf16.mxu0 0
        %6998 = vmatpush1.bf16.msra.mxu0 0
        %6999 = vmatprep.subr.bf16.mxu0 0
        %7000 = vmatpush1.bf16.msra.mxu0 0
        %7001 = vmatprep.subr.bf16.mxu0 0
        %7002 = vmatpush1.bf16.msra.mxu0 0
        %7003 = vmatprep.subr.bf16.mxu0 0
        %7004 = vmatpush1.bf16.msra.mxu0 0
        %7005 = vmatprep.subr.bf16.mxu0 0
        %7006 = vmatpush1.bf16.msra.mxu0 0
        %7007 = vmatprep.subr.bf16.mxu0 %v6994
        %7008 = vmatpush1.bf16.msra.mxu0 %v6993
        %7009 = vmatprep.subr.bf16.mxu0 %v6992
        %7010 = vmatpush1.bf16.msra.mxu0 %v6991
        %7011 = vmatprep.subr.bf16.mxu0 0
        %7012 = vmatpush2.bf16.msra.mxu0 0
        %7013 = vmatprep.subr.bf16.mxu0 0
        %7014 = vmatpush2.bf16.msra.mxu0 0
        %7015 = vmatprep.subr.bf16.mxu0 0
        %7016 = vmatpush2.bf16.msra.mxu0 0
        %7017 = vmatprep.subr.bf16.mxu0 0
        %7018 = vmatpush2.bf16.msra.mxu0 0
        %7019 = vmatprep.subr.bf16.mxu0 0
        %7020 = vmatpush2.bf16.msra.mxu0 0
        %7021 = vmatprep.subr.bf16.mxu0 0
        %7022 = vmatpush2.bf16.msra.mxu0 0
        %7023 = vmatprep.subr.bf16.mxu0 0
        %7024 = vmatpush2.bf16.msra.mxu0 0
        %7025 = vmatprep.subr.bf16.mxu0 0
        %7026 = vmatpush2.bf16.msra.mxu0 0
        %7027 = vmatprep.mubr.bf16.mxu0 0
        %7028 = vmatmul.mubr.bf16.gmra.mxu0 %v6192
        %v7029 = vpop.f32.mrf.mxu0
        %v7030 = vadd.f32 0.0, %v7029
        %v7031 = vpop.f32.mrf.mxu0
        %v7032 = vadd.f32 0.0, %v7031
        %v7033 = vpop.f32.mrf.mxu0
        %v7034 = vpop.f32.mrf.mxu0
        %7035 = vdwg.mxu0
        %v7036 = vadd.f32 %v6462, %v7030
        %v7037 = vadd.f32 %v6463, %v7032
        %7038 = vmatprep.subr.bf16.mxu0 0
        %7039 = vmatpush1.bf16.msra.mxu0 0
        %7040 = vmatprep.subr.bf16.mxu0 0
        %7041 = vmatpush1.bf16.msra.mxu0 0
        %7042 = vmatprep.subr.bf16.mxu0 0
        %7043 = vmatpush1.bf16.msra.mxu0 0
        %7044 = vmatprep.subr.bf16.mxu0 0
        %7045 = vmatpush1.bf16.msra.mxu0 0
        %7046 = vmatprep.subr.bf16.mxu0 0
        %7047 = vmatpush1.bf16.msra.mxu0 0
        %7048 = vmatprep.subr.bf16.mxu0 0
        %7049 = vmatpush1.bf16.msra.mxu0 0
        %7050 = vmatprep.subr.bf16.mxu0 %v6994
        %7051 = vmatpush1.bf16.msra.mxu0 %v6993
        %7052 = vmatprep.subr.bf16.mxu0 %v6992
        %7053 = vmatpush1.bf16.msra.mxu0 %v6991
        %7054 = vmatprep.subr.bf16.mxu0 0
        %7055 = vmatpush2.bf16.msra.mxu0 0
        %7056 = vmatprep.subr.bf16.mxu0 0
        %7057 = vmatpush2.bf16.msra.mxu0 0
        %7058 = vmatprep.subr.bf16.mxu0 0
        %7059 = vmatpush2.bf16.msra.mxu0 0
        %7060 = vmatprep.subr.bf16.mxu0 0
        %7061 = vmatpush2.bf16.msra.mxu0 0
        %7062 = vmatprep.subr.bf16.mxu0 0
        %7063 = vmatpush2.bf16.msra.mxu0 0
        %7064 = vmatprep.subr.bf16.mxu0 0
        %7065 = vmatpush2.bf16.msra.mxu0 0
        %7066 = vmatprep.subr.bf16.mxu0 0
        %7067 = vmatpush2.bf16.msra.mxu0 0
        %7068 = vmatprep.subr.bf16.mxu0 0
        %7069 = vmatpush2.bf16.msra.mxu0 0
        %7070 = vmatprep.mubr.bf16.mxu0 0
        %7071 = vmatmul.mubr.bf16.gmra.mxu0 %v6109
        %v7072 = vpop.f32.mrf.mxu0
        %v7073 = vadd.f32 0.0, %v7072
        %v7074 = vpop.f32.mrf.mxu0
        %v7075 = vadd.f32 0.0, %v7074
        %v7076 = vpop.f32.mrf.mxu0
        %v7077 = vpop.f32.mrf.mxu0
        %7078 = vdwg.mxu0
        %v7079 = vadd.f32 %v6574, %v7073
        %v7080 = vadd.f32 %v6575, %v7075
        %v7081 = vld [vmem:[#allocation17 + $0x8] sm:$0xf]
        %v7082 = vld [vmem:[#allocation17 + $0x14] sm:$0xf]
        %v7083 = vld [vmem:[#allocation17 + $0x20] sm:$0xf]
        %v7084 = vld [vmem:[#allocation17 + $0x2c] sm:$0xf]
        %v7089 = vunpack.c.l.b16 %v7081
        %v7090 = vunpack.c.l.b16 %v7082
        %v7091 = vunpack.c.l.b16 %v7083
        %v7092 = vunpack.c.l.b16 %v7084
        %v7093 = vpack.c.b16 %v7090, %v7089
        %v7094 = vpack.c.b16 %v7092, %v7091
        %v7096 = vsel %vm655, %v7093, 0
        %v7099 = vsel %vm655, %v7094, 0
        %7101 = vmatprep.subr.bf16.mxu0 0
        %7102 = vmatpush1.bf16.msra.mxu0 0
        %7103 = vmatprep.subr.bf16.mxu0 0
        %7104 = vmatpush1.bf16.msra.mxu0 0
        %7105 = vmatprep.subr.bf16.mxu0 0
        %7106 = vmatpush1.bf16.msra.mxu0 0
        %7107 = vmatprep.subr.bf16.mxu0 0
        %7108 = vmatpush1.bf16.msra.mxu0 0
        %7109 = vmatprep.subr.bf16.mxu0 0
        %7110 = vmatpush1.bf16.msra.mxu0 0
        %7111 = vmatprep.subr.bf16.mxu0 0
        %7112 = vmatpush1.bf16.msra.mxu0 0
        %7113 = vmatprep.subr.bf16.mxu0 %v6674
        %7114 = vmatpush1.bf16.msra.mxu0 %v6673
        %7115 = vmatprep.subr.bf16.mxu0 %v6672
        %7116 = vmatpush1.bf16.msra.mxu0 %v6671
        %7117 = vmatprep.subr.bf16.mxu0 0
        %7118 = vmatpush2.bf16.msra.mxu0 0
        %7119 = vmatprep.subr.bf16.mxu0 0
        %7120 = vmatpush2.bf16.msra.mxu0 0
        %7121 = vmatprep.subr.bf16.mxu0 0
        %7122 = vmatpush2.bf16.msra.mxu0 0
        %7123 = vmatprep.subr.bf16.mxu0 0
        %7124 = vmatpush2.bf16.msra.mxu0 0
        %7125 = vmatprep.subr.bf16.mxu0 0
        %7126 = vmatpush2.bf16.msra.mxu0 0
        %7127 = vmatprep.subr.bf16.mxu0 0
        %7128 = vmatpush2.bf16.msra.mxu0 0
        %7129 = vmatprep.subr.bf16.mxu0 0
        %7130 = vmatpush2.bf16.msra.mxu0 0
        %7131 = vmatprep.subr.bf16.mxu0 0
        %7132 = vmatpush2.bf16.msra.mxu0 0
        %7133 = vmatprep.mubr.bf16.mxu0 0
        %7134 = vmatmul.mubr.bf16.gmra.mxu0 %v7096
        %v7135 = vpop.f32.mrf.mxu0
        %v7136 = vadd.f32 %v5416, %v7135
        %v7137 = vpop.f32.mrf.mxu0
        %v7138 = vadd.f32 %v5416, %v7137
        %v7139 = vpop.f32.mrf.mxu0
        %v7140 = vadd.f32 %v5421, %v7139
        %v7141 = vpop.f32.mrf.mxu0
        %v7142 = vadd.f32 %v5421, %v7141
        %7143 = vmatprep.mubr.bf16.mxu0 0
        %7144 = vmatmul.mubr.bf16.gmra.mxu0 %v7099
        %v7145 = vpop.f32.mrf.mxu0
        %v7146 = vadd.f32 %v5426, %v7145
        %v7147 = vpop.f32.mrf.mxu0
        %v7148 = vadd.f32 %v5426, %v7147
        %v7149 = vpop.f32.mrf.mxu0
        %v7150 = vadd.f32 %v5431, %v7149
        %v7151 = vpop.f32.mrf.mxu0
        %v7152 = vadd.f32 %v5431, %v7151
        %7153 = vdwg.mxu0
        %v7154 = vmax.f32 %v7136, 0.0
        %v7155 = vmax.f32 %v7138, 0.0
        %v7156 = vmax.f32 %v7140, 0.0
        %v7157 = vmax.f32 %v7142, 0.0
        %v7158 = vmax.f32 %v7146, 0.0
        %v7159 = vmax.f32 %v7148, 0.0
        %v7160 = vmax.f32 %v7150, 0.0
        %v7161 = vmax.f32 %v7152, 0.0
        %v7162 = vpack.c.bf16 %v7156, %v7154
        %v7163 = vpack.c.bf16 %v7157, %v7155
        %v7164 = vpack.c.bf16 %v7160, %v7158
        %v7165 = vpack.c.bf16 %v7161, %v7159
        %7166 = vmatprep.subr.bf16.mxu0 0
        %7167 = vmatpush1.bf16.msra.mxu0 0
        %7168 = vmatprep.subr.bf16.mxu0 0
        %7169 = vmatpush1.bf16.msra.mxu0 0
        %7170 = vmatprep.subr.bf16.mxu0 0
        %7171 = vmatpush1.bf16.msra.mxu0 0
        %7172 = vmatprep.subr.bf16.mxu0 0
        %7173 = vmatpush1.bf16.msra.mxu0 0
        %7174 = vmatprep.subr.bf16.mxu0 0
        %7175 = vmatpush1.bf16.msra.mxu0 0
        %7176 = vmatprep.subr.bf16.mxu0 0
        %7177 = vmatpush1.bf16.msra.mxu0 0
        %7178 = vmatprep.subr.bf16.mxu0 %v7165
        %7179 = vmatpush1.bf16.msra.mxu0 %v7164
        %7180 = vmatprep.subr.bf16.mxu0 %v7163
        %7181 = vmatpush1.bf16.msra.mxu0 %v7162
        %7182 = vmatprep.subr.bf16.mxu0 0
        %7183 = vmatpush2.bf16.msra.mxu0 0
        %7184 = vmatprep.subr.bf16.mxu0 0
        %7185 = vmatpush2.bf16.msra.mxu0 0
        %7186 = vmatprep.subr.bf16.mxu0 0
        %7187 = vmatpush2.bf16.msra.mxu0 0
        %7188 = vmatprep.subr.bf16.mxu0 0
        %7189 = vmatpush2.bf16.msra.mxu0 0
        %7190 = vmatprep.subr.bf16.mxu0 0
        %7191 = vmatpush2.bf16.msra.mxu0 0
        %7192 = vmatprep.subr.bf16.mxu0 0
        %7193 = vmatpush2.bf16.msra.mxu0 0
        %7194 = vmatprep.subr.bf16.mxu0 0
        %7195 = vmatpush2.bf16.msra.mxu0 0
        %7196 = vmatprep.subr.bf16.mxu0 0
        %7197 = vmatpush2.bf16.msra.mxu0 0
        %7198 = vmatprep.mubr.bf16.mxu0 0
        %7199 = vmatmul.mubr.bf16.gmra.mxu0 %v6192
        %v7200 = vpop.f32.mrf.mxu0
        %v7201 = vadd.f32 0.0, %v7200
        %v7202 = vpop.f32.mrf.mxu0
        %v7203 = vadd.f32 0.0, %v7202
        %v7204 = vpop.f32.mrf.mxu0
        %v7205 = vpop.f32.mrf.mxu0
        %7206 = vdwg.mxu0
        %v7207 = vadd.f32 %v6799, %v7201
        %v7208 = vadd.f32 %v6800, %v7203
        %7209 = vmatprep.subr.bf16.mxu0 0
        %7210 = vmatpush1.bf16.msra.mxu0 0
        %7211 = vmatprep.subr.bf16.mxu0 0
        %7212 = vmatpush1.bf16.msra.mxu0 0
        %7213 = vmatprep.subr.bf16.mxu0 0
        %7214 = vmatpush1.bf16.msra.mxu0 0
        %7215 = vmatprep.subr.bf16.mxu0 0
        %7216 = vmatpush1.bf16.msra.mxu0 0
        %7217 = vmatprep.subr.bf16.mxu0 0
        %7218 = vmatpush1.bf16.msra.mxu0 0
        %7219 = vmatprep.subr.bf16.mxu0 0
        %7220 = vmatpush1.bf16.msra.mxu0 0
        %7221 = vmatprep.subr.bf16.mxu0 %v7165
        %7222 = vmatpush1.bf16.msra.mxu0 %v7164
        %7223 = vmatprep.subr.bf16.mxu0 %v7163
        %7224 = vmatpush1.bf16.msra.mxu0 %v7162
        %7225 = vmatprep.subr.bf16.mxu0 0
        %7226 = vmatpush2.bf16.msra.mxu0 0
        %7227 = vmatprep.subr.bf16.mxu0 0
        %7228 = vmatpush2.bf16.msra.mxu0 0
        %7229 = vmatprep.subr.bf16.mxu0 0
        %7230 = vmatpush2.bf16.msra.mxu0 0
        %7231 = vmatprep.subr.bf16.mxu0 0
        %7232 = vmatpush2.bf16.msra.mxu0 0
        %7233 = vmatprep.subr.bf16.mxu0 0
        %7234 = vmatpush2.bf16.msra.mxu0 0
        %7235 = vmatprep.subr.bf16.mxu0 0
        %7236 = vmatpush2.bf16.msra.mxu0 0
        %7237 = vmatprep.subr.bf16.mxu0 0
        %7238 = vmatpush2.bf16.msra.mxu0 0
        %7239 = vmatprep.subr.bf16.mxu0 0
        %7240 = vmatpush2.bf16.msra.mxu0 0
        %7241 = vmatprep.mubr.bf16.mxu0 0
        %7242 = vmatmul.mubr.bf16.gmra.mxu0 %v5737
        %v7243 = vpop.f32.mrf.mxu0
        %v7244 = vadd.f32 0.0, %v7243
        %v7245 = vpop.f32.mrf.mxu0
        %v7246 = vadd.f32 0.0, %v7245
        %v7247 = vpop.f32.mrf.mxu0
        %v7248 = vpop.f32.mrf.mxu0
        %7249 = vdwg.mxu0
        %v7250 = vadd.f32 %v7036, %v7244
        %v7251 = vadd.f32 %v7037, %v7246
        %7252 = vmatprep.subr.bf16.mxu0 0
        %7253 = vmatpush1.bf16.msra.mxu0 0
        %7254 = vmatprep.subr.bf16.mxu0 0
        %7255 = vmatpush1.bf16.msra.mxu0 0
        %7256 = vmatprep.subr.bf16.mxu0 0
        %7257 = vmatpush1.bf16.msra.mxu0 0
        %7258 = vmatprep.subr.bf16.mxu0 0
        %7259 = vmatpush1.bf16.msra.mxu0 0
        %7260 = vmatprep.subr.bf16.mxu0 0
        %7261 = vmatpush1.bf16.msra.mxu0 0
        %7262 = vmatprep.subr.bf16.mxu0 0
        %7263 = vmatpush1.bf16.msra.mxu0 0
        %7264 = vmatprep.subr.bf16.mxu0 %v7165
        %7265 = vmatpush1.bf16.msra.mxu0 %v7164
        %7266 = vmatprep.subr.bf16.mxu0 %v7163
        %7267 = vmatpush1.bf16.msra.mxu0 %v7162
        %7268 = vmatprep.subr.bf16.mxu0 0
        %7269 = vmatpush2.bf16.msra.mxu0 0
        %7270 = vmatprep.subr.bf16.mxu0 0
        %7271 = vmatpush2.bf16.msra.mxu0 0
        %7272 = vmatprep.subr.bf16.mxu0 0
        %7273 = vmatpush2.bf16.msra.mxu0 0
        %7274 = vmatprep.subr.bf16.mxu0 0
        %7275 = vmatpush2.bf16.msra.mxu0 0
        %7276 = vmatprep.subr.bf16.mxu0 0
        %7277 = vmatpush2.bf16.msra.mxu0 0
        %7278 = vmatprep.subr.bf16.mxu0 0
        %7279 = vmatpush2.bf16.msra.mxu0 0
        %7280 = vmatprep.subr.bf16.mxu0 0
        %7281 = vmatpush2.bf16.msra.mxu0 0
        %7282 = vmatprep.subr.bf16.mxu0 0
        %7283 = vmatpush2.bf16.msra.mxu0 0
        %7284 = vmatprep.mubr.bf16.mxu0 0
        %7285 = vmatmul.mubr.bf16.gmra.mxu0 %v6109
        %v7286 = vpop.f32.mrf.mxu0
        %v7287 = vadd.f32 0.0, %v7286
        %v7288 = vpop.f32.mrf.mxu0
        %v7289 = vadd.f32 0.0, %v7288
        %v7290 = vpop.f32.mrf.mxu0
        %v7291 = vpop.f32.mrf.mxu0
        %7292 = vdwg.mxu0
        %v7293 = vadd.f32 %v6842, %v7287
        %v7294 = vadd.f32 %v6843, %v7289
        %7295 = vmatprep.subr.bf16.mxu0 0
        %7296 = vmatpush1.bf16.msra.mxu0 0
        %7297 = vmatprep.subr.bf16.mxu0 0
        %7298 = vmatpush1.bf16.msra.mxu0 0
        %7299 = vmatprep.subr.bf16.mxu0 0
        %7300 = vmatpush1.bf16.msra.mxu0 0
        %7301 = vmatprep.subr.bf16.mxu0 0
        %7302 = vmatpush1.bf16.msra.mxu0 0
        %7303 = vmatprep.subr.bf16.mxu0 0
        %7304 = vmatpush1.bf16.msra.mxu0 0
        %7305 = vmatprep.subr.bf16.mxu0 0
        %7306 = vmatpush1.bf16.msra.mxu0 0
        %7307 = vmatprep.subr.bf16.mxu0 %v7165
        %7308 = vmatpush1.bf16.msra.mxu0 %v7164
        %7309 = vmatprep.subr.bf16.mxu0 %v7163
        %7310 = vmatpush1.bf16.msra.mxu0 %v7162
        %7311 = vmatprep.subr.bf16.mxu0 0
        %7312 = vmatpush2.bf16.msra.mxu0 0
        %7313 = vmatprep.subr.bf16.mxu0 0
        %7314 = vmatpush2.bf16.msra.mxu0 0
        %7315 = vmatprep.subr.bf16.mxu0 0
        %7316 = vmatpush2.bf16.msra.mxu0 0
        %7317 = vmatprep.subr.bf16.mxu0 0
        %7318 = vmatpush2.bf16.msra.mxu0 0
        %7319 = vmatprep.subr.bf16.mxu0 0
        %7320 = vmatpush2.bf16.msra.mxu0 0
        %7321 = vmatprep.subr.bf16.mxu0 0
        %7322 = vmatpush2.bf16.msra.mxu0 0
        %7323 = vmatprep.subr.bf16.mxu0 0
        %7324 = vmatpush2.bf16.msra.mxu0 0
        %7325 = vmatprep.subr.bf16.mxu0 0
        %7326 = vmatpush2.bf16.msra.mxu0 0
        %7327 = vmatprep.mubr.bf16.mxu0 0
        %7328 = vmatmul.mubr.bf16.gmra.mxu0 %v5655
        %v7329 = vpop.f32.mrf.mxu0
        %v7330 = vadd.f32 0.0, %v7329
        %v7331 = vpop.f32.mrf.mxu0
        %v7332 = vadd.f32 0.0, %v7331
        %v7333 = vpop.f32.mrf.mxu0
        %v7334 = vpop.f32.mrf.mxu0
        %7335 = vdwg.mxu0
        %v7336 = vadd.f32 %v7079, %v7330
        %v7337 = vadd.f32 %v7080, %v7332
        %v7338 = vsub.f32 0.0, %v7207
        %v7339 = vsub.f32 0.0, %v7208
        %v7340 = vmul.f32 %v7338, 1.442695
        %v7341 = vpow.pop %v7340
        %v7342 = vmul.f32 %v7339, 1.442695
        %v7343 = vpow.pop %v7342
        %v7344 = vadd.f32 %v7341, 1.0
        %v7345 = vadd.f32 %v7343, 1.0
        %v7346 = vrcp.pop %v7344
        %v7347 = vrcp.pop %v7345
        %v7348 = vmax.f32 %v7346, 0.0
        %v7349 = vmax.f32 %v7347, 0.0
        %v7350 = vmin.f32 %v7348, 1.0
        %v7351 = vmin.f32 %v7349, 1.0
        %7352 = vst [vmem:[%s622] sm:$0x7] %v7350
        %7353 = vst [vmem:[%s622 + $0x8] sm:$0x7] %v7351
        %v7354 = vsub.f32 0.0, %v7250
        %v7355 = vsub.f32 0.0, %v7251
        %v7356 = vmul.f32 %v7354, 1.442695
        %v7357 = vpow.pop %v7356
        %v7358 = vmul.f32 %v7355, 1.442695
        %v7359 = vpow.pop %v7358
        %v7360 = vadd.f32 %v7357, 1.0
        %v7361 = vadd.f32 %v7359, 1.0
        %v7362 = vrcp.pop %v7360
        %v7363 = vrcp.pop %v7361
        %v7364 = vmax.f32 %v7362, 0.0
        %v7365 = vmax.f32 %v7363, 0.0
        %v7366 = vmin.f32 %v7364, 1.0
        %v7367 = vmin.f32 %v7365, 1.0
        %v7370 = vrot.slane %v7366, 5
        %v7371 = vrot.slane %v7367, 5
        %7374 = vst [vmem:[%s622] sm:$0x38] %v7370
        %7375 = vst [vmem:[%s622 + $0x8] sm:$0x38] %v7371
        %v7376 = vsub.f32 0.0, %v7293
        %v7377 = vsub.f32 0.0, %v7294
        %v7378 = vmul.f32 %v7376, 1.442695
        %v7379 = vpow.pop %v7378
        %v7380 = vmul.f32 %v7377, 1.442695
        %v7381 = vpow.pop %v7380
        %v7382 = vadd.f32 %v7379, 1.0
        %v7383 = vadd.f32 %v7381, 1.0
        %v7384 = vrcp.pop %v7382
        %v7385 = vrcp.pop %v7383
        %v7386 = vmax.f32 %v7384, 0.0
        %v7387 = vmax.f32 %v7385, 0.0
        %v7388 = vmin.f32 %v7386, 1.0
        %v7389 = vmin.f32 %v7387, 1.0
        %v7392 = vrot.slane %v7388, 2
        %v7393 = vrot.slane %v7389, 2
        %7396 = vst [vmem:[%s622] sm:$0xc0] %v7392
        %7397 = vst [vmem:[%s622 + $0x8] sm:$0xc0] %v7393
        %7398 = vst [vmem:[%s622 + $0x10] sm:$0x1] %v7392
        %7399 = vst [vmem:[%s622 + $0x18] sm:$0x1] %v7393
        %v7400 = vsub.f32 0.0, %v7336
        %v7401 = vsub.f32 0.0, %v7337
        %v7402 = vmul.f32 %v7400, 1.442695
        %v7403 = vpow.pop %v7402
        %v7404 = vmul.f32 %v7401, 1.442695
        %v7405 = vpow.pop %v7404
        %v7406 = vadd.f32 %v7403, 1.0
        %v7407 = vadd.f32 %v7405, 1.0
        %v7408 = vrcp.pop %v7406
        %v7409 = vrcp.pop %v7407
        %v7410 = vmax.f32 %v7408, 0.0
        %v7411 = vmax.f32 %v7409, 0.0
        %v7412 = vmin.f32 %v7410, 1.0
        %v7413 = vmin.f32 %v7411, 1.0
        %v7416 = vrot.slane %v7412, 7
        %v7417 = vrot.slane %v7413, 7
        %7420 = vst [vmem:[%s622 + $0x10] sm:$0xe] %v7416
        %7421 = vst [vmem:[%s622 + $0x18] sm:$0xe] %v7417
        %p7422 = scmp.lt.s32.totalorder %s33, 1
        %s7423 = scalar_select %p7422, %s33, 1
        %s7424 = smul.addr %s7423, 4
        %s7425 = smul.addr %s7424, 8
        %s7426 = scalar_lea.vmem %s13, %s7425
        // Predicated region
        $region125: #{decoder_forward.1} parent=71 // pred_check
          %p7427 = pneg %p329
        $region126: #{decoder_forward.1} parent=71 // pred_check_branch
          %7429 = sbr.rel (%p7427) target = $region128
        $region127: #{decoder_forward.1} parent=71 // pred_region
          _
        $region128: #{decoder_forward.1} parent=71 // pred_fallthru
          _
      $region72: #{decoder_forward.1} parent=5 // pred_fallthru
        _
      %p7430 = scmp.le.s32.totalorder 2, %s28
      // Predicated region
      $region129: #{decoder_forward.1} parent=5 // pred_check
        %p7431 = pneg %p7430
      $region130: #{decoder_forward.1} parent=5 // pred_check_branch
        %7433 = sbr.rel (%p7431) target = $region132
      $region131: #{decoder_forward.1} parent=5 // pred_region
        %s7434 = ssub.s32 %s28, 2
        // Predicated region
        $region133: #{decoder_forward.1} parent=131 // pred_check
          %p7435 = pneg %p335
        $region134: #{decoder_forward.1} parent=131 // pred_check_branch
          %7437 = sbr.rel (%p7435) target = $region136
        $region135: #{decoder_forward.1} parent=131 // pred_region
          %p7438 = scmp.lt.s32.totalorder %s34, 1
          %s7439 = scalar_select %p7438, %s34, 1
          %s7440 = smul.addr %s7439, 4
          %s7441 = smul.addr %s7440, 8
          %s7442 = scalar_lea.vmem %s13, %s7441
        $region136: #{decoder_forward.1} parent=131 // pred_fallthru
          _
      $region132: #{decoder_forward.1} parent=5 // pred_fallthru
        _
    $region6: #{decoder_forward.1} parent=1 // loop_footer
      %s32 = sadd.s32 1, %s28
    $region7: #{decoder_forward.1} parent=1 // loop_footer_branch
      %27 = sbr.rel target = $region3
    $region8: #{decoder_forward.1} parent=1 // loop_exit
      _
    %7443 = vsyncpa [#allocation4], 1
    %s7444 = scalar_lea.sflag [#allocation4], 1
    %7445 = vsyncpa %s7444, 1
    %7446 = vsyncpa [#allocation6], 1
    %7447 = vsyncpa [#allocation9], 1
    %7448 = vsyncpa [#allocation12], 1
    %7449 = vsyncpa [#allocation15], 1
    %7450 = vsyncpa [#allocation18], 1
    %7451 = vsyncpa [#allocation21], 1

</llo_original>
